<compile_context>
chip_gen: v7x
topology: tpu7x:2x2x1
jax: 0.10.0
libtpu: 0.0.40
codegen_flags: <defaults>
</compile_context>

<pallas_src>
import numpy as np

import jax
import jax.numpy as jnp
from jax import lax
from jax.experimental import pallas as pl
from jax.experimental.pallas import tpu as pltpu


_VMEM = pl.BlockSpec(memory_space=pltpu.MemorySpace.VMEM)
_LRELU_SLOPE = 0.2
_BN_EPS = 1e-5


# ------------------------------ in-kernel math ------------------------------ #

def _leaky_relu(x):
    return jnp.where(x > 0, x, _LRELU_SLOPE * x)


def _stable_sigmoid(x):
    z = jnp.exp(-jnp.abs(x))            # z in (0, 1], never overflows
    return jnp.where(x >= 0, 1.0 / (1.0 + z), z / (1.0 + z))


def _zero_one(cond, dtype):
    return jnp.where(cond, 1.0, 0.0).astype(dtype)


def _select_tap_rows(x_val, n_img, hin, ho, tap):
    """Rows of the H-tap `tap` slab: out row (n, oh) <- x row (n, 2*oh+tap-1).

    Rows that fall into the (zero) H padding select nothing.  Implemented as a
    0/1 mask matmul so no strided / gathered memory access is needed; the mask
    is exact in bf16 and the product is a pure row selection (no rounding).
    """
    rows, cols = n_img * ho, n_img * hin
    r = lax.broadcasted_iota(jnp.int32, (rows, cols), 0)
    c = lax.broadcasted_iota(jnp.int32, (rows, cols), 1)
    shift = ho.bit_length() - 1                      # ho is a power of two
    n = jnp.right_shift(r, shift)
    oh = jnp.bitwise_and(r, ho - 1)
    h = 2 * oh + (tap - 1)                           # pad = 1
    valid = jnp.logical_and(h >= 0, h < hin)
    mask = _zero_one(jnp.logical_and(c == n * hin + h, valid), jnp.bfloat16)
    sel = jnp.dot(mask, x_val, preferred_element_type=jnp.float32)
    return sel.astype(jnp.bfloat16)                  # lossless (selection of bf16)


def _conv_k4_s2_p1(x_val, g_ref, n_img, hin):
    """One 4x4 / stride-2 / pad-1 conv: sum of 4 H-taps, each = row-selection
    matmul followed by the precomputed W-banded weight matmul (f32 accum)."""
    ho = hin // 2
    acc = None
    for tap in range(4):
        lhs = _select_tap_rows(x_val, n_img, hin, ho, tap)
        part = jnp.dot(lhs, g_ref[tap], preferred_element_type=jnp.float32)
        acc = part if acc is None else acc + part
    return acc                                       # (n_img*ho, wo*cout) f32


def _batchnorm_lrelu(acc, cout, count):
    """BatchNorm2d with batch statistics (gamma=1, beta=0, biased variance)
    + LeakyReLU(0.2).  Lanes are laid out (wo, co); per-channel sum/broadcast
    across the wo groups uses a 0/1 'same channel' matrix on the MXU.
    One-pass stats: var = E[x^2] - mean^2, clamped at 0."""
    lanes = acc.shape[1]
    r = lax.broadcasted_iota(jnp.int32, (lanes, lanes), 0)
    c = lax.broadcasted_iota(jnp.int32, (lanes, lanes), 1)
    same_ch = _zero_one(
        jnp.bitwise_and(r, cout - 1) == jnp.bitwise_and(c, cout - 1),
        jnp.float32)
    s1 = jnp.sum(acc, axis=0, keepdims=True)                       # (1, lanes)
    s2 = jnp.sum(acc * acc, axis=0, keepdims=True)
    inv_n = 1.0 / float(count)
    mean = jnp.dot(s1, same_ch, preferred_element_type=jnp.float32) * inv_n
    ex2 = jnp.dot(s2, same_ch, preferred_element_type=jnp.float32) * inv_n
    var = jnp.maximum(ex2 - mean * mean, 0.0)
    y = (acc - mean) * lax.rsqrt(var + _BN_EPS)
    return _leaky_relu(y)


def _make_discriminator_kernel(n_img, channels, bf):
    """Whole-network kernel, specialised (via closure) to static shapes."""
    # (input spatial extent, cin, cout) for conv1..conv4
    layer_dims = [(64, channels, bf),
                  (32, bf, 2 * bf),
                  (16, 2 * bf, 4 * bf),
                  (8, 4 * bf, 8 * bf)]

    def kernel(x_ref, g1_ref, g2_ref, g3_ref, g4_ref, v_ref, o_ref):
        g_refs = (g1_ref, g2_ref, g3_ref, g4_ref)
        act = x_ref[...]                              # (n*64, 64*channels) bf16
        y = None
        for li, (hin, _, cout) in enumerate(layer_dims):
            acc = _conv_k4_s2_p1(act, g_refs[li], n_img, hin)
            if li == 0:
                y = _leaky_relu(acc)                  # conv1 has no BN
            else:
                ho = hin // 2
                y = _batchnorm_lrelu(acc, cout, n_img * ho * ho)
            act = y.astype(jnp.bfloat16)              # feeds the next MXU layer

        # Head: conv5 (k=4, s=2, p=0, bias-free) on the 4x4x(8*bf) map gives a
        # single logit per image; AdaptiveAvgPool2d(1) over a 1x1 map is the
        # identity.  Done on conv4's f32 epilogue value for accuracy.
        v = v_ref[...]                                # (4, 4*8*bf) f32
        for n in range(n_img):
            blk = y[n * 4:(n + 1) * 4, :]             # rows = h, lanes = (w, c)
            logit = jnp.sum(blk * v, axis=(0, 1), keepdims=True)   # (1, 1)
            o_ref[n:n + 1, :] = _stable_sigmoid(logit)

    return kernel


# ------------------------------- JAX wrapper -------------------------------- #

def _make_band_weights(w_hwio, win):
    """Fold the W-axis structure of a 4x4 / stride-2 / pad-1 conv into 4 banded
    matrices G_i (one per H-tap i):
        G_i[w*cin + c, wo*cout + co] = W[i, (w+1) - 2*wo, c, co]
    (zero outside the 0..3 tap range; W-padding columns vanish because padded
    activations are zero).  Weight-only preprocessing; could be cached."""
    k, _, cin, cout = w_hwio.shape
    wo = win // 2
    ind = np.zeros((win, k, wo), dtype=np.float32)
    for j in range(k):
        for v in range(wo):
            w_abs = 2 * v + j - 1                     # pad = 1
            if 0 <= w_abs < win:
                ind[w_abs, j, v] = 1.0
    g = jnp.einsum("wjv,ijcd->iwcvd", ind, w_hwio.astype(jnp.float32))
    return g.reshape(k, win * cin, wo * cout).astype(jnp.bfloat16)


def discriminator_forward(x_nchw, weights):
    """Pallas implementation of Discriminator.forward. Returns (N, 1) probs.

    BatchNorm uses per-batch statistics with gamma=1 / beta=0 (i.e. a freshly
    initialised nn.BatchNorm2d in training mode), matching the reference."""
    n, cin, h, w = x_nchw.shape
    bf = weights[0].shape[-1]
    assert h == 64 and w == 64, "kernel is specialised to 64x64 DCGAN inputs"
    assert bf >= 2 and (bf & (bf - 1)) == 0, "base_features must be a power of 2"

    # NCHW -> (N*H, W*C) bf16: the only activation glue outside the kernel.
    x2d = jnp.transpose(x_nchw, (0, 2, 3, 1)).reshape(n * h, w * cin)
    x2d = x2d.astype(jnp.bfloat16)

    spatial = (64, 32, 16, 8)
    gs = [_make_band_weights(weights[i], spatial[i]) for i in range(4)]
    c5 = weights[4].shape[2]                          # = 8 * bf
    v = weights[4][:, :, :, 0].reshape(4, 4 * c5).astype(jnp.float32)

    kernel = _make_discriminator_kernel(n, cin, bf)
    return pl.pallas_call(
        kernel,
        out_shape=jax.ShapeDtypeStruct((n, 1), jnp.float32),
        in_specs=[_VMEM] * 6,
        out_specs=_VMEM,
        compiler_params=pltpu.CompilerParams(
            vmem_limit_bytes=32 * 1024 * 1024),
    )(x2d, gs[0], gs[1], gs[2], gs[3], v)


# ------------------------------ init / reference ---------------------------- #

def init_weights(key, channels, bf):
    """HWIO conv weights (equivalent to PyTorch OIHW via transpose), N(0, 0.02)."""
    dims = [(4, 4, channels, bf),
            (4, 4, bf, bf * 2),
            (4, 4, bf * 2, bf * 4),
            (4, 4, bf * 4, bf * 8),
            (4, 4, bf * 8, 1)]
    keys = jax.random.split(key, len(dims))
    return [0.02 * jax.random.normal(k, d, dtype=jnp.float32)
            for k, d in zip(keys, dims)]


def reference_forward(x_nchw, weights):
    """Pure-JAX f32 reference mirroring the same math (sanity check)."""
    def conv(v, w, pad):
        return lax.conv_general_dilated(
            v, w, window_strides=(2, 2), padding=[(pad, pad), (pad, pad)],
            dimension_numbers=("NHWC", "HWIO", "NHWC"),
            precision=lax.Precision.HIGHEST)

    lrelu = lambda v: jnp.where(v > 0, v, _LRELU_SLOPE * v)
    x = jnp.transpose(x_nchw, (0, 2, 3, 1))
    x = lrelu(conv(x, weights[0], 1))
    for w in weights[1:4]:
        x = conv(x, w, 1)
        m = jnp.mean(x, axis=(0, 1, 2), keepdims=True)
        v = jnp.mean((x - m) ** 2, axis=(0, 1, 2), keepdims=True)
        x = lrelu((x - m) * lax.rsqrt(v + _BN_EPS))
    x = conv(x, weights[4], 0)                        # (N, Ho, Wo, 1)
    x = jnp.mean(x, axis=(1, 2))                      # (N, 1)
    return jax.nn.sigmoid(x)


# --------------------------------- main ------------------------------------- #

if __name__ == "__main__":
    key = jax.random.PRNGKey(0)
    k_x, k_w = jax.random.split(key)

    # Small shapes: batch=2, channels=3, 64x64 spatial (minimum size so the
    # final k=4/s=2/p=0 conv is valid), base_features=8.
    channels, base_features = 3, 8
    x = jax.random.normal(k_x, (2, channels, 64, 64), dtype=jnp.float32)
    weights = init_weights(k_w, channels, base_features)

    fwd = jax.jit(discriminator_forward)
    out = jax.block_until_ready(fwd(x, weights))
    assert out.shape == (2, 1), out.shape

    ref = jax.block_until_ready(jax.jit(reference_forward)(x, weights))
    # bf16 MXU inputs + f32 accumulation/epilogue: BN re-normalises each layer
    # and the sigmoid slope is <= 0.25, so final-probability error stays well
    # under 1e-2; 2e-2 keeps ample margin.
    if not jnp.allclose(out, ref, atol=2e-2, rtol=0.0):
        raise AssertionError(f"mismatch: pallas={out} ref={ref}")

    print("KERNEL_OK")
</pallas_src>

<mosaic_0001>
module attributes {stable_mosaic.version = 11 : i64} {
  func.func @kernel(%arg0: memref<128x192xbf16, #tpu.memory_space<vmem>>, %arg1: memref<4x192x256xbf16, #tpu.memory_space<vmem>>, %arg2: memref<4x256x256xbf16, #tpu.memory_space<vmem>>, %arg3: memref<4x256x256xbf16, #tpu.memory_space<vmem>>, %arg4: memref<4x256x256xbf16, #tpu.memory_space<vmem>>, %arg5: memref<4x256xf32, #tpu.memory_space<vmem>>, %arg6: memref<2x1xf32, #tpu.memory_space<vmem>>) attributes {dimension_semantics = [], scalar_prefetch = 0 : i64, scratch_operands = 0 : i64, tpu.core_type = #tpu.core_type<tc>} {
    %c0 = arith.constant 0 : index
    %c0_0 = arith.constant 0 : index
    %0 = vector.load %arg0[%c0, %c0_0] : memref<128x192xbf16, #tpu.memory_space<vmem>>, vector<128x192xbf16>
    %1 = tpu.iota {dimensions = array<i32: 0>} : vector<64x128xi32>
    %2 = tpu.iota {dimensions = array<i32: 1>} : vector<64x128xi32>
    %c5_i32 = arith.constant 5 : i32
    %3 = vector.broadcast %c5_i32 : i32 to vector<64x128xi32>
    %4 = arith.shrsi %1, %3 : vector<64x128xi32>
    %c31_i32 = arith.constant 31 : i32
    %5 = vector.broadcast %c31_i32 : i32 to vector<64x128xi32>
    %6 = arith.andi %1, %5 : vector<64x128xi32>
    %c2_i32 = arith.constant 2 : i32
    %7 = vector.broadcast %c2_i32 : i32 to vector<64x128xi32>
    %8 = arith.muli %7, %6 : vector<64x128xi32>
    %c-1_i32 = arith.constant -1 : i32
    %9 = vector.broadcast %c-1_i32 : i32 to vector<64x128xi32>
    %10 = arith.addi %8, %9 : vector<64x128xi32>
    %c0_i32 = arith.constant 0 : i32
    %11 = vector.broadcast %c0_i32 : i32 to vector<64x128xi32>
    %12 = arith.cmpi sge, %10, %11 : vector<64x128xi32>
    %c64_i32 = arith.constant 64 : i32
    %13 = vector.broadcast %c64_i32 : i32 to vector<64x128xi32>
    %14 = arith.cmpi slt, %10, %13 : vector<64x128xi32>
    %15 = arith.andi %12, %14 : vector<64x128xi1>
    %c64_i32_1 = arith.constant 64 : i32
    %16 = vector.broadcast %c64_i32_1 : i32 to vector<64x128xi32>
    %17 = arith.muli %4, %16 : vector<64x128xi32>
    %18 = arith.addi %17, %10 : vector<64x128xi32>
    %19 = arith.cmpi eq, %2, %18 : vector<64x128xi32>
    %20 = arith.andi %19, %15 : vector<64x128xi1>
    %cst = arith.constant 1.000000e+00 : f32
    %cst_2 = arith.constant 0.000000e+00 : f32
    %21 = vector.broadcast %cst : f32 to vector<64x128xf32>
    %22 = vector.broadcast %cst_2 : f32 to vector<64x128xf32>
    %23 = arith.select %20, %21, %22 : vector<64x128xi1>, vector<64x128xf32>
    %24 = arith.truncf %23 : vector<64x128xf32> to vector<64x128xbf16>
    %cst_3 = arith.constant dense<0.000000e+00> : vector<64x192xf32>
    %25 = tpu.matmul %24, %0, %cst_3 {dimension_numbers = #tpu.dot_dimension_numbers<[1], [0], [0], [1], [0, 0, 1, 1], [], []>} : vector<64x128xbf16>, vector<128x192xbf16>, vector<64x192xf32> -> vector<64x192xf32>
    %26 = arith.truncf %25 : vector<64x192xf32> to vector<64x192xbf16>
    %c0_4 = arith.constant 0 : index
    %c0_5 = arith.constant 0 : index
    %c0_6 = arith.constant 0 : index
    %27 = vector.load %arg1[%c0_4, %c0_5, %c0_6] : memref<4x192x256xbf16, #tpu.memory_space<vmem>>, vector<1x192x256xbf16>
    %28 = vector.shape_cast %27 : vector<1x192x256xbf16> to vector<192x256xbf16>
    %cst_7 = arith.constant dense<0.000000e+00> : vector<64x256xf32>
    %29 = tpu.matmul %26, %28, %cst_7 {dimension_numbers = #tpu.dot_dimension_numbers<[1], [0], [0], [1], [0, 0, 1, 1], [], []>} : vector<64x192xbf16>, vector<192x256xbf16>, vector<64x256xf32> -> vector<64x256xf32>
    %30 = tpu.iota {dimensions = array<i32: 0>} : vector<64x128xi32>
    %31 = tpu.iota {dimensions = array<i32: 1>} : vector<64x128xi32>
    %c5_i32_8 = arith.constant 5 : i32
    %32 = vector.broadcast %c5_i32_8 : i32 to vector<64x128xi32>
    %33 = arith.shrsi %30, %32 : vector<64x128xi32>
    %c31_i32_9 = arith.constant 31 : i32
    %34 = vector.broadcast %c31_i32_9 : i32 to vector<64x128xi32>
    %35 = arith.andi %30, %34 : vector<64x128xi32>
    %c2_i32_10 = arith.constant 2 : i32
    %36 = vector.broadcast %c2_i32_10 : i32 to vector<64x128xi32>
    %37 = arith.muli %36, %35 : vector<64x128xi32>
    %c0_i32_11 = arith.constant 0 : i32
    %38 = vector.broadcast %c0_i32_11 : i32 to vector<64x128xi32>
    %39 = arith.addi %37, %38 : vector<64x128xi32>
    %c0_i32_12 = arith.constant 0 : i32
    %40 = vector.broadcast %c0_i32_12 : i32 to vector<64x128xi32>
    %41 = arith.cmpi sge, %39, %40 : vector<64x128xi32>
    %c64_i32_13 = arith.constant 64 : i32
    %42 = vector.broadcast %c64_i32_13 : i32 to vector<64x128xi32>
    %43 = arith.cmpi slt, %39, %42 : vector<64x128xi32>
    %44 = arith.andi %41, %43 : vector<64x128xi1>
    %c64_i32_14 = arith.constant 64 : i32
    %45 = vector.broadcast %c64_i32_14 : i32 to vector<64x128xi32>
    %46 = arith.muli %33, %45 : vector<64x128xi32>
    %47 = arith.addi %46, %39 : vector<64x128xi32>
    %48 = arith.cmpi eq, %31, %47 : vector<64x128xi32>
    %49 = arith.andi %48, %44 : vector<64x128xi1>
    %cst_15 = arith.constant 1.000000e+00 : f32
    %cst_16 = arith.constant 0.000000e+00 : f32
    %50 = vector.broadcast %cst_15 : f32 to vector<64x128xf32>
    %51 = vector.broadcast %cst_16 : f32 to vector<64x128xf32>
    %52 = arith.select %49, %50, %51 : vector<64x128xi1>, vector<64x128xf32>
    %53 = arith.truncf %52 : vector<64x128xf32> to vector<64x128xbf16>
    %cst_17 = arith.constant dense<0.000000e+00> : vector<64x192xf32>
    %54 = tpu.matmul %53, %0, %cst_17 {dimension_numbers = #tpu.dot_dimension_numbers<[1], [0], [0], [1], [0, 0, 1, 1], [], []>} : vector<64x128xbf16>, vector<128x192xbf16>, vector<64x192xf32> -> vector<64x192xf32>
    %55 = arith.truncf %54 : vector<64x192xf32> to vector<64x192xbf16>
    %c1 = arith.constant 1 : index
    %c0_18 = arith.constant 0 : index
    %c0_19 = arith.constant 0 : index
    %56 = vector.load %arg1[%c1, %c0_18, %c0_19] : memref<4x192x256xbf16, #tpu.memory_space<vmem>>, vector<1x192x256xbf16>
    %57 = vector.shape_cast %56 : vector<1x192x256xbf16> to vector<192x256xbf16>
    %cst_20 = arith.constant dense<0.000000e+00> : vector<64x256xf32>
    %58 = tpu.matmul %55, %57, %cst_20 {dimension_numbers = #tpu.dot_dimension_numbers<[1], [0], [0], [1], [0, 0, 1, 1], [], []>} : vector<64x192xbf16>, vector<192x256xbf16>, vector<64x256xf32> -> vector<64x256xf32>
    %59 = arith.addf %29, %58 : vector<64x256xf32>
    %60 = tpu.iota {dimensions = array<i32: 0>} : vector<64x128xi32>
    %61 = tpu.iota {dimensions = array<i32: 1>} : vector<64x128xi32>
    %c5_i32_21 = arith.constant 5 : i32
    %62 = vector.broadcast %c5_i32_21 : i32 to vector<64x128xi32>
    %63 = arith.shrsi %60, %62 : vector<64x128xi32>
    %c31_i32_22 = arith.constant 31 : i32
    %64 = vector.broadcast %c31_i32_22 : i32 to vector<64x128xi32>
    %65 = arith.andi %60, %64 : vector<64x128xi32>
    %c2_i32_23 = arith.constant 2 : i32
    %66 = vector.broadcast %c2_i32_23 : i32 to vector<64x128xi32>
    %67 = arith.muli %66, %65 : vector<64x128xi32>
    %c1_i32 = arith.constant 1 : i32
    %68 = vector.broadcast %c1_i32 : i32 to vector<64x128xi32>
    %69 = arith.addi %67, %68 : vector<64x128xi32>
    %c0_i32_24 = arith.constant 0 : i32
    %70 = vector.broadcast %c0_i32_24 : i32 to vector<64x128xi32>
    %71 = arith.cmpi sge, %69, %70 : vector<64x128xi32>
    %c64_i32_25 = arith.constant 64 : i32
    %72 = vector.broadcast %c64_i32_25 : i32 to vector<64x128xi32>
    %73 = arith.cmpi slt, %69, %72 : vector<64x128xi32>
    %74 = arith.andi %71, %73 : vector<64x128xi1>
    %c64_i32_26 = arith.constant 64 : i32
    %75 = vector.broadcast %c64_i32_26 : i32 to vector<64x128xi32>
    %76 = arith.muli %63, %75 : vector<64x128xi32>
    %77 = arith.addi %76, %69 : vector<64x128xi32>
    %78 = arith.cmpi eq, %61, %77 : vector<64x128xi32>
    %79 = arith.andi %78, %74 : vector<64x128xi1>
    %cst_27 = arith.constant 1.000000e+00 : f32
    %cst_28 = arith.constant 0.000000e+00 : f32
    %80 = vector.broadcast %cst_27 : f32 to vector<64x128xf32>
    %81 = vector.broadcast %cst_28 : f32 to vector<64x128xf32>
    %82 = arith.select %79, %80, %81 : vector<64x128xi1>, vector<64x128xf32>
    %83 = arith.truncf %82 : vector<64x128xf32> to vector<64x128xbf16>
    %cst_29 = arith.constant dense<0.000000e+00> : vector<64x192xf32>
    %84 = tpu.matmul %83, %0, %cst_29 {dimension_numbers = #tpu.dot_dimension_numbers<[1], [0], [0], [1], [0, 0, 1, 1], [], []>} : vector<64x128xbf16>, vector<128x192xbf16>, vector<64x192xf32> -> vector<64x192xf32>
    %85 = arith.truncf %84 : vector<64x192xf32> to vector<64x192xbf16>
    %c2 = arith.constant 2 : index
    %c0_30 = arith.constant 0 : index
    %c0_31 = arith.constant 0 : index
    %86 = vector.load %arg1[%c2, %c0_30, %c0_31] : memref<4x192x256xbf16, #tpu.memory_space<vmem>>, vector<1x192x256xbf16>
    %87 = vector.shape_cast %86 : vector<1x192x256xbf16> to vector<192x256xbf16>
    %cst_32 = arith.constant dense<0.000000e+00> : vector<64x256xf32>
    %88 = tpu.matmul %85, %87, %cst_32 {dimension_numbers = #tpu.dot_dimension_numbers<[1], [0], [0], [1], [0, 0, 1, 1], [], []>} : vector<64x192xbf16>, vector<192x256xbf16>, vector<64x256xf32> -> vector<64x256xf32>
    %89 = arith.addf %59, %88 : vector<64x256xf32>
    %90 = tpu.iota {dimensions = array<i32: 0>} : vector<64x128xi32>
    %91 = tpu.iota {dimensions = array<i32: 1>} : vector<64x128xi32>
    %c5_i32_33 = arith.constant 5 : i32
    %92 = vector.broadcast %c5_i32_33 : i32 to vector<64x128xi32>
    %93 = arith.shrsi %90, %92 : vector<64x128xi32>
    %c31_i32_34 = arith.constant 31 : i32
    %94 = vector.broadcast %c31_i32_34 : i32 to vector<64x128xi32>
    %95 = arith.andi %90, %94 : vector<64x128xi32>
    %c2_i32_35 = arith.constant 2 : i32
    %96 = vector.broadcast %c2_i32_35 : i32 to vector<64x128xi32>
    %97 = arith.muli %96, %95 : vector<64x128xi32>
    %c2_i32_36 = arith.constant 2 : i32
    %98 = vector.broadcast %c2_i32_36 : i32 to vector<64x128xi32>
    %99 = arith.addi %97, %98 : vector<64x128xi32>
    %c0_i32_37 = arith.constant 0 : i32
    %100 = vector.broadcast %c0_i32_37 : i32 to vector<64x128xi32>
    %101 = arith.cmpi sge, %99, %100 : vector<64x128xi32>
    %c64_i32_38 = arith.constant 64 : i32
    %102 = vector.broadcast %c64_i32_38 : i32 to vector<64x128xi32>
    %103 = arith.cmpi slt, %99, %102 : vector<64x128xi32>
    %104 = arith.andi %101, %103 : vector<64x128xi1>
    %c64_i32_39 = arith.constant 64 : i32
    %105 = vector.broadcast %c64_i32_39 : i32 to vector<64x128xi32>
    %106 = arith.muli %93, %105 : vector<64x128xi32>
    %107 = arith.addi %106, %99 : vector<64x128xi32>
    %108 = arith.cmpi eq, %91, %107 : vector<64x128xi32>
    %109 = arith.andi %108, %104 : vector<64x128xi1>
    %cst_40 = arith.constant 1.000000e+00 : f32
    %cst_41 = arith.constant 0.000000e+00 : f32
    %110 = vector.broadcast %cst_40 : f32 to vector<64x128xf32>
    %111 = vector.broadcast %cst_41 : f32 to vector<64x128xf32>
    %112 = arith.select %109, %110, %111 : vector<64x128xi1>, vector<64x128xf32>
    %113 = arith.truncf %112 : vector<64x128xf32> to vector<64x128xbf16>
    %cst_42 = arith.constant dense<0.000000e+00> : vector<64x192xf32>
    %114 = tpu.matmul %113, %0, %cst_42 {dimension_numbers = #tpu.dot_dimension_numbers<[1], [0], [0], [1], [0, 0, 1, 1], [], []>} : vector<64x128xbf16>, vector<128x192xbf16>, vector<64x192xf32> -> vector<64x192xf32>
    %115 = arith.truncf %114 : vector<64x192xf32> to vector<64x192xbf16>
    %c3 = arith.constant 3 : index
    %c0_43 = arith.constant 0 : index
    %c0_44 = arith.constant 0 : index
    %116 = vector.load %arg1[%c3, %c0_43, %c0_44] : memref<4x192x256xbf16, #tpu.memory_space<vmem>>, vector<1x192x256xbf16>
    %117 = vector.shape_cast %116 : vector<1x192x256xbf16> to vector<192x256xbf16>
    %cst_45 = arith.constant dense<0.000000e+00> : vector<64x256xf32>
    %118 = tpu.matmul %115, %117, %cst_45 {dimension_numbers = #tpu.dot_dimension_numbers<[1], [0], [0], [1], [0, 0, 1, 1], [], []>} : vector<64x192xbf16>, vector<192x256xbf16>, vector<64x256xf32> -> vector<64x256xf32>
    %119 = arith.addf %89, %118 : vector<64x256xf32>
    %cst_46 = arith.constant 0.000000e+00 : f32
    %120 = vector.broadcast %cst_46 : f32 to vector<64x256xf32>
    %121 = arith.cmpf ogt, %119, %120 : vector<64x256xf32>
    %cst_47 = arith.constant 2.000000e-01 : f32
    %122 = vector.broadcast %cst_47 : f32 to vector<64x256xf32>
    %123 = arith.mulf %122, %119 : vector<64x256xf32>
    %124 = arith.select %121, %119, %123 : vector<64x256xi1>, vector<64x256xf32>
    %125 = arith.truncf %124 : vector<64x256xf32> to vector<64x256xbf16>
    %126 = tpu.iota {dimensions = array<i32: 0>} : vector<32x64xi32>
    %127 = tpu.iota {dimensions = array<i32: 1>} : vector<32x64xi32>
    %c4_i32 = arith.constant 4 : i32
    %128 = vector.broadcast %c4_i32 : i32 to vector<32x64xi32>
    %129 = arith.shrsi %126, %128 : vector<32x64xi32>
    %c15_i32 = arith.constant 15 : i32
    %130 = vector.broadcast %c15_i32 : i32 to vector<32x64xi32>
    %131 = arith.andi %126, %130 : vector<32x64xi32>
    %c2_i32_48 = arith.constant 2 : i32
    %132 = vector.broadcast %c2_i32_48 : i32 to vector<32x64xi32>
    %133 = arith.muli %132, %131 : vector<32x64xi32>
    %c-1_i32_49 = arith.constant -1 : i32
    %134 = vector.broadcast %c-1_i32_49 : i32 to vector<32x64xi32>
    %135 = arith.addi %133, %134 : vector<32x64xi32>
    %c0_i32_50 = arith.constant 0 : i32
    %136 = vector.broadcast %c0_i32_50 : i32 to vector<32x64xi32>
    %137 = arith.cmpi sge, %135, %136 : vector<32x64xi32>
    %c32_i32 = arith.constant 32 : i32
    %138 = vector.broadcast %c32_i32 : i32 to vector<32x64xi32>
    %139 = arith.cmpi slt, %135, %138 : vector<32x64xi32>
    %140 = arith.andi %137, %139 : vector<32x64xi1>
    %c32_i32_51 = arith.constant 32 : i32
    %141 = vector.broadcast %c32_i32_51 : i32 to vector<32x64xi32>
    %142 = arith.muli %129, %141 : vector<32x64xi32>
    %143 = arith.addi %142, %135 : vector<32x64xi32>
    %144 = arith.cmpi eq, %127, %143 : vector<32x64xi32>
    %145 = arith.andi %144, %140 : vector<32x64xi1>
    %cst_52 = arith.constant 1.000000e+00 : f32
    %cst_53 = arith.constant 0.000000e+00 : f32
    %146 = vector.broadcast %cst_52 : f32 to vector<32x64xf32>
    %147 = vector.broadcast %cst_53 : f32 to vector<32x64xf32>
    %148 = arith.select %145, %146, %147 : vector<32x64xi1>, vector<32x64xf32>
    %149 = arith.truncf %148 : vector<32x64xf32> to vector<32x64xbf16>
    %cst_54 = arith.constant dense<0.000000e+00> : vector<32x256xf32>
    %150 = tpu.matmul %149, %125, %cst_54 {dimension_numbers = #tpu.dot_dimension_numbers<[1], [0], [0], [1], [0, 0, 1, 1], [], []>} : vector<32x64xbf16>, vector<64x256xbf16>, vector<32x256xf32> -> vector<32x256xf32>
    %151 = arith.truncf %150 : vector<32x256xf32> to vector<32x256xbf16>
    %c0_55 = arith.constant 0 : index
    %c0_56 = arith.constant 0 : index
    %c0_57 = arith.constant 0 : index
    %152 = vector.load %arg2[%c0_55, %c0_56, %c0_57] : memref<4x256x256xbf16, #tpu.memory_space<vmem>>, vector<1x256x256xbf16>
    %153 = vector.shape_cast %152 : vector<1x256x256xbf16> to vector<256x256xbf16>
    %cst_58 = arith.constant dense<0.000000e+00> : vector<32x256xf32>
    %154 = tpu.matmul %151, %153, %cst_58 {dimension_numbers = #tpu.dot_dimension_numbers<[1], [0], [0], [1], [0, 0, 1, 1], [], []>} : vector<32x256xbf16>, vector<256x256xbf16>, vector<32x256xf32> -> vector<32x256xf32>
    %155 = tpu.iota {dimensions = array<i32: 0>} : vector<32x64xi32>
    %156 = tpu.iota {dimensions = array<i32: 1>} : vector<32x64xi32>
    %c4_i32_59 = arith.constant 4 : i32
    %157 = vector.broadcast %c4_i32_59 : i32 to vector<32x64xi32>
    %158 = arith.shrsi %155, %157 : vector<32x64xi32>
    %c15_i32_60 = arith.constant 15 : i32
    %159 = vector.broadcast %c15_i32_60 : i32 to vector<32x64xi32>
    %160 = arith.andi %155, %159 : vector<32x64xi32>
    %c2_i32_61 = arith.constant 2 : i32
    %161 = vector.broadcast %c2_i32_61 : i32 to vector<32x64xi32>
    %162 = arith.muli %161, %160 : vector<32x64xi32>
    %c0_i32_62 = arith.constant 0 : i32
    %163 = vector.broadcast %c0_i32_62 : i32 to vector<32x64xi32>
    %164 = arith.addi %162, %163 : vector<32x64xi32>
    %c0_i32_63 = arith.constant 0 : i32
    %165 = vector.broadcast %c0_i32_63 : i32 to vector<32x64xi32>
    %166 = arith.cmpi sge, %164, %165 : vector<32x64xi32>
    %c32_i32_64 = arith.constant 32 : i32
    %167 = vector.broadcast %c32_i32_64 : i32 to vector<32x64xi32>
    %168 = arith.cmpi slt, %164, %167 : vector<32x64xi32>
    %169 = arith.andi %166, %168 : vector<32x64xi1>
    %c32_i32_65 = arith.constant 32 : i32
    %170 = vector.broadcast %c32_i32_65 : i32 to vector<32x64xi32>
    %171 = arith.muli %158, %170 : vector<32x64xi32>
    %172 = arith.addi %171, %164 : vector<32x64xi32>
    %173 = arith.cmpi eq, %156, %172 : vector<32x64xi32>
    %174 = arith.andi %173, %169 : vector<32x64xi1>
    %cst_66 = arith.constant 1.000000e+00 : f32
    %cst_67 = arith.constant 0.000000e+00 : f32
    %175 = vector.broadcast %cst_66 : f32 to vector<32x64xf32>
    %176 = vector.broadcast %cst_67 : f32 to vector<32x64xf32>
    %177 = arith.select %174, %175, %176 : vector<32x64xi1>, vector<32x64xf32>
    %178 = arith.truncf %177 : vector<32x64xf32> to vector<32x64xbf16>
    %cst_68 = arith.constant dense<0.000000e+00> : vector<32x256xf32>
    %179 = tpu.matmul %178, %125, %cst_68 {dimension_numbers = #tpu.dot_dimension_numbers<[1], [0], [0], [1], [0, 0, 1, 1], [], []>} : vector<32x64xbf16>, vector<64x256xbf16>, vector<32x256xf32> -> vector<32x256xf32>
    %180 = arith.truncf %179 : vector<32x256xf32> to vector<32x256xbf16>
    %c1_69 = arith.constant 1 : index
    %c0_70 = arith.constant 0 : index
    %c0_71 = arith.constant 0 : index
    %181 = vector.load %arg2[%c1_69, %c0_70, %c0_71] : memref<4x256x256xbf16, #tpu.memory_space<vmem>>, vector<1x256x256xbf16>
    %182 = vector.shape_cast %181 : vector<1x256x256xbf16> to vector<256x256xbf16>
    %cst_72 = arith.constant dense<0.000000e+00> : vector<32x256xf32>
    %183 = tpu.matmul %180, %182, %cst_72 {dimension_numbers = #tpu.dot_dimension_numbers<[1], [0], [0], [1], [0, 0, 1, 1], [], []>} : vector<32x256xbf16>, vector<256x256xbf16>, vector<32x256xf32> -> vector<32x256xf32>
    %184 = arith.addf %154, %183 : vector<32x256xf32>
    %185 = tpu.iota {dimensions = array<i32: 0>} : vector<32x64xi32>
    %186 = tpu.iota {dimensions = array<i32: 1>} : vector<32x64xi32>
    %c4_i32_73 = arith.constant 4 : i32
    %187 = vector.broadcast %c4_i32_73 : i32 to vector<32x64xi32>
    %188 = arith.shrsi %185, %187 : vector<32x64xi32>
    %c15_i32_74 = arith.constant 15 : i32
    %189 = vector.broadcast %c15_i32_74 : i32 to vector<32x64xi32>
    %190 = arith.andi %185, %189 : vector<32x64xi32>
    %c2_i32_75 = arith.constant 2 : i32
    %191 = vector.broadcast %c2_i32_75 : i32 to vector<32x64xi32>
    %192 = arith.muli %191, %190 : vector<32x64xi32>
    %c1_i32_76 = arith.constant 1 : i32
    %193 = vector.broadcast %c1_i32_76 : i32 to vector<32x64xi32>
    %194 = arith.addi %192, %193 : vector<32x64xi32>
    %c0_i32_77 = arith.constant 0 : i32
    %195 = vector.broadcast %c0_i32_77 : i32 to vector<32x64xi32>
    %196 = arith.cmpi sge, %194, %195 : vector<32x64xi32>
    %c32_i32_78 = arith.constant 32 : i32
    %197 = vector.broadcast %c32_i32_78 : i32 to vector<32x64xi32>
    %198 = arith.cmpi slt, %194, %197 : vector<32x64xi32>
    %199 = arith.andi %196, %198 : vector<32x64xi1>
    %c32_i32_79 = arith.constant 32 : i32
    %200 = vector.broadcast %c32_i32_79 : i32 to vector<32x64xi32>
    %201 = arith.muli %188, %200 : vector<32x64xi32>
    %202 = arith.addi %201, %194 : vector<32x64xi32>
    %203 = arith.cmpi eq, %186, %202 : vector<32x64xi32>
    %204 = arith.andi %203, %199 : vector<32x64xi1>
    %cst_80 = arith.constant 1.000000e+00 : f32
    %cst_81 = arith.constant 0.000000e+00 : f32
    %205 = vector.broadcast %cst_80 : f32 to vector<32x64xf32>
    %206 = vector.broadcast %cst_81 : f32 to vector<32x64xf32>
    %207 = arith.select %204, %205, %206 : vector<32x64xi1>, vector<32x64xf32>
    %208 = arith.truncf %207 : vector<32x64xf32> to vector<32x64xbf16>
    %cst_82 = arith.constant dense<0.000000e+00> : vector<32x256xf32>
    %209 = tpu.matmul %208, %125, %cst_82 {dimension_numbers = #tpu.dot_dimension_numbers<[1], [0], [0], [1], [0, 0, 1, 1], [], []>} : vector<32x64xbf16>, vector<64x256xbf16>, vector<32x256xf32> -> vector<32x256xf32>
    %210 = arith.truncf %209 : vector<32x256xf32> to vector<32x256xbf16>
    %c2_83 = arith.constant 2 : index
    %c0_84 = arith.constant 0 : index
    %c0_85 = arith.constant 0 : index
    %211 = vector.load %arg2[%c2_83, %c0_84, %c0_85] : memref<4x256x256xbf16, #tpu.memory_space<vmem>>, vector<1x256x256xbf16>
    %212 = vector.shape_cast %211 : vector<1x256x256xbf16> to vector<256x256xbf16>
    %cst_86 = arith.constant dense<0.000000e+00> : vector<32x256xf32>
    %213 = tpu.matmul %210, %212, %cst_86 {dimension_numbers = #tpu.dot_dimension_numbers<[1], [0], [0], [1], [0, 0, 1, 1], [], []>} : vector<32x256xbf16>, vector<256x256xbf16>, vector<32x256xf32> -> vector<32x256xf32>
    %214 = arith.addf %184, %213 : vector<32x256xf32>
    %215 = tpu.iota {dimensions = array<i32: 0>} : vector<32x64xi32>
    %216 = tpu.iota {dimensions = array<i32: 1>} : vector<32x64xi32>
    %c4_i32_87 = arith.constant 4 : i32
    %217 = vector.broadcast %c4_i32_87 : i32 to vector<32x64xi32>
    %218 = arith.shrsi %215, %217 : vector<32x64xi32>
    %c15_i32_88 = arith.constant 15 : i32
    %219 = vector.broadcast %c15_i32_88 : i32 to vector<32x64xi32>
    %220 = arith.andi %215, %219 : vector<32x64xi32>
    %c2_i32_89 = arith.constant 2 : i32
    %221 = vector.broadcast %c2_i32_89 : i32 to vector<32x64xi32>
    %222 = arith.muli %221, %220 : vector<32x64xi32>
    %c2_i32_90 = arith.constant 2 : i32
    %223 = vector.broadcast %c2_i32_90 : i32 to vector<32x64xi32>
    %224 = arith.addi %222, %223 : vector<32x64xi32>
    %c0_i32_91 = arith.constant 0 : i32
    %225 = vector.broadcast %c0_i32_91 : i32 to vector<32x64xi32>
    %226 = arith.cmpi sge, %224, %225 : vector<32x64xi32>
    %c32_i32_92 = arith.constant 32 : i32
    %227 = vector.broadcast %c32_i32_92 : i32 to vector<32x64xi32>
    %228 = arith.cmpi slt, %224, %227 : vector<32x64xi32>
    %229 = arith.andi %226, %228 : vector<32x64xi1>
    %c32_i32_93 = arith.constant 32 : i32
    %230 = vector.broadcast %c32_i32_93 : i32 to vector<32x64xi32>
    %231 = arith.muli %218, %230 : vector<32x64xi32>
    %232 = arith.addi %231, %224 : vector<32x64xi32>
    %233 = arith.cmpi eq, %216, %232 : vector<32x64xi32>
    %234 = arith.andi %233, %229 : vector<32x64xi1>
    %cst_94 = arith.constant 1.000000e+00 : f32
    %cst_95 = arith.constant 0.000000e+00 : f32
    %235 = vector.broadcast %cst_94 : f32 to vector<32x64xf32>
    %236 = vector.broadcast %cst_95 : f32 to vector<32x64xf32>
    %237 = arith.select %234, %235, %236 : vector<32x64xi1>, vector<32x64xf32>
    %238 = arith.truncf %237 : vector<32x64xf32> to vector<32x64xbf16>
    %cst_96 = arith.constant dense<0.000000e+00> : vector<32x256xf32>
    %239 = tpu.matmul %238, %125, %cst_96 {dimension_numbers = #tpu.dot_dimension_numbers<[1], [0], [0], [1], [0, 0, 1, 1], [], []>} : vector<32x64xbf16>, vector<64x256xbf16>, vector<32x256xf32> -> vector<32x256xf32>
    %240 = arith.truncf %239 : vector<32x256xf32> to vector<32x256xbf16>
    %c3_97 = arith.constant 3 : index
    %c0_98 = arith.constant 0 : index
    %c0_99 = arith.constant 0 : index
    %241 = vector.load %arg2[%c3_97, %c0_98, %c0_99] : memref<4x256x256xbf16, #tpu.memory_space<vmem>>, vector<1x256x256xbf16>
    %242 = vector.shape_cast %241 : vector<1x256x256xbf16> to vector<256x256xbf16>
    %cst_100 = arith.constant dense<0.000000e+00> : vector<32x256xf32>
    %243 = tpu.matmul %240, %242, %cst_100 {dimension_numbers = #tpu.dot_dimension_numbers<[1], [0], [0], [1], [0, 0, 1, 1], [], []>} : vector<32x256xbf16>, vector<256x256xbf16>, vector<32x256xf32> -> vector<32x256xf32>
    %244 = arith.addf %214, %243 : vector<32x256xf32>
    %245 = tpu.iota {dimensions = array<i32: 0>} : vector<256x256xi32>
    %246 = tpu.iota {dimensions = array<i32: 1>} : vector<256x256xi32>
    %c15_i32_101 = arith.constant 15 : i32
    %247 = vector.broadcast %c15_i32_101 : i32 to vector<256x256xi32>
    %248 = arith.andi %245, %247 : vector<256x256xi32>
    %c15_i32_102 = arith.constant 15 : i32
    %249 = vector.broadcast %c15_i32_102 : i32 to vector<256x256xi32>
    %250 = arith.andi %246, %249 : vector<256x256xi32>
    %251 = arith.cmpi eq, %248, %250 : vector<256x256xi32>
    %cst_103 = arith.constant 1.000000e+00 : f32
    %cst_104 = arith.constant 0.000000e+00 : f32
    %252 = vector.broadcast %cst_103 : f32 to vector<256x256xf32>
    %253 = vector.broadcast %cst_104 : f32 to vector<256x256xf32>
    %254 = arith.select %251, %252, %253 : vector<256x256xi1>, vector<256x256xf32>
    %cst_105 = arith.constant dense<0.000000e+00> : vector<256xf32>
    %255 = vector.multi_reduction <add>, %244, %cst_105 [0] : vector<32x256xf32> to vector<256xf32>
    %256 = vector.shape_cast %255 : vector<256xf32> to vector<1x256xf32>
    %257 = arith.mulf %244, %244 : vector<32x256xf32>
    %cst_106 = arith.constant dense<0.000000e+00> : vector<256xf32>
    %258 = vector.multi_reduction <add>, %257, %cst_106 [0] : vector<32x256xf32> to vector<256xf32>
    %259 = vector.shape_cast %258 : vector<256xf32> to vector<1x256xf32>
    %cst_107 = arith.constant dense<0.000000e+00> : vector<1x256xf32>
    %260 = tpu.matmul %256, %254, %cst_107 {dimension_numbers = #tpu.dot_dimension_numbers<[1], [0], [0], [1], [0, 0, 1, 1], [], []>} : vector<1x256xf32>, vector<256x256xf32>, vector<1x256xf32> -> vector<1x256xf32>
    %cst_108 = arith.constant 0.001953125 : f32
    %261 = vector.broadcast %cst_108 : f32 to vector<1x256xf32>
    %262 = arith.mulf %260, %261 : vector<1x256xf32>
    %cst_109 = arith.constant dense<0.000000e+00> : vector<1x256xf32>
    %263 = tpu.matmul %259, %254, %cst_109 {dimension_numbers = #tpu.dot_dimension_numbers<[1], [0], [0], [1], [0, 0, 1, 1], [], []>} : vector<1x256xf32>, vector<256x256xf32>, vector<1x256xf32> -> vector<1x256xf32>
    %cst_110 = arith.constant 0.001953125 : f32
    %264 = vector.broadcast %cst_110 : f32 to vector<1x256xf32>
    %265 = arith.mulf %263, %264 : vector<1x256xf32>
    %266 = arith.mulf %262, %262 : vector<1x256xf32>
    %267 = arith.subf %265, %266 : vector<1x256xf32>
    %cst_111 = arith.constant 0.000000e+00 : f32
    %268 = vector.broadcast %cst_111 : f32 to vector<1x256xf32>
    %269 = arith.maximumf %267, %268 : vector<1x256xf32>
    %270 = vector.broadcast %262 : vector<1x256xf32> to vector<32x256xf32>
    %271 = arith.subf %244, %270 : vector<32x256xf32>
    %cst_112 = arith.constant 9.99999974E-6 : f32
    %272 = vector.broadcast %cst_112 : f32 to vector<1x256xf32>
    %273 = arith.addf %269, %272 : vector<1x256xf32>
    %274 = math.rsqrt %273 : vector<1x256xf32>
    %275 = vector.broadcast %274 : vector<1x256xf32> to vector<32x256xf32>
    %276 = arith.mulf %271, %275 : vector<32x256xf32>
    %cst_113 = arith.constant 0.000000e+00 : f32
    %277 = vector.broadcast %cst_113 : f32 to vector<32x256xf32>
    %278 = arith.cmpf ogt, %276, %277 : vector<32x256xf32>
    %cst_114 = arith.constant 2.000000e-01 : f32
    %279 = vector.broadcast %cst_114 : f32 to vector<32x256xf32>
    %280 = arith.mulf %279, %276 : vector<32x256xf32>
    %281 = arith.select %278, %276, %280 : vector<32x256xi1>, vector<32x256xf32>
    %282 = arith.truncf %281 : vector<32x256xf32> to vector<32x256xbf16>
    %283 = tpu.iota {dimensions = array<i32: 0>} : vector<16x32xi32>
    %284 = tpu.iota {dimensions = array<i32: 1>} : vector<16x32xi32>
    %c3_i32 = arith.constant 3 : i32
    %285 = vector.broadcast %c3_i32 : i32 to vector<16x32xi32>
    %286 = arith.shrsi %283, %285 : vector<16x32xi32>
    %c7_i32 = arith.constant 7 : i32
    %287 = vector.broadcast %c7_i32 : i32 to vector<16x32xi32>
    %288 = arith.andi %283, %287 : vector<16x32xi32>
    %c2_i32_115 = arith.constant 2 : i32
    %289 = vector.broadcast %c2_i32_115 : i32 to vector<16x32xi32>
    %290 = arith.muli %289, %288 : vector<16x32xi32>
    %c-1_i32_116 = arith.constant -1 : i32
    %291 = vector.broadcast %c-1_i32_116 : i32 to vector<16x32xi32>
    %292 = arith.addi %290, %291 : vector<16x32xi32>
    %c0_i32_117 = arith.constant 0 : i32
    %293 = vector.broadcast %c0_i32_117 : i32 to vector<16x32xi32>
    %294 = arith.cmpi sge, %292, %293 : vector<16x32xi32>
    %c16_i32 = arith.constant 16 : i32
    %295 = vector.broadcast %c16_i32 : i32 to vector<16x32xi32>
    %296 = arith.cmpi slt, %292, %295 : vector<16x32xi32>
    %297 = arith.andi %294, %296 : vector<16x32xi1>
    %c16_i32_118 = arith.constant 16 : i32
    %298 = vector.broadcast %c16_i32_118 : i32 to vector<16x32xi32>
    %299 = arith.muli %286, %298 : vector<16x32xi32>
    %300 = arith.addi %299, %292 : vector<16x32xi32>
    %301 = arith.cmpi eq, %284, %300 : vector<16x32xi32>
    %302 = arith.andi %301, %297 : vector<16x32xi1>
    %cst_119 = arith.constant 1.000000e+00 : f32
    %cst_120 = arith.constant 0.000000e+00 : f32
    %303 = vector.broadcast %cst_119 : f32 to vector<16x32xf32>
    %304 = vector.broadcast %cst_120 : f32 to vector<16x32xf32>
    %305 = arith.select %302, %303, %304 : vector<16x32xi1>, vector<16x32xf32>
    %306 = arith.truncf %305 : vector<16x32xf32> to vector<16x32xbf16>
    %cst_121 = arith.constant dense<0.000000e+00> : vector<16x256xf32>
    %307 = tpu.matmul %306, %282, %cst_121 {dimension_numbers = #tpu.dot_dimension_numbers<[1], [0], [0], [1], [0, 0, 1, 1], [], []>} : vector<16x32xbf16>, vector<32x256xbf16>, vector<16x256xf32> -> vector<16x256xf32>
    %308 = arith.truncf %307 : vector<16x256xf32> to vector<16x256xbf16>
    %c0_122 = arith.constant 0 : index
    %c0_123 = arith.constant 0 : index
    %c0_124 = arith.constant 0 : index
    %309 = vector.load %arg3[%c0_122, %c0_123, %c0_124] : memref<4x256x256xbf16, #tpu.memory_space<vmem>>, vector<1x256x256xbf16>
    %310 = vector.shape_cast %309 : vector<1x256x256xbf16> to vector<256x256xbf16>
    %cst_125 = arith.constant dense<0.000000e+00> : vector<16x256xf32>
    %311 = tpu.matmul %308, %310, %cst_125 {dimension_numbers = #tpu.dot_dimension_numbers<[1], [0], [0], [1], [0, 0, 1, 1], [], []>} : vector<16x256xbf16>, vector<256x256xbf16>, vector<16x256xf32> -> vector<16x256xf32>
    %312 = tpu.iota {dimensions = array<i32: 0>} : vector<16x32xi32>
    %313 = tpu.iota {dimensions = array<i32: 1>} : vector<16x32xi32>
    %c3_i32_126 = arith.constant 3 : i32
    %314 = vector.broadcast %c3_i32_126 : i32 to vector<16x32xi32>
    %315 = arith.shrsi %312, %314 : vector<16x32xi32>
    %c7_i32_127 = arith.constant 7 : i32
    %316 = vector.broadcast %c7_i32_127 : i32 to vector<16x32xi32>
    %317 = arith.andi %312, %316 : vector<16x32xi32>
    %c2_i32_128 = arith.constant 2 : i32
    %318 = vector.broadcast %c2_i32_128 : i32 to vector<16x32xi32>
    %319 = arith.muli %318, %317 : vector<16x32xi32>
    %c0_i32_129 = arith.constant 0 : i32
    %320 = vector.broadcast %c0_i32_129 : i32 to vector<16x32xi32>
    %321 = arith.addi %319, %320 : vector<16x32xi32>
    %c0_i32_130 = arith.constant 0 : i32
    %322 = vector.broadcast %c0_i32_130 : i32 to vector<16x32xi32>
    %323 = arith.cmpi sge, %321, %322 : vector<16x32xi32>
    %c16_i32_131 = arith.constant 16 : i32
    %324 = vector.broadcast %c16_i32_131 : i32 to vector<16x32xi32>
    %325 = arith.cmpi slt, %321, %324 : vector<16x32xi32>
    %326 = arith.andi %323, %325 : vector<16x32xi1>
    %c16_i32_132 = arith.constant 16 : i32
    %327 = vector.broadcast %c16_i32_132 : i32 to vector<16x32xi32>
    %328 = arith.muli %315, %327 : vector<16x32xi32>
    %329 = arith.addi %328, %321 : vector<16x32xi32>
    %330 = arith.cmpi eq, %313, %329 : vector<16x32xi32>
    %331 = arith.andi %330, %326 : vector<16x32xi1>
    %cst_133 = arith.constant 1.000000e+00 : f32
    %cst_134 = arith.constant 0.000000e+00 : f32
    %332 = vector.broadcast %cst_133 : f32 to vector<16x32xf32>
    %333 = vector.broadcast %cst_134 : f32 to vector<16x32xf32>
    %334 = arith.select %331, %332, %333 : vector<16x32xi1>, vector<16x32xf32>
    %335 = arith.truncf %334 : vector<16x32xf32> to vector<16x32xbf16>
    %cst_135 = arith.constant dense<0.000000e+00> : vector<16x256xf32>
    %336 = tpu.matmul %335, %282, %cst_135 {dimension_numbers = #tpu.dot_dimension_numbers<[1], [0], [0], [1], [0, 0, 1, 1], [], []>} : vector<16x32xbf16>, vector<32x256xbf16>, vector<16x256xf32> -> vector<16x256xf32>
    %337 = arith.truncf %336 : vector<16x256xf32> to vector<16x256xbf16>
    %c1_136 = arith.constant 1 : index
    %c0_137 = arith.constant 0 : index
    %c0_138 = arith.constant 0 : index
    %338 = vector.load %arg3[%c1_136, %c0_137, %c0_138] : memref<4x256x256xbf16, #tpu.memory_space<vmem>>, vector<1x256x256xbf16>
    %339 = vector.shape_cast %338 : vector<1x256x256xbf16> to vector<256x256xbf16>
    %cst_139 = arith.constant dense<0.000000e+00> : vector<16x256xf32>
    %340 = tpu.matmul %337, %339, %cst_139 {dimension_numbers = #tpu.dot_dimension_numbers<[1], [0], [0], [1], [0, 0, 1, 1], [], []>} : vector<16x256xbf16>, vector<256x256xbf16>, vector<16x256xf32> -> vector<16x256xf32>
    %341 = arith.addf %311, %340 : vector<16x256xf32>
    %342 = tpu.iota {dimensions = array<i32: 0>} : vector<16x32xi32>
    %343 = tpu.iota {dimensions = array<i32: 1>} : vector<16x32xi32>
    %c3_i32_140 = arith.constant 3 : i32
    %344 = vector.broadcast %c3_i32_140 : i32 to vector<16x32xi32>
    %345 = arith.shrsi %342, %344 : vector<16x32xi32>
    %c7_i32_141 = arith.constant 7 : i32
    %346 = vector.broadcast %c7_i32_141 : i32 to vector<16x32xi32>
    %347 = arith.andi %342, %346 : vector<16x32xi32>
    %c2_i32_142 = arith.constant 2 : i32
    %348 = vector.broadcast %c2_i32_142 : i32 to vector<16x32xi32>
    %349 = arith.muli %348, %347 : vector<16x32xi32>
    %c1_i32_143 = arith.constant 1 : i32
    %350 = vector.broadcast %c1_i32_143 : i32 to vector<16x32xi32>
    %351 = arith.addi %349, %350 : vector<16x32xi32>
    %c0_i32_144 = arith.constant 0 : i32
    %352 = vector.broadcast %c0_i32_144 : i32 to vector<16x32xi32>
    %353 = arith.cmpi sge, %351, %352 : vector<16x32xi32>
    %c16_i32_145 = arith.constant 16 : i32
    %354 = vector.broadcast %c16_i32_145 : i32 to vector<16x32xi32>
    %355 = arith.cmpi slt, %351, %354 : vector<16x32xi32>
    %356 = arith.andi %353, %355 : vector<16x32xi1>
    %c16_i32_146 = arith.constant 16 : i32
    %357 = vector.broadcast %c16_i32_146 : i32 to vector<16x32xi32>
    %358 = arith.muli %345, %357 : vector<16x32xi32>
    %359 = arith.addi %358, %351 : vector<16x32xi32>
    %360 = arith.cmpi eq, %343, %359 : vector<16x32xi32>
    %361 = arith.andi %360, %356 : vector<16x32xi1>
    %cst_147 = arith.constant 1.000000e+00 : f32
    %cst_148 = arith.constant 0.000000e+00 : f32
    %362 = vector.broadcast %cst_147 : f32 to vector<16x32xf32>
    %363 = vector.broadcast %cst_148 : f32 to vector<16x32xf32>
    %364 = arith.select %361, %362, %363 : vector<16x32xi1>, vector<16x32xf32>
    %365 = arith.truncf %364 : vector<16x32xf32> to vector<16x32xbf16>
    %cst_149 = arith.constant dense<0.000000e+00> : vector<16x256xf32>
    %366 = tpu.matmul %365, %282, %cst_149 {dimension_numbers = #tpu.dot_dimension_numbers<[1], [0], [0], [1], [0, 0, 1, 1], [], []>} : vector<16x32xbf16>, vector<32x256xbf16>, vector<16x256xf32> -> vector<16x256xf32>
    %367 = arith.truncf %366 : vector<16x256xf32> to vector<16x256xbf16>
    %c2_150 = arith.constant 2 : index
    %c0_151 = arith.constant 0 : index
    %c0_152 = arith.constant 0 : index
    %368 = vector.load %arg3[%c2_150, %c0_151, %c0_152] : memref<4x256x256xbf16, #tpu.memory_space<vmem>>, vector<1x256x256xbf16>
    %369 = vector.shape_cast %368 : vector<1x256x256xbf16> to vector<256x256xbf16>
    %cst_153 = arith.constant dense<0.000000e+00> : vector<16x256xf32>
    %370 = tpu.matmul %367, %369, %cst_153 {dimension_numbers = #tpu.dot_dimension_numbers<[1], [0], [0], [1], [0, 0, 1, 1], [], []>} : vector<16x256xbf16>, vector<256x256xbf16>, vector<16x256xf32> -> vector<16x256xf32>
    %371 = arith.addf %341, %370 : vector<16x256xf32>
    %372 = tpu.iota {dimensions = array<i32: 0>} : vector<16x32xi32>
    %373 = tpu.iota {dimensions = array<i32: 1>} : vector<16x32xi32>
    %c3_i32_154 = arith.constant 3 : i32
    %374 = vector.broadcast %c3_i32_154 : i32 to vector<16x32xi32>
    %375 = arith.shrsi %372, %374 : vector<16x32xi32>
    %c7_i32_155 = arith.constant 7 : i32
    %376 = vector.broadcast %c7_i32_155 : i32 to vector<16x32xi32>
    %377 = arith.andi %372, %376 : vector<16x32xi32>
    %c2_i32_156 = arith.constant 2 : i32
    %378 = vector.broadcast %c2_i32_156 : i32 to vector<16x32xi32>
    %379 = arith.muli %378, %377 : vector<16x32xi32>
    %c2_i32_157 = arith.constant 2 : i32
    %380 = vector.broadcast %c2_i32_157 : i32 to vector<16x32xi32>
    %381 = arith.addi %379, %380 : vector<16x32xi32>
    %c0_i32_158 = arith.constant 0 : i32
    %382 = vector.broadcast %c0_i32_158 : i32 to vector<16x32xi32>
    %383 = arith.cmpi sge, %381, %382 : vector<16x32xi32>
    %c16_i32_159 = arith.constant 16 : i32
    %384 = vector.broadcast %c16_i32_159 : i32 to vector<16x32xi32>
    %385 = arith.cmpi slt, %381, %384 : vector<16x32xi32>
    %386 = arith.andi %383, %385 : vector<16x32xi1>
    %c16_i32_160 = arith.constant 16 : i32
    %387 = vector.broadcast %c16_i32_160 : i32 to vector<16x32xi32>
    %388 = arith.muli %375, %387 : vector<16x32xi32>
    %389 = arith.addi %388, %381 : vector<16x32xi32>
    %390 = arith.cmpi eq, %373, %389 : vector<16x32xi32>
    %391 = arith.andi %390, %386 : vector<16x32xi1>
    %cst_161 = arith.constant 1.000000e+00 : f32
    %cst_162 = arith.constant 0.000000e+00 : f32
    %392 = vector.broadcast %cst_161 : f32 to vector<16x32xf32>
    %393 = vector.broadcast %cst_162 : f32 to vector<16x32xf32>
    %394 = arith.select %391, %392, %393 : vector<16x32xi1>, vector<16x32xf32>
    %395 = arith.truncf %394 : vector<16x32xf32> to vector<16x32xbf16>
    %cst_163 = arith.constant dense<0.000000e+00> : vector<16x256xf32>
    %396 = tpu.matmul %395, %282, %cst_163 {dimension_numbers = #tpu.dot_dimension_numbers<[1], [0], [0], [1], [0, 0, 1, 1], [], []>} : vector<16x32xbf16>, vector<32x256xbf16>, vector<16x256xf32> -> vector<16x256xf32>
    %397 = arith.truncf %396 : vector<16x256xf32> to vector<16x256xbf16>
    %c3_164 = arith.constant 3 : index
    %c0_165 = arith.constant 0 : index
    %c0_166 = arith.constant 0 : index
    %398 = vector.load %arg3[%c3_164, %c0_165, %c0_166] : memref<4x256x256xbf16, #tpu.memory_space<vmem>>, vector<1x256x256xbf16>
    %399 = vector.shape_cast %398 : vector<1x256x256xbf16> to vector<256x256xbf16>
    %cst_167 = arith.constant dense<0.000000e+00> : vector<16x256xf32>
    %400 = tpu.matmul %397, %399, %cst_167 {dimension_numbers = #tpu.dot_dimension_numbers<[1], [0], [0], [1], [0, 0, 1, 1], [], []>} : vector<16x256xbf16>, vector<256x256xbf16>, vector<16x256xf32> -> vector<16x256xf32>
    %401 = arith.addf %371, %400 : vector<16x256xf32>
    %402 = tpu.iota {dimensions = array<i32: 0>} : vector<256x256xi32>
    %403 = tpu.iota {dimensions = array<i32: 1>} : vector<256x256xi32>
    %c31_i32_168 = arith.constant 31 : i32
    %404 = vector.broadcast %c31_i32_168 : i32 to vector<256x256xi32>
    %405 = arith.andi %402, %404 : vector<256x256xi32>
    %c31_i32_169 = arith.constant 31 : i32
    %406 = vector.broadcast %c31_i32_169 : i32 to vector<256x256xi32>
    %407 = arith.andi %403, %406 : vector<256x256xi32>
    %408 = arith.cmpi eq, %405, %407 : vector<256x256xi32>
    %cst_170 = arith.constant 1.000000e+00 : f32
    %cst_171 = arith.constant 0.000000e+00 : f32
    %409 = vector.broadcast %cst_170 : f32 to vector<256x256xf32>
    %410 = vector.broadcast %cst_171 : f32 to vector<256x256xf32>
    %411 = arith.select %408, %409, %410 : vector<256x256xi1>, vector<256x256xf32>
    %cst_172 = arith.constant dense<0.000000e+00> : vector<256xf32>
    %412 = vector.multi_reduction <add>, %401, %cst_172 [0] : vector<16x256xf32> to vector<256xf32>
    %413 = vector.shape_cast %412 : vector<256xf32> to vector<1x256xf32>
    %414 = arith.mulf %401, %401 : vector<16x256xf32>
    %cst_173 = arith.constant dense<0.000000e+00> : vector<256xf32>
    %415 = vector.multi_reduction <add>, %414, %cst_173 [0] : vector<16x256xf32> to vector<256xf32>
    %416 = vector.shape_cast %415 : vector<256xf32> to vector<1x256xf32>
    %cst_174 = arith.constant dense<0.000000e+00> : vector<1x256xf32>
    %417 = tpu.matmul %413, %411, %cst_174 {dimension_numbers = #tpu.dot_dimension_numbers<[1], [0], [0], [1], [0, 0, 1, 1], [], []>} : vector<1x256xf32>, vector<256x256xf32>, vector<1x256xf32> -> vector<1x256xf32>
    %cst_175 = arith.constant 7.812500e-03 : f32
    %418 = vector.broadcast %cst_175 : f32 to vector<1x256xf32>
    %419 = arith.mulf %417, %418 : vector<1x256xf32>
    %cst_176 = arith.constant dense<0.000000e+00> : vector<1x256xf32>
    %420 = tpu.matmul %416, %411, %cst_176 {dimension_numbers = #tpu.dot_dimension_numbers<[1], [0], [0], [1], [0, 0, 1, 1], [], []>} : vector<1x256xf32>, vector<256x256xf32>, vector<1x256xf32> -> vector<1x256xf32>
    %cst_177 = arith.constant 7.812500e-03 : f32
    %421 = vector.broadcast %cst_177 : f32 to vector<1x256xf32>
    %422 = arith.mulf %420, %421 : vector<1x256xf32>
    %423 = arith.mulf %419, %419 : vector<1x256xf32>
    %424 = arith.subf %422, %423 : vector<1x256xf32>
    %cst_178 = arith.constant 0.000000e+00 : f32
    %425 = vector.broadcast %cst_178 : f32 to vector<1x256xf32>
    %426 = arith.maximumf %424, %425 : vector<1x256xf32>
    %427 = vector.broadcast %419 : vector<1x256xf32> to vector<16x256xf32>
    %428 = arith.subf %401, %427 : vector<16x256xf32>
    %cst_179 = arith.constant 9.99999974E-6 : f32
    %429 = vector.broadcast %cst_179 : f32 to vector<1x256xf32>
    %430 = arith.addf %426, %429 : vector<1x256xf32>
    %431 = math.rsqrt %430 : vector<1x256xf32>
    %432 = vector.broadcast %431 : vector<1x256xf32> to vector<16x256xf32>
    %433 = arith.mulf %428, %432 : vector<16x256xf32>
    %cst_180 = arith.constant 0.000000e+00 : f32
    %434 = vector.broadcast %cst_180 : f32 to vector<16x256xf32>
    %435 = arith.cmpf ogt, %433, %434 : vector<16x256xf32>
    %cst_181 = arith.constant 2.000000e-01 : f32
    %436 = vector.broadcast %cst_181 : f32 to vector<16x256xf32>
    %437 = arith.mulf %436, %433 : vector<16x256xf32>
    %438 = arith.select %435, %433, %437 : vector<16x256xi1>, vector<16x256xf32>
    %439 = arith.truncf %438 : vector<16x256xf32> to vector<16x256xbf16>
    %440 = tpu.iota {dimensions = array<i32: 0>} : vector<8x16xi32>
    %441 = tpu.iota {dimensions = array<i32: 1>} : vector<8x16xi32>
    %c2_i32_182 = arith.constant 2 : i32
    %442 = vector.broadcast %c2_i32_182 : i32 to vector<8x16xi32>
    %443 = arith.shrsi %440, %442 : vector<8x16xi32>
    %c3_i32_183 = arith.constant 3 : i32
    %444 = vector.broadcast %c3_i32_183 : i32 to vector<8x16xi32>
    %445 = arith.andi %440, %444 : vector<8x16xi32>
    %c2_i32_184 = arith.constant 2 : i32
    %446 = vector.broadcast %c2_i32_184 : i32 to vector<8x16xi32>
    %447 = arith.muli %446, %445 : vector<8x16xi32>
    %c-1_i32_185 = arith.constant -1 : i32
    %448 = vector.broadcast %c-1_i32_185 : i32 to vector<8x16xi32>
    %449 = arith.addi %447, %448 : vector<8x16xi32>
    %c0_i32_186 = arith.constant 0 : i32
    %450 = vector.broadcast %c0_i32_186 : i32 to vector<8x16xi32>
    %451 = arith.cmpi sge, %449, %450 : vector<8x16xi32>
    %c8_i32 = arith.constant 8 : i32
    %452 = vector.broadcast %c8_i32 : i32 to vector<8x16xi32>
    %453 = arith.cmpi slt, %449, %452 : vector<8x16xi32>
    %454 = arith.andi %451, %453 : vector<8x16xi1>
    %c8_i32_187 = arith.constant 8 : i32
    %455 = vector.broadcast %c8_i32_187 : i32 to vector<8x16xi32>
    %456 = arith.muli %443, %455 : vector<8x16xi32>
    %457 = arith.addi %456, %449 : vector<8x16xi32>
    %458 = arith.cmpi eq, %441, %457 : vector<8x16xi32>
    %459 = arith.andi %458, %454 : vector<8x16xi1>
    %cst_188 = arith.constant 1.000000e+00 : f32
    %cst_189 = arith.constant 0.000000e+00 : f32
    %460 = vector.broadcast %cst_188 : f32 to vector<8x16xf32>
    %461 = vector.broadcast %cst_189 : f32 to vector<8x16xf32>
    %462 = arith.select %459, %460, %461 : vector<8x16xi1>, vector<8x16xf32>
    %463 = arith.truncf %462 : vector<8x16xf32> to vector<8x16xbf16>
    %cst_190 = arith.constant dense<0.000000e+00> : vector<8x256xf32>
    %464 = tpu.matmul %463, %439, %cst_190 {dimension_numbers = #tpu.dot_dimension_numbers<[1], [0], [0], [1], [0, 0, 1, 1], [], []>} : vector<8x16xbf16>, vector<16x256xbf16>, vector<8x256xf32> -> vector<8x256xf32>
    %465 = arith.truncf %464 : vector<8x256xf32> to vector<8x256xbf16>
    %c0_191 = arith.constant 0 : index
    %c0_192 = arith.constant 0 : index
    %c0_193 = arith.constant 0 : index
    %466 = vector.load %arg4[%c0_191, %c0_192, %c0_193] : memref<4x256x256xbf16, #tpu.memory_space<vmem>>, vector<1x256x256xbf16>
    %467 = vector.shape_cast %466 : vector<1x256x256xbf16> to vector<256x256xbf16>
    %cst_194 = arith.constant dense<0.000000e+00> : vector<8x256xf32>
    %468 = tpu.matmul %465, %467, %cst_194 {dimension_numbers = #tpu.dot_dimension_numbers<[1], [0], [0], [1], [0, 0, 1, 1], [], []>} : vector<8x256xbf16>, vector<256x256xbf16>, vector<8x256xf32> -> vector<8x256xf32>
    %469 = tpu.iota {dimensions = array<i32: 0>} : vector<8x16xi32>
    %470 = tpu.iota {dimensions = array<i32: 1>} : vector<8x16xi32>
    %c2_i32_195 = arith.constant 2 : i32
    %471 = vector.broadcast %c2_i32_195 : i32 to vector<8x16xi32>
    %472 = arith.shrsi %469, %471 : vector<8x16xi32>
    %c3_i32_196 = arith.constant 3 : i32
    %473 = vector.broadcast %c3_i32_196 : i32 to vector<8x16xi32>
    %474 = arith.andi %469, %473 : vector<8x16xi32>
    %c2_i32_197 = arith.constant 2 : i32
    %475 = vector.broadcast %c2_i32_197 : i32 to vector<8x16xi32>
    %476 = arith.muli %475, %474 : vector<8x16xi32>
    %c0_i32_198 = arith.constant 0 : i32
    %477 = vector.broadcast %c0_i32_198 : i32 to vector<8x16xi32>
    %478 = arith.addi %476, %477 : vector<8x16xi32>
    %c0_i32_199 = arith.constant 0 : i32
    %479 = vector.broadcast %c0_i32_199 : i32 to vector<8x16xi32>
    %480 = arith.cmpi sge, %478, %479 : vector<8x16xi32>
    %c8_i32_200 = arith.constant 8 : i32
    %481 = vector.broadcast %c8_i32_200 : i32 to vector<8x16xi32>
    %482 = arith.cmpi slt, %478, %481 : vector<8x16xi32>
    %483 = arith.andi %480, %482 : vector<8x16xi1>
    %c8_i32_201 = arith.constant 8 : i32
    %484 = vector.broadcast %c8_i32_201 : i32 to vector<8x16xi32>
    %485 = arith.muli %472, %484 : vector<8x16xi32>
    %486 = arith.addi %485, %478 : vector<8x16xi32>
    %487 = arith.cmpi eq, %470, %486 : vector<8x16xi32>
    %488 = arith.andi %487, %483 : vector<8x16xi1>
    %cst_202 = arith.constant 1.000000e+00 : f32
    %cst_203 = arith.constant 0.000000e+00 : f32
    %489 = vector.broadcast %cst_202 : f32 to vector<8x16xf32>
    %490 = vector.broadcast %cst_203 : f32 to vector<8x16xf32>
    %491 = arith.select %488, %489, %490 : vector<8x16xi1>, vector<8x16xf32>
    %492 = arith.truncf %491 : vector<8x16xf32> to vector<8x16xbf16>
    %cst_204 = arith.constant dense<0.000000e+00> : vector<8x256xf32>
    %493 = tpu.matmul %492, %439, %cst_204 {dimension_numbers = #tpu.dot_dimension_numbers<[1], [0], [0], [1], [0, 0, 1, 1], [], []>} : vector<8x16xbf16>, vector<16x256xbf16>, vector<8x256xf32> -> vector<8x256xf32>
    %494 = arith.truncf %493 : vector<8x256xf32> to vector<8x256xbf16>
    %c1_205 = arith.constant 1 : index
    %c0_206 = arith.constant 0 : index
    %c0_207 = arith.constant 0 : index
    %495 = vector.load %arg4[%c1_205, %c0_206, %c0_207] : memref<4x256x256xbf16, #tpu.memory_space<vmem>>, vector<1x256x256xbf16>
    %496 = vector.shape_cast %495 : vector<1x256x256xbf16> to vector<256x256xbf16>
    %cst_208 = arith.constant dense<0.000000e+00> : vector<8x256xf32>
    %497 = tpu.matmul %494, %496, %cst_208 {dimension_numbers = #tpu.dot_dimension_numbers<[1], [0], [0], [1], [0, 0, 1, 1], [], []>} : vector<8x256xbf16>, vector<256x256xbf16>, vector<8x256xf32> -> vector<8x256xf32>
    %498 = arith.addf %468, %497 : vector<8x256xf32>
    %499 = tpu.iota {dimensions = array<i32: 0>} : vector<8x16xi32>
    %500 = tpu.iota {dimensions = array<i32: 1>} : vector<8x16xi32>
    %c2_i32_209 = arith.constant 2 : i32
    %501 = vector.broadcast %c2_i32_209 : i32 to vector<8x16xi32>
    %502 = arith.shrsi %499, %501 : vector<8x16xi32>
    %c3_i32_210 = arith.constant 3 : i32
    %503 = vector.broadcast %c3_i32_210 : i32 to vector<8x16xi32>
    %504 = arith.andi %499, %503 : vector<8x16xi32>
    %c2_i32_211 = arith.constant 2 : i32
    %505 = vector.broadcast %c2_i32_211 : i32 to vector<8x16xi32>
    %506 = arith.muli %505, %504 : vector<8x16xi32>
    %c1_i32_212 = arith.constant 1 : i32
    %507 = vector.broadcast %c1_i32_212 : i32 to vector<8x16xi32>
    %508 = arith.addi %506, %507 : vector<8x16xi32>
    %c0_i32_213 = arith.constant 0 : i32
    %509 = vector.broadcast %c0_i32_213 : i32 to vector<8x16xi32>
    %510 = arith.cmpi sge, %508, %509 : vector<8x16xi32>
    %c8_i32_214 = arith.constant 8 : i32
    %511 = vector.broadcast %c8_i32_214 : i32 to vector<8x16xi32>
    %512 = arith.cmpi slt, %508, %511 : vector<8x16xi32>
    %513 = arith.andi %510, %512 : vector<8x16xi1>
    %c8_i32_215 = arith.constant 8 : i32
    %514 = vector.broadcast %c8_i32_215 : i32 to vector<8x16xi32>
    %515 = arith.muli %502, %514 : vector<8x16xi32>
    %516 = arith.addi %515, %508 : vector<8x16xi32>
    %517 = arith.cmpi eq, %500, %516 : vector<8x16xi32>
    %518 = arith.andi %517, %513 : vector<8x16xi1>
    %cst_216 = arith.constant 1.000000e+00 : f32
    %cst_217 = arith.constant 0.000000e+00 : f32
    %519 = vector.broadcast %cst_216 : f32 to vector<8x16xf32>
    %520 = vector.broadcast %cst_217 : f32 to vector<8x16xf32>
    %521 = arith.select %518, %519, %520 : vector<8x16xi1>, vector<8x16xf32>
    %522 = arith.truncf %521 : vector<8x16xf32> to vector<8x16xbf16>
    %cst_218 = arith.constant dense<0.000000e+00> : vector<8x256xf32>
    %523 = tpu.matmul %522, %439, %cst_218 {dimension_numbers = #tpu.dot_dimension_numbers<[1], [0], [0], [1], [0, 0, 1, 1], [], []>} : vector<8x16xbf16>, vector<16x256xbf16>, vector<8x256xf32> -> vector<8x256xf32>
    %524 = arith.truncf %523 : vector<8x256xf32> to vector<8x256xbf16>
    %c2_219 = arith.constant 2 : index
    %c0_220 = arith.constant 0 : index
    %c0_221 = arith.constant 0 : index
    %525 = vector.load %arg4[%c2_219, %c0_220, %c0_221] : memref<4x256x256xbf16, #tpu.memory_space<vmem>>, vector<1x256x256xbf16>
    %526 = vector.shape_cast %525 : vector<1x256x256xbf16> to vector<256x256xbf16>
    %cst_222 = arith.constant dense<0.000000e+00> : vector<8x256xf32>
    %527 = tpu.matmul %524, %526, %cst_222 {dimension_numbers = #tpu.dot_dimension_numbers<[1], [0], [0], [1], [0, 0, 1, 1], [], []>} : vector<8x256xbf16>, vector<256x256xbf16>, vector<8x256xf32> -> vector<8x256xf32>
    %528 = arith.addf %498, %527 : vector<8x256xf32>
    %529 = tpu.iota {dimensions = array<i32: 0>} : vector<8x16xi32>
    %530 = tpu.iota {dimensions = array<i32: 1>} : vector<8x16xi32>
    %c2_i32_223 = arith.constant 2 : i32
    %531 = vector.broadcast %c2_i32_223 : i32 to vector<8x16xi32>
    %532 = arith.shrsi %529, %531 : vector<8x16xi32>
    %c3_i32_224 = arith.constant 3 : i32
    %533 = vector.broadcast %c3_i32_224 : i32 to vector<8x16xi32>
    %534 = arith.andi %529, %533 : vector<8x16xi32>
    %c2_i32_225 = arith.constant 2 : i32
    %535 = vector.broadcast %c2_i32_225 : i32 to vector<8x16xi32>
    %536 = arith.muli %535, %534 : vector<8x16xi32>
    %c2_i32_226 = arith.constant 2 : i32
    %537 = vector.broadcast %c2_i32_226 : i32 to vector<8x16xi32>
    %538 = arith.addi %536, %537 : vector<8x16xi32>
    %c0_i32_227 = arith.constant 0 : i32
    %539 = vector.broadcast %c0_i32_227 : i32 to vector<8x16xi32>
    %540 = arith.cmpi sge, %538, %539 : vector<8x16xi32>
    %c8_i32_228 = arith.constant 8 : i32
    %541 = vector.broadcast %c8_i32_228 : i32 to vector<8x16xi32>
    %542 = arith.cmpi slt, %538, %541 : vector<8x16xi32>
    %543 = arith.andi %540, %542 : vector<8x16xi1>
    %c8_i32_229 = arith.constant 8 : i32
    %544 = vector.broadcast %c8_i32_229 : i32 to vector<8x16xi32>
    %545 = arith.muli %532, %544 : vector<8x16xi32>
    %546 = arith.addi %545, %538 : vector<8x16xi32>
    %547 = arith.cmpi eq, %530, %546 : vector<8x16xi32>
    %548 = arith.andi %547, %543 : vector<8x16xi1>
    %cst_230 = arith.constant 1.000000e+00 : f32
    %cst_231 = arith.constant 0.000000e+00 : f32
    %549 = vector.broadcast %cst_230 : f32 to vector<8x16xf32>
    %550 = vector.broadcast %cst_231 : f32 to vector<8x16xf32>
    %551 = arith.select %548, %549, %550 : vector<8x16xi1>, vector<8x16xf32>
    %552 = arith.truncf %551 : vector<8x16xf32> to vector<8x16xbf16>
    %cst_232 = arith.constant dense<0.000000e+00> : vector<8x256xf32>
    %553 = tpu.matmul %552, %439, %cst_232 {dimension_numbers = #tpu.dot_dimension_numbers<[1], [0], [0], [1], [0, 0, 1, 1], [], []>} : vector<8x16xbf16>, vector<16x256xbf16>, vector<8x256xf32> -> vector<8x256xf32>
    %554 = arith.truncf %553 : vector<8x256xf32> to vector<8x256xbf16>
    %c3_233 = arith.constant 3 : index
    %c0_234 = arith.constant 0 : index
    %c0_235 = arith.constant 0 : index
    %555 = vector.load %arg4[%c3_233, %c0_234, %c0_235] : memref<4x256x256xbf16, #tpu.memory_space<vmem>>, vector<1x256x256xbf16>
    %556 = vector.shape_cast %555 : vector<1x256x256xbf16> to vector<256x256xbf16>
    %cst_236 = arith.constant dense<0.000000e+00> : vector<8x256xf32>
    %557 = tpu.matmul %554, %556, %cst_236 {dimension_numbers = #tpu.dot_dimension_numbers<[1], [0], [0], [1], [0, 0, 1, 1], [], []>} : vector<8x256xbf16>, vector<256x256xbf16>, vector<8x256xf32> -> vector<8x256xf32>
    %558 = arith.addf %528, %557 : vector<8x256xf32>
    %559 = tpu.iota {dimensions = array<i32: 0>} : vector<256x256xi32>
    %560 = tpu.iota {dimensions = array<i32: 1>} : vector<256x256xi32>
    %c63_i32 = arith.constant 63 : i32
    %561 = vector.broadcast %c63_i32 : i32 to vector<256x256xi32>
    %562 = arith.andi %559, %561 : vector<256x256xi32>
    %c63_i32_237 = arith.constant 63 : i32
    %563 = vector.broadcast %c63_i32_237 : i32 to vector<256x256xi32>
    %564 = arith.andi %560, %563 : vector<256x256xi32>
    %565 = arith.cmpi eq, %562, %564 : vector<256x256xi32>
    %cst_238 = arith.constant 1.000000e+00 : f32
    %cst_239 = arith.constant 0.000000e+00 : f32
    %566 = vector.broadcast %cst_238 : f32 to vector<256x256xf32>
    %567 = vector.broadcast %cst_239 : f32 to vector<256x256xf32>
    %568 = arith.select %565, %566, %567 : vector<256x256xi1>, vector<256x256xf32>
    %cst_240 = arith.constant dense<0.000000e+00> : vector<256xf32>
    %569 = vector.multi_reduction <add>, %558, %cst_240 [0] : vector<8x256xf32> to vector<256xf32>
    %570 = vector.shape_cast %569 : vector<256xf32> to vector<1x256xf32>
    %571 = arith.mulf %558, %558 : vector<8x256xf32>
    %cst_241 = arith.constant dense<0.000000e+00> : vector<256xf32>
    %572 = vector.multi_reduction <add>, %571, %cst_241 [0] : vector<8x256xf32> to vector<256xf32>
    %573 = vector.shape_cast %572 : vector<256xf32> to vector<1x256xf32>
    %cst_242 = arith.constant dense<0.000000e+00> : vector<1x256xf32>
    %574 = tpu.matmul %570, %568, %cst_242 {dimension_numbers = #tpu.dot_dimension_numbers<[1], [0], [0], [1], [0, 0, 1, 1], [], []>} : vector<1x256xf32>, vector<256x256xf32>, vector<1x256xf32> -> vector<1x256xf32>
    %cst_243 = arith.constant 3.125000e-02 : f32
    %575 = vector.broadcast %cst_243 : f32 to vector<1x256xf32>
    %576 = arith.mulf %574, %575 : vector<1x256xf32>
    %cst_244 = arith.constant dense<0.000000e+00> : vector<1x256xf32>
    %577 = tpu.matmul %573, %568, %cst_244 {dimension_numbers = #tpu.dot_dimension_numbers<[1], [0], [0], [1], [0, 0, 1, 1], [], []>} : vector<1x256xf32>, vector<256x256xf32>, vector<1x256xf32> -> vector<1x256xf32>
    %cst_245 = arith.constant 3.125000e-02 : f32
    %578 = vector.broadcast %cst_245 : f32 to vector<1x256xf32>
    %579 = arith.mulf %577, %578 : vector<1x256xf32>
    %580 = arith.mulf %576, %576 : vector<1x256xf32>
    %581 = arith.subf %579, %580 : vector<1x256xf32>
    %cst_246 = arith.constant 0.000000e+00 : f32
    %582 = vector.broadcast %cst_246 : f32 to vector<1x256xf32>
    %583 = arith.maximumf %581, %582 : vector<1x256xf32>
    %584 = vector.broadcast %576 : vector<1x256xf32> to vector<8x256xf32>
    %585 = arith.subf %558, %584 : vector<8x256xf32>
    %cst_247 = arith.constant 9.99999974E-6 : f32
    %586 = vector.broadcast %cst_247 : f32 to vector<1x256xf32>
    %587 = arith.addf %583, %586 : vector<1x256xf32>
    %588 = math.rsqrt %587 : vector<1x256xf32>
    %589 = vector.broadcast %588 : vector<1x256xf32> to vector<8x256xf32>
    %590 = arith.mulf %585, %589 : vector<8x256xf32>
    %cst_248 = arith.constant 0.000000e+00 : f32
    %591 = vector.broadcast %cst_248 : f32 to vector<8x256xf32>
    %592 = arith.cmpf ogt, %590, %591 : vector<8x256xf32>
    %cst_249 = arith.constant 2.000000e-01 : f32
    %593 = vector.broadcast %cst_249 : f32 to vector<8x256xf32>
    %594 = arith.mulf %593, %590 : vector<8x256xf32>
    %595 = arith.select %592, %590, %594 : vector<8x256xi1>, vector<8x256xf32>
    %c0_250 = arith.constant 0 : index
    %c0_251 = arith.constant 0 : index
    %596 = vector.load %arg5[%c0_250, %c0_251] : memref<4x256xf32, #tpu.memory_space<vmem>>, vector<4x256xf32>
    %597 = vector.extract_strided_slice %595 {offsets = [0, 0], sizes = [4, 256], strides = [1, 1]} : vector<8x256xf32> to vector<4x256xf32>
    %598 = arith.mulf %597, %596 : vector<4x256xf32>
    %599 = vector.shape_cast %598 : vector<4x256xf32> to vector<1x4x256xf32>
    %cst_252 = arith.constant dense<0.000000e+00> : vector<1xf32>
    %600 = vector.multi_reduction <add>, %599, %cst_252 [1, 2] : vector<1x4x256xf32> to vector<1xf32>
    %601 = vector.shape_cast %600 : vector<1xf32> to vector<1x1x1xf32>
    %602 = vector.extract %601[0, 0, 0] : f32 from vector<1x1x1xf32>
    %603 = vector.broadcast %602 : f32 to vector<1x1xf32>
    %604 = math.absf %603 : vector<1x1xf32>
    %cst_253 = arith.constant 0.000000e+00 : f32
    %605 = vector.broadcast %cst_253 : f32 to vector<1x1xf32>
    %606 = arith.subf %605, %604 : vector<1x1xf32>
    %607 = math.exp %606 : vector<1x1xf32>
    %cst_254 = arith.constant 0.000000e+00 : f32
    %608 = vector.broadcast %cst_254 : f32 to vector<1x1xf32>
    %609 = arith.cmpf oge, %603, %608 : vector<1x1xf32>
    %cst_255 = arith.constant 1.000000e+00 : f32
    %610 = vector.broadcast %cst_255 : f32 to vector<1x1xf32>
    %611 = arith.addf %610, %607 : vector<1x1xf32>
    %cst_256 = arith.constant 1.000000e+00 : f32
    %612 = vector.broadcast %cst_256 : f32 to vector<1x1xf32>
    %613 = arith.divf %612, %611 : vector<1x1xf32>
    %cst_257 = arith.constant 1.000000e+00 : f32
    %614 = vector.broadcast %cst_257 : f32 to vector<1x1xf32>
    %615 = arith.addf %614, %607 : vector<1x1xf32>
    %616 = arith.divf %607, %615 : vector<1x1xf32>
    %617 = arith.select %609, %613, %616 : vector<1x1xi1>, vector<1x1xf32>
    %c0_258 = arith.constant 0 : index
    %c0_259 = arith.constant 0 : index
    %618 = vector.load %arg6[%c0_258, %c0_259] : memref<2x1xf32, #tpu.memory_space<vmem>>, vector<1x1xf32>
    tpu.vector_store %arg6[%c0_258, %c0_259], %617 {strides = array<i32>} : memref<2x1xf32, #tpu.memory_space<vmem>>, vector<1x1xf32>,
    %619 = vector.extract_strided_slice %595 {offsets = [4, 0], sizes = [4, 256], strides = [1, 1]} : vector<8x256xf32> to vector<4x256xf32>
    %620 = arith.mulf %619, %596 : vector<4x256xf32>
    %621 = vector.shape_cast %620 : vector<4x256xf32> to vector<1x4x256xf32>
    %cst_260 = arith.constant dense<0.000000e+00> : vector<1xf32>
    %622 = vector.multi_reduction <add>, %621, %cst_260 [1, 2] : vector<1x4x256xf32> to vector<1xf32>
    %623 = vector.shape_cast %622 : vector<1xf32> to vector<1x1x1xf32>
    %624 = vector.extract %623[0, 0, 0] : f32 from vector<1x1x1xf32>
    %625 = vector.broadcast %624 : f32 to vector<1x1xf32>
    %626 = math.absf %625 : vector<1x1xf32>
    %cst_261 = arith.constant 0.000000e+00 : f32
    %627 = vector.broadcast %cst_261 : f32 to vector<1x1xf32>
    %628 = arith.subf %627, %626 : vector<1x1xf32>
    %629 = math.exp %628 : vector<1x1xf32>
    %cst_262 = arith.constant 0.000000e+00 : f32
    %630 = vector.broadcast %cst_262 : f32 to vector<1x1xf32>
    %631 = arith.cmpf oge, %625, %630 : vector<1x1xf32>
    %cst_263 = arith.constant 1.000000e+00 : f32
    %632 = vector.broadcast %cst_263 : f32 to vector<1x1xf32>
    %633 = arith.addf %632, %629 : vector<1x1xf32>
    %cst_264 = arith.constant 1.000000e+00 : f32
    %634 = vector.broadcast %cst_264 : f32 to vector<1x1xf32>
    %635 = arith.divf %634, %633 : vector<1x1xf32>
    %cst_265 = arith.constant 1.000000e+00 : f32
    %636 = vector.broadcast %cst_265 : f32 to vector<1x1xf32>
    %637 = arith.addf %636, %629 : vector<1x1xf32>
    %638 = arith.divf %629, %637 : vector<1x1xf32>
    %639 = arith.select %631, %635, %638 : vector<1x1xi1>, vector<1x1xf32>
    %c1_266 = arith.constant 1 : index
    %c0_267 = arith.constant 0 : index
    %640 = vector.load %arg6[%c1_266, %c0_267] : memref<2x1xf32, #tpu.memory_space<vmem>>, vector<1x1xf32>
    tpu.vector_store %arg6[%c1_266, %c0_267], %639 {strides = array<i32>} : memref<2x1xf32, #tpu.memory_space<vmem>>, vector<1x1xf32>,
    return
  }
}

</mosaic_0001>

<llo_original>
// kernel: squeeze.1
$region0: #{squeeze.1}
  %s0 = inlined_call_operand.vmem [shape: f32[4,4,64], index: 0, kind: input, shape index: {}]
  %s1 = inlined_call_operand.vmem [shape: f32[4,256], index: 1, kind: output, shape index: {}]
  $region1: #{squeeze.1} parent=0
    #allocation0 [shape = 'u8[8192]{0}', space=vmem, size = 0x2000, scoped, tag = 'scoped mem for output reshape']
    #allocation1 [shape = 'u8[16384]{0}', space=vmem, size = 0x4000, scoped, tag = 'scoped mem for input reshape']
    %s3 = sshllo.u32 0, 4
    %s4 = smul.addr 4, 3
    %s5 = scalar_lea.vmem %s0, %s4
    %v6 = vld [vmem:[%s5] sm:%s3]
    %s7 = scalar_lea.vmem [#allocation1], 24
    %8 = vst [vmem:[%s7] sm:%s3] %v6
    %s9 = smul.addr 4, 2
    %s10 = scalar_lea.vmem %s0, %s9
    %v11 = vld [vmem:[%s10] sm:%s3]
    %s12 = scalar_lea.vmem [#allocation1], 16
    %13 = vst [vmem:[%s12] sm:%s3] %v11
    %s14 = scalar_lea.vmem %s0, 4
    %v15 = vld [vmem:[%s14] sm:%s3]
    %s16 = scalar_lea.vmem [#allocation1], 8
    %17 = vst [vmem:[%s16] sm:%s3] %v15
    %v18 = vld [vmem:[%s0] sm:%s3]
    %19 = vst [vmem:[#allocation1] sm:%s3] %v18
    %s20 = smov 3
    %v21 = vld [vmem:[#allocation1] ss:$2 sm:%s20]
    %vm22 = vcmask 523264
    %23 = vst.msk [vmem:[#allocation0] ss:$8 sm:$0x3] %vm22, %v21
    %s24 = scalar_lea.vmem [#allocation1], 8
    %s25 = smov 3
    %v26 = vld [vmem:[%s24] ss:$2 sm:%s25]
    %vm27 = vcmask 523264
    %s28 = scalar_lea.vmem [#allocation0], 1
    %29 = vst.msk [vmem:[%s28] ss:$8 sm:$0x3] %vm27, %v26
    %s30 = scalar_lea.vmem [#allocation1], 16
    %s31 = smov 3
    %v32 = vld [vmem:[%s30] ss:$2 sm:%s31]
    %vm33 = vcmask 523264
    %s34 = scalar_lea.vmem [#allocation0], 2
    %35 = vst.msk [vmem:[%s34] ss:$8 sm:$0x3] %vm33, %v32
    %s36 = scalar_lea.vmem [#allocation1], 24
    %s37 = smov 3
    %v38 = vld [vmem:[%s36] ss:$2 sm:%s37]
    %vm39 = vcmask 523264
    %s40 = scalar_lea.vmem [#allocation0], 3
    %41 = vst.msk [vmem:[%s40] ss:$8 sm:$0x3] %vm39, %v38
    %s42 = scalar_lea.vmem [#allocation1], 1
    %v43 = vld [vmem:[%s42] ss:$8 sm:$0xf]
    %s44 = scalar_lea.vmem [#allocation1], 4294967267
    %v45 = vld [vmem:[%s44] ss:$8 sm:$0xf0]
    %vm46 = vcmask 1047556
    %v47 = vsel %vm46, %v45, %v43
    %48 = vrot.lane.b32.xlu0 %v47, 64
    %v49 = vpop.permute.xlu0 %48
    %vm50 = vcmask 1048064
    %51 = vst.msk [vmem:[#allocation0] sm:$0xf] %vm50, %v49
    %s52 = scalar_lea.vmem [#allocation0], 4
    %53 = vst.msk [vmem:[%s52] sm:$0xf0] %vm50, %v49
    %s55 = sshllo.u32 0, 4
    %v57 = vld [vmem:[#allocation0] sm:%s55]
    %s58 = sshllo.u32 0, 4
    %59 = vst [vmem:[%s1] sm:%s58] %v57
    %s60 = scalar_lea.vmem [#allocation0], 8
    %v61 = vld [vmem:[%s60] sm:%s55]
    %s62 = sshllo.u32 0, 4
    %s63 = scalar_lea.vmem %s1, 4
    %64 = vst [vmem:[%s63] sm:%s62] %v61

// kernel: discriminator_forward.1
$region0: #{discriminator_forward.1}
  #allocation0 [shape = 'u32[]', space=smem, size = 0x4, offset = 0x4, fixed_abs, tag = 'smem constant byte address 0x4 - core index']
  #allocation1 [shape = 'u32[144,128]{1,0:T(1,128)}', space=vmem, size = 0x12000, scoped, tag = 'internal scratch']
  %s0 = inlined_call_operand.vmem [shape: bf16[128,192], index: 0, kind: input, shape index: {}]
  %s1 = inlined_call_operand.vmem [shape: bf16[4,192,256], index: 1, kind: input, shape index: {}]
  %s2 = inlined_call_operand.vmem [shape: bf16[4,256,256], index: 2, kind: input, shape index: {}]
  %s3 = inlined_call_operand.vmem [shape: bf16[4,256,256], index: 3, kind: input, shape index: {}]
  %s4 = inlined_call_operand.vmem [shape: bf16[4,256,256], index: 4, kind: input, shape index: {}]
  %s5 = inlined_call_operand.vmem [shape: f32[4,256], index: 5, kind: input, shape index: {}]
  %s6 = inlined_call_operand.vmem [shape: f32[2,1], index: 6, kind: output, shape index: {}]
  %s7 = sld [smem:[#allocation0]]
  $region34: #{discriminator_forward.1} parent=0
    _
  %s9 = ssub.s32 1, %s7
  %s10 = scalar_select 0, %s9, %s7
  // Predicated region
  $region2: #{discriminator_forward.1} parent=0 // pred_check
    _
  $region3: #{discriminator_forward.1} parent=0 // pred_check_branch
    %12 = sbr.rel (0) target = $region5
  $region4: #{discriminator_forward.1} parent=0 // pred_region
    _
  $region5: #{discriminator_forward.1} parent=0 // pred_fallthru
    _
  // Predicated region
  $region6: #{discriminator_forward.1} parent=0 // pred_check
    _
  $region7: #{discriminator_forward.1} parent=0 // pred_check_branch
    %14 = sbr.rel (0) target = $region9
  $region8: #{discriminator_forward.1} parent=0 // pred_region
    _
  $region9: #{discriminator_forward.1} parent=0 // pred_fallthru
    _
  // Predicated region
  $region10: #{discriminator_forward.1} parent=0 // pred_check
    _
  $region11: #{discriminator_forward.1} parent=0 // pred_check_branch
    %16 = sbr.rel (0) target = $region13
  $region12: #{discriminator_forward.1} parent=0 // pred_region
    _
  $region13: #{discriminator_forward.1} parent=0 // pred_fallthru
    _
  // Predicated region
  $region14: #{discriminator_forward.1} parent=0 // pred_check
    _
  $region15: #{discriminator_forward.1} parent=0 // pred_check_branch
    %18 = sbr.rel (0) target = $region17
  $region16: #{discriminator_forward.1} parent=0 // pred_region
    _
  $region17: #{discriminator_forward.1} parent=0 // pred_fallthru
    _
  // Predicated region
  $region18: #{discriminator_forward.1} parent=0 // pred_check
    _
  $region19: #{discriminator_forward.1} parent=0 // pred_check_branch
    %20 = sbr.rel (0) target = $region21
  $region20: #{discriminator_forward.1} parent=0 // pred_region
    _
  $region21: #{discriminator_forward.1} parent=0 // pred_fallthru
    _
  // Predicated region
  $region22: #{discriminator_forward.1} parent=0 // pred_check
    _
  $region23: #{discriminator_forward.1} parent=0 // pred_check_branch
    %22 = sbr.rel (0) target = $region25
  $region24: #{discriminator_forward.1} parent=0 // pred_region
    _
  $region25: #{discriminator_forward.1} parent=0 // pred_fallthru
    _
  %v24 = vld [vmem:[%s0] sm:$0xff]
  %v25 = vld [vmem:[%s0 + $0x8] sm:$0xff]
  %v26 = vld [vmem:[%s0 + $0x10] sm:$0xff]
  %v27 = vld [vmem:[%s0 + $0x18] sm:$0xff]
  %v28 = vld [vmem:[%s0 + $0x20] sm:$0xff]
  %v29 = vld [vmem:[%s0 + $0x28] sm:$0xff]
  %v30 = vld [vmem:[%s0 + $0x30] sm:$0xff]
  %v31 = vld [vmem:[%s0 + $0x38] sm:$0xff]
  %v32 = vld [vmem:[%s0 + $0x40] sm:$0xff]
  %v33 = vld [vmem:[%s0 + $0x48] sm:$0xff]
  %v34 = vld [vmem:[%s0 + $0x50] sm:$0xff]
  %v35 = vld [vmem:[%s0 + $0x58] sm:$0xff]
  %v36 = vld [vmem:[%s0 + $0x60] sm:$0xff]
  %v37 = vld [vmem:[%s0 + $0x68] sm:$0xff]
  %v38 = vld [vmem:[%s0 + $0x70] sm:$0xff]
  %v39 = vld [vmem:[%s0 + $0x78] sm:$0xff]
  %v40 = vlaneseq
  %v41 = vshrl.u32 %v40, 7
  %v42 = vadd.s32 %v41, 8
  %v43 = vadd.s32 %v41, 16
  %v44 = vadd.s32 %v41, 24
  %v45 = vadd.s32 %v41, 32
  %v46 = vadd.s32 %v41, 40
  %v47 = vadd.s32 %v41, 48
  %v48 = vadd.s32 %v41, 56
  %v49 = vlaneseq
  %v50 = vand.u32 %v49, 127
  %v51 = vshra.s32 %v41, 5
  %v52 = vshra.s32 %v42, 5
  %v53 = vshra.s32 %v43, 5
  %v54 = vshra.s32 %v44, 5
  %v55 = vshra.s32 %v45, 5
  %v56 = vshra.s32 %v46, 5
  %v57 = vshra.s32 %v47, 5
  %v58 = vshra.s32 %v48, 5
  %v59 = vand.u32 %v41, 31
  %v60 = vand.u32 %v42, 31
  %v61 = vand.u32 %v43, 31
  %v62 = vand.u32 %v44, 31
  %v63 = vand.u32 %v45, 31
  %v64 = vand.u32 %v46, 31
  %v65 = vand.u32 %v47, 31
  %v66 = vand.u32 %v48, 31
  %v67 = vmul.u32 %v59, 2
  %v68 = vmul.u32 %v60, 2
  %v69 = vmul.u32 %v61, 2
  %v70 = vmul.u32 %v62, 2
  %v71 = vmul.u32 %v63, 2
  %v72 = vmul.u32 %v64, 2
  %v73 = vmul.u32 %v65, 2
  %v74 = vmul.u32 %v66, 2
  %v75 = vadd.s32 %v67, 4294967295
  %v76 = vadd.s32 %v68, 4294967295
  %v77 = vadd.s32 %v69, 4294967295
  %v78 = vadd.s32 %v70, 4294967295
  %v79 = vadd.s32 %v71, 4294967295
  %v80 = vadd.s32 %v72, 4294967295
  %v81 = vadd.s32 %v73, 4294967295
  %v82 = vadd.s32 %v74, 4294967295
  %vm83 = vcmp.ge.s32.totalorder %v75, 0
  %vm84 = vcmp.ge.s32.totalorder %v76, 0
  %vm85 = vcmp.ge.s32.totalorder %v77, 0
  %vm86 = vcmp.ge.s32.totalorder %v78, 0
  %vm87 = vcmp.ge.s32.totalorder %v79, 0
  %vm88 = vcmp.ge.s32.totalorder %v80, 0
  %vm89 = vcmp.ge.s32.totalorder %v81, 0
  %vm90 = vcmp.ge.s32.totalorder %v82, 0
  %vm91 = vcmp.lt.s32.totalorder %v75, 64
  %vm92 = vcmp.lt.s32.totalorder %v76, 64
  %vm93 = vcmp.lt.s32.totalorder %v77, 64
  %vm94 = vcmp.lt.s32.totalorder %v78, 64
  %vm95 = vcmp.lt.s32.totalorder %v79, 64
  %vm96 = vcmp.lt.s32.totalorder %v80, 64
  %vm97 = vcmp.lt.s32.totalorder %v81, 64
  %vm98 = vcmp.lt.s32.totalorder %v82, 64
  %vm99 = vmand %vm83, %vm91
  %vm100 = vmand %vm84, %vm92
  %vm101 = vmand %vm85, %vm93
  %vm102 = vmand %vm86, %vm94
  %vm103 = vmand %vm87, %vm95
  %vm104 = vmand %vm88, %vm96
  %vm105 = vmand %vm89, %vm97
  %vm106 = vmand %vm90, %vm98
  %v107 = vmul.u32 %v51, 64
  %v108 = vmul.u32 %v52, 64
  %v109 = vmul.u32 %v53, 64
  %v110 = vmul.u32 %v54, 64
  %v111 = vmul.u32 %v55, 64
  %v112 = vmul.u32 %v56, 64
  %v113 = vmul.u32 %v57, 64
  %v114 = vmul.u32 %v58, 64
  %v115 = vadd.s32 %v107, %v75
  %v116 = vadd.s32 %v108, %v76
  %v117 = vadd.s32 %v109, %v77
  %v118 = vadd.s32 %v110, %v78
  %v119 = vadd.s32 %v111, %v79
  %v120 = vadd.s32 %v112, %v80
  %v121 = vadd.s32 %v113, %v81
  %v122 = vadd.s32 %v114, %v82
  %vm123 = vcmp.eq.s32.totalorder %v50, %v115
  %vm124 = vcmp.eq.s32.totalorder %v50, %v116
  %vm125 = vcmp.eq.s32.totalorder %v50, %v117
  %vm126 = vcmp.eq.s32.totalorder %v50, %v118
  %vm127 = vcmp.eq.s32.totalorder %v50, %v119
  %vm128 = vcmp.eq.s32.totalorder %v50, %v120
  %vm129 = vcmp.eq.s32.totalorder %v50, %v121
  %vm130 = vcmp.eq.s32.totalorder %v50, %v122
  %vm131 = vmand %vm123, %vm99
  %vm132 = vmand %vm124, %vm100
  %vm133 = vmand %vm125, %vm101
  %vm134 = vmand %vm126, %vm102
  %vm135 = vmand %vm127, %vm103
  %vm136 = vmand %vm128, %vm104
  %vm137 = vmand %vm129, %vm105
  %vm138 = vmand %vm130, %vm106
  %v139 = vsel %vm131, 1.0, 0.0
  %v140 = vsel %vm132, 1.0, 0.0
  %v141 = vsel %vm133, 1.0, 0.0
  %v142 = vsel %vm134, 1.0, 0.0
  %v143 = vsel %vm135, 1.0, 0.0
  %v144 = vsel %vm136, 1.0, 0.0
  %v145 = vsel %vm137, 1.0, 0.0
  %v146 = vsel %vm138, 1.0, 0.0
  %v147 = vpack.c.bf16 %v140, %v139
  %v148 = vpack.c.bf16 %v142, %v141
  %v149 = vpack.c.bf16 %v144, %v143
  %v150 = vpack.c.bf16 %v146, %v145
  %v167 = vunpack.c.l.b16 %v24
  %v168 = vunpack.c.h.b16 %v24
  %v169 = vunpack.c.l.b16 %v25
  %v170 = vunpack.c.h.b16 %v25
  %v171 = vunpack.c.l.b16 %v26
  %v172 = vunpack.c.h.b16 %v26
  %v173 = vunpack.c.l.b16 %v27
  %v174 = vunpack.c.h.b16 %v27
  %v175 = vunpack.c.l.b16 %v28
  %v176 = vunpack.c.h.b16 %v28
  %v177 = vunpack.c.l.b16 %v29
  %v178 = vunpack.c.h.b16 %v29
  %v179 = vunpack.c.l.b16 %v30
  %v180 = vunpack.c.h.b16 %v30
  %v181 = vunpack.c.l.b16 %v31
  %v182 = vunpack.c.h.b16 %v31
  %v183 = vunpack.c.l.b16 %v32
  %v184 = vunpack.c.h.b16 %v32
  %v185 = vunpack.c.l.b16 %v33
  %v186 = vunpack.c.h.b16 %v33
  %v187 = vunpack.c.l.b16 %v34
  %v188 = vunpack.c.h.b16 %v34
  %v189 = vunpack.c.l.b16 %v35
  %v190 = vunpack.c.h.b16 %v35
  %v191 = vunpack.c.l.b16 %v36
  %v192 = vunpack.c.h.b16 %v36
  %v193 = vunpack.c.l.b16 %v37
  %v194 = vunpack.c.h.b16 %v37
  %v195 = vunpack.c.l.b16 %v38
  %v196 = vunpack.c.h.b16 %v38
  %v197 = vunpack.c.l.b16 %v39
  %v198 = vunpack.c.h.b16 %v39
  %v199 = vpack.c.b16 %v169, %v167
  %v200 = vpack.c.b16 %v170, %v168
  %v201 = vpack.c.b16 %v173, %v171
  %v202 = vpack.c.b16 %v174, %v172
  %v203 = vpack.c.b16 %v177, %v175
  %v204 = vpack.c.b16 %v178, %v176
  %v205 = vpack.c.b16 %v181, %v179
  %v206 = vpack.c.b16 %v182, %v180
  %v207 = vpack.c.b16 %v185, %v183
  %v208 = vpack.c.b16 %v186, %v184
  %v209 = vpack.c.b16 %v189, %v187
  %v210 = vpack.c.b16 %v190, %v188
  %v211 = vpack.c.b16 %v193, %v191
  %v212 = vpack.c.b16 %v194, %v192
  %v213 = vpack.c.b16 %v197, %v195
  %v214 = vpack.c.b16 %v198, %v196
  %231 = vmatprep.subr.bf16.mxu0 %v200
  %232 = vmatpush1.bf16.msra.mxu0 %v199
  %233 = vmatprep.subr.bf16.mxu0 %v202
  %234 = vmatpush1.bf16.msra.mxu0 %v201
  %235 = vmatprep.subr.bf16.mxu0 %v204
  %236 = vmatpush1.bf16.msra.mxu0 %v203
  %237 = vmatprep.subr.bf16.mxu0 %v206
  %238 = vmatpush1.bf16.msra.mxu0 %v205
  %239 = vmatprep.subr.bf16.mxu0 %v208
  %240 = vmatpush1.bf16.msra.mxu0 %v207
  %241 = vmatprep.subr.bf16.mxu0 %v210
  %242 = vmatpush1.bf16.msra.mxu0 %v209
  %243 = vmatprep.subr.bf16.mxu0 %v212
  %244 = vmatpush1.bf16.msra.mxu0 %v211
  %245 = vmatprep.subr.bf16.mxu0 %v214
  %246 = vmatpush1.bf16.msra.mxu0 %v213
  %247 = vmatprep.subr.bf16.mxu0 0
  %248 = vmatpush1.bf16.msra.mxu0 0
  %249 = vmatprep.subr.bf16.mxu0 0
  %250 = vmatpush1.bf16.msra.mxu0 0
  %251 = vmatprep.subr.bf16.mxu0 0
  %252 = vmatpush1.bf16.msra.mxu0 0
  %253 = vmatprep.subr.bf16.mxu0 0
  %254 = vmatpush1.bf16.msra.mxu0 0
  %255 = vmatprep.subr.bf16.mxu0 0
  %256 = vmatpush1.bf16.msra.mxu0 0
  %257 = vmatprep.subr.bf16.mxu0 0
  %258 = vmatpush1.bf16.msra.mxu0 0
  %259 = vmatprep.subr.bf16.mxu0 0
  %260 = vmatpush1.bf16.msra.mxu0 0
  %261 = vmatprep.subr.bf16.mxu0 0
  %262 = vmatpush1.bf16.msra.mxu0 0
  %263 = vmatprep.mubr.bf16.mxu0 0
  %264 = vmatmul.mubr.bf16.gmra.mrb[0].mxu0 %v147
  %v265 = vpop.f32.mrb[0].mxu0
  %v266 = vadd.f32 0.0, %v265
  %v267 = vpop.f32.mrb[0].mxu0
  %v268 = vadd.f32 0.0, %v267
  %v269 = vpop.f32.mrb[0].mxu0
  %v270 = vadd.f32 0.0, %v269
  %v271 = vpop.f32.mrb[0].mxu0
  %v272 = vadd.f32 0.0, %v271
  %273 = vmatprep.mubr.bf16.mxu0 0
  %274 = vmatmul.mubr.bf16.gmra.mrb[0].mxu0 %v148
  %v275 = vpop.f32.mrb[0].mxu0
  %v276 = vadd.f32 0.0, %v275
  %v277 = vpop.f32.mrb[0].mxu0
  %v278 = vadd.f32 0.0, %v277
  %v279 = vpop.f32.mrb[0].mxu0
  %v280 = vadd.f32 0.0, %v279
  %v281 = vpop.f32.mrb[0].mxu0
  %v282 = vadd.f32 0.0, %v281
  %283 = vmatprep.mubr.bf16.mxu0 0
  %284 = vmatmul.mubr.bf16.gmra.mrb[0].mxu0 %v149
  %v285 = vpop.f32.mrb[0].mxu0
  %v286 = vadd.f32 0.0, %v285
  %v287 = vpop.f32.mrb[0].mxu0
  %v288 = vadd.f32 0.0, %v287
  %v289 = vpop.f32.mrb[0].mxu0
  %v290 = vadd.f32 0.0, %v289
  %v291 = vpop.f32.mrb[0].mxu0
  %v292 = vadd.f32 0.0, %v291
  %293 = vmatprep.mubr.bf16.mxu0 0
  %294 = vmatmul.mubr.bf16.gmra.mrb[0].mxu0 %v150
  %v295 = vpop.f32.mrb[0].mxu0
  %v296 = vadd.f32 0.0, %v295
  %v297 = vpop.f32.mrb[0].mxu0
  %v298 = vadd.f32 0.0, %v297
  %v299 = vpop.f32.mrb[0].mxu0
  %v300 = vadd.f32 0.0, %v299
  %v301 = vpop.f32.mrb[0].mxu0
  %v302 = vadd.f32 0.0, %v301
  %303 = vdwg.mxu0
  %v304 = vpack.c.bf16 %v270, %v266
  %v305 = vpack.c.bf16 %v272, %v268
  %v306 = vpack.c.bf16 %v280, %v276
  %v307 = vpack.c.bf16 %v282, %v278
  %v308 = vpack.c.bf16 %v290, %v286
  %v309 = vpack.c.bf16 %v292, %v288
  %v310 = vpack.c.bf16 %v300, %v296
  %v311 = vpack.c.bf16 %v302, %v298
  %v312 = vld [vmem:[%s1] sm:$0xff]
  %v313 = vld [vmem:[%s1 + $0x8] sm:$0xff]
  %v314 = vld [vmem:[%s1 + $0x10] sm:$0xff]
  %v315 = vld [vmem:[%s1 + $0x18] sm:$0xff]
  %v316 = vld [vmem:[%s1 + $0x20] sm:$0xff]
  %v317 = vld [vmem:[%s1 + $0x28] sm:$0xff]
  %v318 = vld [vmem:[%s1 + $0x30] sm:$0xff]
  %v319 = vld [vmem:[%s1 + $0x38] sm:$0xff]
  %v320 = vld [vmem:[%s1 + $0x40] sm:$0xff]
  %v321 = vld [vmem:[%s1 + $0x48] sm:$0xff]
  %v322 = vld [vmem:[%s1 + $0x50] sm:$0xff]
  %v323 = vld [vmem:[%s1 + $0x58] sm:$0xff]
  %v324 = vld [vmem:[%s1 + $0x60] sm:$0xff]
  %v325 = vld [vmem:[%s1 + $0x68] sm:$0xff]
  %v326 = vld [vmem:[%s1 + $0x70] sm:$0xff]
  %v327 = vld [vmem:[%s1 + $0x78] sm:$0xff]
  %v328 = vld [vmem:[%s1 + $0x80] sm:$0xff]
  %v329 = vld [vmem:[%s1 + $0x88] sm:$0xff]
  %v330 = vld [vmem:[%s1 + $0x90] sm:$0xff]
  %v331 = vld [vmem:[%s1 + $0x98] sm:$0xff]
  %v332 = vld [vmem:[%s1 + $0xa0] sm:$0xff]
  %v333 = vld [vmem:[%s1 + $0xa8] sm:$0xff]
  %v334 = vld [vmem:[%s1 + $0xb0] sm:$0xff]
  %v335 = vld [vmem:[%s1 + $0xb8] sm:$0xff]
  %vm336 = vcmp.ge.s32.totalorder %v67, 0
  %vm337 = vcmp.ge.s32.totalorder %v68, 0
  %vm338 = vcmp.ge.s32.totalorder %v69, 0
  %vm339 = vcmp.ge.s32.totalorder %v70, 0
  %vm340 = vcmp.ge.s32.totalorder %v71, 0
  %vm341 = vcmp.ge.s32.totalorder %v72, 0
  %vm342 = vcmp.ge.s32.totalorder %v73, 0
  %vm343 = vcmp.ge.s32.totalorder %v74, 0
  %vm344 = vcmp.lt.s32.totalorder %v67, 64
  %vm345 = vcmp.lt.s32.totalorder %v68, 64
  %vm346 = vcmp.lt.s32.totalorder %v69, 64
  %vm347 = vcmp.lt.s32.totalorder %v70, 64
  %vm348 = vcmp.lt.s32.totalorder %v71, 64
  %vm349 = vcmp.lt.s32.totalorder %v72, 64
  %vm350 = vcmp.lt.s32.totalorder %v73, 64
  %vm351 = vcmp.lt.s32.totalorder %v74, 64
  %vm352 = vmand %vm336, %vm344
  %vm353 = vmand %vm337, %vm345
  %vm354 = vmand %vm338, %vm346
  %vm355 = vmand %vm339, %vm347
  %vm356 = vmand %vm340, %vm348
  %vm357 = vmand %vm341, %vm349
  %vm358 = vmand %vm342, %vm350
  %vm359 = vmand %vm343, %vm351
  %v360 = vadd.s32 %v107, %v67
  %v361 = vadd.s32 %v108, %v68
  %v362 = vadd.s32 %v109, %v69
  %v363 = vadd.s32 %v110, %v70
  %v364 = vadd.s32 %v111, %v71
  %v365 = vadd.s32 %v112, %v72
  %v366 = vadd.s32 %v113, %v73
  %v367 = vadd.s32 %v114, %v74
  %vm368 = vcmp.eq.s32.totalorder %v50, %v360
  %vm369 = vcmp.eq.s32.totalorder %v50, %v361
  %vm370 = vcmp.eq.s32.totalorder %v50, %v362
  %vm371 = vcmp.eq.s32.totalorder %v50, %v363
  %vm372 = vcmp.eq.s32.totalorder %v50, %v364
  %vm373 = vcmp.eq.s32.totalorder %v50, %v365
  %vm374 = vcmp.eq.s32.totalorder %v50, %v366
  %vm375 = vcmp.eq.s32.totalorder %v50, %v367
  %vm376 = vmand %vm368, %vm352
  %vm377 = vmand %vm369, %vm353
  %vm378 = vmand %vm370, %vm354
  %vm379 = vmand %vm371, %vm355
  %vm380 = vmand %vm372, %vm356
  %vm381 = vmand %vm373, %vm357
  %vm382 = vmand %vm374, %vm358
  %vm383 = vmand %vm375, %vm359
  %v384 = vsel %vm376, 1.0, 0.0
  %v385 = vsel %vm377, 1.0, 0.0
  %v386 = vsel %vm378, 1.0, 0.0
  %v387 = vsel %vm379, 1.0, 0.0
  %v388 = vsel %vm380, 1.0, 0.0
  %v389 = vsel %vm381, 1.0, 0.0
  %v390 = vsel %vm382, 1.0, 0.0
  %v391 = vsel %vm383, 1.0, 0.0
  %v392 = vpack.c.bf16 %v385, %v384
  %v393 = vpack.c.bf16 %v387, %v386
  %v394 = vpack.c.bf16 %v389, %v388
  %v395 = vpack.c.bf16 %v391, %v390
  %396 = vmatprep.subr.bf16.mxu0 %v200
  %397 = vmatpush1.bf16.msra.mxu0 %v199
  %398 = vmatprep.subr.bf16.mxu0 %v202
  %399 = vmatpush1.bf16.msra.mxu0 %v201
  %400 = vmatprep.subr.bf16.mxu0 %v204
  %401 = vmatpush1.bf16.msra.mxu0 %v203
  %402 = vmatprep.subr.bf16.mxu0 %v206
  %403 = vmatpush1.bf16.msra.mxu0 %v205
  %404 = vmatprep.subr.bf16.mxu0 %v208
  %405 = vmatpush1.bf16.msra.mxu0 %v207
  %406 = vmatprep.subr.bf16.mxu0 %v210
  %407 = vmatpush1.bf16.msra.mxu0 %v209
  %408 = vmatprep.subr.bf16.mxu0 %v212
  %409 = vmatpush1.bf16.msra.mxu0 %v211
  %410 = vmatprep.subr.bf16.mxu0 %v214
  %411 = vmatpush1.bf16.msra.mxu0 %v213
  %412 = vmatprep.subr.bf16.mxu0 0
  %413 = vmatpush1.bf16.msra.mxu0 0
  %414 = vmatprep.subr.bf16.mxu0 0
  %415 = vmatpush1.bf16.msra.mxu0 0
  %416 = vmatprep.subr.bf16.mxu0 0
  %417 = vmatpush1.bf16.msra.mxu0 0
  %418 = vmatprep.subr.bf16.mxu0 0
  %419 = vmatpush1.bf16.msra.mxu0 0
  %420 = vmatprep.subr.bf16.mxu0 0
  %421 = vmatpush1.bf16.msra.mxu0 0
  %422 = vmatprep.subr.bf16.mxu0 0
  %423 = vmatpush1.bf16.msra.mxu0 0
  %424 = vmatprep.subr.bf16.mxu0 0
  %425 = vmatpush1.bf16.msra.mxu0 0
  %426 = vmatprep.subr.bf16.mxu0 0
  %427 = vmatpush1.bf16.msra.mxu0 0
  %428 = vmatprep.mubr.bf16.mxu0 0
  %429 = vmatmul.mubr.bf16.gmra.mrb[0].mxu0 %v392
  %v430 = vpop.f32.mrb[0].mxu0
  %v431 = vadd.f32 0.0, %v430
  %v432 = vpop.f32.mrb[0].mxu0
  %v433 = vadd.f32 0.0, %v432
  %v434 = vpop.f32.mrb[0].mxu0
  %v435 = vadd.f32 0.0, %v434
  %v436 = vpop.f32.mrb[0].mxu0
  %v437 = vadd.f32 0.0, %v436
  %438 = vmatprep.mubr.bf16.mxu0 0
  %439 = vmatmul.mubr.bf16.gmra.mrb[0].mxu0 %v393
  %v440 = vpop.f32.mrb[0].mxu0
  %v441 = vadd.f32 0.0, %v440
  %v442 = vpop.f32.mrb[0].mxu0
  %v443 = vadd.f32 0.0, %v442
  %v444 = vpop.f32.mrb[0].mxu0
  %v445 = vadd.f32 0.0, %v444
  %v446 = vpop.f32.mrb[0].mxu0
  %v447 = vadd.f32 0.0, %v446
  %448 = vmatprep.mubr.bf16.mxu0 0
  %449 = vmatmul.mubr.bf16.gmra.mrb[0].mxu0 %v394
  %v450 = vpop.f32.mrb[0].mxu0
  %v451 = vadd.f32 0.0, %v450
  %v452 = vpop.f32.mrb[0].mxu0
  %v453 = vadd.f32 0.0, %v452
  %v454 = vpop.f32.mrb[0].mxu0
  %v455 = vadd.f32 0.0, %v454
  %v456 = vpop.f32.mrb[0].mxu0
  %v457 = vadd.f32 0.0, %v456
  %458 = vmatprep.mubr.bf16.mxu0 0
  %459 = vmatmul.mubr.bf16.gmra.mrb[0].mxu0 %v395
  %v460 = vpop.f32.mrb[0].mxu0
  %v461 = vadd.f32 0.0, %v460
  %v462 = vpop.f32.mrb[0].mxu0
  %v463 = vadd.f32 0.0, %v462
  %v464 = vpop.f32.mrb[0].mxu0
  %v465 = vadd.f32 0.0, %v464
  %v466 = vpop.f32.mrb[0].mxu0
  %v467 = vadd.f32 0.0, %v466
  %468 = vdwg.mxu0
  %v469 = vpack.c.bf16 %v435, %v431
  %v470 = vpack.c.bf16 %v437, %v433
  %v471 = vpack.c.bf16 %v445, %v441
  %v472 = vpack.c.bf16 %v447, %v443
  %v473 = vpack.c.bf16 %v455, %v451
  %v474 = vpack.c.bf16 %v457, %v453
  %v475 = vpack.c.bf16 %v465, %v461
  %v476 = vpack.c.bf16 %v467, %v463
  %s477 = scalar_lea.vmem %s1, 192
  %v478 = vld [vmem:[%s477] sm:$0xff]
  %v479 = vld [vmem:[%s477 + $0x8] sm:$0xff]
  %v480 = vld [vmem:[%s477 + $0x10] sm:$0xff]
  %v481 = vld [vmem:[%s477 + $0x18] sm:$0xff]
  %v482 = vld [vmem:[%s477 + $0x20] sm:$0xff]
  %v483 = vld [vmem:[%s477 + $0x28] sm:$0xff]
  %v484 = vld [vmem:[%s477 + $0x30] sm:$0xff]
  %v485 = vld [vmem:[%s477 + $0x38] sm:$0xff]
  %v486 = vld [vmem:[%s477 + $0x40] sm:$0xff]
  %v487 = vld [vmem:[%s477 + $0x48] sm:$0xff]
  %v488 = vld [vmem:[%s477 + $0x50] sm:$0xff]
  %v489 = vld [vmem:[%s477 + $0x58] sm:$0xff]
  %v490 = vld [vmem:[%s477 + $0x60] sm:$0xff]
  %v491 = vld [vmem:[%s477 + $0x68] sm:$0xff]
  %v492 = vld [vmem:[%s477 + $0x70] sm:$0xff]
  %v493 = vld [vmem:[%s477 + $0x78] sm:$0xff]
  %v494 = vld [vmem:[%s477 + $0x80] sm:$0xff]
  %v495 = vld [vmem:[%s477 + $0x88] sm:$0xff]
  %v496 = vld [vmem:[%s477 + $0x90] sm:$0xff]
  %v497 = vld [vmem:[%s477 + $0x98] sm:$0xff]
  %v498 = vld [vmem:[%s477 + $0xa0] sm:$0xff]
  %v499 = vld [vmem:[%s477 + $0xa8] sm:$0xff]
  %v500 = vld [vmem:[%s477 + $0xb0] sm:$0xff]
  %v501 = vld [vmem:[%s477 + $0xb8] sm:$0xff]
  %v526 = vunpack.c.l.b16 %v478
  %v527 = vunpack.c.h.b16 %v478
  %v528 = vunpack.c.l.b16 %v479
  %v529 = vunpack.c.h.b16 %v479
  %v530 = vunpack.c.l.b16 %v480
  %v531 = vunpack.c.h.b16 %v480
  %v532 = vunpack.c.l.b16 %v481
  %v533 = vunpack.c.h.b16 %v481
  %v534 = vunpack.c.l.b16 %v482
  %v535 = vunpack.c.h.b16 %v482
  %v536 = vunpack.c.l.b16 %v483
  %v537 = vunpack.c.h.b16 %v483
  %v538 = vunpack.c.l.b16 %v484
  %v539 = vunpack.c.h.b16 %v484
  %v540 = vunpack.c.l.b16 %v485
  %v541 = vunpack.c.h.b16 %v485
  %v542 = vunpack.c.l.b16 %v486
  %v543 = vunpack.c.h.b16 %v486
  %v544 = vunpack.c.l.b16 %v487
  %v545 = vunpack.c.h.b16 %v487
  %v546 = vunpack.c.l.b16 %v488
  %v547 = vunpack.c.h.b16 %v488
  %v548 = vunpack.c.l.b16 %v489
  %v549 = vunpack.c.h.b16 %v489
  %v550 = vunpack.c.l.b16 %v490
  %v551 = vunpack.c.h.b16 %v490
  %v552 = vunpack.c.l.b16 %v491
  %v553 = vunpack.c.h.b16 %v491
  %v554 = vunpack.c.l.b16 %v492
  %v555 = vunpack.c.h.b16 %v492
  %v556 = vunpack.c.l.b16 %v493
  %v557 = vunpack.c.h.b16 %v493
  %v558 = vunpack.c.l.b16 %v494
  %v559 = vunpack.c.h.b16 %v494
  %v560 = vunpack.c.l.b16 %v495
  %v561 = vunpack.c.h.b16 %v495
  %v562 = vunpack.c.l.b16 %v496
  %v563 = vunpack.c.h.b16 %v496
  %v564 = vunpack.c.l.b16 %v497
  %v565 = vunpack.c.h.b16 %v497
  %v566 = vunpack.c.l.b16 %v498
  %v567 = vunpack.c.h.b16 %v498
  %v568 = vunpack.c.l.b16 %v499
  %v569 = vunpack.c.h.b16 %v499
  %v570 = vunpack.c.l.b16 %v500
  %v571 = vunpack.c.h.b16 %v500
  %v572 = vunpack.c.l.b16 %v501
  %v573 = vunpack.c.h.b16 %v501
  %v574 = vpack.c.b16 %v528, %v526
  %v575 = vpack.c.b16 %v529, %v527
  %v576 = vpack.c.b16 %v532, %v530
  %v577 = vpack.c.b16 %v533, %v531
  %v578 = vpack.c.b16 %v536, %v534
  %v579 = vpack.c.b16 %v537, %v535
  %v580 = vpack.c.b16 %v540, %v538
  %v581 = vpack.c.b16 %v541, %v539
  %v582 = vpack.c.b16 %v544, %v542
  %v583 = vpack.c.b16 %v545, %v543
  %v584 = vpack.c.b16 %v548, %v546
  %v585 = vpack.c.b16 %v549, %v547
  %v586 = vpack.c.b16 %v552, %v550
  %v587 = vpack.c.b16 %v553, %v551
  %v588 = vpack.c.b16 %v556, %v554
  %v589 = vpack.c.b16 %v557, %v555
  %v590 = vpack.c.b16 %v560, %v558
  %v591 = vpack.c.b16 %v561, %v559
  %v592 = vpack.c.b16 %v564, %v562
  %v593 = vpack.c.b16 %v565, %v563
  %v594 = vpack.c.b16 %v568, %v566
  %v595 = vpack.c.b16 %v569, %v567
  %v596 = vpack.c.b16 %v572, %v570
  %v597 = vpack.c.b16 %v573, %v571
  %vm622 = vcmask 523264
  %v624 = vsel %vm622, %v470, 0
  %v627 = vsel %vm622, %v472, 0
  %v630 = vsel %vm622, %v474, 0
  %v633 = vsel %vm622, %v476, 0
  %635 = vmatprep.subr.bf16.mxu0 %v575
  %636 = vmatpush1.bf16.msra.mxu0 %v574
  %637 = vmatprep.subr.bf16.mxu0 %v577
  %638 = vmatpush1.bf16.msra.mxu0 %v576
  %639 = vmatprep.subr.bf16.mxu0 %v579
  %640 = vmatpush1.bf16.msra.mxu0 %v578
  %641 = vmatprep.subr.bf16.mxu0 %v581
  %642 = vmatpush1.bf16.msra.mxu0 %v580
  %643 = vmatprep.subr.bf16.mxu0 %v583
  %644 = vmatpush1.bf16.msra.mxu0 %v582
  %645 = vmatprep.subr.bf16.mxu0 %v585
  %646 = vmatpush1.bf16.msra.mxu0 %v584
  %647 = vmatprep.subr.bf16.mxu0 %v587
  %648 = vmatpush1.bf16.msra.mxu0 %v586
  %649 = vmatprep.subr.bf16.mxu0 %v589
  %650 = vmatpush1.bf16.msra.mxu0 %v588
  %651 = vmatprep.subr.bf16.mxu0 %v591
  %652 = vmatpush1.bf16.msra.mxu0 %v590
  %653 = vmatprep.subr.bf16.mxu0 %v593
  %654 = vmatpush1.bf16.msra.mxu0 %v592
  %655 = vmatprep.subr.bf16.mxu0 %v595
  %656 = vmatpush1.bf16.msra.mxu0 %v594
  %657 = vmatprep.subr.bf16.mxu0 %v597
  %658 = vmatpush1.bf16.msra.mxu0 %v596
  %659 = vmatprep.subr.bf16.mxu0 0
  %660 = vmatpush1.bf16.msra.mxu0 0
  %661 = vmatprep.subr.bf16.mxu0 0
  %662 = vmatpush1.bf16.msra.mxu0 0
  %663 = vmatprep.subr.bf16.mxu0 0
  %664 = vmatpush1.bf16.msra.mxu0 0
  %665 = vmatprep.subr.bf16.mxu0 0
  %666 = vmatpush1.bf16.msra.mxu0 0
  %667 = vmatprep.mubr.bf16.mxu0 %v624
  %668 = vmatmul.mubr.bf16.gmra.mrb[0].mxu0 %v469
  %v669 = vpop.f32.mrb[0].mxu0
  %v670 = vadd.f32 0.0, %v669
  %v671 = vpop.f32.mrb[0].mxu0
  %v672 = vadd.f32 0.0, %v671
  %v673 = vpop.f32.mrb[0].mxu0
  %v674 = vadd.f32 0.0, %v673
  %v675 = vpop.f32.mrb[0].mxu0
  %v676 = vadd.f32 0.0, %v675
  %677 = vmatprep.mubr.bf16.mxu0 %v627
  %678 = vmatmul.mubr.bf16.gmra.mrb[0].mxu0 %v471
  %v679 = vpop.f32.mrb[0].mxu0
  %v680 = vadd.f32 0.0, %v679
  %v681 = vpop.f32.mrb[0].mxu0
  %v682 = vadd.f32 0.0, %v681
  %v683 = vpop.f32.mrb[0].mxu0
  %v684 = vadd.f32 0.0, %v683
  %v685 = vpop.f32.mrb[0].mxu0
  %v686 = vadd.f32 0.0, %v685
  %687 = vmatprep.mubr.bf16.mxu0 %v630
  %688 = vmatmul.mubr.bf16.gmra.mrb[0].mxu0 %v473
  %v689 = vpop.f32.mrb[0].mxu0
  %v690 = vadd.f32 0.0, %v689
  %v691 = vpop.f32.mrb[0].mxu0
  %v692 = vadd.f32 0.0, %v691
  %v693 = vpop.f32.mrb[0].mxu0
  %v694 = vadd.f32 0.0, %v693
  %v695 = vpop.f32.mrb[0].mxu0
  %v696 = vadd.f32 0.0, %v695
  %697 = vmatprep.mubr.bf16.mxu0 %v633
  %698 = vmatmul.mubr.bf16.gmra.mrb[0].mxu0 %v475
  %v699 = vpop.f32.mrb[0].mxu0
  %v700 = vadd.f32 0.0, %v699
  %v701 = vpop.f32.mrb[0].mxu0
  %v702 = vadd.f32 0.0, %v701
  %v703 = vpop.f32.mrb[0].mxu0
  %v704 = vadd.f32 0.0, %v703
  %v705 = vpop.f32.mrb[0].mxu0
  %v706 = vadd.f32 0.0, %v705
  %707 = vdwg.mxu0
  %v732 = vunpack.c.l.b16 %v312
  %v733 = vunpack.c.h.b16 %v312
  %v734 = vunpack.c.l.b16 %v313
  %v735 = vunpack.c.h.b16 %v313
  %v736 = vunpack.c.l.b16 %v314
  %v737 = vunpack.c.h.b16 %v314
  %v738 = vunpack.c.l.b16 %v315
  %v739 = vunpack.c.h.b16 %v315
  %v740 = vunpack.c.l.b16 %v316
  %v741 = vunpack.c.h.b16 %v316
  %v742 = vunpack.c.l.b16 %v317
  %v743 = vunpack.c.h.b16 %v317
  %v744 = vunpack.c.l.b16 %v318
  %v745 = vunpack.c.h.b16 %v318
  %v746 = vunpack.c.l.b16 %v319
  %v747 = vunpack.c.h.b16 %v319
  %v748 = vunpack.c.l.b16 %v320
  %v749 = vunpack.c.h.b16 %v320
  %v750 = vunpack.c.l.b16 %v321
  %v751 = vunpack.c.h.b16 %v321
  %v752 = vunpack.c.l.b16 %v322
  %v753 = vunpack.c.h.b16 %v322
  %v754 = vunpack.c.l.b16 %v323
  %v755 = vunpack.c.h.b16 %v323
  %v756 = vunpack.c.l.b16 %v324
  %v757 = vunpack.c.h.b16 %v324
  %v758 = vunpack.c.l.b16 %v325
  %v759 = vunpack.c.h.b16 %v325
  %v760 = vunpack.c.l.b16 %v326
  %v761 = vunpack.c.h.b16 %v326
  %v762 = vunpack.c.l.b16 %v327
  %v763 = vunpack.c.h.b16 %v327
  %v764 = vunpack.c.l.b16 %v328
  %v765 = vunpack.c.h.b16 %v328
  %v766 = vunpack.c.l.b16 %v329
  %v767 = vunpack.c.h.b16 %v329
  %v768 = vunpack.c.l.b16 %v330
  %v769 = vunpack.c.h.b16 %v330
  %v770 = vunpack.c.l.b16 %v331
  %v771 = vunpack.c.h.b16 %v331
  %v772 = vunpack.c.l.b16 %v332
  %v773 = vunpack.c.h.b16 %v332
  %v774 = vunpack.c.l.b16 %v333
  %v775 = vunpack.c.h.b16 %v333
  %v776 = vunpack.c.l.b16 %v334
  %v777 = vunpack.c.h.b16 %v334
  %v778 = vunpack.c.l.b16 %v335
  %v779 = vunpack.c.h.b16 %v335
  %v780 = vpack.c.b16 %v734, %v732
  %v781 = vpack.c.b16 %v735, %v733
  %v782 = vpack.c.b16 %v738, %v736
  %v783 = vpack.c.b16 %v739, %v737
  %v784 = vpack.c.b16 %v742, %v740
  %v785 = vpack.c.b16 %v743, %v741
  %v786 = vpack.c.b16 %v746, %v744
  %v787 = vpack.c.b16 %v747, %v745
  %v788 = vpack.c.b16 %v750, %v748
  %v789 = vpack.c.b16 %v751, %v749
  %v790 = vpack.c.b16 %v754, %v752
  %v791 = vpack.c.b16 %v755, %v753
  %v792 = vpack.c.b16 %v758, %v756
  %v793 = vpack.c.b16 %v759, %v757
  %v794 = vpack.c.b16 %v762, %v760
  %v795 = vpack.c.b16 %v763, %v761
  %v796 = vpack.c.b16 %v766, %v764
  %v797 = vpack.c.b16 %v767, %v765
  %v798 = vpack.c.b16 %v770, %v768
  %v799 = vpack.c.b16 %v771, %v769
  %v800 = vpack.c.b16 %v774, %v772
  %v801 = vpack.c.b16 %v775, %v773
  %v802 = vpack.c.b16 %v778, %v776
  %v803 = vpack.c.b16 %v779, %v777
  %v829 = vsel %vm622, %v305, 0
  %v832 = vsel %vm622, %v307, 0
  %v835 = vsel %vm622, %v309, 0
  %v838 = vsel %vm622, %v311, 0
  %840 = vmatprep.subr.bf16.mxu0 %v781
  %841 = vmatpush1.bf16.msra.mxu0 %v780
  %842 = vmatprep.subr.bf16.mxu0 %v783
  %843 = vmatpush1.bf16.msra.mxu0 %v782
  %844 = vmatprep.subr.bf16.mxu0 %v785
  %845 = vmatpush1.bf16.msra.mxu0 %v784
  %846 = vmatprep.subr.bf16.mxu0 %v787
  %847 = vmatpush1.bf16.msra.mxu0 %v786
  %848 = vmatprep.subr.bf16.mxu0 %v789
  %849 = vmatpush1.bf16.msra.mxu0 %v788
  %850 = vmatprep.subr.bf16.mxu0 %v791
  %851 = vmatpush1.bf16.msra.mxu0 %v790
  %852 = vmatprep.subr.bf16.mxu0 %v793
  %853 = vmatpush1.bf16.msra.mxu0 %v792
  %854 = vmatprep.subr.bf16.mxu0 %v795
  %855 = vmatpush1.bf16.msra.mxu0 %v794
  %856 = vmatprep.subr.bf16.mxu0 %v797
  %857 = vmatpush1.bf16.msra.mxu0 %v796
  %858 = vmatprep.subr.bf16.mxu0 %v799
  %859 = vmatpush1.bf16.msra.mxu0 %v798
  %860 = vmatprep.subr.bf16.mxu0 %v801
  %861 = vmatpush1.bf16.msra.mxu0 %v800
  %862 = vmatprep.subr.bf16.mxu0 %v803
  %863 = vmatpush1.bf16.msra.mxu0 %v802
  %864 = vmatprep.subr.bf16.mxu0 0
  %865 = vmatpush1.bf16.msra.mxu0 0
  %866 = vmatprep.subr.bf16.mxu0 0
  %867 = vmatpush1.bf16.msra.mxu0 0
  %868 = vmatprep.subr.bf16.mxu0 0
  %869 = vmatpush1.bf16.msra.mxu0 0
  %870 = vmatprep.subr.bf16.mxu0 0
  %871 = vmatpush1.bf16.msra.mxu0 0
  %872 = vmatprep.mubr.bf16.mxu0 %v829
  %873 = vmatmul.mubr.bf16.gmra.mrb[0].mxu0 %v304
  %v874 = vpop.f32.mrb[0].mxu0
  %v875 = vadd.f32 %v670, %v874
  %v876 = vpop.f32.mrb[0].mxu0
  %v877 = vadd.f32 %v672, %v876
  %v878 = vpop.f32.mrb[0].mxu0
  %v879 = vadd.f32 %v674, %v878
  %v880 = vpop.f32.mrb[0].mxu0
  %v881 = vadd.f32 %v676, %v880
  %882 = vmatprep.mubr.bf16.mxu0 %v832
  %883 = vmatmul.mubr.bf16.gmra.mrb[0].mxu0 %v306
  %v884 = vpop.f32.mrb[0].mxu0
  %v885 = vadd.f32 %v680, %v884
  %v886 = vpop.f32.mrb[0].mxu0
  %v887 = vadd.f32 %v682, %v886
  %v888 = vpop.f32.mrb[0].mxu0
  %v889 = vadd.f32 %v684, %v888
  %v890 = vpop.f32.mrb[0].mxu0
  %v891 = vadd.f32 %v686, %v890
  %892 = vmatprep.mubr.bf16.mxu0 %v835
  %893 = vmatmul.mubr.bf16.gmra.mrb[0].mxu0 %v308
  %v894 = vpop.f32.mrb[0].mxu0
  %v895 = vadd.f32 %v690, %v894
  %v896 = vpop.f32.mrb[0].mxu0
  %v897 = vadd.f32 %v692, %v896
  %v898 = vpop.f32.mrb[0].mxu0
  %v899 = vadd.f32 %v694, %v898
  %v900 = vpop.f32.mrb[0].mxu0
  %v901 = vadd.f32 %v696, %v900
  %902 = vmatprep.mubr.bf16.mxu0 %v838
  %903 = vmatmul.mubr.bf16.gmra.mrb[0].mxu0 %v310
  %v904 = vpop.f32.mrb[0].mxu0
  %v905 = vadd.f32 %v700, %v904
  %v906 = vpop.f32.mrb[0].mxu0
  %v907 = vadd.f32 %v702, %v906
  %v908 = vpop.f32.mrb[0].mxu0
  %v909 = vadd.f32 %v704, %v908
  %v910 = vpop.f32.mrb[0].mxu0
  %v911 = vadd.f32 %v706, %v910
  %912 = vdwg.mxu0
  %v913 = vadd.s32 %v67, 1
  %v914 = vadd.s32 %v68, 1
  %v915 = vadd.s32 %v69, 1
  %v916 = vadd.s32 %v70, 1
  %v917 = vadd.s32 %v71, 1
  %v918 = vadd.s32 %v72, 1
  %v919 = vadd.s32 %v73, 1
  %v920 = vadd.s32 %v74, 1
  %vm921 = vcmp.ge.s32.totalorder %v913, 0
  %vm922 = vcmp.ge.s32.totalorder %v914, 0
  %vm923 = vcmp.ge.s32.totalorder %v915, 0
  %vm924 = vcmp.ge.s32.totalorder %v916, 0
  %vm925 = vcmp.ge.s32.totalorder %v917, 0
  %vm926 = vcmp.ge.s32.totalorder %v918, 0
  %vm927 = vcmp.ge.s32.totalorder %v919, 0
  %vm928 = vcmp.ge.s32.totalorder %v920, 0
  %vm929 = vcmp.lt.s32.totalorder %v913, 64
  %vm930 = vcmp.lt.s32.totalorder %v914, 64
  %vm931 = vcmp.lt.s32.totalorder %v915, 64
  %vm932 = vcmp.lt.s32.totalorder %v916, 64
  %vm933 = vcmp.lt.s32.totalorder %v917, 64
  %vm934 = vcmp.lt.s32.totalorder %v918, 64
  %vm935 = vcmp.lt.s32.totalorder %v919, 64
  %vm936 = vcmp.lt.s32.totalorder %v920, 64
  %vm937 = vmand %vm921, %vm929
  %vm938 = vmand %vm922, %vm930
  %vm939 = vmand %vm923, %vm931
  %vm940 = vmand %vm924, %vm932
  %vm941 = vmand %vm925, %vm933
  %vm942 = vmand %vm926, %vm934
  %vm943 = vmand %vm927, %vm935
  %vm944 = vmand %vm928, %vm936
  %v945 = vadd.s32 %v107, %v913
  %v946 = vadd.s32 %v108, %v914
  %v947 = vadd.s32 %v109, %v915
  %v948 = vadd.s32 %v110, %v916
  %v949 = vadd.s32 %v111, %v917
  %v950 = vadd.s32 %v112, %v918
  %v951 = vadd.s32 %v113, %v919
  %v952 = vadd.s32 %v114, %v920
  %vm953 = vcmp.eq.s32.totalorder %v50, %v945
  %vm954 = vcmp.eq.s32.totalorder %v50, %v946
  %vm955 = vcmp.eq.s32.totalorder %v50, %v947
  %vm956 = vcmp.eq.s32.totalorder %v50, %v948
  %vm957 = vcmp.eq.s32.totalorder %v50, %v949
  %vm958 = vcmp.eq.s32.totalorder %v50, %v950
  %vm959 = vcmp.eq.s32.totalorder %v50, %v951
  %vm960 = vcmp.eq.s32.totalorder %v50, %v952
  %vm961 = vmand %vm953, %vm937
  %vm962 = vmand %vm954, %vm938
  %vm963 = vmand %vm955, %vm939
  %vm964 = vmand %vm956, %vm940
  %vm965 = vmand %vm957, %vm941
  %vm966 = vmand %vm958, %vm942
  %vm967 = vmand %vm959, %vm943
  %vm968 = vmand %vm960, %vm944
  %v969 = vsel %vm961, 1.0, 0.0
  %v970 = vsel %vm962, 1.0, 0.0
  %v971 = vsel %vm963, 1.0, 0.0
  %v972 = vsel %vm964, 1.0, 0.0
  %v973 = vsel %vm965, 1.0, 0.0
  %v974 = vsel %vm966, 1.0, 0.0
  %v975 = vsel %vm967, 1.0, 0.0
  %v976 = vsel %vm968, 1.0, 0.0
  %v977 = vpack.c.bf16 %v970, %v969
  %v978 = vpack.c.bf16 %v972, %v971
  %v979 = vpack.c.bf16 %v974, %v973
  %v980 = vpack.c.bf16 %v976, %v975
  %981 = vmatprep.subr.bf16.mxu0 %v200
  %982 = vmatpush1.bf16.msra.mxu0 %v199
  %983 = vmatprep.subr.bf16.mxu0 %v202
  %984 = vmatpush1.bf16.msra.mxu0 %v201
  %985 = vmatprep.subr.bf16.mxu0 %v204
  %986 = vmatpush1.bf16.msra.mxu0 %v203
  %987 = vmatprep.subr.bf16.mxu0 %v206
  %988 = vmatpush1.bf16.msra.mxu0 %v205
  %989 = vmatprep.subr.bf16.mxu0 %v208
  %990 = vmatpush1.bf16.msra.mxu0 %v207
  %991 = vmatprep.subr.bf16.mxu0 %v210
  %992 = vmatpush1.bf16.msra.mxu0 %v209
  %993 = vmatprep.subr.bf16.mxu0 %v212
  %994 = vmatpush1.bf16.msra.mxu0 %v211
  %995 = vmatprep.subr.bf16.mxu0 %v214
  %996 = vmatpush1.bf16.msra.mxu0 %v213
  %997 = vmatprep.subr.bf16.mxu0 0
  %998 = vmatpush1.bf16.msra.mxu0 0
  %999 = vmatprep.subr.bf16.mxu0 0
  %1000 = vmatpush1.bf16.msra.mxu0 0
  %1001 = vmatprep.subr.bf16.mxu0 0
  %1002 = vmatpush1.bf16.msra.mxu0 0
  %1003 = vmatprep.subr.bf16.mxu0 0
  %1004 = vmatpush1.bf16.msra.mxu0 0
  %1005 = vmatprep.subr.bf16.mxu0 0
  %1006 = vmatpush1.bf16.msra.mxu0 0
  %1007 = vmatprep.subr.bf16.mxu0 0
  %1008 = vmatpush1.bf16.msra.mxu0 0
  %1009 = vmatprep.subr.bf16.mxu0 0
  %1010 = vmatpush1.bf16.msra.mxu0 0
  %1011 = vmatprep.subr.bf16.mxu0 0
  %1012 = vmatpush1.bf16.msra.mxu0 0
  %1013 = vmatprep.mubr.bf16.mxu0 0
  %1014 = vmatmul.mubr.bf16.gmra.mrb[0].mxu0 %v977
  %v1015 = vpop.f32.mrb[0].mxu0
  %v1016 = vadd.f32 0.0, %v1015
  %v1017 = vpop.f32.mrb[0].mxu0
  %v1018 = vadd.f32 0.0, %v1017
  %v1019 = vpop.f32.mrb[0].mxu0
  %v1020 = vadd.f32 0.0, %v1019
  %v1021 = vpop.f32.mrb[0].mxu0
  %v1022 = vadd.f32 0.0, %v1021
  %1023 = vmatprep.mubr.bf16.mxu0 0
  %1024 = vmatmul.mubr.bf16.gmra.mrb[0].mxu0 %v978
  %v1025 = vpop.f32.mrb[0].mxu0
  %v1026 = vadd.f32 0.0, %v1025
  %v1027 = vpop.f32.mrb[0].mxu0
  %v1028 = vadd.f32 0.0, %v1027
  %v1029 = vpop.f32.mrb[0].mxu0
  %v1030 = vadd.f32 0.0, %v1029
  %v1031 = vpop.f32.mrb[0].mxu0
  %v1032 = vadd.f32 0.0, %v1031
  %1033 = vmatprep.mubr.bf16.mxu0 0
  %1034 = vmatmul.mubr.bf16.gmra.mrb[0].mxu0 %v979
  %v1035 = vpop.f32.mrb[0].mxu0
  %v1036 = vadd.f32 0.0, %v1035
  %v1037 = vpop.f32.mrb[0].mxu0
  %v1038 = vadd.f32 0.0, %v1037
  %v1039 = vpop.f32.mrb[0].mxu0
  %v1040 = vadd.f32 0.0, %v1039
  %v1041 = vpop.f32.mrb[0].mxu0
  %v1042 = vadd.f32 0.0, %v1041
  %1043 = vmatprep.mubr.bf16.mxu0 0
  %1044 = vmatmul.mubr.bf16.gmra.mrb[0].mxu0 %v980
  %v1045 = vpop.f32.mrb[0].mxu0
  %v1046 = vadd.f32 0.0, %v1045
  %v1047 = vpop.f32.mrb[0].mxu0
  %v1048 = vadd.f32 0.0, %v1047
  %v1049 = vpop.f32.mrb[0].mxu0
  %v1050 = vadd.f32 0.0, %v1049
  %v1051 = vpop.f32.mrb[0].mxu0
  %v1052 = vadd.f32 0.0, %v1051
  %1053 = vdwg.mxu0
  %v1054 = vpack.c.bf16 %v1020, %v1016
  %v1055 = vpack.c.bf16 %v1022, %v1018
  %v1056 = vpack.c.bf16 %v1030, %v1026
  %v1057 = vpack.c.bf16 %v1032, %v1028
  %v1058 = vpack.c.bf16 %v1040, %v1036
  %v1059 = vpack.c.bf16 %v1042, %v1038
  %v1060 = vpack.c.bf16 %v1050, %v1046
  %v1061 = vpack.c.bf16 %v1052, %v1048
  %s1062 = scalar_lea.vmem %s1, 384
  %v1063 = vld [vmem:[%s1062] sm:$0xff]
  %v1064 = vld [vmem:[%s1062 + $0x8] sm:$0xff]
  %v1065 = vld [vmem:[%s1062 + $0x10] sm:$0xff]
  %v1066 = vld [vmem:[%s1062 + $0x18] sm:$0xff]
  %v1067 = vld [vmem:[%s1062 + $0x20] sm:$0xff]
  %v1068 = vld [vmem:[%s1062 + $0x28] sm:$0xff]
  %v1069 = vld [vmem:[%s1062 + $0x30] sm:$0xff]
  %v1070 = vld [vmem:[%s1062 + $0x38] sm:$0xff]
  %v1071 = vld [vmem:[%s1062 + $0x40] sm:$0xff]
  %v1072 = vld [vmem:[%s1062 + $0x48] sm:$0xff]
  %v1073 = vld [vmem:[%s1062 + $0x50] sm:$0xff]
  %v1074 = vld [vmem:[%s1062 + $0x58] sm:$0xff]
  %v1075 = vld [vmem:[%s1062 + $0x60] sm:$0xff]
  %v1076 = vld [vmem:[%s1062 + $0x68] sm:$0xff]
  %v1077 = vld [vmem:[%s1062 + $0x70] sm:$0xff]
  %v1078 = vld [vmem:[%s1062 + $0x78] sm:$0xff]
  %v1079 = vld [vmem:[%s1062 + $0x80] sm:$0xff]
  %v1080 = vld [vmem:[%s1062 + $0x88] sm:$0xff]
  %v1081 = vld [vmem:[%s1062 + $0x90] sm:$0xff]
  %v1082 = vld [vmem:[%s1062 + $0x98] sm:$0xff]
  %v1083 = vld [vmem:[%s1062 + $0xa0] sm:$0xff]
  %v1084 = vld [vmem:[%s1062 + $0xa8] sm:$0xff]
  %v1085 = vld [vmem:[%s1062 + $0xb0] sm:$0xff]
  %v1086 = vld [vmem:[%s1062 + $0xb8] sm:$0xff]
  %v1111 = vunpack.c.l.b16 %v1063
  %v1112 = vunpack.c.h.b16 %v1063
  %v1113 = vunpack.c.l.b16 %v1064
  %v1114 = vunpack.c.h.b16 %v1064
  %v1115 = vunpack.c.l.b16 %v1065
  %v1116 = vunpack.c.h.b16 %v1065
  %v1117 = vunpack.c.l.b16 %v1066
  %v1118 = vunpack.c.h.b16 %v1066
  %v1119 = vunpack.c.l.b16 %v1067
  %v1120 = vunpack.c.h.b16 %v1067
  %v1121 = vunpack.c.l.b16 %v1068
  %v1122 = vunpack.c.h.b16 %v1068
  %v1123 = vunpack.c.l.b16 %v1069
  %v1124 = vunpack.c.h.b16 %v1069
  %v1125 = vunpack.c.l.b16 %v1070
  %v1126 = vunpack.c.h.b16 %v1070
  %v1127 = vunpack.c.l.b16 %v1071
  %v1128 = vunpack.c.h.b16 %v1071
  %v1129 = vunpack.c.l.b16 %v1072
  %v1130 = vunpack.c.h.b16 %v1072
  %v1131 = vunpack.c.l.b16 %v1073
  %v1132 = vunpack.c.h.b16 %v1073
  %v1133 = vunpack.c.l.b16 %v1074
  %v1134 = vunpack.c.h.b16 %v1074
  %v1135 = vunpack.c.l.b16 %v1075
  %v1136 = vunpack.c.h.b16 %v1075
  %v1137 = vunpack.c.l.b16 %v1076
  %v1138 = vunpack.c.h.b16 %v1076
  %v1139 = vunpack.c.l.b16 %v1077
  %v1140 = vunpack.c.h.b16 %v1077
  %v1141 = vunpack.c.l.b16 %v1078
  %v1142 = vunpack.c.h.b16 %v1078
  %v1143 = vunpack.c.l.b16 %v1079
  %v1144 = vunpack.c.h.b16 %v1079
  %v1145 = vunpack.c.l.b16 %v1080
  %v1146 = vunpack.c.h.b16 %v1080
  %v1147 = vunpack.c.l.b16 %v1081
  %v1148 = vunpack.c.h.b16 %v1081
  %v1149 = vunpack.c.l.b16 %v1082
  %v1150 = vunpack.c.h.b16 %v1082
  %v1151 = vunpack.c.l.b16 %v1083
  %v1152 = vunpack.c.h.b16 %v1083
  %v1153 = vunpack.c.l.b16 %v1084
  %v1154 = vunpack.c.h.b16 %v1084
  %v1155 = vunpack.c.l.b16 %v1085
  %v1156 = vunpack.c.h.b16 %v1085
  %v1157 = vunpack.c.l.b16 %v1086
  %v1158 = vunpack.c.h.b16 %v1086
  %v1159 = vpack.c.b16 %v1113, %v1111
  %v1160 = vpack.c.b16 %v1114, %v1112
  %v1161 = vpack.c.b16 %v1117, %v1115
  %v1162 = vpack.c.b16 %v1118, %v1116
  %v1163 = vpack.c.b16 %v1121, %v1119
  %v1164 = vpack.c.b16 %v1122, %v1120
  %v1165 = vpack.c.b16 %v1125, %v1123
  %v1166 = vpack.c.b16 %v1126, %v1124
  %v1167 = vpack.c.b16 %v1129, %v1127
  %v1168 = vpack.c.b16 %v1130, %v1128
  %v1169 = vpack.c.b16 %v1133, %v1131
  %v1170 = vpack.c.b16 %v1134, %v1132
  %v1171 = vpack.c.b16 %v1137, %v1135
  %v1172 = vpack.c.b16 %v1138, %v1136
  %v1173 = vpack.c.b16 %v1141, %v1139
  %v1174 = vpack.c.b16 %v1142, %v1140
  %v1175 = vpack.c.b16 %v1145, %v1143
  %v1176 = vpack.c.b16 %v1146, %v1144
  %v1177 = vpack.c.b16 %v1149, %v1147
  %v1178 = vpack.c.b16 %v1150, %v1148
  %v1179 = vpack.c.b16 %v1153, %v1151
  %v1180 = vpack.c.b16 %v1154, %v1152
  %v1181 = vpack.c.b16 %v1157, %v1155
  %v1182 = vpack.c.b16 %v1158, %v1156
  %v1208 = vsel %vm622, %v1055, 0
  %v1211 = vsel %vm622, %v1057, 0
  %v1214 = vsel %vm622, %v1059, 0
  %v1217 = vsel %vm622, %v1061, 0
  %1219 = vmatprep.subr.bf16.mxu0 %v1160
  %1220 = vmatpush1.bf16.msra.mxu0 %v1159
  %1221 = vmatprep.subr.bf16.mxu0 %v1162
  %1222 = vmatpush1.bf16.msra.mxu0 %v1161
  %1223 = vmatprep.subr.bf16.mxu0 %v1164
  %1224 = vmatpush1.bf16.msra.mxu0 %v1163
  %1225 = vmatprep.subr.bf16.mxu0 %v1166
  %1226 = vmatpush1.bf16.msra.mxu0 %v1165
  %1227 = vmatprep.subr.bf16.mxu0 %v1168
  %1228 = vmatpush1.bf16.msra.mxu0 %v1167
  %1229 = vmatprep.subr.bf16.mxu0 %v1170
  %1230 = vmatpush1.bf16.msra.mxu0 %v1169
  %1231 = vmatprep.subr.bf16.mxu0 %v1172
  %1232 = vmatpush1.bf16.msra.mxu0 %v1171
  %1233 = vmatprep.subr.bf16.mxu0 %v1174
  %1234 = vmatpush1.bf16.msra.mxu0 %v1173
  %1235 = vmatprep.subr.bf16.mxu0 %v1176
  %1236 = vmatpush1.bf16.msra.mxu0 %v1175
  %1237 = vmatprep.subr.bf16.mxu0 %v1178
  %1238 = vmatpush1.bf16.msra.mxu0 %v1177
  %1239 = vmatprep.subr.bf16.mxu0 %v1180
  %1240 = vmatpush1.bf16.msra.mxu0 %v1179
  %1241 = vmatprep.subr.bf16.mxu0 %v1182
  %1242 = vmatpush1.bf16.msra.mxu0 %v1181
  %1243 = vmatprep.subr.bf16.mxu0 0
  %1244 = vmatpush1.bf16.msra.mxu0 0
  %1245 = vmatprep.subr.bf16.mxu0 0
  %1246 = vmatpush1.bf16.msra.mxu0 0
  %1247 = vmatprep.subr.bf16.mxu0 0
  %1248 = vmatpush1.bf16.msra.mxu0 0
  %1249 = vmatprep.subr.bf16.mxu0 0
  %1250 = vmatpush1.bf16.msra.mxu0 0
  %1251 = vmatprep.mubr.bf16.mxu0 %v1208
  %1252 = vmatmul.mubr.bf16.gmra.mrb[0].mxu0 %v1054
  %v1253 = vpop.f32.mrb[0].mxu0
  %v1254 = vadd.f32 0.0, %v1253
  %v1255 = vpop.f32.mrb[0].mxu0
  %v1256 = vadd.f32 0.0, %v1255
  %v1257 = vpop.f32.mrb[0].mxu0
  %v1258 = vadd.f32 0.0, %v1257
  %v1259 = vpop.f32.mrb[0].mxu0
  %v1260 = vadd.f32 0.0, %v1259
  %1261 = vmatprep.mubr.bf16.mxu0 %v1211
  %1262 = vmatmul.mubr.bf16.gmra.mrb[0].mxu0 %v1056
  %v1263 = vpop.f32.mrb[0].mxu0
  %v1264 = vadd.f32 0.0, %v1263
  %v1265 = vpop.f32.mrb[0].mxu0
  %v1266 = vadd.f32 0.0, %v1265
  %v1267 = vpop.f32.mrb[0].mxu0
  %v1268 = vadd.f32 0.0, %v1267
  %v1269 = vpop.f32.mrb[0].mxu0
  %v1270 = vadd.f32 0.0, %v1269
  %1271 = vmatprep.mubr.bf16.mxu0 %v1214
  %1272 = vmatmul.mubr.bf16.gmra.mrb[0].mxu0 %v1058
  %v1273 = vpop.f32.mrb[0].mxu0
  %v1274 = vadd.f32 0.0, %v1273
  %v1275 = vpop.f32.mrb[0].mxu0
  %v1276 = vadd.f32 0.0, %v1275
  %v1277 = vpop.f32.mrb[0].mxu0
  %v1278 = vadd.f32 0.0, %v1277
  %v1279 = vpop.f32.mrb[0].mxu0
  %v1280 = vadd.f32 0.0, %v1279
  %1281 = vmatprep.mubr.bf16.mxu0 %v1217
  %1282 = vmatmul.mubr.bf16.gmra.mrb[0].mxu0 %v1060
  %v1283 = vpop.f32.mrb[0].mxu0
  %v1284 = vadd.f32 0.0, %v1283
  %v1285 = vpop.f32.mrb[0].mxu0
  %v1286 = vadd.f32 0.0, %v1285
  %v1287 = vpop.f32.mrb[0].mxu0
  %v1288 = vadd.f32 0.0, %v1287
  %v1289 = vpop.f32.mrb[0].mxu0
  %v1290 = vadd.f32 0.0, %v1289
  %1291 = vdwg.mxu0
  %v1292 = vadd.f32 %v875, %v1254
  %v1293 = vadd.f32 %v877, %v1256
  %v1294 = vadd.f32 %v879, %v1258
  %v1295 = vadd.f32 %v881, %v1260
  %v1296 = vadd.f32 %v885, %v1264
  %v1297 = vadd.f32 %v887, %v1266
  %v1298 = vadd.f32 %v889, %v1268
  %v1299 = vadd.f32 %v891, %v1270
  %v1300 = vadd.f32 %v895, %v1274
  %v1301 = vadd.f32 %v897, %v1276
  %v1302 = vadd.f32 %v899, %v1278
  %v1303 = vadd.f32 %v901, %v1280
  %v1304 = vadd.f32 %v905, %v1284
  %v1305 = vadd.f32 %v907, %v1286
  %v1306 = vadd.f32 %v909, %v1288
  %v1307 = vadd.f32 %v911, %v1290
  %v1308 = vadd.s32 %v67, 2
  %v1309 = vadd.s32 %v68, 2
  %v1310 = vadd.s32 %v69, 2
  %v1311 = vadd.s32 %v70, 2
  %v1312 = vadd.s32 %v71, 2
  %v1313 = vadd.s32 %v72, 2
  %v1314 = vadd.s32 %v73, 2
  %v1315 = vadd.s32 %v74, 2
  %vm1316 = vcmp.ge.s32.totalorder %v1308, 0
  %vm1317 = vcmp.ge.s32.totalorder %v1309, 0
  %vm1318 = vcmp.ge.s32.totalorder %v1310, 0
  %vm1319 = vcmp.ge.s32.totalorder %v1311, 0
  %vm1320 = vcmp.ge.s32.totalorder %v1312, 0
  %vm1321 = vcmp.ge.s32.totalorder %v1313, 0
  %vm1322 = vcmp.ge.s32.totalorder %v1314, 0
  %vm1323 = vcmp.ge.s32.totalorder %v1315, 0
  %vm1324 = vcmp.lt.s32.totalorder %v1308, 64
  %vm1325 = vcmp.lt.s32.totalorder %v1309, 64
  %vm1326 = vcmp.lt.s32.totalorder %v1310, 64
  %vm1327 = vcmp.lt.s32.totalorder %v1311, 64
  %vm1328 = vcmp.lt.s32.totalorder %v1312, 64
  %vm1329 = vcmp.lt.s32.totalorder %v1313, 64
  %vm1330 = vcmp.lt.s32.totalorder %v1314, 64
  %vm1331 = vcmp.lt.s32.totalorder %v1315, 64
  %vm1332 = vmand %vm1316, %vm1324
  %vm1333 = vmand %vm1317, %vm1325
  %vm1334 = vmand %vm1318, %vm1326
  %vm1335 = vmand %vm1319, %vm1327
  %vm1336 = vmand %vm1320, %vm1328
  %vm1337 = vmand %vm1321, %vm1329
  %vm1338 = vmand %vm1322, %vm1330
  %vm1339 = vmand %vm1323, %vm1331
  %v1340 = vadd.s32 %v107, %v1308
  %v1341 = vadd.s32 %v108, %v1309
  %v1342 = vadd.s32 %v109, %v1310
  %v1343 = vadd.s32 %v110, %v1311
  %v1344 = vadd.s32 %v111, %v1312
  %v1345 = vadd.s32 %v112, %v1313
  %v1346 = vadd.s32 %v113, %v1314
  %v1347 = vadd.s32 %v114, %v1315
  %vm1348 = vcmp.eq.s32.totalorder %v50, %v1340
  %vm1349 = vcmp.eq.s32.totalorder %v50, %v1341
  %vm1350 = vcmp.eq.s32.totalorder %v50, %v1342
  %vm1351 = vcmp.eq.s32.totalorder %v50, %v1343
  %vm1352 = vcmp.eq.s32.totalorder %v50, %v1344
  %vm1353 = vcmp.eq.s32.totalorder %v50, %v1345
  %vm1354 = vcmp.eq.s32.totalorder %v50, %v1346
  %vm1355 = vcmp.eq.s32.totalorder %v50, %v1347
  %vm1356 = vmand %vm1348, %vm1332
  %vm1357 = vmand %vm1349, %vm1333
  %vm1358 = vmand %vm1350, %vm1334
  %vm1359 = vmand %vm1351, %vm1335
  %vm1360 = vmand %vm1352, %vm1336
  %vm1361 = vmand %vm1353, %vm1337
  %vm1362 = vmand %vm1354, %vm1338
  %vm1363 = vmand %vm1355, %vm1339
  %v1364 = vsel %vm1356, 1.0, 0.0
  %v1365 = vsel %vm1357, 1.0, 0.0
  %v1366 = vsel %vm1358, 1.0, 0.0
  %v1367 = vsel %vm1359, 1.0, 0.0
  %v1368 = vsel %vm1360, 1.0, 0.0
  %v1369 = vsel %vm1361, 1.0, 0.0
  %v1370 = vsel %vm1362, 1.0, 0.0
  %v1371 = vsel %vm1363, 1.0, 0.0
  %v1372 = vpack.c.bf16 %v1365, %v1364
  %v1373 = vpack.c.bf16 %v1367, %v1366
  %v1374 = vpack.c.bf16 %v1369, %v1368
  %v1375 = vpack.c.bf16 %v1371, %v1370
  %1376 = vmatprep.subr.bf16.mxu0 %v200
  %1377 = vmatpush1.bf16.msra.mxu0 %v199
  %1378 = vmatprep.subr.bf16.mxu0 %v202
  %1379 = vmatpush1.bf16.msra.mxu0 %v201
  %1380 = vmatprep.subr.bf16.mxu0 %v204
  %1381 = vmatpush1.bf16.msra.mxu0 %v203
  %1382 = vmatprep.subr.bf16.mxu0 %v206
  %1383 = vmatpush1.bf16.msra.mxu0 %v205
  %1384 = vmatprep.subr.bf16.mxu0 %v208
  %1385 = vmatpush1.bf16.msra.mxu0 %v207
  %1386 = vmatprep.subr.bf16.mxu0 %v210
  %1387 = vmatpush1.bf16.msra.mxu0 %v209
  %1388 = vmatprep.subr.bf16.mxu0 %v212
  %1389 = vmatpush1.bf16.msra.mxu0 %v211
  %1390 = vmatprep.subr.bf16.mxu0 %v214
  %1391 = vmatpush1.bf16.msra.mxu0 %v213
  %1392 = vmatprep.subr.bf16.mxu0 0
  %1393 = vmatpush1.bf16.msra.mxu0 0
  %1394 = vmatprep.subr.bf16.mxu0 0
  %1395 = vmatpush1.bf16.msra.mxu0 0
  %1396 = vmatprep.subr.bf16.mxu0 0
  %1397 = vmatpush1.bf16.msra.mxu0 0
  %1398 = vmatprep.subr.bf16.mxu0 0
  %1399 = vmatpush1.bf16.msra.mxu0 0
  %1400 = vmatprep.subr.bf16.mxu0 0
  %1401 = vmatpush1.bf16.msra.mxu0 0
  %1402 = vmatprep.subr.bf16.mxu0 0
  %1403 = vmatpush1.bf16.msra.mxu0 0
  %1404 = vmatprep.subr.bf16.mxu0 0
  %1405 = vmatpush1.bf16.msra.mxu0 0
  %1406 = vmatprep.subr.bf16.mxu0 0
  %1407 = vmatpush1.bf16.msra.mxu0 0
  %1408 = vmatprep.mubr.bf16.mxu0 0
  %1409 = vmatmul.mubr.bf16.gmra.mrb[0].mxu0 %v1372
  %v1410 = vpop.f32.mrb[0].mxu0
  %v1411 = vadd.f32 0.0, %v1410
  %v1412 = vpop.f32.mrb[0].mxu0
  %v1413 = vadd.f32 0.0, %v1412
  %v1414 = vpop.f32.mrb[0].mxu0
  %v1415 = vadd.f32 0.0, %v1414
  %v1416 = vpop.f32.mrb[0].mxu0
  %v1417 = vadd.f32 0.0, %v1416
  %1418 = vmatprep.mubr.bf16.mxu0 0
  %1419 = vmatmul.mubr.bf16.gmra.mrb[0].mxu0 %v1373
  %v1420 = vpop.f32.mrb[0].mxu0
  %v1421 = vadd.f32 0.0, %v1420
  %v1422 = vpop.f32.mrb[0].mxu0
  %v1423 = vadd.f32 0.0, %v1422
  %v1424 = vpop.f32.mrb[0].mxu0
  %v1425 = vadd.f32 0.0, %v1424
  %v1426 = vpop.f32.mrb[0].mxu0
  %v1427 = vadd.f32 0.0, %v1426
  %1428 = vmatprep.mubr.bf16.mxu0 0
  %1429 = vmatmul.mubr.bf16.gmra.mrb[0].mxu0 %v1374
  %v1430 = vpop.f32.mrb[0].mxu0
  %v1431 = vadd.f32 0.0, %v1430
  %v1432 = vpop.f32.mrb[0].mxu0
  %v1433 = vadd.f32 0.0, %v1432
  %v1434 = vpop.f32.mrb[0].mxu0
  %v1435 = vadd.f32 0.0, %v1434
  %v1436 = vpop.f32.mrb[0].mxu0
  %v1437 = vadd.f32 0.0, %v1436
  %1438 = vmatprep.mubr.bf16.mxu0 0
  %1439 = vmatmul.mubr.bf16.gmra.mrb[0].mxu0 %v1375
  %v1440 = vpop.f32.mrb[0].mxu0
  %v1441 = vadd.f32 0.0, %v1440
  %v1442 = vpop.f32.mrb[0].mxu0
  %v1443 = vadd.f32 0.0, %v1442
  %v1444 = vpop.f32.mrb[0].mxu0
  %v1445 = vadd.f32 0.0, %v1444
  %v1446 = vpop.f32.mrb[0].mxu0
  %v1447 = vadd.f32 0.0, %v1446
  %1448 = vdwg.mxu0
  %v1449 = vpack.c.bf16 %v1415, %v1411
  %v1450 = vpack.c.bf16 %v1417, %v1413
  %v1451 = vpack.c.bf16 %v1425, %v1421
  %v1452 = vpack.c.bf16 %v1427, %v1423
  %v1453 = vpack.c.bf16 %v1435, %v1431
  %v1454 = vpack.c.bf16 %v1437, %v1433
  %v1455 = vpack.c.bf16 %v1445, %v1441
  %v1456 = vpack.c.bf16 %v1447, %v1443
  %s1457 = scalar_lea.vmem %s1, 576
  %v1458 = vld [vmem:[%s1457] sm:$0xff]
  %v1459 = vld [vmem:[%s1457 + $0x8] sm:$0xff]
  %v1460 = vld [vmem:[%s1457 + $0x10] sm:$0xff]
  %v1461 = vld [vmem:[%s1457 + $0x18] sm:$0xff]
  %v1462 = vld [vmem:[%s1457 + $0x20] sm:$0xff]
  %v1463 = vld [vmem:[%s1457 + $0x28] sm:$0xff]
  %v1464 = vld [vmem:[%s1457 + $0x30] sm:$0xff]
  %v1465 = vld [vmem:[%s1457 + $0x38] sm:$0xff]
  %v1466 = vld [vmem:[%s1457 + $0x40] sm:$0xff]
  %v1467 = vld [vmem:[%s1457 + $0x48] sm:$0xff]
  %v1468 = vld [vmem:[%s1457 + $0x50] sm:$0xff]
  %v1469 = vld [vmem:[%s1457 + $0x58] sm:$0xff]
  %v1470 = vld [vmem:[%s1457 + $0x60] sm:$0xff]
  %v1471 = vld [vmem:[%s1457 + $0x68] sm:$0xff]
  %v1472 = vld [vmem:[%s1457 + $0x70] sm:$0xff]
  %v1473 = vld [vmem:[%s1457 + $0x78] sm:$0xff]
  %v1474 = vld [vmem:[%s1457 + $0x80] sm:$0xff]
  %v1475 = vld [vmem:[%s1457 + $0x88] sm:$0xff]
  %v1476 = vld [vmem:[%s1457 + $0x90] sm:$0xff]
  %v1477 = vld [vmem:[%s1457 + $0x98] sm:$0xff]
  %v1478 = vld [vmem:[%s1457 + $0xa0] sm:$0xff]
  %v1479 = vld [vmem:[%s1457 + $0xa8] sm:$0xff]
  %v1480 = vld [vmem:[%s1457 + $0xb0] sm:$0xff]
  %v1481 = vld [vmem:[%s1457 + $0xb8] sm:$0xff]
  %v1506 = vunpack.c.l.b16 %v1458
  %v1507 = vunpack.c.h.b16 %v1458
  %v1508 = vunpack.c.l.b16 %v1459
  %v1509 = vunpack.c.h.b16 %v1459
  %v1510 = vunpack.c.l.b16 %v1460
  %v1511 = vunpack.c.h.b16 %v1460
  %v1512 = vunpack.c.l.b16 %v1461
  %v1513 = vunpack.c.h.b16 %v1461
  %v1514 = vunpack.c.l.b16 %v1462
  %v1515 = vunpack.c.h.b16 %v1462
  %v1516 = vunpack.c.l.b16 %v1463
  %v1517 = vunpack.c.h.b16 %v1463
  %v1518 = vunpack.c.l.b16 %v1464
  %v1519 = vunpack.c.h.b16 %v1464
  %v1520 = vunpack.c.l.b16 %v1465
  %v1521 = vunpack.c.h.b16 %v1465
  %v1522 = vunpack.c.l.b16 %v1466
  %v1523 = vunpack.c.h.b16 %v1466
  %v1524 = vunpack.c.l.b16 %v1467
  %v1525 = vunpack.c.h.b16 %v1467
  %v1526 = vunpack.c.l.b16 %v1468
  %v1527 = vunpack.c.h.b16 %v1468
  %v1528 = vunpack.c.l.b16 %v1469
  %v1529 = vunpack.c.h.b16 %v1469
  %v1530 = vunpack.c.l.b16 %v1470
  %v1531 = vunpack.c.h.b16 %v1470
  %v1532 = vunpack.c.l.b16 %v1471
  %v1533 = vunpack.c.h.b16 %v1471
  %v1534 = vunpack.c.l.b16 %v1472
  %v1535 = vunpack.c.h.b16 %v1472
  %v1536 = vunpack.c.l.b16 %v1473
  %v1537 = vunpack.c.h.b16 %v1473
  %v1538 = vunpack.c.l.b16 %v1474
  %v1539 = vunpack.c.h.b16 %v1474
  %v1540 = vunpack.c.l.b16 %v1475
  %v1541 = vunpack.c.h.b16 %v1475
  %v1542 = vunpack.c.l.b16 %v1476
  %v1543 = vunpack.c.h.b16 %v1476
  %v1544 = vunpack.c.l.b16 %v1477
  %v1545 = vunpack.c.h.b16 %v1477
  %v1546 = vunpack.c.l.b16 %v1478
  %v1547 = vunpack.c.h.b16 %v1478
  %v1548 = vunpack.c.l.b16 %v1479
  %v1549 = vunpack.c.h.b16 %v1479
  %v1550 = vunpack.c.l.b16 %v1480
  %v1551 = vunpack.c.h.b16 %v1480
  %v1552 = vunpack.c.l.b16 %v1481
  %v1553 = vunpack.c.h.b16 %v1481
  %v1554 = vpack.c.b16 %v1508, %v1506
  %v1555 = vpack.c.b16 %v1509, %v1507
  %v1556 = vpack.c.b16 %v1512, %v1510
  %v1557 = vpack.c.b16 %v1513, %v1511
  %v1558 = vpack.c.b16 %v1516, %v1514
  %v1559 = vpack.c.b16 %v1517, %v1515
  %v1560 = vpack.c.b16 %v1520, %v1518
  %v1561 = vpack.c.b16 %v1521, %v1519
  %v1562 = vpack.c.b16 %v1524, %v1522
  %v1563 = vpack.c.b16 %v1525, %v1523
  %v1564 = vpack.c.b16 %v1528, %v1526
  %v1565 = vpack.c.b16 %v1529, %v1527
  %v1566 = vpack.c.b16 %v1532, %v1530
  %v1567 = vpack.c.b16 %v1533, %v1531
  %v1568 = vpack.c.b16 %v1536, %v1534
  %v1569 = vpack.c.b16 %v1537, %v1535
  %v1570 = vpack.c.b16 %v1540, %v1538
  %v1571 = vpack.c.b16 %v1541, %v1539
  %v1572 = vpack.c.b16 %v1544, %v1542
  %v1573 = vpack.c.b16 %v1545, %v1543
  %v1574 = vpack.c.b16 %v1548, %v1546
  %v1575 = vpack.c.b16 %v1549, %v1547
  %v1576 = vpack.c.b16 %v1552, %v1550
  %v1577 = vpack.c.b16 %v1553, %v1551
  %v1603 = vsel %vm622, %v1450, 0
  %v1606 = vsel %vm622, %v1452, 0
  %v1609 = vsel %vm622, %v1454, 0
  %v1612 = vsel %vm622, %v1456, 0
  %1614 = vmatprep.subr.bf16.mxu0 %v1555
  %1615 = vmatpush1.bf16.msra.mxu0 %v1554
  %1616 = vmatprep.subr.bf16.mxu0 %v1557
  %1617 = vmatpush1.bf16.msra.mxu0 %v1556
  %1618 = vmatprep.subr.bf16.mxu0 %v1559
  %1619 = vmatpush1.bf16.msra.mxu0 %v1558
  %1620 = vmatprep.subr.bf16.mxu0 %v1561
  %1621 = vmatpush1.bf16.msra.mxu0 %v1560
  %1622 = vmatprep.subr.bf16.mxu0 %v1563
  %1623 = vmatpush1.bf16.msra.mxu0 %v1562
  %1624 = vmatprep.subr.bf16.mxu0 %v1565
  %1625 = vmatpush1.bf16.msra.mxu0 %v1564
  %1626 = vmatprep.subr.bf16.mxu0 %v1567
  %1627 = vmatpush1.bf16.msra.mxu0 %v1566
  %1628 = vmatprep.subr.bf16.mxu0 %v1569
  %1629 = vmatpush1.bf16.msra.mxu0 %v1568
  %1630 = vmatprep.subr.bf16.mxu0 %v1571
  %1631 = vmatpush1.bf16.msra.mxu0 %v1570
  %1632 = vmatprep.subr.bf16.mxu0 %v1573
  %1633 = vmatpush1.bf16.msra.mxu0 %v1572
  %1634 = vmatprep.subr.bf16.mxu0 %v1575
  %1635 = vmatpush1.bf16.msra.mxu0 %v1574
  %1636 = vmatprep.subr.bf16.mxu0 %v1577
  %1637 = vmatpush1.bf16.msra.mxu0 %v1576
  %1638 = vmatprep.subr.bf16.mxu0 0
  %1639 = vmatpush1.bf16.msra.mxu0 0
  %1640 = vmatprep.subr.bf16.mxu0 0
  %1641 = vmatpush1.bf16.msra.mxu0 0
  %1642 = vmatprep.subr.bf16.mxu0 0
  %1643 = vmatpush1.bf16.msra.mxu0 0
  %1644 = vmatprep.subr.bf16.mxu0 0
  %1645 = vmatpush1.bf16.msra.mxu0 0
  %1646 = vmatprep.mubr.bf16.mxu0 %v1603
  %1647 = vmatmul.mubr.bf16.gmra.mrb[0].mxu0 %v1449
  %v1648 = vpop.f32.mrb[0].mxu0
  %v1649 = vadd.f32 0.0, %v1648
  %v1650 = vpop.f32.mrb[0].mxu0
  %v1651 = vadd.f32 0.0, %v1650
  %v1652 = vpop.f32.mrb[0].mxu0
  %v1653 = vadd.f32 0.0, %v1652
  %v1654 = vpop.f32.mrb[0].mxu0
  %v1655 = vadd.f32 0.0, %v1654
  %1656 = vmatprep.mubr.bf16.mxu0 %v1606
  %1657 = vmatmul.mubr.bf16.gmra.mrb[0].mxu0 %v1451
  %v1658 = vpop.f32.mrb[0].mxu0
  %v1659 = vadd.f32 0.0, %v1658
  %v1660 = vpop.f32.mrb[0].mxu0
  %v1661 = vadd.f32 0.0, %v1660
  %v1662 = vpop.f32.mrb[0].mxu0
  %v1663 = vadd.f32 0.0, %v1662
  %v1664 = vpop.f32.mrb[0].mxu0
  %v1665 = vadd.f32 0.0, %v1664
  %1666 = vmatprep.mubr.bf16.mxu0 %v1609
  %1667 = vmatmul.mubr.bf16.gmra.mrb[0].mxu0 %v1453
  %v1668 = vpop.f32.mrb[0].mxu0
  %v1669 = vadd.f32 0.0, %v1668
  %v1670 = vpop.f32.mrb[0].mxu0
  %v1671 = vadd.f32 0.0, %v1670
  %v1672 = vpop.f32.mrb[0].mxu0
  %v1673 = vadd.f32 0.0, %v1672
  %v1674 = vpop.f32.mrb[0].mxu0
  %v1675 = vadd.f32 0.0, %v1674
  %1676 = vmatprep.mubr.bf16.mxu0 %v1612
  %1677 = vmatmul.mubr.bf16.gmra.mrb[0].mxu0 %v1455
  %v1678 = vpop.f32.mrb[0].mxu0
  %v1679 = vadd.f32 0.0, %v1678
  %v1680 = vpop.f32.mrb[0].mxu0
  %v1681 = vadd.f32 0.0, %v1680
  %v1682 = vpop.f32.mrb[0].mxu0
  %v1683 = vadd.f32 0.0, %v1682
  %v1684 = vpop.f32.mrb[0].mxu0
  %v1685 = vadd.f32 0.0, %v1684
  %1686 = vdwg.mxu0
  %v1687 = vadd.f32 %v1292, %v1649
  %v1688 = vadd.f32 %v1293, %v1651
  %v1689 = vadd.f32 %v1294, %v1653
  %v1690 = vadd.f32 %v1295, %v1655
  %v1691 = vadd.f32 %v1296, %v1659
  %v1692 = vadd.f32 %v1297, %v1661
  %v1693 = vadd.f32 %v1298, %v1663
  %v1694 = vadd.f32 %v1299, %v1665
  %v1695 = vadd.f32 %v1300, %v1669
  %v1696 = vadd.f32 %v1301, %v1671
  %v1697 = vadd.f32 %v1302, %v1673
  %v1698 = vadd.f32 %v1303, %v1675
  %v1699 = vadd.f32 %v1304, %v1679
  %v1700 = vadd.f32 %v1305, %v1681
  %v1701 = vadd.f32 %v1306, %v1683
  %v1702 = vadd.f32 %v1307, %v1685
  %vm1703 = vcmp.gt.f32.partialorder %v1687, 0.0
  %vm1704 = vcmp.gt.f32.partialorder %v1688, 0.0
  %vm1705 = vcmp.gt.f32.partialorder %v1689, 0.0
  %vm1706 = vcmp.gt.f32.partialorder %v1690, 0.0
  %vm1707 = vcmp.gt.f32.partialorder %v1691, 0.0
  %vm1708 = vcmp.gt.f32.partialorder %v1692, 0.0
  %vm1709 = vcmp.gt.f32.partialorder %v1693, 0.0
  %vm1710 = vcmp.gt.f32.partialorder %v1694, 0.0
  %vm1711 = vcmp.gt.f32.partialorder %v1695, 0.0
  %vm1712 = vcmp.gt.f32.partialorder %v1696, 0.0
  %vm1713 = vcmp.gt.f32.partialorder %v1697, 0.0
  %vm1714 = vcmp.gt.f32.partialorder %v1698, 0.0
  %vm1715 = vcmp.gt.f32.partialorder %v1699, 0.0
  %vm1716 = vcmp.gt.f32.partialorder %v1700, 0.0
  %vm1717 = vcmp.gt.f32.partialorder %v1701, 0.0
  %vm1718 = vcmp.gt.f32.partialorder %v1702, 0.0
  %v1719 = vmul.f32 %v1687, 0.2
  %v1720 = vmul.f32 %v1688, 0.2
  %v1721 = vmul.f32 %v1689, 0.2
  %v1722 = vmul.f32 %v1690, 0.2
  %v1723 = vmul.f32 %v1691, 0.2
  %v1724 = vmul.f32 %v1692, 0.2
  %v1725 = vmul.f32 %v1693, 0.2
  %v1726 = vmul.f32 %v1694, 0.2
  %v1727 = vmul.f32 %v1695, 0.2
  %v1728 = vmul.f32 %v1696, 0.2
  %v1729 = vmul.f32 %v1697, 0.2
  %v1730 = vmul.f32 %v1698, 0.2
  %v1731 = vmul.f32 %v1699, 0.2
  %v1732 = vmul.f32 %v1700, 0.2
  %v1733 = vmul.f32 %v1701, 0.2
  %v1734 = vmul.f32 %v1702, 0.2
  %v1735 = vsel %vm1703, %v1687, %v1719
  %v1736 = vsel %vm1704, %v1688, %v1720
  %v1737 = vsel %vm1705, %v1689, %v1721
  %v1738 = vsel %vm1706, %v1690, %v1722
  %v1739 = vsel %vm1707, %v1691, %v1723
  %v1740 = vsel %vm1708, %v1692, %v1724
  %v1741 = vsel %vm1709, %v1693, %v1725
  %v1742 = vsel %vm1710, %v1694, %v1726
  %v1743 = vsel %vm1711, %v1695, %v1727
  %v1744 = vsel %vm1712, %v1696, %v1728
  %v1745 = vsel %vm1713, %v1697, %v1729
  %v1746 = vsel %vm1714, %v1698, %v1730
  %v1747 = vsel %vm1715, %v1699, %v1731
  %v1748 = vsel %vm1716, %v1700, %v1732
  %v1749 = vsel %vm1717, %v1701, %v1733
  %v1750 = vsel %vm1718, %v1702, %v1734
  %v1751 = vpack.c.bf16 %v1737, %v1735
  %v1752 = vpack.c.bf16 %v1738, %v1736
  %v1753 = vpack.c.bf16 %v1741, %v1739
  %v1754 = vpack.c.bf16 %v1742, %v1740
  %v1755 = vpack.c.bf16 %v1745, %v1743
  %v1756 = vpack.c.bf16 %v1746, %v1744
  %v1757 = vpack.c.bf16 %v1749, %v1747
  %v1758 = vpack.c.bf16 %v1750, %v1748
  %v1759 = vshra.s32 %v41, 4
  %v1760 = vshra.s32 %v42, 4
  %v1761 = vshra.s32 %v43, 4
  %v1762 = vshra.s32 %v44, 4
  %v1763 = vand.u32 %v41, 15
  %v1764 = vand.u32 %v42, 15
  %v1765 = vand.u32 %v43, 15
  %v1766 = vand.u32 %v44, 15
  %v1767 = vmul.u32 %v1763, 2
  %v1768 = vmul.u32 %v1764, 2
  %v1769 = vmul.u32 %v1765, 2
  %v1770 = vmul.u32 %v1766, 2
  %v1771 = vadd.s32 %v1767, 4294967295
  %v1772 = vadd.s32 %v1768, 4294967295
  %v1773 = vadd.s32 %v1769, 4294967295
  %v1774 = vadd.s32 %v1770, 4294967295
  %vm1775 = vcmp.ge.s32.totalorder %v1771, 0
  %vm1776 = vcmp.ge.s32.totalorder %v1772, 0
  %vm1777 = vcmp.ge.s32.totalorder %v1773, 0
  %vm1778 = vcmp.ge.s32.totalorder %v1774, 0
  %vm1779 = vcmp.lt.s32.totalorder %v1771, 32
  %vm1780 = vcmp.lt.s32.totalorder %v1772, 32
  %vm1781 = vcmp.lt.s32.totalorder %v1773, 32
  %vm1782 = vcmp.lt.s32.totalorder %v1774, 32
  %vm1783 = vmand %vm1775, %vm1779
  %vm1784 = vmand %vm1776, %vm1780
  %vm1785 = vmand %vm1777, %vm1781
  %vm1786 = vmand %vm1778, %vm1782
  %v1787 = vmul.u32 %v1759, 32
  %v1788 = vmul.u32 %v1760, 32
  %v1789 = vmul.u32 %v1761, 32
  %v1790 = vmul.u32 %v1762, 32
  %v1791 = vadd.s32 %v1787, %v1771
  %v1792 = vadd.s32 %v1788, %v1772
  %v1793 = vadd.s32 %v1789, %v1773
  %v1794 = vadd.s32 %v1790, %v1774
  %vm1795 = vcmp.eq.s32.totalorder %v50, %v1791
  %vm1796 = vcmp.eq.s32.totalorder %v50, %v1792
  %vm1797 = vcmp.eq.s32.totalorder %v50, %v1793
  %vm1798 = vcmp.eq.s32.totalorder %v50, %v1794
  %vm1799 = vmand %vm1795, %vm1783
  %vm1800 = vmand %vm1796, %vm1784
  %vm1801 = vmand %vm1797, %vm1785
  %vm1802 = vmand %vm1798, %vm1786
  %v1803 = vsel %vm1799, 1.0, 0.0
  %v1804 = vsel %vm1800, 1.0, 0.0
  %v1805 = vsel %vm1801, 1.0, 0.0
  %v1806 = vsel %vm1802, 1.0, 0.0
  %v1807 = vpack.c.bf16 %v1804, %v1803
  %v1808 = vpack.c.bf16 %v1806, %v1805
  %v1810 = vsel %vm622, %v1807, 0
  %v1813 = vsel %vm622, %v1808, 0
  %1815 = vmatprep.subr.bf16.mxu0 %v1752
  %1816 = vmatpush1.bf16.msra.mxu0 %v1751
  %1817 = vmatprep.subr.bf16.mxu0 %v1754
  %1818 = vmatpush1.bf16.msra.mxu0 %v1753
  %1819 = vmatprep.subr.bf16.mxu0 %v1756
  %1820 = vmatpush1.bf16.msra.mxu0 %v1755
  %1821 = vmatprep.subr.bf16.mxu0 %v1758
  %1822 = vmatpush1.bf16.msra.mxu0 %v1757
  %1823 = vmatprep.subr.bf16.mxu0 0
  %1824 = vmatpush1.bf16.msra.mxu0 0
  %1825 = vmatprep.subr.bf16.mxu0 0
  %1826 = vmatpush1.bf16.msra.mxu0 0
  %1827 = vmatprep.subr.bf16.mxu0 0
  %1828 = vmatpush1.bf16.msra.mxu0 0
  %1829 = vmatprep.subr.bf16.mxu0 0
  %1830 = vmatpush1.bf16.msra.mxu0 0
  %1831 = vmatprep.subr.bf16.mxu0 0
  %1832 = vmatpush1.bf16.msra.mxu0 0
  %1833 = vmatprep.subr.bf16.mxu0 0
  %1834 = vmatpush1.bf16.msra.mxu0 0
  %1835 = vmatprep.subr.bf16.mxu0 0
  %1836 = vmatpush1.bf16.msra.mxu0 0
  %1837 = vmatprep.subr.bf16.mxu0 0
  %1838 = vmatpush1.bf16.msra.mxu0 0
  %1839 = vmatprep.subr.bf16.mxu0 0
  %1840 = vmatpush1.bf16.msra.mxu0 0
  %1841 = vmatprep.subr.bf16.mxu0 0
  %1842 = vmatpush1.bf16.msra.mxu0 0
  %1843 = vmatprep.subr.bf16.mxu0 0
  %1844 = vmatpush1.bf16.msra.mxu0 0
  %1845 = vmatprep.subr.bf16.mxu0 0
  %1846 = vmatpush1.bf16.msra.mxu0 0
  %1847 = vmatprep.mubr.bf16.mxu0 0
  %1848 = vmatmul.mubr.bf16.gmra.mrb[0].mxu0 %v1810
  %v1849 = vpop.f32.mrb[0].mxu0
  %v1850 = vadd.f32 0.0, %v1849
  %v1851 = vpop.f32.mrb[0].mxu0
  %v1852 = vadd.f32 0.0, %v1851
  %v1853 = vpop.f32.mrb[0].mxu0
  %v1854 = vadd.f32 0.0, %v1853
  %v1855 = vpop.f32.mrb[0].mxu0
  %v1856 = vadd.f32 0.0, %v1855
  %1857 = vmatprep.mubr.bf16.mxu0 0
  %1858 = vmatmul.mubr.bf16.gmra.mrb[0].mxu0 %v1813
  %v1859 = vpop.f32.mrb[0].mxu0
  %v1860 = vadd.f32 0.0, %v1859
  %v1861 = vpop.f32.mrb[0].mxu0
  %v1862 = vadd.f32 0.0, %v1861
  %v1863 = vpop.f32.mrb[0].mxu0
  %v1864 = vadd.f32 0.0, %v1863
  %v1865 = vpop.f32.mrb[0].mxu0
  %v1866 = vadd.f32 0.0, %v1865
  %1867 = vdwg.mxu0
  %v1868 = vpack.c.bf16 %v1854, %v1850
  %v1869 = vpack.c.bf16 %v1856, %v1852
  %v1870 = vpack.c.bf16 %v1864, %v1860
  %v1871 = vpack.c.bf16 %v1866, %v1862
  %v1872 = vld [vmem:[%s2] sm:$0xff]
  %v1873 = vld [vmem:[%s2 + $0x8] sm:$0xff]
  %v1874 = vld [vmem:[%s2 + $0x10] sm:$0xff]
  %v1875 = vld [vmem:[%s2 + $0x18] sm:$0xff]
  %v1876 = vld [vmem:[%s2 + $0x20] sm:$0xff]
  %v1877 = vld [vmem:[%s2 + $0x28] sm:$0xff]
  %v1878 = vld [vmem:[%s2 + $0x30] sm:$0xff]
  %v1879 = vld [vmem:[%s2 + $0x38] sm:$0xff]
  %v1880 = vld [vmem:[%s2 + $0x40] sm:$0xff]
  %v1881 = vld [vmem:[%s2 + $0x48] sm:$0xff]
  %v1882 = vld [vmem:[%s2 + $0x50] sm:$0xff]
  %v1883 = vld [vmem:[%s2 + $0x58] sm:$0xff]
  %v1884 = vld [vmem:[%s2 + $0x60] sm:$0xff]
  %v1885 = vld [vmem:[%s2 + $0x68] sm:$0xff]
  %v1886 = vld [vmem:[%s2 + $0x70] sm:$0xff]
  %v1887 = vld [vmem:[%s2 + $0x78] sm:$0xff]
  %v1888 = vld [vmem:[%s2 + $0x80] sm:$0xff]
  %v1889 = vld [vmem:[%s2 + $0x88] sm:$0xff]
  %v1890 = vld [vmem:[%s2 + $0x90] sm:$0xff]
  %v1891 = vld [vmem:[%s2 + $0x98] sm:$0xff]
  %v1892 = vld [vmem:[%s2 + $0xa0] sm:$0xff]
  %v1893 = vld [vmem:[%s2 + $0xa8] sm:$0xff]
  %v1894 = vld [vmem:[%s2 + $0xb0] sm:$0xff]
  %v1895 = vld [vmem:[%s2 + $0xb8] sm:$0xff]
  %v1896 = vld [vmem:[%s2 + $0xc0] sm:$0xff]
  %v1897 = vld [vmem:[%s2 + $0xc8] sm:$0xff]
  %v1898 = vld [vmem:[%s2 + $0xd0] sm:$0xff]
  %v1899 = vld [vmem:[%s2 + $0xd8] sm:$0xff]
  %v1900 = vld [vmem:[%s2 + $0xe0] sm:$0xff]
  %v1901 = vld [vmem:[%s2 + $0xe8] sm:$0xff]
  %v1902 = vld [vmem:[%s2 + $0xf0] sm:$0xff]
  %v1903 = vld [vmem:[%s2 + $0xf8] sm:$0xff]
  %vm1904 = vcmp.ge.s32.totalorder %v1767, 0
  %vm1905 = vcmp.ge.s32.totalorder %v1768, 0
  %vm1906 = vcmp.ge.s32.totalorder %v1769, 0
  %vm1907 = vcmp.ge.s32.totalorder %v1770, 0
  %vm1908 = vcmp.lt.s32.totalorder %v1767, 32
  %vm1909 = vcmp.lt.s32.totalorder %v1768, 32
  %vm1910 = vcmp.lt.s32.totalorder %v1769, 32
  %vm1911 = vcmp.lt.s32.totalorder %v1770, 32
  %vm1912 = vmand %vm1904, %vm1908
  %vm1913 = vmand %vm1905, %vm1909
  %vm1914 = vmand %vm1906, %vm1910
  %vm1915 = vmand %vm1907, %vm1911
  %v1916 = vadd.s32 %v1787, %v1767
  %v1917 = vadd.s32 %v1788, %v1768
  %v1918 = vadd.s32 %v1789, %v1769
  %v1919 = vadd.s32 %v1790, %v1770
  %vm1920 = vcmp.eq.s32.totalorder %v50, %v1916
  %vm1921 = vcmp.eq.s32.totalorder %v50, %v1917
  %vm1922 = vcmp.eq.s32.totalorder %v50, %v1918
  %vm1923 = vcmp.eq.s32.totalorder %v50, %v1919
  %vm1924 = vmand %vm1920, %vm1912
  %vm1925 = vmand %vm1921, %vm1913
  %vm1926 = vmand %vm1922, %vm1914
  %vm1927 = vmand %vm1923, %vm1915
  %v1928 = vsel %vm1924, 1.0, 0.0
  %v1929 = vsel %vm1925, 1.0, 0.0
  %v1930 = vsel %vm1926, 1.0, 0.0
  %v1931 = vsel %vm1927, 1.0, 0.0
  %v1932 = vpack.c.bf16 %v1929, %v1928
  %v1933 = vpack.c.bf16 %v1931, %v1930
  %v1935 = vsel %vm622, %v1932, 0
  %v1938 = vsel %vm622, %v1933, 0
  %1940 = vmatprep.subr.bf16.mxu0 %v1752
  %1941 = vmatpush1.bf16.msra.mxu0 %v1751
  %1942 = vmatprep.subr.bf16.mxu0 %v1754
  %1943 = vmatpush1.bf16.msra.mxu0 %v1753
  %1944 = vmatprep.subr.bf16.mxu0 %v1756
  %1945 = vmatpush1.bf16.msra.mxu0 %v1755
  %1946 = vmatprep.subr.bf16.mxu0 %v1758
  %1947 = vmatpush1.bf16.msra.mxu0 %v1757
  %1948 = vmatprep.subr.bf16.mxu0 0
  %1949 = vmatpush1.bf16.msra.mxu0 0
  %1950 = vmatprep.subr.bf16.mxu0 0
  %1951 = vmatpush1.bf16.msra.mxu0 0
  %1952 = vmatprep.subr.bf16.mxu0 0
  %1953 = vmatpush1.bf16.msra.mxu0 0
  %1954 = vmatprep.subr.bf16.mxu0 0
  %1955 = vmatpush1.bf16.msra.mxu0 0
  %1956 = vmatprep.subr.bf16.mxu0 0
  %1957 = vmatpush1.bf16.msra.mxu0 0
  %1958 = vmatprep.subr.bf16.mxu0 0
  %1959 = vmatpush1.bf16.msra.mxu0 0
  %1960 = vmatprep.subr.bf16.mxu0 0
  %1961 = vmatpush1.bf16.msra.mxu0 0
  %1962 = vmatprep.subr.bf16.mxu0 0
  %1963 = vmatpush1.bf16.msra.mxu0 0
  %1964 = vmatprep.subr.bf16.mxu0 0
  %1965 = vmatpush1.bf16.msra.mxu0 0
  %1966 = vmatprep.subr.bf16.mxu0 0
  %1967 = vmatpush1.bf16.msra.mxu0 0
  %1968 = vmatprep.subr.bf16.mxu0 0
  %1969 = vmatpush1.bf16.msra.mxu0 0
  %1970 = vmatprep.subr.bf16.mxu0 0
  %1971 = vmatpush1.bf16.msra.mxu0 0
  %1972 = vmatprep.mubr.bf16.mxu0 0
  %1973 = vmatmul.mubr.bf16.gmra.mrb[0].mxu0 %v1935
  %v1974 = vpop.f32.mrb[0].mxu0
  %v1975 = vadd.f32 0.0, %v1974
  %v1976 = vpop.f32.mrb[0].mxu0
  %v1977 = vadd.f32 0.0, %v1976
  %v1978 = vpop.f32.mrb[0].mxu0
  %v1979 = vadd.f32 0.0, %v1978
  %v1980 = vpop.f32.mrb[0].mxu0
  %v1981 = vadd.f32 0.0, %v1980
  %1982 = vmatprep.mubr.bf16.mxu0 0
  %1983 = vmatmul.mubr.bf16.gmra.mrb[0].mxu0 %v1938
  %v1984 = vpop.f32.mrb[0].mxu0
  %v1985 = vadd.f32 0.0, %v1984
  %v1986 = vpop.f32.mrb[0].mxu0
  %v1987 = vadd.f32 0.0, %v1986
  %v1988 = vpop.f32.mrb[0].mxu0
  %v1989 = vadd.f32 0.0, %v1988
  %v1990 = vpop.f32.mrb[0].mxu0
  %v1991 = vadd.f32 0.0, %v1990
  %1992 = vdwg.mxu0
  %v1993 = vpack.c.bf16 %v1979, %v1975
  %v1994 = vpack.c.bf16 %v1981, %v1977
  %v1995 = vpack.c.bf16 %v1989, %v1985
  %v1996 = vpack.c.bf16 %v1991, %v1987
  %s1997 = scalar_lea.vmem %s2, 256
  %v1998 = vld [vmem:[%s1997] sm:$0xff]
  %v1999 = vld [vmem:[%s1997 + $0x8] sm:$0xff]
  %v2000 = vld [vmem:[%s1997 + $0x10] sm:$0xff]
  %v2001 = vld [vmem:[%s1997 + $0x18] sm:$0xff]
  %v2002 = vld [vmem:[%s1997 + $0x20] sm:$0xff]
  %v2003 = vld [vmem:[%s1997 + $0x28] sm:$0xff]
  %v2004 = vld [vmem:[%s1997 + $0x30] sm:$0xff]
  %v2005 = vld [vmem:[%s1997 + $0x38] sm:$0xff]
  %v2006 = vld [vmem:[%s1997 + $0x40] sm:$0xff]
  %v2007 = vld [vmem:[%s1997 + $0x48] sm:$0xff]
  %v2008 = vld [vmem:[%s1997 + $0x50] sm:$0xff]
  %v2009 = vld [vmem:[%s1997 + $0x58] sm:$0xff]
  %v2010 = vld [vmem:[%s1997 + $0x60] sm:$0xff]
  %v2011 = vld [vmem:[%s1997 + $0x68] sm:$0xff]
  %v2012 = vld [vmem:[%s1997 + $0x70] sm:$0xff]
  %v2013 = vld [vmem:[%s1997 + $0x78] sm:$0xff]
  %v2014 = vld [vmem:[%s1997 + $0x80] sm:$0xff]
  %v2015 = vld [vmem:[%s1997 + $0x88] sm:$0xff]
  %v2016 = vld [vmem:[%s1997 + $0x90] sm:$0xff]
  %v2017 = vld [vmem:[%s1997 + $0x98] sm:$0xff]
  %v2018 = vld [vmem:[%s1997 + $0xa0] sm:$0xff]
  %v2019 = vld [vmem:[%s1997 + $0xa8] sm:$0xff]
  %v2020 = vld [vmem:[%s1997 + $0xb0] sm:$0xff]
  %v2021 = vld [vmem:[%s1997 + $0xb8] sm:$0xff]
  %v2022 = vld [vmem:[%s1997 + $0xc0] sm:$0xff]
  %v2023 = vld [vmem:[%s1997 + $0xc8] sm:$0xff]
  %v2024 = vld [vmem:[%s1997 + $0xd0] sm:$0xff]
  %v2025 = vld [vmem:[%s1997 + $0xd8] sm:$0xff]
  %v2026 = vld [vmem:[%s1997 + $0xe0] sm:$0xff]
  %v2027 = vld [vmem:[%s1997 + $0xe8] sm:$0xff]
  %v2028 = vld [vmem:[%s1997 + $0xf0] sm:$0xff]
  %v2029 = vld [vmem:[%s1997 + $0xf8] sm:$0xff]
  %v2062 = vunpack.c.l.b16 %v1998
  %v2063 = vunpack.c.h.b16 %v1998
  %v2064 = vunpack.c.l.b16 %v1999
  %v2065 = vunpack.c.h.b16 %v1999
  %v2066 = vunpack.c.l.b16 %v2000
  %v2067 = vunpack.c.h.b16 %v2000
  %v2068 = vunpack.c.l.b16 %v2001
  %v2069 = vunpack.c.h.b16 %v2001
  %v2070 = vunpack.c.l.b16 %v2002
  %v2071 = vunpack.c.h.b16 %v2002
  %v2072 = vunpack.c.l.b16 %v2003
  %v2073 = vunpack.c.h.b16 %v2003
  %v2074 = vunpack.c.l.b16 %v2004
  %v2075 = vunpack.c.h.b16 %v2004
  %v2076 = vunpack.c.l.b16 %v2005
  %v2077 = vunpack.c.h.b16 %v2005
  %v2078 = vunpack.c.l.b16 %v2006
  %v2079 = vunpack.c.h.b16 %v2006
  %v2080 = vunpack.c.l.b16 %v2007
  %v2081 = vunpack.c.h.b16 %v2007
  %v2082 = vunpack.c.l.b16 %v2008
  %v2083 = vunpack.c.h.b16 %v2008
  %v2084 = vunpack.c.l.b16 %v2009
  %v2085 = vunpack.c.h.b16 %v2009
  %v2086 = vunpack.c.l.b16 %v2010
  %v2087 = vunpack.c.h.b16 %v2010
  %v2088 = vunpack.c.l.b16 %v2011
  %v2089 = vunpack.c.h.b16 %v2011
  %v2090 = vunpack.c.l.b16 %v2012
  %v2091 = vunpack.c.h.b16 %v2012
  %v2092 = vunpack.c.l.b16 %v2013
  %v2093 = vunpack.c.h.b16 %v2013
  %v2094 = vunpack.c.l.b16 %v2014
  %v2095 = vunpack.c.h.b16 %v2014
  %v2096 = vunpack.c.l.b16 %v2015
  %v2097 = vunpack.c.h.b16 %v2015
  %v2098 = vunpack.c.l.b16 %v2016
  %v2099 = vunpack.c.h.b16 %v2016
  %v2100 = vunpack.c.l.b16 %v2017
  %v2101 = vunpack.c.h.b16 %v2017
  %v2102 = vunpack.c.l.b16 %v2018
  %v2103 = vunpack.c.h.b16 %v2018
  %v2104 = vunpack.c.l.b16 %v2019
  %v2105 = vunpack.c.h.b16 %v2019
  %v2106 = vunpack.c.l.b16 %v2020
  %v2107 = vunpack.c.h.b16 %v2020
  %v2108 = vunpack.c.l.b16 %v2021
  %v2109 = vunpack.c.h.b16 %v2021
  %v2110 = vunpack.c.l.b16 %v2022
  %v2111 = vunpack.c.h.b16 %v2022
  %v2112 = vunpack.c.l.b16 %v2023
  %v2113 = vunpack.c.h.b16 %v2023
  %v2114 = vunpack.c.l.b16 %v2024
  %v2115 = vunpack.c.h.b16 %v2024
  %v2116 = vunpack.c.l.b16 %v2025
  %v2117 = vunpack.c.h.b16 %v2025
  %v2118 = vunpack.c.l.b16 %v2026
  %v2119 = vunpack.c.h.b16 %v2026
  %v2120 = vunpack.c.l.b16 %v2027
  %v2121 = vunpack.c.h.b16 %v2027
  %v2122 = vunpack.c.l.b16 %v2028
  %v2123 = vunpack.c.h.b16 %v2028
  %v2124 = vunpack.c.l.b16 %v2029
  %v2125 = vunpack.c.h.b16 %v2029
  %v2126 = vpack.c.b16 %v2064, %v2062
  %v2127 = vpack.c.b16 %v2065, %v2063
  %v2128 = vpack.c.b16 %v2068, %v2066
  %v2129 = vpack.c.b16 %v2069, %v2067
  %v2130 = vpack.c.b16 %v2072, %v2070
  %v2131 = vpack.c.b16 %v2073, %v2071
  %v2132 = vpack.c.b16 %v2076, %v2074
  %v2133 = vpack.c.b16 %v2077, %v2075
  %v2134 = vpack.c.b16 %v2080, %v2078
  %v2135 = vpack.c.b16 %v2081, %v2079
  %v2136 = vpack.c.b16 %v2084, %v2082
  %v2137 = vpack.c.b16 %v2085, %v2083
  %v2138 = vpack.c.b16 %v2088, %v2086
  %v2139 = vpack.c.b16 %v2089, %v2087
  %v2140 = vpack.c.b16 %v2092, %v2090
  %v2141 = vpack.c.b16 %v2093, %v2091
  %v2142 = vpack.c.b16 %v2096, %v2094
  %v2143 = vpack.c.b16 %v2097, %v2095
  %v2144 = vpack.c.b16 %v2100, %v2098
  %v2145 = vpack.c.b16 %v2101, %v2099
  %v2146 = vpack.c.b16 %v2104, %v2102
  %v2147 = vpack.c.b16 %v2105, %v2103
  %v2148 = vpack.c.b16 %v2108, %v2106
  %v2149 = vpack.c.b16 %v2109, %v2107
  %v2150 = vpack.c.b16 %v2112, %v2110
  %v2151 = vpack.c.b16 %v2113, %v2111
  %v2152 = vpack.c.b16 %v2116, %v2114
  %v2153 = vpack.c.b16 %v2117, %v2115
  %v2154 = vpack.c.b16 %v2120, %v2118
  %v2155 = vpack.c.b16 %v2121, %v2119
  %v2156 = vpack.c.b16 %v2124, %v2122
  %v2157 = vpack.c.b16 %v2125, %v2123
  %2190 = vmatprep.subr.bf16.mxu0 %v2127
  %2191 = vmatpush1.bf16.msra.mxu0 %v2126
  %2192 = vmatprep.subr.bf16.mxu0 %v2129
  %2193 = vmatpush1.bf16.msra.mxu0 %v2128
  %2194 = vmatprep.subr.bf16.mxu0 %v2131
  %2195 = vmatpush1.bf16.msra.mxu0 %v2130
  %2196 = vmatprep.subr.bf16.mxu0 %v2133
  %2197 = vmatpush1.bf16.msra.mxu0 %v2132
  %2198 = vmatprep.subr.bf16.mxu0 %v2135
  %2199 = vmatpush1.bf16.msra.mxu0 %v2134
  %2200 = vmatprep.subr.bf16.mxu0 %v2137
  %2201 = vmatpush1.bf16.msra.mxu0 %v2136
  %2202 = vmatprep.subr.bf16.mxu0 %v2139
  %2203 = vmatpush1.bf16.msra.mxu0 %v2138
  %2204 = vmatprep.subr.bf16.mxu0 %v2141
  %2205 = vmatpush1.bf16.msra.mxu0 %v2140
  %2206 = vmatprep.subr.bf16.mxu0 %v2143
  %2207 = vmatpush1.bf16.msra.mxu0 %v2142
  %2208 = vmatprep.subr.bf16.mxu0 %v2145
  %2209 = vmatpush1.bf16.msra.mxu0 %v2144
  %2210 = vmatprep.subr.bf16.mxu0 %v2147
  %2211 = vmatpush1.bf16.msra.mxu0 %v2146
  %2212 = vmatprep.subr.bf16.mxu0 %v2149
  %2213 = vmatpush1.bf16.msra.mxu0 %v2148
  %2214 = vmatprep.subr.bf16.mxu0 %v2151
  %2215 = vmatpush1.bf16.msra.mxu0 %v2150
  %2216 = vmatprep.subr.bf16.mxu0 %v2153
  %2217 = vmatpush1.bf16.msra.mxu0 %v2152
  %2218 = vmatprep.subr.bf16.mxu0 %v2155
  %2219 = vmatpush1.bf16.msra.mxu0 %v2154
  %2220 = vmatprep.subr.bf16.mxu0 %v2157
  %2221 = vmatpush1.bf16.msra.mxu0 %v2156
  %2222 = vmatprep.mubr.bf16.mxu0 %v1994
  %2223 = vmatmul.mubr.bf16.gmra.mrb[0].mxu0 %v1993
  %v2224 = vpop.f32.mrb[0].mxu0
  %v2225 = vadd.f32 0.0, %v2224
  %v2226 = vpop.f32.mrb[0].mxu0
  %v2227 = vadd.f32 0.0, %v2226
  %v2228 = vpop.f32.mrb[0].mxu0
  %v2229 = vadd.f32 0.0, %v2228
  %v2230 = vpop.f32.mrb[0].mxu0
  %v2231 = vadd.f32 0.0, %v2230
  %2232 = vmatprep.mubr.bf16.mxu0 %v1996
  %2233 = vmatmul.mubr.bf16.gmra.mrb[0].mxu0 %v1995
  %v2234 = vpop.f32.mrb[0].mxu0
  %v2235 = vadd.f32 0.0, %v2234
  %v2236 = vpop.f32.mrb[0].mxu0
  %v2237 = vadd.f32 0.0, %v2236
  %v2238 = vpop.f32.mrb[0].mxu0
  %v2239 = vadd.f32 0.0, %v2238
  %v2240 = vpop.f32.mrb[0].mxu0
  %v2241 = vadd.f32 0.0, %v2240
  %2242 = vdwg.mxu0
  %v2275 = vunpack.c.l.b16 %v1872
  %v2276 = vunpack.c.h.b16 %v1872
  %v2277 = vunpack.c.l.b16 %v1873
  %v2278 = vunpack.c.h.b16 %v1873
  %v2279 = vunpack.c.l.b16 %v1874
  %v2280 = vunpack.c.h.b16 %v1874
  %v2281 = vunpack.c.l.b16 %v1875
  %v2282 = vunpack.c.h.b16 %v1875
  %v2283 = vunpack.c.l.b16 %v1876
  %v2284 = vunpack.c.h.b16 %v1876
  %v2285 = vunpack.c.l.b16 %v1877
  %v2286 = vunpack.c.h.b16 %v1877
  %v2287 = vunpack.c.l.b16 %v1878
  %v2288 = vunpack.c.h.b16 %v1878
  %v2289 = vunpack.c.l.b16 %v1879
  %v2290 = vunpack.c.h.b16 %v1879
  %v2291 = vunpack.c.l.b16 %v1880
  %v2292 = vunpack.c.h.b16 %v1880
  %v2293 = vunpack.c.l.b16 %v1881
  %v2294 = vunpack.c.h.b16 %v1881
  %v2295 = vunpack.c.l.b16 %v1882
  %v2296 = vunpack.c.h.b16 %v1882
  %v2297 = vunpack.c.l.b16 %v1883
  %v2298 = vunpack.c.h.b16 %v1883
  %v2299 = vunpack.c.l.b16 %v1884
  %v2300 = vunpack.c.h.b16 %v1884
  %v2301 = vunpack.c.l.b16 %v1885
  %v2302 = vunpack.c.h.b16 %v1885
  %v2303 = vunpack.c.l.b16 %v1886
  %v2304 = vunpack.c.h.b16 %v1886
  %v2305 = vunpack.c.l.b16 %v1887
  %v2306 = vunpack.c.h.b16 %v1887
  %v2307 = vunpack.c.l.b16 %v1888
  %v2308 = vunpack.c.h.b16 %v1888
  %v2309 = vunpack.c.l.b16 %v1889
  %v2310 = vunpack.c.h.b16 %v1889
  %v2311 = vunpack.c.l.b16 %v1890
  %v2312 = vunpack.c.h.b16 %v1890
  %v2313 = vunpack.c.l.b16 %v1891
  %v2314 = vunpack.c.h.b16 %v1891
  %v2315 = vunpack.c.l.b16 %v1892
  %v2316 = vunpack.c.h.b16 %v1892
  %v2317 = vunpack.c.l.b16 %v1893
  %v2318 = vunpack.c.h.b16 %v1893
  %v2319 = vunpack.c.l.b16 %v1894
  %v2320 = vunpack.c.h.b16 %v1894
  %v2321 = vunpack.c.l.b16 %v1895
  %v2322 = vunpack.c.h.b16 %v1895
  %v2323 = vunpack.c.l.b16 %v1896
  %v2324 = vunpack.c.h.b16 %v1896
  %v2325 = vunpack.c.l.b16 %v1897
  %v2326 = vunpack.c.h.b16 %v1897
  %v2327 = vunpack.c.l.b16 %v1898
  %v2328 = vunpack.c.h.b16 %v1898
  %v2329 = vunpack.c.l.b16 %v1899
  %v2330 = vunpack.c.h.b16 %v1899
  %v2331 = vunpack.c.l.b16 %v1900
  %v2332 = vunpack.c.h.b16 %v1900
  %v2333 = vunpack.c.l.b16 %v1901
  %v2334 = vunpack.c.h.b16 %v1901
  %v2335 = vunpack.c.l.b16 %v1902
  %v2336 = vunpack.c.h.b16 %v1902
  %v2337 = vunpack.c.l.b16 %v1903
  %v2338 = vunpack.c.h.b16 %v1903
  %v2339 = vpack.c.b16 %v2277, %v2275
  %v2340 = vpack.c.b16 %v2278, %v2276
  %v2341 = vpack.c.b16 %v2281, %v2279
  %v2342 = vpack.c.b16 %v2282, %v2280
  %v2343 = vpack.c.b16 %v2285, %v2283
  %v2344 = vpack.c.b16 %v2286, %v2284
  %v2345 = vpack.c.b16 %v2289, %v2287
  %v2346 = vpack.c.b16 %v2290, %v2288
  %v2347 = vpack.c.b16 %v2293, %v2291
  %v2348 = vpack.c.b16 %v2294, %v2292
  %v2349 = vpack.c.b16 %v2297, %v2295
  %v2350 = vpack.c.b16 %v2298, %v2296
  %v2351 = vpack.c.b16 %v2301, %v2299
  %v2352 = vpack.c.b16 %v2302, %v2300
  %v2353 = vpack.c.b16 %v2305, %v2303
  %v2354 = vpack.c.b16 %v2306, %v2304
  %v2355 = vpack.c.b16 %v2309, %v2307
  %v2356 = vpack.c.b16 %v2310, %v2308
  %v2357 = vpack.c.b16 %v2313, %v2311
  %v2358 = vpack.c.b16 %v2314, %v2312
  %v2359 = vpack.c.b16 %v2317, %v2315
  %v2360 = vpack.c.b16 %v2318, %v2316
  %v2361 = vpack.c.b16 %v2321, %v2319
  %v2362 = vpack.c.b16 %v2322, %v2320
  %v2363 = vpack.c.b16 %v2325, %v2323
  %v2364 = vpack.c.b16 %v2326, %v2324
  %v2365 = vpack.c.b16 %v2329, %v2327
  %v2366 = vpack.c.b16 %v2330, %v2328
  %v2367 = vpack.c.b16 %v2333, %v2331
  %v2368 = vpack.c.b16 %v2334, %v2332
  %v2369 = vpack.c.b16 %v2337, %v2335
  %v2370 = vpack.c.b16 %v2338, %v2336
  %2403 = vmatprep.subr.bf16.mxu0 %v2340
  %2404 = vmatpush1.bf16.msra.mxu0 %v2339
  %2405 = vmatprep.subr.bf16.mxu0 %v2342
  %2406 = vmatpush1.bf16.msra.mxu0 %v2341
  %2407 = vmatprep.subr.bf16.mxu0 %v2344
  %2408 = vmatpush1.bf16.msra.mxu0 %v2343
  %2409 = vmatprep.subr.bf16.mxu0 %v2346
  %2410 = vmatpush1.bf16.msra.mxu0 %v2345
  %2411 = vmatprep.subr.bf16.mxu0 %v2348
  %2412 = vmatpush1.bf16.msra.mxu0 %v2347
  %2413 = vmatprep.subr.bf16.mxu0 %v2350
  %2414 = vmatpush1.bf16.msra.mxu0 %v2349
  %2415 = vmatprep.subr.bf16.mxu0 %v2352
  %2416 = vmatpush1.bf16.msra.mxu0 %v2351
  %2417 = vmatprep.subr.bf16.mxu0 %v2354
  %2418 = vmatpush1.bf16.msra.mxu0 %v2353
  %2419 = vmatprep.subr.bf16.mxu0 %v2356
  %2420 = vmatpush1.bf16.msra.mxu0 %v2355
  %2421 = vmatprep.subr.bf16.mxu0 %v2358
  %2422 = vmatpush1.bf16.msra.mxu0 %v2357
  %2423 = vmatprep.subr.bf16.mxu0 %v2360
  %2424 = vmatpush1.bf16.msra.mxu0 %v2359
  %2425 = vmatprep.subr.bf16.mxu0 %v2362
  %2426 = vmatpush1.bf16.msra.mxu0 %v2361
  %2427 = vmatprep.subr.bf16.mxu0 %v2364
  %2428 = vmatpush1.bf16.msra.mxu0 %v2363
  %2429 = vmatprep.subr.bf16.mxu0 %v2366
  %2430 = vmatpush1.bf16.msra.mxu0 %v2365
  %2431 = vmatprep.subr.bf16.mxu0 %v2368
  %2432 = vmatpush1.bf16.msra.mxu0 %v2367
  %2433 = vmatprep.subr.bf16.mxu0 %v2370
  %2434 = vmatpush1.bf16.msra.mxu0 %v2369
  %2435 = vmatprep.mubr.bf16.mxu0 %v1869
  %2436 = vmatmul.mubr.bf16.gmra.mrb[0].mxu0 %v1868
  %v2437 = vpop.f32.mrb[0].mxu0
  %v2438 = vadd.f32 %v2225, %v2437
  %v2439 = vpop.f32.mrb[0].mxu0
  %v2440 = vadd.f32 %v2227, %v2439
  %v2441 = vpop.f32.mrb[0].mxu0
  %v2442 = vadd.f32 %v2229, %v2441
  %v2443 = vpop.f32.mrb[0].mxu0
  %v2444 = vadd.f32 %v2231, %v2443
  %2445 = vmatprep.mubr.bf16.mxu0 %v1871
  %2446 = vmatmul.mubr.bf16.gmra.mrb[0].mxu0 %v1870
  %v2447 = vpop.f32.mrb[0].mxu0
  %v2448 = vadd.f32 %v2235, %v2447
  %v2449 = vpop.f32.mrb[0].mxu0
  %v2450 = vadd.f32 %v2237, %v2449
  %v2451 = vpop.f32.mrb[0].mxu0
  %v2452 = vadd.f32 %v2239, %v2451
  %v2453 = vpop.f32.mrb[0].mxu0
  %v2454 = vadd.f32 %v2241, %v2453
  %2455 = vdwg.mxu0
  %v2456 = vadd.s32 %v1767, 1
  %v2457 = vadd.s32 %v1768, 1
  %v2458 = vadd.s32 %v1769, 1
  %v2459 = vadd.s32 %v1770, 1
  %vm2460 = vcmp.ge.s32.totalorder %v2456, 0
  %vm2461 = vcmp.ge.s32.totalorder %v2457, 0
  %vm2462 = vcmp.ge.s32.totalorder %v2458, 0
  %vm2463 = vcmp.ge.s32.totalorder %v2459, 0
  %vm2464 = vcmp.lt.s32.totalorder %v2456, 32
  %vm2465 = vcmp.lt.s32.totalorder %v2457, 32
  %vm2466 = vcmp.lt.s32.totalorder %v2458, 32
  %vm2467 = vcmp.lt.s32.totalorder %v2459, 32
  %vm2468 = vmand %vm2460, %vm2464
  %vm2469 = vmand %vm2461, %vm2465
  %vm2470 = vmand %vm2462, %vm2466
  %vm2471 = vmand %vm2463, %vm2467
  %v2472 = vadd.s32 %v1787, %v2456
  %v2473 = vadd.s32 %v1788, %v2457
  %v2474 = vadd.s32 %v1789, %v2458
  %v2475 = vadd.s32 %v1790, %v2459
  %vm2476 = vcmp.eq.s32.totalorder %v50, %v2472
  %vm2477 = vcmp.eq.s32.totalorder %v50, %v2473
  %vm2478 = vcmp.eq.s32.totalorder %v50, %v2474
  %vm2479 = vcmp.eq.s32.totalorder %v50, %v2475
  %vm2480 = vmand %vm2476, %vm2468
  %vm2481 = vmand %vm2477, %vm2469
  %vm2482 = vmand %vm2478, %vm2470
  %vm2483 = vmand %vm2479, %vm2471
  %v2484 = vsel %vm2480, 1.0, 0.0
  %v2485 = vsel %vm2481, 1.0, 0.0
  %v2486 = vsel %vm2482, 1.0, 0.0
  %v2487 = vsel %vm2483, 1.0, 0.0
  %v2488 = vpack.c.bf16 %v2485, %v2484
  %v2489 = vpack.c.bf16 %v2487, %v2486
  %v2491 = vsel %vm622, %v2488, 0
  %v2494 = vsel %vm622, %v2489, 0
  %2496 = vmatprep.subr.bf16.mxu0 %v1752
  %2497 = vmatpush1.bf16.msra.mxu0 %v1751
  %2498 = vmatprep.subr.bf16.mxu0 %v1754
  %2499 = vmatpush1.bf16.msra.mxu0 %v1753
  %2500 = vmatprep.subr.bf16.mxu0 %v1756
  %2501 = vmatpush1.bf16.msra.mxu0 %v1755
  %2502 = vmatprep.subr.bf16.mxu0 %v1758
  %2503 = vmatpush1.bf16.msra.mxu0 %v1757
  %2504 = vmatprep.subr.bf16.mxu0 0
  %2505 = vmatpush1.bf16.msra.mxu0 0
  %2506 = vmatprep.subr.bf16.mxu0 0
  %2507 = vmatpush1.bf16.msra.mxu0 0
  %2508 = vmatprep.subr.bf16.mxu0 0
  %2509 = vmatpush1.bf16.msra.mxu0 0
  %2510 = vmatprep.subr.bf16.mxu0 0
  %2511 = vmatpush1.bf16.msra.mxu0 0
  %2512 = vmatprep.subr.bf16.mxu0 0
  %2513 = vmatpush1.bf16.msra.mxu0 0
  %2514 = vmatprep.subr.bf16.mxu0 0
  %2515 = vmatpush1.bf16.msra.mxu0 0
  %2516 = vmatprep.subr.bf16.mxu0 0
  %2517 = vmatpush1.bf16.msra.mxu0 0
  %2518 = vmatprep.subr.bf16.mxu0 0
  %2519 = vmatpush1.bf16.msra.mxu0 0
  %2520 = vmatprep.subr.bf16.mxu0 0
  %2521 = vmatpush1.bf16.msra.mxu0 0
  %2522 = vmatprep.subr.bf16.mxu0 0
  %2523 = vmatpush1.bf16.msra.mxu0 0
  %2524 = vmatprep.subr.bf16.mxu0 0
  %2525 = vmatpush1.bf16.msra.mxu0 0
  %2526 = vmatprep.subr.bf16.mxu0 0
  %2527 = vmatpush1.bf16.msra.mxu0 0
  %2528 = vmatprep.mubr.bf16.mxu0 0
  %2529 = vmatmul.mubr.bf16.gmra.mrb[0].mxu0 %v2491
  %v2530 = vpop.f32.mrb[0].mxu0
  %v2531 = vadd.f32 0.0, %v2530
  %v2532 = vpop.f32.mrb[0].mxu0
  %v2533 = vadd.f32 0.0, %v2532
  %v2534 = vpop.f32.mrb[0].mxu0
  %v2535 = vadd.f32 0.0, %v2534
  %v2536 = vpop.f32.mrb[0].mxu0
  %v2537 = vadd.f32 0.0, %v2536
  %2538 = vmatprep.mubr.bf16.mxu0 0
  %2539 = vmatmul.mubr.bf16.gmra.mrb[0].mxu0 %v2494
  %v2540 = vpop.f32.mrb[0].mxu0
  %v2541 = vadd.f32 0.0, %v2540
  %v2542 = vpop.f32.mrb[0].mxu0
  %v2543 = vadd.f32 0.0, %v2542
  %v2544 = vpop.f32.mrb[0].mxu0
  %v2545 = vadd.f32 0.0, %v2544
  %v2546 = vpop.f32.mrb[0].mxu0
  %v2547 = vadd.f32 0.0, %v2546
  %2548 = vdwg.mxu0
  %v2549 = vpack.c.bf16 %v2535, %v2531
  %v2550 = vpack.c.bf16 %v2537, %v2533
  %v2551 = vpack.c.bf16 %v2545, %v2541
  %v2552 = vpack.c.bf16 %v2547, %v2543
  %s2553 = scalar_lea.vmem %s2, 512
  %v2554 = vld [vmem:[%s2553] sm:$0xff]
  %v2555 = vld [vmem:[%s2553 + $0x8] sm:$0xff]
  %v2556 = vld [vmem:[%s2553 + $0x10] sm:$0xff]
  %v2557 = vld [vmem:[%s2553 + $0x18] sm:$0xff]
  %v2558 = vld [vmem:[%s2553 + $0x20] sm:$0xff]
  %v2559 = vld [vmem:[%s2553 + $0x28] sm:$0xff]
  %v2560 = vld [vmem:[%s2553 + $0x30] sm:$0xff]
  %v2561 = vld [vmem:[%s2553 + $0x38] sm:$0xff]
  %v2562 = vld [vmem:[%s2553 + $0x40] sm:$0xff]
  %v2563 = vld [vmem:[%s2553 + $0x48] sm:$0xff]
  %v2564 = vld [vmem:[%s2553 + $0x50] sm:$0xff]
  %v2565 = vld [vmem:[%s2553 + $0x58] sm:$0xff]
  %v2566 = vld [vmem:[%s2553 + $0x60] sm:$0xff]
  %v2567 = vld [vmem:[%s2553 + $0x68] sm:$0xff]
  %v2568 = vld [vmem:[%s2553 + $0x70] sm:$0xff]
  %v2569 = vld [vmem:[%s2553 + $0x78] sm:$0xff]
  %v2570 = vld [vmem:[%s2553 + $0x80] sm:$0xff]
  %v2571 = vld [vmem:[%s2553 + $0x88] sm:$0xff]
  %v2572 = vld [vmem:[%s2553 + $0x90] sm:$0xff]
  %v2573 = vld [vmem:[%s2553 + $0x98] sm:$0xff]
  %v2574 = vld [vmem:[%s2553 + $0xa0] sm:$0xff]
  %v2575 = vld [vmem:[%s2553 + $0xa8] sm:$0xff]
  %v2576 = vld [vmem:[%s2553 + $0xb0] sm:$0xff]
  %v2577 = vld [vmem:[%s2553 + $0xb8] sm:$0xff]
  %v2578 = vld [vmem:[%s2553 + $0xc0] sm:$0xff]
  %v2579 = vld [vmem:[%s2553 + $0xc8] sm:$0xff]
  %v2580 = vld [vmem:[%s2553 + $0xd0] sm:$0xff]
  %v2581 = vld [vmem:[%s2553 + $0xd8] sm:$0xff]
  %v2582 = vld [vmem:[%s2553 + $0xe0] sm:$0xff]
  %v2583 = vld [vmem:[%s2553 + $0xe8] sm:$0xff]
  %v2584 = vld [vmem:[%s2553 + $0xf0] sm:$0xff]
  %v2585 = vld [vmem:[%s2553 + $0xf8] sm:$0xff]
  %v2618 = vunpack.c.l.b16 %v2554
  %v2619 = vunpack.c.h.b16 %v2554
  %v2620 = vunpack.c.l.b16 %v2555
  %v2621 = vunpack.c.h.b16 %v2555
  %v2622 = vunpack.c.l.b16 %v2556
  %v2623 = vunpack.c.h.b16 %v2556
  %v2624 = vunpack.c.l.b16 %v2557
  %v2625 = vunpack.c.h.b16 %v2557
  %v2626 = vunpack.c.l.b16 %v2558
  %v2627 = vunpack.c.h.b16 %v2558
  %v2628 = vunpack.c.l.b16 %v2559
  %v2629 = vunpack.c.h.b16 %v2559
  %v2630 = vunpack.c.l.b16 %v2560
  %v2631 = vunpack.c.h.b16 %v2560
  %v2632 = vunpack.c.l.b16 %v2561
  %v2633 = vunpack.c.h.b16 %v2561
  %v2634 = vunpack.c.l.b16 %v2562
  %v2635 = vunpack.c.h.b16 %v2562
  %v2636 = vunpack.c.l.b16 %v2563
  %v2637 = vunpack.c.h.b16 %v2563
  %v2638 = vunpack.c.l.b16 %v2564
  %v2639 = vunpack.c.h.b16 %v2564
  %v2640 = vunpack.c.l.b16 %v2565
  %v2641 = vunpack.c.h.b16 %v2565
  %v2642 = vunpack.c.l.b16 %v2566
  %v2643 = vunpack.c.h.b16 %v2566
  %v2644 = vunpack.c.l.b16 %v2567
  %v2645 = vunpack.c.h.b16 %v2567
  %v2646 = vunpack.c.l.b16 %v2568
  %v2647 = vunpack.c.h.b16 %v2568
  %v2648 = vunpack.c.l.b16 %v2569
  %v2649 = vunpack.c.h.b16 %v2569
  %v2650 = vunpack.c.l.b16 %v2570
  %v2651 = vunpack.c.h.b16 %v2570
  %v2652 = vunpack.c.l.b16 %v2571
  %v2653 = vunpack.c.h.b16 %v2571
  %v2654 = vunpack.c.l.b16 %v2572
  %v2655 = vunpack.c.h.b16 %v2572
  %v2656 = vunpack.c.l.b16 %v2573
  %v2657 = vunpack.c.h.b16 %v2573
  %v2658 = vunpack.c.l.b16 %v2574
  %v2659 = vunpack.c.h.b16 %v2574
  %v2660 = vunpack.c.l.b16 %v2575
  %v2661 = vunpack.c.h.b16 %v2575
  %v2662 = vunpack.c.l.b16 %v2576
  %v2663 = vunpack.c.h.b16 %v2576
  %v2664 = vunpack.c.l.b16 %v2577
  %v2665 = vunpack.c.h.b16 %v2577
  %v2666 = vunpack.c.l.b16 %v2578
  %v2667 = vunpack.c.h.b16 %v2578
  %v2668 = vunpack.c.l.b16 %v2579
  %v2669 = vunpack.c.h.b16 %v2579
  %v2670 = vunpack.c.l.b16 %v2580
  %v2671 = vunpack.c.h.b16 %v2580
  %v2672 = vunpack.c.l.b16 %v2581
  %v2673 = vunpack.c.h.b16 %v2581
  %v2674 = vunpack.c.l.b16 %v2582
  %v2675 = vunpack.c.h.b16 %v2582
  %v2676 = vunpack.c.l.b16 %v2583
  %v2677 = vunpack.c.h.b16 %v2583
  %v2678 = vunpack.c.l.b16 %v2584
  %v2679 = vunpack.c.h.b16 %v2584
  %v2680 = vunpack.c.l.b16 %v2585
  %v2681 = vunpack.c.h.b16 %v2585
  %v2682 = vpack.c.b16 %v2620, %v2618
  %v2683 = vpack.c.b16 %v2621, %v2619
  %v2684 = vpack.c.b16 %v2624, %v2622
  %v2685 = vpack.c.b16 %v2625, %v2623
  %v2686 = vpack.c.b16 %v2628, %v2626
  %v2687 = vpack.c.b16 %v2629, %v2627
  %v2688 = vpack.c.b16 %v2632, %v2630
  %v2689 = vpack.c.b16 %v2633, %v2631
  %v2690 = vpack.c.b16 %v2636, %v2634
  %v2691 = vpack.c.b16 %v2637, %v2635
  %v2692 = vpack.c.b16 %v2640, %v2638
  %v2693 = vpack.c.b16 %v2641, %v2639
  %v2694 = vpack.c.b16 %v2644, %v2642
  %v2695 = vpack.c.b16 %v2645, %v2643
  %v2696 = vpack.c.b16 %v2648, %v2646
  %v2697 = vpack.c.b16 %v2649, %v2647
  %v2698 = vpack.c.b16 %v2652, %v2650
  %v2699 = vpack.c.b16 %v2653, %v2651
  %v2700 = vpack.c.b16 %v2656, %v2654
  %v2701 = vpack.c.b16 %v2657, %v2655
  %v2702 = vpack.c.b16 %v2660, %v2658
  %v2703 = vpack.c.b16 %v2661, %v2659
  %v2704 = vpack.c.b16 %v2664, %v2662
  %v2705 = vpack.c.b16 %v2665, %v2663
  %v2706 = vpack.c.b16 %v2668, %v2666
  %v2707 = vpack.c.b16 %v2669, %v2667
  %v2708 = vpack.c.b16 %v2672, %v2670
  %v2709 = vpack.c.b16 %v2673, %v2671
  %v2710 = vpack.c.b16 %v2676, %v2674
  %v2711 = vpack.c.b16 %v2677, %v2675
  %v2712 = vpack.c.b16 %v2680, %v2678
  %v2713 = vpack.c.b16 %v2681, %v2679
  %2746 = vmatprep.subr.bf16.mxu0 %v2683
  %2747 = vmatpush1.bf16.msra.mxu0 %v2682
  %2748 = vmatprep.subr.bf16.mxu0 %v2685
  %2749 = vmatpush1.bf16.msra.mxu0 %v2684
  %2750 = vmatprep.subr.bf16.mxu0 %v2687
  %2751 = vmatpush1.bf16.msra.mxu0 %v2686
  %2752 = vmatprep.subr.bf16.mxu0 %v2689
  %2753 = vmatpush1.bf16.msra.mxu0 %v2688
  %2754 = vmatprep.subr.bf16.mxu0 %v2691
  %2755 = vmatpush1.bf16.msra.mxu0 %v2690
  %2756 = vmatprep.subr.bf16.mxu0 %v2693
  %2757 = vmatpush1.bf16.msra.mxu0 %v2692
  %2758 = vmatprep.subr.bf16.mxu0 %v2695
  %2759 = vmatpush1.bf16.msra.mxu0 %v2694
  %2760 = vmatprep.subr.bf16.mxu0 %v2697
  %2761 = vmatpush1.bf16.msra.mxu0 %v2696
  %2762 = vmatprep.subr.bf16.mxu0 %v2699
  %2763 = vmatpush1.bf16.msra.mxu0 %v2698
  %2764 = vmatprep.subr.bf16.mxu0 %v2701
  %2765 = vmatpush1.bf16.msra.mxu0 %v2700
  %2766 = vmatprep.subr.bf16.mxu0 %v2703
  %2767 = vmatpush1.bf16.msra.mxu0 %v2702
  %2768 = vmatprep.subr.bf16.mxu0 %v2705
  %2769 = vmatpush1.bf16.msra.mxu0 %v2704
  %2770 = vmatprep.subr.bf16.mxu0 %v2707
  %2771 = vmatpush1.bf16.msra.mxu0 %v2706
  %2772 = vmatprep.subr.bf16.mxu0 %v2709
  %2773 = vmatpush1.bf16.msra.mxu0 %v2708
  %2774 = vmatprep.subr.bf16.mxu0 %v2711
  %2775 = vmatpush1.bf16.msra.mxu0 %v2710
  %2776 = vmatprep.subr.bf16.mxu0 %v2713
  %2777 = vmatpush1.bf16.msra.mxu0 %v2712
  %2778 = vmatprep.mubr.bf16.mxu0 %v2550
  %2779 = vmatmul.mubr.bf16.gmra.mrb[0].mxu0 %v2549
  %v2780 = vpop.f32.mrb[0].mxu0
  %v2781 = vadd.f32 0.0, %v2780
  %v2782 = vpop.f32.mrb[0].mxu0
  %v2783 = vadd.f32 0.0, %v2782
  %v2784 = vpop.f32.mrb[0].mxu0
  %v2785 = vadd.f32 0.0, %v2784
  %v2786 = vpop.f32.mrb[0].mxu0
  %v2787 = vadd.f32 0.0, %v2786
  %2788 = vmatprep.mubr.bf16.mxu0 %v2552
  %2789 = vmatmul.mubr.bf16.gmra.mrb[0].mxu0 %v2551
  %v2790 = vpop.f32.mrb[0].mxu0
  %v2791 = vadd.f32 0.0, %v2790
  %v2792 = vpop.f32.mrb[0].mxu0
  %v2793 = vadd.f32 0.0, %v2792
  %v2794 = vpop.f32.mrb[0].mxu0
  %v2795 = vadd.f32 0.0, %v2794
  %v2796 = vpop.f32.mrb[0].mxu0
  %v2797 = vadd.f32 0.0, %v2796
  %2798 = vdwg.mxu0
  %v2799 = vadd.f32 %v2438, %v2781
  %v2800 = vadd.f32 %v2440, %v2783
  %v2801 = vadd.f32 %v2442, %v2785
  %v2802 = vadd.f32 %v2444, %v2787
  %v2803 = vadd.f32 %v2448, %v2791
  %v2804 = vadd.f32 %v2450, %v2793
  %v2805 = vadd.f32 %v2452, %v2795
  %v2806 = vadd.f32 %v2454, %v2797
  %v2807 = vadd.s32 %v1767, 2
  %v2808 = vadd.s32 %v1768, 2
  %v2809 = vadd.s32 %v1769, 2
  %v2810 = vadd.s32 %v1770, 2
  %vm2811 = vcmp.ge.s32.totalorder %v2807, 0
  %vm2812 = vcmp.ge.s32.totalorder %v2808, 0
  %vm2813 = vcmp.ge.s32.totalorder %v2809, 0
  %vm2814 = vcmp.ge.s32.totalorder %v2810, 0
  %vm2815 = vcmp.lt.s32.totalorder %v2807, 32
  %vm2816 = vcmp.lt.s32.totalorder %v2808, 32
  %vm2817 = vcmp.lt.s32.totalorder %v2809, 32
  %vm2818 = vcmp.lt.s32.totalorder %v2810, 32
  %vm2819 = vmand %vm2811, %vm2815
  %vm2820 = vmand %vm2812, %vm2816
  %vm2821 = vmand %vm2813, %vm2817
  %vm2822 = vmand %vm2814, %vm2818
  %v2823 = vadd.s32 %v1787, %v2807
  %v2824 = vadd.s32 %v1788, %v2808
  %v2825 = vadd.s32 %v1789, %v2809
  %v2826 = vadd.s32 %v1790, %v2810
  %vm2827 = vcmp.eq.s32.totalorder %v50, %v2823
  %vm2828 = vcmp.eq.s32.totalorder %v50, %v2824
  %vm2829 = vcmp.eq.s32.totalorder %v50, %v2825
  %vm2830 = vcmp.eq.s32.totalorder %v50, %v2826
  %vm2831 = vmand %vm2827, %vm2819
  %vm2832 = vmand %vm2828, %vm2820
  %vm2833 = vmand %vm2829, %vm2821
  %vm2834 = vmand %vm2830, %vm2822
  %v2835 = vsel %vm2831, 1.0, 0.0
  %v2836 = vsel %vm2832, 1.0, 0.0
  %v2837 = vsel %vm2833, 1.0, 0.0
  %v2838 = vsel %vm2834, 1.0, 0.0
  %v2839 = vpack.c.bf16 %v2836, %v2835
  %v2840 = vpack.c.bf16 %v2838, %v2837
  %v2842 = vsel %vm622, %v2839, 0
  %v2845 = vsel %vm622, %v2840, 0
  %2847 = vmatprep.subr.bf16.mxu0 %v1752
  %2848 = vmatpush1.bf16.msra.mxu0 %v1751
  %2849 = vmatprep.subr.bf16.mxu0 %v1754
  %2850 = vmatpush1.bf16.msra.mxu0 %v1753
  %2851 = vmatprep.subr.bf16.mxu0 %v1756
  %2852 = vmatpush1.bf16.msra.mxu0 %v1755
  %2853 = vmatprep.subr.bf16.mxu0 %v1758
  %2854 = vmatpush1.bf16.msra.mxu0 %v1757
  %2855 = vmatprep.subr.bf16.mxu0 0
  %2856 = vmatpush1.bf16.msra.mxu0 0
  %2857 = vmatprep.subr.bf16.mxu0 0
  %2858 = vmatpush1.bf16.msra.mxu0 0
  %2859 = vmatprep.subr.bf16.mxu0 0
  %2860 = vmatpush1.bf16.msra.mxu0 0
  %2861 = vmatprep.subr.bf16.mxu0 0
  %2862 = vmatpush1.bf16.msra.mxu0 0
  %2863 = vmatprep.subr.bf16.mxu0 0
  %2864 = vmatpush1.bf16.msra.mxu0 0
  %2865 = vmatprep.subr.bf16.mxu0 0
  %2866 = vmatpush1.bf16.msra.mxu0 0
  %2867 = vmatprep.subr.bf16.mxu0 0
  %2868 = vmatpush1.bf16.msra.mxu0 0
  %2869 = vmatprep.subr.bf16.mxu0 0
  %2870 = vmatpush1.bf16.msra.mxu0 0
  %2871 = vmatprep.subr.bf16.mxu0 0
  %2872 = vmatpush1.bf16.msra.mxu0 0
  %2873 = vmatprep.subr.bf16.mxu0 0
  %2874 = vmatpush1.bf16.msra.mxu0 0
  %2875 = vmatprep.subr.bf16.mxu0 0
  %2876 = vmatpush1.bf16.msra.mxu0 0
  %2877 = vmatprep.subr.bf16.mxu0 0
  %2878 = vmatpush1.bf16.msra.mxu0 0
  %2879 = vmatprep.mubr.bf16.mxu0 0
  %2880 = vmatmul.mubr.bf16.gmra.mrb[0].mxu0 %v2842
  %v2881 = vpop.f32.mrb[0].mxu0
  %v2882 = vadd.f32 0.0, %v2881
  %v2883 = vpop.f32.mrb[0].mxu0
  %v2884 = vadd.f32 0.0, %v2883
  %v2885 = vpop.f32.mrb[0].mxu0
  %v2886 = vadd.f32 0.0, %v2885
  %v2887 = vpop.f32.mrb[0].mxu0
  %v2888 = vadd.f32 0.0, %v2887
  %2889 = vmatprep.mubr.bf16.mxu0 0
  %2890 = vmatmul.mubr.bf16.gmra.mrb[0].mxu0 %v2845
  %v2891 = vpop.f32.mrb[0].mxu0
  %v2892 = vadd.f32 0.0, %v2891
  %v2893 = vpop.f32.mrb[0].mxu0
  %v2894 = vadd.f32 0.0, %v2893
  %v2895 = vpop.f32.mrb[0].mxu0
  %v2896 = vadd.f32 0.0, %v2895
  %v2897 = vpop.f32.mrb[0].mxu0
  %v2898 = vadd.f32 0.0, %v2897
  %2899 = vdwg.mxu0
  %v2900 = vpack.c.bf16 %v2886, %v2882
  %v2901 = vpack.c.bf16 %v2888, %v2884
  %v2902 = vpack.c.bf16 %v2896, %v2892
  %v2903 = vpack.c.bf16 %v2898, %v2894
  %s2904 = scalar_lea.vmem %s2, 768
  %v2905 = vld [vmem:[%s2904] sm:$0xff]
  %v2906 = vld [vmem:[%s2904 + $0x8] sm:$0xff]
  %v2907 = vld [vmem:[%s2904 + $0x10] sm:$0xff]
  %v2908 = vld [vmem:[%s2904 + $0x18] sm:$0xff]
  %v2909 = vld [vmem:[%s2904 + $0x20] sm:$0xff]
  %v2910 = vld [vmem:[%s2904 + $0x28] sm:$0xff]
  %v2911 = vld [vmem:[%s2904 + $0x30] sm:$0xff]
  %v2912 = vld [vmem:[%s2904 + $0x38] sm:$0xff]
  %v2913 = vld [vmem:[%s2904 + $0x40] sm:$0xff]
  %v2914 = vld [vmem:[%s2904 + $0x48] sm:$0xff]
  %v2915 = vld [vmem:[%s2904 + $0x50] sm:$0xff]
  %v2916 = vld [vmem:[%s2904 + $0x58] sm:$0xff]
  %v2917 = vld [vmem:[%s2904 + $0x60] sm:$0xff]
  %v2918 = vld [vmem:[%s2904 + $0x68] sm:$0xff]
  %v2919 = vld [vmem:[%s2904 + $0x70] sm:$0xff]
  %v2920 = vld [vmem:[%s2904 + $0x78] sm:$0xff]
  %v2921 = vld [vmem:[%s2904 + $0x80] sm:$0xff]
  %v2922 = vld [vmem:[%s2904 + $0x88] sm:$0xff]
  %v2923 = vld [vmem:[%s2904 + $0x90] sm:$0xff]
  %v2924 = vld [vmem:[%s2904 + $0x98] sm:$0xff]
  %v2925 = vld [vmem:[%s2904 + $0xa0] sm:$0xff]
  %v2926 = vld [vmem:[%s2904 + $0xa8] sm:$0xff]
  %v2927 = vld [vmem:[%s2904 + $0xb0] sm:$0xff]
  %v2928 = vld [vmem:[%s2904 + $0xb8] sm:$0xff]
  %v2929 = vld [vmem:[%s2904 + $0xc0] sm:$0xff]
  %v2930 = vld [vmem:[%s2904 + $0xc8] sm:$0xff]
  %v2931 = vld [vmem:[%s2904 + $0xd0] sm:$0xff]
  %v2932 = vld [vmem:[%s2904 + $0xd8] sm:$0xff]
  %v2933 = vld [vmem:[%s2904 + $0xe0] sm:$0xff]
  %v2934 = vld [vmem:[%s2904 + $0xe8] sm:$0xff]
  %v2935 = vld [vmem:[%s2904 + $0xf0] sm:$0xff]
  %v2936 = vld [vmem:[%s2904 + $0xf8] sm:$0xff]
  %v2969 = vunpack.c.l.b16 %v2905
  %v2970 = vunpack.c.h.b16 %v2905
  %v2971 = vunpack.c.l.b16 %v2906
  %v2972 = vunpack.c.h.b16 %v2906
  %v2973 = vunpack.c.l.b16 %v2907
  %v2974 = vunpack.c.h.b16 %v2907
  %v2975 = vunpack.c.l.b16 %v2908
  %v2976 = vunpack.c.h.b16 %v2908
  %v2977 = vunpack.c.l.b16 %v2909
  %v2978 = vunpack.c.h.b16 %v2909
  %v2979 = vunpack.c.l.b16 %v2910
  %v2980 = vunpack.c.h.b16 %v2910
  %v2981 = vunpack.c.l.b16 %v2911
  %v2982 = vunpack.c.h.b16 %v2911
  %v2983 = vunpack.c.l.b16 %v2912
  %v2984 = vunpack.c.h.b16 %v2912
  %v2985 = vunpack.c.l.b16 %v2913
  %v2986 = vunpack.c.h.b16 %v2913
  %v2987 = vunpack.c.l.b16 %v2914
  %v2988 = vunpack.c.h.b16 %v2914
  %v2989 = vunpack.c.l.b16 %v2915
  %v2990 = vunpack.c.h.b16 %v2915
  %v2991 = vunpack.c.l.b16 %v2916
  %v2992 = vunpack.c.h.b16 %v2916
  %v2993 = vunpack.c.l.b16 %v2917
  %v2994 = vunpack.c.h.b16 %v2917
  %v2995 = vunpack.c.l.b16 %v2918
  %v2996 = vunpack.c.h.b16 %v2918
  %v2997 = vunpack.c.l.b16 %v2919
  %v2998 = vunpack.c.h.b16 %v2919
  %v2999 = vunpack.c.l.b16 %v2920
  %v3000 = vunpack.c.h.b16 %v2920
  %v3001 = vunpack.c.l.b16 %v2921
  %v3002 = vunpack.c.h.b16 %v2921
  %v3003 = vunpack.c.l.b16 %v2922
  %v3004 = vunpack.c.h.b16 %v2922
  %v3005 = vunpack.c.l.b16 %v2923
  %v3006 = vunpack.c.h.b16 %v2923
  %v3007 = vunpack.c.l.b16 %v2924
  %v3008 = vunpack.c.h.b16 %v2924
  %v3009 = vunpack.c.l.b16 %v2925
  %v3010 = vunpack.c.h.b16 %v2925
  %v3011 = vunpack.c.l.b16 %v2926
  %v3012 = vunpack.c.h.b16 %v2926
  %v3013 = vunpack.c.l.b16 %v2927
  %v3014 = vunpack.c.h.b16 %v2927
  %v3015 = vunpack.c.l.b16 %v2928
  %v3016 = vunpack.c.h.b16 %v2928
  %v3017 = vunpack.c.l.b16 %v2929
  %v3018 = vunpack.c.h.b16 %v2929
  %v3019 = vunpack.c.l.b16 %v2930
  %v3020 = vunpack.c.h.b16 %v2930
  %v3021 = vunpack.c.l.b16 %v2931
  %v3022 = vunpack.c.h.b16 %v2931
  %v3023 = vunpack.c.l.b16 %v2932
  %v3024 = vunpack.c.h.b16 %v2932
  %v3025 = vunpack.c.l.b16 %v2933
  %v3026 = vunpack.c.h.b16 %v2933
  %v3027 = vunpack.c.l.b16 %v2934
  %v3028 = vunpack.c.h.b16 %v2934
  %v3029 = vunpack.c.l.b16 %v2935
  %v3030 = vunpack.c.h.b16 %v2935
  %v3031 = vunpack.c.l.b16 %v2936
  %v3032 = vunpack.c.h.b16 %v2936
  %v3033 = vpack.c.b16 %v2971, %v2969
  %v3034 = vpack.c.b16 %v2972, %v2970
  %v3035 = vpack.c.b16 %v2975, %v2973
  %v3036 = vpack.c.b16 %v2976, %v2974
  %v3037 = vpack.c.b16 %v2979, %v2977
  %v3038 = vpack.c.b16 %v2980, %v2978
  %v3039 = vpack.c.b16 %v2983, %v2981
  %v3040 = vpack.c.b16 %v2984, %v2982
  %v3041 = vpack.c.b16 %v2987, %v2985
  %v3042 = vpack.c.b16 %v2988, %v2986
  %v3043 = vpack.c.b16 %v2991, %v2989
  %v3044 = vpack.c.b16 %v2992, %v2990
  %v3045 = vpack.c.b16 %v2995, %v2993
  %v3046 = vpack.c.b16 %v2996, %v2994
  %v3047 = vpack.c.b16 %v2999, %v2997
  %v3048 = vpack.c.b16 %v3000, %v2998
  %v3049 = vpack.c.b16 %v3003, %v3001
  %v3050 = vpack.c.b16 %v3004, %v3002
  %v3051 = vpack.c.b16 %v3007, %v3005
  %v3052 = vpack.c.b16 %v3008, %v3006
  %v3053 = vpack.c.b16 %v3011, %v3009
  %v3054 = vpack.c.b16 %v3012, %v3010
  %v3055 = vpack.c.b16 %v3015, %v3013
  %v3056 = vpack.c.b16 %v3016, %v3014
  %v3057 = vpack.c.b16 %v3019, %v3017
  %v3058 = vpack.c.b16 %v3020, %v3018
  %v3059 = vpack.c.b16 %v3023, %v3021
  %v3060 = vpack.c.b16 %v3024, %v3022
  %v3061 = vpack.c.b16 %v3027, %v3025
  %v3062 = vpack.c.b16 %v3028, %v3026
  %v3063 = vpack.c.b16 %v3031, %v3029
  %v3064 = vpack.c.b16 %v3032, %v3030
  %3097 = vmatprep.subr.bf16.mxu0 %v3034
  %3098 = vmatpush1.bf16.msra.mxu0 %v3033
  %3099 = vmatprep.subr.bf16.mxu0 %v3036
  %3100 = vmatpush1.bf16.msra.mxu0 %v3035
  %3101 = vmatprep.subr.bf16.mxu0 %v3038
  %3102 = vmatpush1.bf16.msra.mxu0 %v3037
  %3103 = vmatprep.subr.bf16.mxu0 %v3040
  %3104 = vmatpush1.bf16.msra.mxu0 %v3039
  %3105 = vmatprep.subr.bf16.mxu0 %v3042
  %3106 = vmatpush1.bf16.msra.mxu0 %v3041
  %3107 = vmatprep.subr.bf16.mxu0 %v3044
  %3108 = vmatpush1.bf16.msra.mxu0 %v3043
  %3109 = vmatprep.subr.bf16.mxu0 %v3046
  %3110 = vmatpush1.bf16.msra.mxu0 %v3045
  %3111 = vmatprep.subr.bf16.mxu0 %v3048
  %3112 = vmatpush1.bf16.msra.mxu0 %v3047
  %3113 = vmatprep.subr.bf16.mxu0 %v3050
  %3114 = vmatpush1.bf16.msra.mxu0 %v3049
  %3115 = vmatprep.subr.bf16.mxu0 %v3052
  %3116 = vmatpush1.bf16.msra.mxu0 %v3051
  %3117 = vmatprep.subr.bf16.mxu0 %v3054
  %3118 = vmatpush1.bf16.msra.mxu0 %v3053
  %3119 = vmatprep.subr.bf16.mxu0 %v3056
  %3120 = vmatpush1.bf16.msra.mxu0 %v3055
  %3121 = vmatprep.subr.bf16.mxu0 %v3058
  %3122 = vmatpush1.bf16.msra.mxu0 %v3057
  %3123 = vmatprep.subr.bf16.mxu0 %v3060
  %3124 = vmatpush1.bf16.msra.mxu0 %v3059
  %3125 = vmatprep.subr.bf16.mxu0 %v3062
  %3126 = vmatpush1.bf16.msra.mxu0 %v3061
  %3127 = vmatprep.subr.bf16.mxu0 %v3064
  %3128 = vmatpush1.bf16.msra.mxu0 %v3063
  %3129 = vmatprep.mubr.bf16.mxu0 %v2901
  %3130 = vmatmul.mubr.bf16.gmra.mrb[0].mxu0 %v2900
  %v3131 = vpop.f32.mrb[0].mxu0
  %v3132 = vadd.f32 0.0, %v3131
  %v3133 = vpop.f32.mrb[0].mxu0
  %v3134 = vadd.f32 0.0, %v3133
  %v3135 = vpop.f32.mrb[0].mxu0
  %v3136 = vadd.f32 0.0, %v3135
  %v3137 = vpop.f32.mrb[0].mxu0
  %v3138 = vadd.f32 0.0, %v3137
  %3139 = vmatprep.mubr.bf16.mxu0 %v2903
  %3140 = vmatmul.mubr.bf16.gmra.mrb[0].mxu0 %v2902
  %v3141 = vpop.f32.mrb[0].mxu0
  %v3142 = vadd.f32 0.0, %v3141
  %v3143 = vpop.f32.mrb[0].mxu0
  %v3144 = vadd.f32 0.0, %v3143
  %v3145 = vpop.f32.mrb[0].mxu0
  %v3146 = vadd.f32 0.0, %v3145
  %v3147 = vpop.f32.mrb[0].mxu0
  %v3148 = vadd.f32 0.0, %v3147
  %3149 = vdwg.mxu0
  %v3150 = vadd.f32 %v2799, %v3132
  %v3151 = vadd.f32 %v2800, %v3134
  %v3152 = vadd.f32 %v2801, %v3136
  %v3153 = vadd.f32 %v2802, %v3138
  %v3154 = vadd.f32 %v2803, %v3142
  %v3155 = vadd.f32 %v2804, %v3144
  %v3156 = vadd.f32 %v2805, %v3146
  %v3157 = vadd.f32 %v2806, %v3148
  %v3158 = vadd.s32 %v41, 64
  %v3159 = vadd.s32 %v41, 72
  %v3160 = vadd.s32 %v41, 80
  %v3161 = vadd.s32 %v41, 88
  %v3162 = vadd.s32 %v41, 96
  %v3163 = vadd.s32 %v41, 104
  %v3164 = vadd.s32 %v41, 112
  %v3165 = vadd.s32 %v41, 120
  %v3166 = vadd.s32 %v41, 128
  %v3167 = vadd.s32 %v41, 136
  %v3168 = vadd.s32 %v41, 144
  %v3169 = vadd.s32 %v41, 152
  %v3170 = vadd.s32 %v41, 160
  %v3171 = vadd.s32 %v41, 168
  %v3172 = vadd.s32 %v41, 176
  %v3173 = vadd.s32 %v41, 184
  %v3174 = vadd.s32 %v41, 192
  %v3175 = vadd.s32 %v41, 200
  %v3176 = vadd.s32 %v41, 208
  %v3177 = vadd.s32 %v41, 216
  %v3178 = vadd.s32 %v41, 224
  %v3179 = vadd.s32 %v41, 232
  %v3180 = vadd.s32 %v41, 240
  %v3181 = vadd.s32 %v41, 248
  %v3182 = vadd.s32 %v50, 128
  %v3183 = vand.u32 %v45, 15
  %v3184 = vand.u32 %v46, 15
  %v3185 = vand.u32 %v47, 15
  %v3186 = vand.u32 %v48, 15
  %v3187 = vand.u32 %v3158, 15
  %v3188 = vand.u32 %v3159, 15
  %v3189 = vand.u32 %v3160, 15
  %v3190 = vand.u32 %v3161, 15
  %v3191 = vand.u32 %v3162, 15
  %v3192 = vand.u32 %v3163, 15
  %v3193 = vand.u32 %v3164, 15
  %v3194 = vand.u32 %v3165, 15
  %v3195 = vand.u32 %v3166, 15
  %v3196 = vand.u32 %v3167, 15
  %v3197 = vand.u32 %v3168, 15
  %v3198 = vand.u32 %v3169, 15
  %v3199 = vand.u32 %v3170, 15
  %v3200 = vand.u32 %v3171, 15
  %v3201 = vand.u32 %v3172, 15
  %v3202 = vand.u32 %v3173, 15
  %v3203 = vand.u32 %v3174, 15
  %v3204 = vand.u32 %v3175, 15
  %v3205 = vand.u32 %v3176, 15
  %v3206 = vand.u32 %v3177, 15
  %v3207 = vand.u32 %v3178, 15
  %v3208 = vand.u32 %v3179, 15
  %v3209 = vand.u32 %v3180, 15
  %v3210 = vand.u32 %v3181, 15
  %v3211 = vand.u32 %v50, 15
  %v3212 = vand.u32 %v3182, 15
  %vm3213 = vcmp.eq.s32.totalorder %v1763, %v3211
  %vm3214 = vcmp.eq.s32.totalorder %v1763, %v3212
  %vm3215 = vcmp.eq.s32.totalorder %v1764, %v3211
  %vm3216 = vcmp.eq.s32.totalorder %v1764, %v3212
  %vm3217 = vcmp.eq.s32.totalorder %v1765, %v3211
  %vm3218 = vcmp.eq.s32.totalorder %v1765, %v3212
  %vm3219 = vcmp.eq.s32.totalorder %v1766, %v3211
  %vm3220 = vcmp.eq.s32.totalorder %v1766, %v3212
  %vm3221 = vcmp.eq.s32.totalorder %v3183, %v3211
  %vm3222 = vcmp.eq.s32.totalorder %v3183, %v3212
  %vm3223 = vcmp.eq.s32.totalorder %v3184, %v3211
  %vm3224 = vcmp.eq.s32.totalorder %v3184, %v3212
  %vm3225 = vcmp.eq.s32.totalorder %v3185, %v3211
  %vm3226 = vcmp.eq.s32.totalorder %v3185, %v3212
  %vm3227 = vcmp.eq.s32.totalorder %v3186, %v3211
  %vm3228 = vcmp.eq.s32.totalorder %v3186, %v3212
  %vm3229 = vcmp.eq.s32.totalorder %v3187, %v3211
  %vm3230 = vcmp.eq.s32.totalorder %v3187, %v3212
  %vm3231 = vcmp.eq.s32.totalorder %v3188, %v3211
  %vm3232 = vcmp.eq.s32.totalorder %v3188, %v3212
  %vm3233 = vcmp.eq.s32.totalorder %v3189, %v3211
  %vm3234 = vcmp.eq.s32.totalorder %v3189, %v3212
  %vm3235 = vcmp.eq.s32.totalorder %v3190, %v3211
  %vm3236 = vcmp.eq.s32.totalorder %v3190, %v3212
  %vm3237 = vcmp.eq.s32.totalorder %v3191, %v3211
  %vm3238 = vcmp.eq.s32.totalorder %v3191, %v3212
  %vm3239 = vcmp.eq.s32.totalorder %v3192, %v3211
  %vm3240 = vcmp.eq.s32.totalorder %v3192, %v3212
  %vm3241 = vcmp.eq.s32.totalorder %v3193, %v3211
  %vm3242 = vcmp.eq.s32.totalorder %v3193, %v3212
  %vm3243 = vcmp.eq.s32.totalorder %v3194, %v3211
  %vm3244 = vcmp.eq.s32.totalorder %v3194, %v3212
  %vm3245 = vcmp.eq.s32.totalorder %v3195, %v3211
  %vm3246 = vcmp.eq.s32.totalorder %v3195, %v3212
  %vm3247 = vcmp.eq.s32.totalorder %v3196, %v3211
  %vm3248 = vcmp.eq.s32.totalorder %v3196, %v3212
  %vm3249 = vcmp.eq.s32.totalorder %v3197, %v3211
  %vm3250 = vcmp.eq.s32.totalorder %v3197, %v3212
  %vm3251 = vcmp.eq.s32.totalorder %v3198, %v3211
  %vm3252 = vcmp.eq.s32.totalorder %v3198, %v3212
  %vm3253 = vcmp.eq.s32.totalorder %v3199, %v3211
  %vm3254 = vcmp.eq.s32.totalorder %v3199, %v3212
  %vm3255 = vcmp.eq.s32.totalorder %v3200, %v3211
  %vm3256 = vcmp.eq.s32.totalorder %v3200, %v3212
  %vm3257 = vcmp.eq.s32.totalorder %v3201, %v3211
  %vm3258 = vcmp.eq.s32.totalorder %v3201, %v3212
  %vm3259 = vcmp.eq.s32.totalorder %v3202, %v3211
  %vm3260 = vcmp.eq.s32.totalorder %v3202, %v3212
  %vm3261 = vcmp.eq.s32.totalorder %v3203, %v3211
  %vm3262 = vcmp.eq.s32.totalorder %v3203, %v3212
  %vm3263 = vcmp.eq.s32.totalorder %v3204, %v3211
  %vm3264 = vcmp.eq.s32.totalorder %v3204, %v3212
  %vm3265 = vcmp.eq.s32.totalorder %v3205, %v3211
  %vm3266 = vcmp.eq.s32.totalorder %v3205, %v3212
  %vm3267 = vcmp.eq.s32.totalorder %v3206, %v3211
  %vm3268 = vcmp.eq.s32.totalorder %v3206, %v3212
  %vm3269 = vcmp.eq.s32.totalorder %v3207, %v3211
  %vm3270 = vcmp.eq.s32.totalorder %v3207, %v3212
  %vm3271 = vcmp.eq.s32.totalorder %v3208, %v3211
  %vm3272 = vcmp.eq.s32.totalorder %v3208, %v3212
  %vm3273 = vcmp.eq.s32.totalorder %v3209, %v3211
  %vm3274 = vcmp.eq.s32.totalorder %v3209, %v3212
  %vm3275 = vcmp.eq.s32.totalorder %v3210, %v3211
  %vm3276 = vcmp.eq.s32.totalorder %v3210, %v3212
  %v3277 = vsel %vm3213, 1.0, 0.0
  %v3278 = vsel %vm3214, 1.0, 0.0
  %v3279 = vsel %vm3215, 1.0, 0.0
  %v3280 = vsel %vm3216, 1.0, 0.0
  %v3281 = vsel %vm3217, 1.0, 0.0
  %v3282 = vsel %vm3218, 1.0, 0.0
  %v3283 = vsel %vm3219, 1.0, 0.0
  %v3284 = vsel %vm3220, 1.0, 0.0
  %v3285 = vsel %vm3221, 1.0, 0.0
  %v3286 = vsel %vm3222, 1.0, 0.0
  %v3287 = vsel %vm3223, 1.0, 0.0
  %v3288 = vsel %vm3224, 1.0, 0.0
  %v3289 = vsel %vm3225, 1.0, 0.0
  %v3290 = vsel %vm3226, 1.0, 0.0
  %v3291 = vsel %vm3227, 1.0, 0.0
  %v3292 = vsel %vm3228, 1.0, 0.0
  %v3293 = vsel %vm3229, 1.0, 0.0
  %v3294 = vsel %vm3230, 1.0, 0.0
  %v3295 = vsel %vm3231, 1.0, 0.0
  %v3296 = vsel %vm3232, 1.0, 0.0
  %v3297 = vsel %vm3233, 1.0, 0.0
  %v3298 = vsel %vm3234, 1.0, 0.0
  %v3299 = vsel %vm3235, 1.0, 0.0
  %v3300 = vsel %vm3236, 1.0, 0.0
  %v3301 = vsel %vm3237, 1.0, 0.0
  %v3302 = vsel %vm3238, 1.0, 0.0
  %v3303 = vsel %vm3239, 1.0, 0.0
  %v3304 = vsel %vm3240, 1.0, 0.0
  %v3305 = vsel %vm3241, 1.0, 0.0
  %v3306 = vsel %vm3242, 1.0, 0.0
  %v3307 = vsel %vm3243, 1.0, 0.0
  %v3308 = vsel %vm3244, 1.0, 0.0
  %v3309 = vsel %vm3245, 1.0, 0.0
  %v3310 = vsel %vm3246, 1.0, 0.0
  %v3311 = vsel %vm3247, 1.0, 0.0
  %v3312 = vsel %vm3248, 1.0, 0.0
  %v3313 = vsel %vm3249, 1.0, 0.0
  %v3314 = vsel %vm3250, 1.0, 0.0
  %v3315 = vsel %vm3251, 1.0, 0.0
  %v3316 = vsel %vm3252, 1.0, 0.0
  %v3317 = vsel %vm3253, 1.0, 0.0
  %v3318 = vsel %vm3254, 1.0, 0.0
  %v3319 = vsel %vm3255, 1.0, 0.0
  %v3320 = vsel %vm3256, 1.0, 0.0
  %v3321 = vsel %vm3257, 1.0, 0.0
  %v3322 = vsel %vm3258, 1.0, 0.0
  %v3323 = vsel %vm3259, 1.0, 0.0
  %v3324 = vsel %vm3260, 1.0, 0.0
  %v3325 = vsel %vm3261, 1.0, 0.0
  %v3326 = vsel %vm3262, 1.0, 0.0
  %v3327 = vsel %vm3263, 1.0, 0.0
  %v3328 = vsel %vm3264, 1.0, 0.0
  %v3329 = vsel %vm3265, 1.0, 0.0
  %v3330 = vsel %vm3266, 1.0, 0.0
  %v3331 = vsel %vm3267, 1.0, 0.0
  %v3332 = vsel %vm3268, 1.0, 0.0
  %v3333 = vsel %vm3269, 1.0, 0.0
  %v3334 = vsel %vm3270, 1.0, 0.0
  %v3335 = vsel %vm3271, 1.0, 0.0
  %v3336 = vsel %vm3272, 1.0, 0.0
  %v3337 = vsel %vm3273, 1.0, 0.0
  %v3338 = vsel %vm3274, 1.0, 0.0
  %v3339 = vsel %vm3275, 1.0, 0.0
  %v3340 = vsel %vm3276, 1.0, 0.0
  %v3341 = vadd.f32 %v3150, %v3152
  %v3342 = vadd.f32 %v3341, %v3154
  %v3343 = vadd.f32 %v3342, %v3156
  %v3344 = vrot.slane %v3343, 4
  %v3345 = vadd.f32 %v3343, %v3344
  %v3346 = vrot.slane %v3345, 2
  %v3347 = vadd.f32 %v3345, %v3346
  %v3348 = vrot.slane %v3347, 1
  %v3349 = vadd.f32 %v3347, %v3348
  %v3350 = vadd.f32 %v3151, %v3153
  %v3351 = vadd.f32 %v3350, %v3155
  %v3352 = vadd.f32 %v3351, %v3157
  %v3353 = vrot.slane %v3352, 4
  %v3354 = vadd.f32 %v3352, %v3353
  %v3355 = vrot.slane %v3354, 2
  %v3356 = vadd.f32 %v3354, %v3355
  %v3357 = vrot.slane %v3356, 1
  %v3358 = vadd.f32 %v3356, %v3357
  %v3359 = vmul.f32 %v3150, %v3150
  %v3360 = vmul.f32 %v3151, %v3151
  %v3361 = vmul.f32 %v3152, %v3152
  %v3362 = vmul.f32 %v3153, %v3153
  %v3363 = vmul.f32 %v3154, %v3154
  %v3364 = vmul.f32 %v3155, %v3155
  %v3365 = vmul.f32 %v3156, %v3156
  %v3366 = vmul.f32 %v3157, %v3157
  %v3367 = vadd.f32 %v3359, %v3361
  %v3368 = vadd.f32 %v3367, %v3363
  %v3369 = vadd.f32 %v3368, %v3365
  %v3370 = vrot.slane %v3369, 4
  %v3371 = vadd.f32 %v3369, %v3370
  %v3372 = vrot.slane %v3371, 2
  %v3373 = vadd.f32 %v3371, %v3372
  %v3374 = vrot.slane %v3373, 1
  %v3375 = vadd.f32 %v3373, %v3374
  %v3376 = vadd.f32 %v3360, %v3362
  %v3377 = vadd.f32 %v3376, %v3364
  %v3378 = vadd.f32 %v3377, %v3366
  %v3379 = vrot.slane %v3378, 4
  %v3380 = vadd.f32 %v3378, %v3379
  %v3381 = vrot.slane %v3380, 2
  %v3382 = vadd.f32 %v3380, %v3381
  %v3383 = vrot.slane %v3382, 1
  %v3384 = vadd.f32 %v3382, %v3383
  %3385 = vmatprep.subr.mxu0 %v3278
  %3386 = vmatpush1.msra.mxu0 %v3277
  %3387 = vmatprep.subr.mxu0 %v3280
  %3388 = vmatpush1.msra.mxu0 %v3279
  %3389 = vmatprep.subr.mxu0 %v3282
  %3390 = vmatpush1.msra.mxu0 %v3281
  %3391 = vmatprep.subr.mxu0 %v3284
  %3392 = vmatpush1.msra.mxu0 %v3283
  %3393 = vmatprep.subr.mxu0 %v3286
  %3394 = vmatpush1.msra.mxu0 %v3285
  %3395 = vmatprep.subr.mxu0 %v3288
  %3396 = vmatpush1.msra.mxu0 %v3287
  %3397 = vmatprep.subr.mxu0 %v3290
  %3398 = vmatpush1.msra.mxu0 %v3289
  %3399 = vmatprep.subr.mxu0 %v3292
  %3400 = vmatpush1.msra.mxu0 %v3291
  %3401 = vmatprep.subr.mxu0 %v3294
  %3402 = vmatpush1.msra.mxu0 %v3293
  %3403 = vmatprep.subr.mxu0 %v3296
  %3404 = vmatpush1.msra.mxu0 %v3295
  %3405 = vmatprep.subr.mxu0 %v3298
  %3406 = vmatpush1.msra.mxu0 %v3297
  %3407 = vmatprep.subr.mxu0 %v3300
  %3408 = vmatpush1.msra.mxu0 %v3299
  %3409 = vmatprep.subr.mxu0 %v3302
  %3410 = vmatpush1.msra.mxu0 %v3301
  %3411 = vmatprep.subr.mxu0 %v3304
  %3412 = vmatpush1.msra.mxu0 %v3303
  %3413 = vmatprep.subr.mxu0 %v3306
  %3414 = vmatpush1.msra.mxu0 %v3305
  %3415 = vmatprep.subr.mxu0 %v3308
  %3416 = vmatpush1.msra.mxu0 %v3307
  %3417 = vmatprep.subr.mxu0 %v3310
  %3418 = vmatpush1.msra.mxu0 %v3309
  %3419 = vmatprep.subr.mxu0 %v3312
  %3420 = vmatpush1.msra.mxu0 %v3311
  %3421 = vmatprep.subr.mxu0 %v3314
  %3422 = vmatpush1.msra.mxu0 %v3313
  %3423 = vmatprep.subr.mxu0 %v3316
  %3424 = vmatpush1.msra.mxu0 %v3315
  %3425 = vmatprep.subr.mxu0 %v3318
  %3426 = vmatpush1.msra.mxu0 %v3317
  %3427 = vmatprep.subr.mxu0 %v3320
  %3428 = vmatpush1.msra.mxu0 %v3319
  %3429 = vmatprep.subr.mxu0 %v3322
  %3430 = vmatpush1.msra.mxu0 %v3321
  %3431 = vmatprep.subr.mxu0 %v3324
  %3432 = vmatpush1.msra.mxu0 %v3323
  %3433 = vmatprep.subr.mxu0 %v3326
  %3434 = vmatpush1.msra.mxu0 %v3325
  %3435 = vmatprep.subr.mxu0 %v3328
  %3436 = vmatpush1.msra.mxu0 %v3327
  %3437 = vmatprep.subr.mxu0 %v3330
  %3438 = vmatpush1.msra.mxu0 %v3329
  %3439 = vmatprep.subr.mxu0 %v3332
  %3440 = vmatpush1.msra.mxu0 %v3331
  %3441 = vmatprep.subr.mxu0 %v3334
  %3442 = vmatpush1.msra.mxu0 %v3333
  %3443 = vmatprep.subr.mxu0 %v3336
  %3444 = vmatpush1.msra.mxu0 %v3335
  %3445 = vmatprep.subr.mxu0 %v3338
  %3446 = vmatpush1.msra.mxu0 %v3337
  %3447 = vmatprep.subr.mxu0 %v3340
  %3448 = vmatpush1.msra.mxu0 %v3339
  %3449 = vmatprep.mubr.f32.mxu0 %v3358
  %3450 = vmatmul.mubr.f32.gmra.mrb[0].mxu0 %v3349
  %v3451 = vpop.f32.mrb[0].mxu0
  %v3452 = vadd.f32 0.0, %v3451
  %v3453 = vpop.f32.mrb[0].mxu0
  %v3454 = vadd.f32 0.0, %v3453
  %3455 = vdwg.mxu0
  %v3456 = vmul.f32 %v3452, 0.001953125
  %v3457 = vmul.f32 %v3454, 0.001953125
  %3458 = vmatprep.subr.mxu0 %v3278
  %3459 = vmatpush1.msra.mxu0 %v3277
  %3460 = vmatprep.subr.mxu0 %v3280
  %3461 = vmatpush1.msra.mxu0 %v3279
  %3462 = vmatprep.subr.mxu0 %v3282
  %3463 = vmatpush1.msra.mxu0 %v3281
  %3464 = vmatprep.subr.mxu0 %v3284
  %3465 = vmatpush1.msra.mxu0 %v3283
  %3466 = vmatprep.subr.mxu0 %v3286
  %3467 = vmatpush1.msra.mxu0 %v3285
  %3468 = vmatprep.subr.mxu0 %v3288
  %3469 = vmatpush1.msra.mxu0 %v3287
  %3470 = vmatprep.subr.mxu0 %v3290
  %3471 = vmatpush1.msra.mxu0 %v3289
  %3472 = vmatprep.subr.mxu0 %v3292
  %3473 = vmatpush1.msra.mxu0 %v3291
  %3474 = vmatprep.subr.mxu0 %v3294
  %3475 = vmatpush1.msra.mxu0 %v3293
  %3476 = vmatprep.subr.mxu0 %v3296
  %3477 = vmatpush1.msra.mxu0 %v3295
  %3478 = vmatprep.subr.mxu0 %v3298
  %3479 = vmatpush1.msra.mxu0 %v3297
  %3480 = vmatprep.subr.mxu0 %v3300
  %3481 = vmatpush1.msra.mxu0 %v3299
  %3482 = vmatprep.subr.mxu0 %v3302
  %3483 = vmatpush1.msra.mxu0 %v3301
  %3484 = vmatprep.subr.mxu0 %v3304
  %3485 = vmatpush1.msra.mxu0 %v3303
  %3486 = vmatprep.subr.mxu0 %v3306
  %3487 = vmatpush1.msra.mxu0 %v3305
  %3488 = vmatprep.subr.mxu0 %v3308
  %3489 = vmatpush1.msra.mxu0 %v3307
  %3490 = vmatprep.subr.mxu0 %v3310
  %3491 = vmatpush1.msra.mxu0 %v3309
  %3492 = vmatprep.subr.mxu0 %v3312
  %3493 = vmatpush1.msra.mxu0 %v3311
  %3494 = vmatprep.subr.mxu0 %v3314
  %3495 = vmatpush1.msra.mxu0 %v3313
  %3496 = vmatprep.subr.mxu0 %v3316
  %3497 = vmatpush1.msra.mxu0 %v3315
  %3498 = vmatprep.subr.mxu0 %v3318
  %3499 = vmatpush1.msra.mxu0 %v3317
  %3500 = vmatprep.subr.mxu0 %v3320
  %3501 = vmatpush1.msra.mxu0 %v3319
  %3502 = vmatprep.subr.mxu0 %v3322
  %3503 = vmatpush1.msra.mxu0 %v3321
  %3504 = vmatprep.subr.mxu0 %v3324
  %3505 = vmatpush1.msra.mxu0 %v3323
  %3506 = vmatprep.subr.mxu0 %v3326
  %3507 = vmatpush1.msra.mxu0 %v3325
  %3508 = vmatprep.subr.mxu0 %v3328
  %3509 = vmatpush1.msra.mxu0 %v3327
  %3510 = vmatprep.subr.mxu0 %v3330
  %3511 = vmatpush1.msra.mxu0 %v3329
  %3512 = vmatprep.subr.mxu0 %v3332
  %3513 = vmatpush1.msra.mxu0 %v3331
  %3514 = vmatprep.subr.mxu0 %v3334
  %3515 = vmatpush1.msra.mxu0 %v3333
  %3516 = vmatprep.subr.mxu0 %v3336
  %3517 = vmatpush1.msra.mxu0 %v3335
  %3518 = vmatprep.subr.mxu0 %v3338
  %3519 = vmatpush1.msra.mxu0 %v3337
  %3520 = vmatprep.subr.mxu0 %v3340
  %3521 = vmatpush1.msra.mxu0 %v3339
  %3522 = vmatprep.mubr.f32.mxu0 %v3384
  %3523 = vmatmul.mubr.f32.gmra.mrb[0].mxu0 %v3375
  %v3524 = vpop.f32.mrb[0].mxu0
  %v3525 = vadd.f32 0.0, %v3524
  %v3526 = vpop.f32.mrb[0].mxu0
  %v3527 = vadd.f32 0.0, %v3526
  %3528 = vdwg.mxu0
  %v3529 = vmul.f32 %v3525, 0.001953125
  %v3530 = vmul.f32 %v3527, 0.001953125
  %v3531 = vmul.f32 %v3456, %v3456
  %v3532 = vmul.f32 %v3457, %v3457
  %v3533 = vsub.f32 %v3529, %v3531
  %v3534 = vsub.f32 %v3530, %v3532
  %v3535 = vmax.f32 %v3533, 0.0
  %v3536 = vmax.f32 %v3534, 0.0
  %v3537 = vlaneseq
  %v3538 = vshrl.u32 %v3537, 7
  %v3539 = vsub.s32 0, %v3538
  %v3540 = vrot.slane %v3456, %v3539
  %v3541 = vlaneseq
  %v3542 = vshrl.u32 %v3541, 7
  %v3543 = vsub.s32 0, %v3542
  %v3544 = vrot.slane %v3457, %v3543
  %v3545 = vsub.f32 %v3150, %v3540
  %v3546 = vsub.f32 %v3151, %v3544
  %v3547 = vsub.f32 %v3152, %v3540
  %v3548 = vsub.f32 %v3153, %v3544
  %v3549 = vsub.f32 %v3154, %v3540
  %v3550 = vsub.f32 %v3155, %v3544
  %v3551 = vsub.f32 %v3156, %v3540
  %v3552 = vsub.f32 %v3157, %v3544
  %v3553 = vadd.f32 %v3535, 1e-05
  %v3554 = vadd.f32 %v3536, 1e-05
  %v3555 = vrsqrt.pop %v3553
  %v3556 = vrsqrt.pop %v3554
  %v3557 = vlaneseq
  %v3558 = vshrl.u32 %v3557, 7
  %v3559 = vsub.s32 0, %v3558
  %v3560 = vrot.slane %v3555, %v3559
  %v3561 = vlaneseq
  %v3562 = vshrl.u32 %v3561, 7
  %v3563 = vsub.s32 0, %v3562
  %v3564 = vrot.slane %v3556, %v3563
  %v3565 = vmul.f32 %v3545, %v3560
  %v3566 = vmul.f32 %v3546, %v3564
  %v3567 = vmul.f32 %v3547, %v3560
  %v3568 = vmul.f32 %v3548, %v3564
  %v3569 = vmul.f32 %v3549, %v3560
  %v3570 = vmul.f32 %v3550, %v3564
  %v3571 = vmul.f32 %v3551, %v3560
  %v3572 = vmul.f32 %v3552, %v3564
  %vm3573 = vcmp.gt.f32.partialorder %v3565, 0.0
  %vm3574 = vcmp.gt.f32.partialorder %v3566, 0.0
  %vm3575 = vcmp.gt.f32.partialorder %v3567, 0.0
  %vm3576 = vcmp.gt.f32.partialorder %v3568, 0.0
  %vm3577 = vcmp.gt.f32.partialorder %v3569, 0.0
  %vm3578 = vcmp.gt.f32.partialorder %v3570, 0.0
  %vm3579 = vcmp.gt.f32.partialorder %v3571, 0.0
  %vm3580 = vcmp.gt.f32.partialorder %v3572, 0.0
  %v3581 = vmul.f32 %v3565, 0.2
  %v3582 = vmul.f32 %v3566, 0.2
  %v3583 = vmul.f32 %v3567, 0.2
  %v3584 = vmul.f32 %v3568, 0.2
  %v3585 = vmul.f32 %v3569, 0.2
  %v3586 = vmul.f32 %v3570, 0.2
  %v3587 = vmul.f32 %v3571, 0.2
  %v3588 = vmul.f32 %v3572, 0.2
  %v3589 = vsel %vm3573, %v3565, %v3581
  %v3590 = vsel %vm3574, %v3566, %v3582
  %v3591 = vsel %vm3575, %v3567, %v3583
  %v3592 = vsel %vm3576, %v3568, %v3584
  %v3593 = vsel %vm3577, %v3569, %v3585
  %v3594 = vsel %vm3578, %v3570, %v3586
  %v3595 = vsel %vm3579, %v3571, %v3587
  %v3596 = vsel %vm3580, %v3572, %v3588
  %v3597 = vpack.c.bf16 %v3591, %v3589
  %v3598 = vpack.c.bf16 %v3592, %v3590
  %v3599 = vpack.c.bf16 %v3595, %v3593
  %v3600 = vpack.c.bf16 %v3596, %v3594
  %v3601 = vshra.s32 %v41, 3
  %v3602 = vshra.s32 %v42, 3
  %v3603 = vand.u32 %v41, 7
  %v3604 = vand.u32 %v42, 7
  %v3605 = vmul.u32 %v3603, 2
  %v3606 = vmul.u32 %v3604, 2
  %v3607 = vadd.s32 %v3605, 4294967295
  %v3608 = vadd.s32 %v3606, 4294967295
  %vm3609 = vcmp.ge.s32.totalorder %v3607, 0
  %vm3610 = vcmp.ge.s32.totalorder %v3608, 0
  %vm3611 = vcmp.lt.s32.totalorder %v3607, 16
  %vm3612 = vcmp.lt.s32.totalorder %v3608, 16
  %vm3613 = vmand %vm3609, %vm3611
  %vm3614 = vmand %vm3610, %vm3612
  %v3615 = vmul.u32 %v3601, 16
  %v3616 = vmul.u32 %v3602, 16
  %v3617 = vadd.s32 %v3615, %v3607
  %v3618 = vadd.s32 %v3616, %v3608
  %vm3619 = vcmp.eq.s32.totalorder %v50, %v3617
  %vm3620 = vcmp.eq.s32.totalorder %v50, %v3618
  %vm3621 = vmand %vm3619, %vm3613
  %vm3622 = vmand %vm3620, %vm3614
  %v3623 = vsel %vm3621, 1.0, 0.0
  %v3624 = vsel %vm3622, 1.0, 0.0
  %v3625 = vpack.c.bf16 %v3624, %v3623
  %vm3626 = vcmask 261120
  %v3628 = vsel %vm3626, %v3625, 0
  %3630 = vmatprep.subr.bf16.mxu0 %v3598
  %3631 = vmatpush1.bf16.msra.mxu0 %v3597
  %3632 = vmatprep.subr.bf16.mxu0 %v3600
  %3633 = vmatpush1.bf16.msra.mxu0 %v3599
  %3634 = vmatprep.subr.bf16.mxu0 0
  %3635 = vmatpush1.bf16.msra.mxu0 0
  %3636 = vmatprep.subr.bf16.mxu0 0
  %3637 = vmatpush1.bf16.msra.mxu0 0
  %3638 = vmatprep.subr.bf16.mxu0 0
  %3639 = vmatpush1.bf16.msra.mxu0 0
  %3640 = vmatprep.subr.bf16.mxu0 0
  %3641 = vmatpush1.bf16.msra.mxu0 0
  %3642 = vmatprep.subr.bf16.mxu0 0
  %3643 = vmatpush1.bf16.msra.mxu0 0
  %3644 = vmatprep.subr.bf16.mxu0 0
  %3645 = vmatpush1.bf16.msra.mxu0 0
  %3646 = vmatprep.subr.bf16.mxu0 0
  %3647 = vmatpush1.bf16.msra.mxu0 0
  %3648 = vmatprep.subr.bf16.mxu0 0
  %3649 = vmatpush1.bf16.msra.mxu0 0
  %3650 = vmatprep.subr.bf16.mxu0 0
  %3651 = vmatpush1.bf16.msra.mxu0 0
  %3652 = vmatprep.subr.bf16.mxu0 0
  %3653 = vmatpush1.bf16.msra.mxu0 0
  %3654 = vmatprep.subr.bf16.mxu0 0
  %3655 = vmatpush1.bf16.msra.mxu0 0
  %3656 = vmatprep.subr.bf16.mxu0 0
  %3657 = vmatpush1.bf16.msra.mxu0 0
  %3658 = vmatprep.subr.bf16.mxu0 0
  %3659 = vmatpush1.bf16.msra.mxu0 0
  %3660 = vmatprep.subr.bf16.mxu0 0
  %3661 = vmatpush1.bf16.msra.mxu0 0
  %3662 = vmatprep.mubr.bf16.mxu0 0
  %3663 = vmatmul.mubr.bf16.gmra.mrb[0].mxu0 %v3628
  %v3664 = vpop.f32.mrb[0].mxu0
  %v3665 = vadd.f32 0.0, %v3664
  %v3666 = vpop.f32.mrb[0].mxu0
  %v3667 = vadd.f32 0.0, %v3666
  %v3668 = vpop.f32.mrb[0].mxu0
  %v3669 = vadd.f32 0.0, %v3668
  %v3670 = vpop.f32.mrb[0].mxu0
  %v3671 = vadd.f32 0.0, %v3670
  %3672 = vdwg.mxu0
  %v3673 = vpack.c.bf16 %v3669, %v3665
  %v3674 = vpack.c.bf16 %v3671, %v3667
  %v3675 = vld [vmem:[%s3] sm:$0xff]
  %v3676 = vld [vmem:[%s3 + $0x8] sm:$0xff]
  %v3677 = vld [vmem:[%s3 + $0x10] sm:$0xff]
  %v3678 = vld [vmem:[%s3 + $0x18] sm:$0xff]
  %v3679 = vld [vmem:[%s3 + $0x20] sm:$0xff]
  %v3680 = vld [vmem:[%s3 + $0x28] sm:$0xff]
  %v3681 = vld [vmem:[%s3 + $0x30] sm:$0xff]
  %v3682 = vld [vmem:[%s3 + $0x38] sm:$0xff]
  %v3683 = vld [vmem:[%s3 + $0x40] sm:$0xff]
  %v3684 = vld [vmem:[%s3 + $0x48] sm:$0xff]
  %v3685 = vld [vmem:[%s3 + $0x50] sm:$0xff]
  %v3686 = vld [vmem:[%s3 + $0x58] sm:$0xff]
  %v3687 = vld [vmem:[%s3 + $0x60] sm:$0xff]
  %v3688 = vld [vmem:[%s3 + $0x68] sm:$0xff]
  %v3689 = vld [vmem:[%s3 + $0x70] sm:$0xff]
  %v3690 = vld [vmem:[%s3 + $0x78] sm:$0xff]
  %v3691 = vld [vmem:[%s3 + $0x80] sm:$0xff]
  %v3692 = vld [vmem:[%s3 + $0x88] sm:$0xff]
  %v3693 = vld [vmem:[%s3 + $0x90] sm:$0xff]
  %v3694 = vld [vmem:[%s3 + $0x98] sm:$0xff]
  %v3695 = vld [vmem:[%s3 + $0xa0] sm:$0xff]
  %v3696 = vld [vmem:[%s3 + $0xa8] sm:$0xff]
  %v3697 = vld [vmem:[%s3 + $0xb0] sm:$0xff]
  %v3698 = vld [vmem:[%s3 + $0xb8] sm:$0xff]
  %v3699 = vld [vmem:[%s3 + $0xc0] sm:$0xff]
  %v3700 = vld [vmem:[%s3 + $0xc8] sm:$0xff]
  %v3701 = vld [vmem:[%s3 + $0xd0] sm:$0xff]
  %v3702 = vld [vmem:[%s3 + $0xd8] sm:$0xff]
  %v3703 = vld [vmem:[%s3 + $0xe0] sm:$0xff]
  %v3704 = vld [vmem:[%s3 + $0xe8] sm:$0xff]
  %v3705 = vld [vmem:[%s3 + $0xf0] sm:$0xff]
  %v3706 = vld [vmem:[%s3 + $0xf8] sm:$0xff]
  %vm3707 = vcmp.ge.s32.totalorder %v3605, 0
  %vm3708 = vcmp.ge.s32.totalorder %v3606, 0
  %vm3709 = vcmp.lt.s32.totalorder %v3605, 16
  %vm3710 = vcmp.lt.s32.totalorder %v3606, 16
  %vm3711 = vmand %vm3707, %vm3709
  %vm3712 = vmand %vm3708, %vm3710
  %v3713 = vadd.s32 %v3615, %v3605
  %v3714 = vadd.s32 %v3616, %v3606
  %vm3715 = vcmp.eq.s32.totalorder %v50, %v3713
  %vm3716 = vcmp.eq.s32.totalorder %v50, %v3714
  %vm3717 = vmand %vm3715, %vm3711
  %vm3718 = vmand %vm3716, %vm3712
  %v3719 = vsel %vm3717, 1.0, 0.0
  %v3720 = vsel %vm3718, 1.0, 0.0
  %v3721 = vpack.c.bf16 %v3720, %v3719
  %v3723 = vsel %vm3626, %v3721, 0
  %3725 = vmatprep.subr.bf16.mxu0 %v3598
  %3726 = vmatpush1.bf16.msra.mxu0 %v3597
  %3727 = vmatprep.subr.bf16.mxu0 %v3600
  %3728 = vmatpush1.bf16.msra.mxu0 %v3599
  %3729 = vmatprep.subr.bf16.mxu0 0
  %3730 = vmatpush1.bf16.msra.mxu0 0
  %3731 = vmatprep.subr.bf16.mxu0 0
  %3732 = vmatpush1.bf16.msra.mxu0 0
  %3733 = vmatprep.subr.bf16.mxu0 0
  %3734 = vmatpush1.bf16.msra.mxu0 0
  %3735 = vmatprep.subr.bf16.mxu0 0
  %3736 = vmatpush1.bf16.msra.mxu0 0
  %3737 = vmatprep.subr.bf16.mxu0 0
  %3738 = vmatpush1.bf16.msra.mxu0 0
  %3739 = vmatprep.subr.bf16.mxu0 0
  %3740 = vmatpush1.bf16.msra.mxu0 0
  %3741 = vmatprep.subr.bf16.mxu0 0
  %3742 = vmatpush1.bf16.msra.mxu0 0
  %3743 = vmatprep.subr.bf16.mxu0 0
  %3744 = vmatpush1.bf16.msra.mxu0 0
  %3745 = vmatprep.subr.bf16.mxu0 0
  %3746 = vmatpush1.bf16.msra.mxu0 0
  %3747 = vmatprep.subr.bf16.mxu0 0
  %3748 = vmatpush1.bf16.msra.mxu0 0
  %3749 = vmatprep.subr.bf16.mxu0 0
  %3750 = vmatpush1.bf16.msra.mxu0 0
  %3751 = vmatprep.subr.bf16.mxu0 0
  %3752 = vmatpush1.bf16.msra.mxu0 0
  %3753 = vmatprep.subr.bf16.mxu0 0
  %3754 = vmatpush1.bf16.msra.mxu0 0
  %3755 = vmatprep.subr.bf16.mxu0 0
  %3756 = vmatpush1.bf16.msra.mxu0 0
  %3757 = vmatprep.mubr.bf16.mxu0 0
  %3758 = vmatmul.mubr.bf16.gmra.mrb[0].mxu0 %v3723
  %v3759 = vpop.f32.mrb[0].mxu0
  %v3760 = vadd.f32 0.0, %v3759
  %v3761 = vpop.f32.mrb[0].mxu0
  %v3762 = vadd.f32 0.0, %v3761
  %v3763 = vpop.f32.mrb[0].mxu0
  %v3764 = vadd.f32 0.0, %v3763
  %v3765 = vpop.f32.mrb[0].mxu0
  %v3766 = vadd.f32 0.0, %v3765
  %3767 = vdwg.mxu0
  %v3768 = vpack.c.bf16 %v3764, %v3760
  %v3769 = vpack.c.bf16 %v3766, %v3762
  %s3770 = scalar_lea.vmem %s3, 256
  %v3771 = vld [vmem:[%s3770] sm:$0xff]
  %v3772 = vld [vmem:[%s3770 + $0x8] sm:$0xff]
  %v3773 = vld [vmem:[%s3770 + $0x10] sm:$0xff]
  %v3774 = vld [vmem:[%s3770 + $0x18] sm:$0xff]
  %v3775 = vld [vmem:[%s3770 + $0x20] sm:$0xff]
  %v3776 = vld [vmem:[%s3770 + $0x28] sm:$0xff]
  %v3777 = vld [vmem:[%s3770 + $0x30] sm:$0xff]
  %v3778 = vld [vmem:[%s3770 + $0x38] sm:$0xff]
  %v3779 = vld [vmem:[%s3770 + $0x40] sm:$0xff]
  %v3780 = vld [vmem:[%s3770 + $0x48] sm:$0xff]
  %v3781 = vld [vmem:[%s3770 + $0x50] sm:$0xff]
  %v3782 = vld [vmem:[%s3770 + $0x58] sm:$0xff]
  %v3783 = vld [vmem:[%s3770 + $0x60] sm:$0xff]
  %v3784 = vld [vmem:[%s3770 + $0x68] sm:$0xff]
  %v3785 = vld [vmem:[%s3770 + $0x70] sm:$0xff]
  %v3786 = vld [vmem:[%s3770 + $0x78] sm:$0xff]
  %v3787 = vld [vmem:[%s3770 + $0x80] sm:$0xff]
  %v3788 = vld [vmem:[%s3770 + $0x88] sm:$0xff]
  %v3789 = vld [vmem:[%s3770 + $0x90] sm:$0xff]
  %v3790 = vld [vmem:[%s3770 + $0x98] sm:$0xff]
  %v3791 = vld [vmem:[%s3770 + $0xa0] sm:$0xff]
  %v3792 = vld [vmem:[%s3770 + $0xa8] sm:$0xff]
  %v3793 = vld [vmem:[%s3770 + $0xb0] sm:$0xff]
  %v3794 = vld [vmem:[%s3770 + $0xb8] sm:$0xff]
  %v3795 = vld [vmem:[%s3770 + $0xc0] sm:$0xff]
  %v3796 = vld [vmem:[%s3770 + $0xc8] sm:$0xff]
  %v3797 = vld [vmem:[%s3770 + $0xd0] sm:$0xff]
  %v3798 = vld [vmem:[%s3770 + $0xd8] sm:$0xff]
  %v3799 = vld [vmem:[%s3770 + $0xe0] sm:$0xff]
  %v3800 = vld [vmem:[%s3770 + $0xe8] sm:$0xff]
  %v3801 = vld [vmem:[%s3770 + $0xf0] sm:$0xff]
  %v3802 = vld [vmem:[%s3770 + $0xf8] sm:$0xff]
  %v3835 = vunpack.c.l.b16 %v3771
  %v3836 = vunpack.c.h.b16 %v3771
  %v3837 = vunpack.c.l.b16 %v3772
  %v3838 = vunpack.c.h.b16 %v3772
  %v3839 = vunpack.c.l.b16 %v3773
  %v3840 = vunpack.c.h.b16 %v3773
  %v3841 = vunpack.c.l.b16 %v3774
  %v3842 = vunpack.c.h.b16 %v3774
  %v3843 = vunpack.c.l.b16 %v3775
  %v3844 = vunpack.c.h.b16 %v3775
  %v3845 = vunpack.c.l.b16 %v3776
  %v3846 = vunpack.c.h.b16 %v3776
  %v3847 = vunpack.c.l.b16 %v3777
  %v3848 = vunpack.c.h.b16 %v3777
  %v3849 = vunpack.c.l.b16 %v3778
  %v3850 = vunpack.c.h.b16 %v3778
  %v3851 = vunpack.c.l.b16 %v3779
  %v3852 = vunpack.c.h.b16 %v3779
  %v3853 = vunpack.c.l.b16 %v3780
  %v3854 = vunpack.c.h.b16 %v3780
  %v3855 = vunpack.c.l.b16 %v3781
  %v3856 = vunpack.c.h.b16 %v3781
  %v3857 = vunpack.c.l.b16 %v3782
  %v3858 = vunpack.c.h.b16 %v3782
  %v3859 = vunpack.c.l.b16 %v3783
  %v3860 = vunpack.c.h.b16 %v3783
  %v3861 = vunpack.c.l.b16 %v3784
  %v3862 = vunpack.c.h.b16 %v3784
  %v3863 = vunpack.c.l.b16 %v3785
  %v3864 = vunpack.c.h.b16 %v3785
  %v3865 = vunpack.c.l.b16 %v3786
  %v3866 = vunpack.c.h.b16 %v3786
  %v3867 = vunpack.c.l.b16 %v3787
  %v3868 = vunpack.c.h.b16 %v3787
  %v3869 = vunpack.c.l.b16 %v3788
  %v3870 = vunpack.c.h.b16 %v3788
  %v3871 = vunpack.c.l.b16 %v3789
  %v3872 = vunpack.c.h.b16 %v3789
  %v3873 = vunpack.c.l.b16 %v3790
  %v3874 = vunpack.c.h.b16 %v3790
  %v3875 = vunpack.c.l.b16 %v3791
  %v3876 = vunpack.c.h.b16 %v3791
  %v3877 = vunpack.c.l.b16 %v3792
  %v3878 = vunpack.c.h.b16 %v3792
  %v3879 = vunpack.c.l.b16 %v3793
  %v3880 = vunpack.c.h.b16 %v3793
  %v3881 = vunpack.c.l.b16 %v3794
  %v3882 = vunpack.c.h.b16 %v3794
  %v3883 = vunpack.c.l.b16 %v3795
  %v3884 = vunpack.c.h.b16 %v3795
  %v3885 = vunpack.c.l.b16 %v3796
  %v3886 = vunpack.c.h.b16 %v3796
  %v3887 = vunpack.c.l.b16 %v3797
  %v3888 = vunpack.c.h.b16 %v3797
  %v3889 = vunpack.c.l.b16 %v3798
  %v3890 = vunpack.c.h.b16 %v3798
  %v3891 = vunpack.c.l.b16 %v3799
  %v3892 = vunpack.c.h.b16 %v3799
  %v3893 = vunpack.c.l.b16 %v3800
  %v3894 = vunpack.c.h.b16 %v3800
  %v3895 = vunpack.c.l.b16 %v3801
  %v3896 = vunpack.c.h.b16 %v3801
  %v3897 = vunpack.c.l.b16 %v3802
  %v3898 = vunpack.c.h.b16 %v3802
  %v3899 = vpack.c.b16 %v3837, %v3835
  %v3900 = vpack.c.b16 %v3838, %v3836
  %v3901 = vpack.c.b16 %v3841, %v3839
  %v3902 = vpack.c.b16 %v3842, %v3840
  %v3903 = vpack.c.b16 %v3845, %v3843
  %v3904 = vpack.c.b16 %v3846, %v3844
  %v3905 = vpack.c.b16 %v3849, %v3847
  %v3906 = vpack.c.b16 %v3850, %v3848
  %v3907 = vpack.c.b16 %v3853, %v3851
  %v3908 = vpack.c.b16 %v3854, %v3852
  %v3909 = vpack.c.b16 %v3857, %v3855
  %v3910 = vpack.c.b16 %v3858, %v3856
  %v3911 = vpack.c.b16 %v3861, %v3859
  %v3912 = vpack.c.b16 %v3862, %v3860
  %v3913 = vpack.c.b16 %v3865, %v3863
  %v3914 = vpack.c.b16 %v3866, %v3864
  %v3915 = vpack.c.b16 %v3869, %v3867
  %v3916 = vpack.c.b16 %v3870, %v3868
  %v3917 = vpack.c.b16 %v3873, %v3871
  %v3918 = vpack.c.b16 %v3874, %v3872
  %v3919 = vpack.c.b16 %v3877, %v3875
  %v3920 = vpack.c.b16 %v3878, %v3876
  %v3921 = vpack.c.b16 %v3881, %v3879
  %v3922 = vpack.c.b16 %v3882, %v3880
  %v3923 = vpack.c.b16 %v3885, %v3883
  %v3924 = vpack.c.b16 %v3886, %v3884
  %v3925 = vpack.c.b16 %v3889, %v3887
  %v3926 = vpack.c.b16 %v3890, %v3888
  %v3927 = vpack.c.b16 %v3893, %v3891
  %v3928 = vpack.c.b16 %v3894, %v3892
  %v3929 = vpack.c.b16 %v3897, %v3895
  %v3930 = vpack.c.b16 %v3898, %v3896
  %3963 = vmatprep.subr.bf16.mxu0 %v3900
  %3964 = vmatpush1.bf16.msra.mxu0 %v3899
  %3965 = vmatprep.subr.bf16.mxu0 %v3902
  %3966 = vmatpush1.bf16.msra.mxu0 %v3901
  %3967 = vmatprep.subr.bf16.mxu0 %v3904
  %3968 = vmatpush1.bf16.msra.mxu0 %v3903
  %3969 = vmatprep.subr.bf16.mxu0 %v3906
  %3970 = vmatpush1.bf16.msra.mxu0 %v3905
  %3971 = vmatprep.subr.bf16.mxu0 %v3908
  %3972 = vmatpush1.bf16.msra.mxu0 %v3907
  %3973 = vmatprep.subr.bf16.mxu0 %v3910
  %3974 = vmatpush1.bf16.msra.mxu0 %v3909
  %3975 = vmatprep.subr.bf16.mxu0 %v3912
  %3976 = vmatpush1.bf16.msra.mxu0 %v3911
  %3977 = vmatprep.subr.bf16.mxu0 %v3914
  %3978 = vmatpush1.bf16.msra.mxu0 %v3913
  %3979 = vmatprep.subr.bf16.mxu0 %v3916
  %3980 = vmatpush1.bf16.msra.mxu0 %v3915
  %3981 = vmatprep.subr.bf16.mxu0 %v3918
  %3982 = vmatpush1.bf16.msra.mxu0 %v3917
  %3983 = vmatprep.subr.bf16.mxu0 %v3920
  %3984 = vmatpush1.bf16.msra.mxu0 %v3919
  %3985 = vmatprep.subr.bf16.mxu0 %v3922
  %3986 = vmatpush1.bf16.msra.mxu0 %v3921
  %3987 = vmatprep.subr.bf16.mxu0 %v3924
  %3988 = vmatpush1.bf16.msra.mxu0 %v3923
  %3989 = vmatprep.subr.bf16.mxu0 %v3926
  %3990 = vmatpush1.bf16.msra.mxu0 %v3925
  %3991 = vmatprep.subr.bf16.mxu0 %v3928
  %3992 = vmatpush1.bf16.msra.mxu0 %v3927
  %3993 = vmatprep.subr.bf16.mxu0 %v3930
  %3994 = vmatpush1.bf16.msra.mxu0 %v3929
  %3995 = vmatprep.mubr.bf16.mxu0 %v3769
  %3996 = vmatmul.mubr.bf16.gmra.mrb[0].mxu0 %v3768
  %v3997 = vpop.f32.mrb[0].mxu0
  %v3998 = vadd.f32 0.0, %v3997
  %v3999 = vpop.f32.mrb[0].mxu0
  %v4000 = vadd.f32 0.0, %v3999
  %v4001 = vpop.f32.mrb[0].mxu0
  %v4002 = vadd.f32 0.0, %v4001
  %v4003 = vpop.f32.mrb[0].mxu0
  %v4004 = vadd.f32 0.0, %v4003
  %4005 = vdwg.mxu0
  %v4038 = vunpack.c.l.b16 %v3675
  %v4039 = vunpack.c.h.b16 %v3675
  %v4040 = vunpack.c.l.b16 %v3676
  %v4041 = vunpack.c.h.b16 %v3676
  %v4042 = vunpack.c.l.b16 %v3677
  %v4043 = vunpack.c.h.b16 %v3677
  %v4044 = vunpack.c.l.b16 %v3678
  %v4045 = vunpack.c.h.b16 %v3678
  %v4046 = vunpack.c.l.b16 %v3679
  %v4047 = vunpack.c.h.b16 %v3679
  %v4048 = vunpack.c.l.b16 %v3680
  %v4049 = vunpack.c.h.b16 %v3680
  %v4050 = vunpack.c.l.b16 %v3681
  %v4051 = vunpack.c.h.b16 %v3681
  %v4052 = vunpack.c.l.b16 %v3682
  %v4053 = vunpack.c.h.b16 %v3682
  %v4054 = vunpack.c.l.b16 %v3683
  %v4055 = vunpack.c.h.b16 %v3683
  %v4056 = vunpack.c.l.b16 %v3684
  %v4057 = vunpack.c.h.b16 %v3684
  %v4058 = vunpack.c.l.b16 %v3685
  %v4059 = vunpack.c.h.b16 %v3685
  %v4060 = vunpack.c.l.b16 %v3686
  %v4061 = vunpack.c.h.b16 %v3686
  %v4062 = vunpack.c.l.b16 %v3687
  %v4063 = vunpack.c.h.b16 %v3687
  %v4064 = vunpack.c.l.b16 %v3688
  %v4065 = vunpack.c.h.b16 %v3688
  %v4066 = vunpack.c.l.b16 %v3689
  %v4067 = vunpack.c.h.b16 %v3689
  %v4068 = vunpack.c.l.b16 %v3690
  %v4069 = vunpack.c.h.b16 %v3690
  %v4070 = vunpack.c.l.b16 %v3691
  %v4071 = vunpack.c.h.b16 %v3691
  %v4072 = vunpack.c.l.b16 %v3692
  %v4073 = vunpack.c.h.b16 %v3692
  %v4074 = vunpack.c.l.b16 %v3693
  %v4075 = vunpack.c.h.b16 %v3693
  %v4076 = vunpack.c.l.b16 %v3694
  %v4077 = vunpack.c.h.b16 %v3694
  %v4078 = vunpack.c.l.b16 %v3695
  %v4079 = vunpack.c.h.b16 %v3695
  %v4080 = vunpack.c.l.b16 %v3696
  %v4081 = vunpack.c.h.b16 %v3696
  %v4082 = vunpack.c.l.b16 %v3697
  %v4083 = vunpack.c.h.b16 %v3697
  %v4084 = vunpack.c.l.b16 %v3698
  %v4085 = vunpack.c.h.b16 %v3698
  %v4086 = vunpack.c.l.b16 %v3699
  %v4087 = vunpack.c.h.b16 %v3699
  %v4088 = vunpack.c.l.b16 %v3700
  %v4089 = vunpack.c.h.b16 %v3700
  %v4090 = vunpack.c.l.b16 %v3701
  %v4091 = vunpack.c.h.b16 %v3701
  %v4092 = vunpack.c.l.b16 %v3702
  %v4093 = vunpack.c.h.b16 %v3702
  %v4094 = vunpack.c.l.b16 %v3703
  %v4095 = vunpack.c.h.b16 %v3703
  %v4096 = vunpack.c.l.b16 %v3704
  %v4097 = vunpack.c.h.b16 %v3704
  %v4098 = vunpack.c.l.b16 %v3705
  %v4099 = vunpack.c.h.b16 %v3705
  %v4100 = vunpack.c.l.b16 %v3706
  %v4101 = vunpack.c.h.b16 %v3706
  %v4102 = vpack.c.b16 %v4040, %v4038
  %v4103 = vpack.c.b16 %v4041, %v4039
  %v4104 = vpack.c.b16 %v4044, %v4042
  %v4105 = vpack.c.b16 %v4045, %v4043
  %v4106 = vpack.c.b16 %v4048, %v4046
  %v4107 = vpack.c.b16 %v4049, %v4047
  %v4108 = vpack.c.b16 %v4052, %v4050
  %v4109 = vpack.c.b16 %v4053, %v4051
  %v4110 = vpack.c.b16 %v4056, %v4054
  %v4111 = vpack.c.b16 %v4057, %v4055
  %v4112 = vpack.c.b16 %v4060, %v4058
  %v4113 = vpack.c.b16 %v4061, %v4059
  %v4114 = vpack.c.b16 %v4064, %v4062
  %v4115 = vpack.c.b16 %v4065, %v4063
  %v4116 = vpack.c.b16 %v4068, %v4066
  %v4117 = vpack.c.b16 %v4069, %v4067
  %v4118 = vpack.c.b16 %v4072, %v4070
  %v4119 = vpack.c.b16 %v4073, %v4071
  %v4120 = vpack.c.b16 %v4076, %v4074
  %v4121 = vpack.c.b16 %v4077, %v4075
  %v4122 = vpack.c.b16 %v4080, %v4078
  %v4123 = vpack.c.b16 %v4081, %v4079
  %v4124 = vpack.c.b16 %v4084, %v4082
  %v4125 = vpack.c.b16 %v4085, %v4083
  %v4126 = vpack.c.b16 %v4088, %v4086
  %v4127 = vpack.c.b16 %v4089, %v4087
  %v4128 = vpack.c.b16 %v4092, %v4090
  %v4129 = vpack.c.b16 %v4093, %v4091
  %v4130 = vpack.c.b16 %v4096, %v4094
  %v4131 = vpack.c.b16 %v4097, %v4095
  %v4132 = vpack.c.b16 %v4100, %v4098
  %v4133 = vpack.c.b16 %v4101, %v4099
  %4166 = vmatprep.subr.bf16.mxu0 %v4103
  %4167 = vmatpush1.bf16.msra.mxu0 %v4102
  %4168 = vmatprep.subr.bf16.mxu0 %v4105
  %4169 = vmatpush1.bf16.msra.mxu0 %v4104
  %4170 = vmatprep.subr.bf16.mxu0 %v4107
  %4171 = vmatpush1.bf16.msra.mxu0 %v4106
  %4172 = vmatprep.subr.bf16.mxu0 %v4109
  %4173 = vmatpush1.bf16.msra.mxu0 %v4108
  %4174 = vmatprep.subr.bf16.mxu0 %v4111
  %4175 = vmatpush1.bf16.msra.mxu0 %v4110
  %4176 = vmatprep.subr.bf16.mxu0 %v4113
  %4177 = vmatpush1.bf16.msra.mxu0 %v4112
  %4178 = vmatprep.subr.bf16.mxu0 %v4115
  %4179 = vmatpush1.bf16.msra.mxu0 %v4114
  %4180 = vmatprep.subr.bf16.mxu0 %v4117
  %4181 = vmatpush1.bf16.msra.mxu0 %v4116
  %4182 = vmatprep.subr.bf16.mxu0 %v4119
  %4183 = vmatpush1.bf16.msra.mxu0 %v4118
  %4184 = vmatprep.subr.bf16.mxu0 %v4121
  %4185 = vmatpush1.bf16.msra.mxu0 %v4120
  %4186 = vmatprep.subr.bf16.mxu0 %v4123
  %4187 = vmatpush1.bf16.msra.mxu0 %v4122
  %4188 = vmatprep.subr.bf16.mxu0 %v4125
  %4189 = vmatpush1.bf16.msra.mxu0 %v4124
  %4190 = vmatprep.subr.bf16.mxu0 %v4127
  %4191 = vmatpush1.bf16.msra.mxu0 %v4126
  %4192 = vmatprep.subr.bf16.mxu0 %v4129
  %4193 = vmatpush1.bf16.msra.mxu0 %v4128
  %4194 = vmatprep.subr.bf16.mxu0 %v4131
  %4195 = vmatpush1.bf16.msra.mxu0 %v4130
  %4196 = vmatprep.subr.bf16.mxu0 %v4133
  %4197 = vmatpush1.bf16.msra.mxu0 %v4132
  %4198 = vmatprep.mubr.bf16.mxu0 %v3674
  %4199 = vmatmul.mubr.bf16.gmra.mrb[0].mxu0 %v3673
  %v4200 = vpop.f32.mrb[0].mxu0
  %v4201 = vadd.f32 %v3998, %v4200
  %v4202 = vpop.f32.mrb[0].mxu0
  %v4203 = vadd.f32 %v4000, %v4202
  %v4204 = vpop.f32.mrb[0].mxu0
  %v4205 = vadd.f32 %v4002, %v4204
  %v4206 = vpop.f32.mrb[0].mxu0
  %v4207 = vadd.f32 %v4004, %v4206
  %4208 = vdwg.mxu0
  %v4209 = vadd.s32 %v3605, 1
  %v4210 = vadd.s32 %v3606, 1
  %vm4211 = vcmp.ge.s32.totalorder %v4209, 0
  %vm4212 = vcmp.ge.s32.totalorder %v4210, 0
  %vm4213 = vcmp.lt.s32.totalorder %v4209, 16
  %vm4214 = vcmp.lt.s32.totalorder %v4210, 16
  %vm4215 = vmand %vm4211, %vm4213
  %vm4216 = vmand %vm4212, %vm4214
  %v4217 = vadd.s32 %v3615, %v4209
  %v4218 = vadd.s32 %v3616, %v4210
  %vm4219 = vcmp.eq.s32.totalorder %v50, %v4217
  %vm4220 = vcmp.eq.s32.totalorder %v50, %v4218
  %vm4221 = vmand %vm4219, %vm4215
  %vm4222 = vmand %vm4220, %vm4216
  %v4223 = vsel %vm4221, 1.0, 0.0
  %v4224 = vsel %vm4222, 1.0, 0.0
  %v4225 = vpack.c.bf16 %v4224, %v4223
  %v4227 = vsel %vm3626, %v4225, 0
  %4229 = vmatprep.subr.bf16.mxu0 %v3598
  %4230 = vmatpush1.bf16.msra.mxu0 %v3597
  %4231 = vmatprep.subr.bf16.mxu0 %v3600
  %4232 = vmatpush1.bf16.msra.mxu0 %v3599
  %4233 = vmatprep.subr.bf16.mxu0 0
  %4234 = vmatpush1.bf16.msra.mxu0 0
  %4235 = vmatprep.subr.bf16.mxu0 0
  %4236 = vmatpush1.bf16.msra.mxu0 0
  %4237 = vmatprep.subr.bf16.mxu0 0
  %4238 = vmatpush1.bf16.msra.mxu0 0
  %4239 = vmatprep.subr.bf16.mxu0 0
  %4240 = vmatpush1.bf16.msra.mxu0 0
  %4241 = vmatprep.subr.bf16.mxu0 0
  %4242 = vmatpush1.bf16.msra.mxu0 0
  %4243 = vmatprep.subr.bf16.mxu0 0
  %4244 = vmatpush1.bf16.msra.mxu0 0
  %4245 = vmatprep.subr.bf16.mxu0 0
  %4246 = vmatpush1.bf16.msra.mxu0 0
  %4247 = vmatprep.subr.bf16.mxu0 0
  %4248 = vmatpush1.bf16.msra.mxu0 0
  %4249 = vmatprep.subr.bf16.mxu0 0
  %4250 = vmatpush1.bf16.msra.mxu0 0
  %4251 = vmatprep.subr.bf16.mxu0 0
  %4252 = vmatpush1.bf16.msra.mxu0 0
  %4253 = vmatprep.subr.bf16.mxu0 0
  %4254 = vmatpush1.bf16.msra.mxu0 0
  %4255 = vmatprep.subr.bf16.mxu0 0
  %4256 = vmatpush1.bf16.msra.mxu0 0
  %4257 = vmatprep.subr.bf16.mxu0 0
  %4258 = vmatpush1.bf16.msra.mxu0 0
  %4259 = vmatprep.subr.bf16.mxu0 0
  %4260 = vmatpush1.bf16.msra.mxu0 0
  %4261 = vmatprep.mubr.bf16.mxu0 0
  %4262 = vmatmul.mubr.bf16.gmra.mrb[0].mxu0 %v4227
  %v4263 = vpop.f32.mrb[0].mxu0
  %v4264 = vadd.f32 0.0, %v4263
  %v4265 = vpop.f32.mrb[0].mxu0
  %v4266 = vadd.f32 0.0, %v4265
  %v4267 = vpop.f32.mrb[0].mxu0
  %v4268 = vadd.f32 0.0, %v4267
  %v4269 = vpop.f32.mrb[0].mxu0
  %v4270 = vadd.f32 0.0, %v4269
  %4271 = vdwg.mxu0
  %v4272 = vpack.c.bf16 %v4268, %v4264
  %v4273 = vpack.c.bf16 %v4270, %v4266
  %s4274 = scalar_lea.vmem %s3, 512
  %v4275 = vld [vmem:[%s4274] sm:$0xff]
  %v4276 = vld [vmem:[%s4274 + $0x8] sm:$0xff]
  %v4277 = vld [vmem:[%s4274 + $0x10] sm:$0xff]
  %v4278 = vld [vmem:[%s4274 + $0x18] sm:$0xff]
  %v4279 = vld [vmem:[%s4274 + $0x20] sm:$0xff]
  %v4280 = vld [vmem:[%s4274 + $0x28] sm:$0xff]
  %v4281 = vld [vmem:[%s4274 + $0x30] sm:$0xff]
  %v4282 = vld [vmem:[%s4274 + $0x38] sm:$0xff]
  %v4283 = vld [vmem:[%s4274 + $0x40] sm:$0xff]
  %v4284 = vld [vmem:[%s4274 + $0x48] sm:$0xff]
  %v4285 = vld [vmem:[%s4274 + $0x50] sm:$0xff]
  %v4286 = vld [vmem:[%s4274 + $0x58] sm:$0xff]
  %v4287 = vld [vmem:[%s4274 + $0x60] sm:$0xff]
  %v4288 = vld [vmem:[%s4274 + $0x68] sm:$0xff]
  %v4289 = vld [vmem:[%s4274 + $0x70] sm:$0xff]
  %v4290 = vld [vmem:[%s4274 + $0x78] sm:$0xff]
  %v4291 = vld [vmem:[%s4274 + $0x80] sm:$0xff]
  %v4292 = vld [vmem:[%s4274 + $0x88] sm:$0xff]
  %v4293 = vld [vmem:[%s4274 + $0x90] sm:$0xff]
  %v4294 = vld [vmem:[%s4274 + $0x98] sm:$0xff]
  %v4295 = vld [vmem:[%s4274 + $0xa0] sm:$0xff]
  %v4296 = vld [vmem:[%s4274 + $0xa8] sm:$0xff]
  %v4297 = vld [vmem:[%s4274 + $0xb0] sm:$0xff]
  %v4298 = vld [vmem:[%s4274 + $0xb8] sm:$0xff]
  %v4299 = vld [vmem:[%s4274 + $0xc0] sm:$0xff]
  %v4300 = vld [vmem:[%s4274 + $0xc8] sm:$0xff]
  %v4301 = vld [vmem:[%s4274 + $0xd0] sm:$0xff]
  %v4302 = vld [vmem:[%s4274 + $0xd8] sm:$0xff]
  %v4303 = vld [vmem:[%s4274 + $0xe0] sm:$0xff]
  %v4304 = vld [vmem:[%s4274 + $0xe8] sm:$0xff]
  %v4305 = vld [vmem:[%s4274 + $0xf0] sm:$0xff]
  %v4306 = vld [vmem:[%s4274 + $0xf8] sm:$0xff]
  %v4339 = vunpack.c.l.b16 %v4275
  %v4340 = vunpack.c.h.b16 %v4275
  %v4341 = vunpack.c.l.b16 %v4276
  %v4342 = vunpack.c.h.b16 %v4276
  %v4343 = vunpack.c.l.b16 %v4277
  %v4344 = vunpack.c.h.b16 %v4277
  %v4345 = vunpack.c.l.b16 %v4278
  %v4346 = vunpack.c.h.b16 %v4278
  %v4347 = vunpack.c.l.b16 %v4279
  %v4348 = vunpack.c.h.b16 %v4279
  %v4349 = vunpack.c.l.b16 %v4280
  %v4350 = vunpack.c.h.b16 %v4280
  %v4351 = vunpack.c.l.b16 %v4281
  %v4352 = vunpack.c.h.b16 %v4281
  %v4353 = vunpack.c.l.b16 %v4282
  %v4354 = vunpack.c.h.b16 %v4282
  %v4355 = vunpack.c.l.b16 %v4283
  %v4356 = vunpack.c.h.b16 %v4283
  %v4357 = vunpack.c.l.b16 %v4284
  %v4358 = vunpack.c.h.b16 %v4284
  %v4359 = vunpack.c.l.b16 %v4285
  %v4360 = vunpack.c.h.b16 %v4285
  %v4361 = vunpack.c.l.b16 %v4286
  %v4362 = vunpack.c.h.b16 %v4286
  %v4363 = vunpack.c.l.b16 %v4287
  %v4364 = vunpack.c.h.b16 %v4287
  %v4365 = vunpack.c.l.b16 %v4288
  %v4366 = vunpack.c.h.b16 %v4288
  %v4367 = vunpack.c.l.b16 %v4289
  %v4368 = vunpack.c.h.b16 %v4289
  %v4369 = vunpack.c.l.b16 %v4290
  %v4370 = vunpack.c.h.b16 %v4290
  %v4371 = vunpack.c.l.b16 %v4291
  %v4372 = vunpack.c.h.b16 %v4291
  %v4373 = vunpack.c.l.b16 %v4292
  %v4374 = vunpack.c.h.b16 %v4292
  %v4375 = vunpack.c.l.b16 %v4293
  %v4376 = vunpack.c.h.b16 %v4293
  %v4377 = vunpack.c.l.b16 %v4294
  %v4378 = vunpack.c.h.b16 %v4294
  %v4379 = vunpack.c.l.b16 %v4295
  %v4380 = vunpack.c.h.b16 %v4295
  %v4381 = vunpack.c.l.b16 %v4296
  %v4382 = vunpack.c.h.b16 %v4296
  %v4383 = vunpack.c.l.b16 %v4297
  %v4384 = vunpack.c.h.b16 %v4297
  %v4385 = vunpack.c.l.b16 %v4298
  %v4386 = vunpack.c.h.b16 %v4298
  %v4387 = vunpack.c.l.b16 %v4299
  %v4388 = vunpack.c.h.b16 %v4299
  %v4389 = vunpack.c.l.b16 %v4300
  %v4390 = vunpack.c.h.b16 %v4300
  %v4391 = vunpack.c.l.b16 %v4301
  %v4392 = vunpack.c.h.b16 %v4301
  %v4393 = vunpack.c.l.b16 %v4302
  %v4394 = vunpack.c.h.b16 %v4302
  %v4395 = vunpack.c.l.b16 %v4303
  %v4396 = vunpack.c.h.b16 %v4303
  %v4397 = vunpack.c.l.b16 %v4304
  %v4398 = vunpack.c.h.b16 %v4304
  %v4399 = vunpack.c.l.b16 %v4305
  %v4400 = vunpack.c.h.b16 %v4305
  %v4401 = vunpack.c.l.b16 %v4306
  %v4402 = vunpack.c.h.b16 %v4306
  %v4403 = vpack.c.b16 %v4341, %v4339
  %v4404 = vpack.c.b16 %v4342, %v4340
  %v4405 = vpack.c.b16 %v4345, %v4343
  %v4406 = vpack.c.b16 %v4346, %v4344
  %v4407 = vpack.c.b16 %v4349, %v4347
  %v4408 = vpack.c.b16 %v4350, %v4348
  %v4409 = vpack.c.b16 %v4353, %v4351
  %v4410 = vpack.c.b16 %v4354, %v4352
  %v4411 = vpack.c.b16 %v4357, %v4355
  %v4412 = vpack.c.b16 %v4358, %v4356
  %v4413 = vpack.c.b16 %v4361, %v4359
  %v4414 = vpack.c.b16 %v4362, %v4360
  %v4415 = vpack.c.b16 %v4365, %v4363
  %v4416 = vpack.c.b16 %v4366, %v4364
  %v4417 = vpack.c.b16 %v4369, %v4367
  %v4418 = vpack.c.b16 %v4370, %v4368
  %v4419 = vpack.c.b16 %v4373, %v4371
  %v4420 = vpack.c.b16 %v4374, %v4372
  %v4421 = vpack.c.b16 %v4377, %v4375
  %v4422 = vpack.c.b16 %v4378, %v4376
  %v4423 = vpack.c.b16 %v4381, %v4379
  %v4424 = vpack.c.b16 %v4382, %v4380
  %v4425 = vpack.c.b16 %v4385, %v4383
  %v4426 = vpack.c.b16 %v4386, %v4384
  %v4427 = vpack.c.b16 %v4389, %v4387
  %v4428 = vpack.c.b16 %v4390, %v4388
  %v4429 = vpack.c.b16 %v4393, %v4391
  %v4430 = vpack.c.b16 %v4394, %v4392
  %v4431 = vpack.c.b16 %v4397, %v4395
  %v4432 = vpack.c.b16 %v4398, %v4396
  %v4433 = vpack.c.b16 %v4401, %v4399
  %v4434 = vpack.c.b16 %v4402, %v4400
  %4467 = vmatprep.subr.bf16.mxu0 %v4404
  %4468 = vmatpush1.bf16.msra.mxu0 %v4403
  %4469 = vmatprep.subr.bf16.mxu0 %v4406
  %4470 = vmatpush1.bf16.msra.mxu0 %v4405
  %4471 = vmatprep.subr.bf16.mxu0 %v4408
  %4472 = vmatpush1.bf16.msra.mxu0 %v4407
  %4473 = vmatprep.subr.bf16.mxu0 %v4410
  %4474 = vmatpush1.bf16.msra.mxu0 %v4409
  %4475 = vmatprep.subr.bf16.mxu0 %v4412
  %4476 = vmatpush1.bf16.msra.mxu0 %v4411
  %4477 = vmatprep.subr.bf16.mxu0 %v4414
  %4478 = vmatpush1.bf16.msra.mxu0 %v4413
  %4479 = vmatprep.subr.bf16.mxu0 %v4416
  %4480 = vmatpush1.bf16.msra.mxu0 %v4415
  %4481 = vmatprep.subr.bf16.mxu0 %v4418
  %4482 = vmatpush1.bf16.msra.mxu0 %v4417
  %4483 = vmatprep.subr.bf16.mxu0 %v4420
  %4484 = vmatpush1.bf16.msra.mxu0 %v4419
  %4485 = vmatprep.subr.bf16.mxu0 %v4422
  %4486 = vmatpush1.bf16.msra.mxu0 %v4421
  %4487 = vmatprep.subr.bf16.mxu0 %v4424
  %4488 = vmatpush1.bf16.msra.mxu0 %v4423
  %4489 = vmatprep.subr.bf16.mxu0 %v4426
  %4490 = vmatpush1.bf16.msra.mxu0 %v4425
  %4491 = vmatprep.subr.bf16.mxu0 %v4428
  %4492 = vmatpush1.bf16.msra.mxu0 %v4427
  %4493 = vmatprep.subr.bf16.mxu0 %v4430
  %4494 = vmatpush1.bf16.msra.mxu0 %v4429
  %4495 = vmatprep.subr.bf16.mxu0 %v4432
  %4496 = vmatpush1.bf16.msra.mxu0 %v4431
  %4497 = vmatprep.subr.bf16.mxu0 %v4434
  %4498 = vmatpush1.bf16.msra.mxu0 %v4433
  %4499 = vmatprep.mubr.bf16.mxu0 %v4273
  %4500 = vmatmul.mubr.bf16.gmra.mrb[0].mxu0 %v4272
  %v4501 = vpop.f32.mrb[0].mxu0
  %v4502 = vadd.f32 0.0, %v4501
  %v4503 = vpop.f32.mrb[0].mxu0
  %v4504 = vadd.f32 0.0, %v4503
  %v4505 = vpop.f32.mrb[0].mxu0
  %v4506 = vadd.f32 0.0, %v4505
  %v4507 = vpop.f32.mrb[0].mxu0
  %v4508 = vadd.f32 0.0, %v4507
  %4509 = vdwg.mxu0
  %v4510 = vadd.f32 %v4201, %v4502
  %v4511 = vadd.f32 %v4203, %v4504
  %v4512 = vadd.f32 %v4205, %v4506
  %v4513 = vadd.f32 %v4207, %v4508
  %v4514 = vadd.s32 %v3605, 2
  %v4515 = vadd.s32 %v3606, 2
  %vm4516 = vcmp.ge.s32.totalorder %v4514, 0
  %vm4517 = vcmp.ge.s32.totalorder %v4515, 0
  %vm4518 = vcmp.lt.s32.totalorder %v4514, 16
  %vm4519 = vcmp.lt.s32.totalorder %v4515, 16
  %vm4520 = vmand %vm4516, %vm4518
  %vm4521 = vmand %vm4517, %vm4519
  %v4522 = vadd.s32 %v3615, %v4514
  %v4523 = vadd.s32 %v3616, %v4515
  %vm4524 = vcmp.eq.s32.totalorder %v50, %v4522
  %vm4525 = vcmp.eq.s32.totalorder %v50, %v4523
  %vm4526 = vmand %vm4524, %vm4520
  %vm4527 = vmand %vm4525, %vm4521
  %v4528 = vsel %vm4526, 1.0, 0.0
  %v4529 = vsel %vm4527, 1.0, 0.0
  %v4530 = vpack.c.bf16 %v4529, %v4528
  %v4532 = vsel %vm3626, %v4530, 0
  %4534 = vmatprep.subr.bf16.mxu0 %v3598
  %4535 = vmatpush1.bf16.msra.mxu0 %v3597
  %4536 = vmatprep.subr.bf16.mxu0 %v3600
  %4537 = vmatpush1.bf16.msra.mxu0 %v3599
  %4538 = vmatprep.subr.bf16.mxu0 0
  %4539 = vmatpush1.bf16.msra.mxu0 0
  %4540 = vmatprep.subr.bf16.mxu0 0
  %4541 = vmatpush1.bf16.msra.mxu0 0
  %4542 = vmatprep.subr.bf16.mxu0 0
  %4543 = vmatpush1.bf16.msra.mxu0 0
  %4544 = vmatprep.subr.bf16.mxu0 0
  %4545 = vmatpush1.bf16.msra.mxu0 0
  %4546 = vmatprep.subr.bf16.mxu0 0
  %4547 = vmatpush1.bf16.msra.mxu0 0
  %4548 = vmatprep.subr.bf16.mxu0 0
  %4549 = vmatpush1.bf16.msra.mxu0 0
  %4550 = vmatprep.subr.bf16.mxu0 0
  %4551 = vmatpush1.bf16.msra.mxu0 0
  %4552 = vmatprep.subr.bf16.mxu0 0
  %4553 = vmatpush1.bf16.msra.mxu0 0
  %4554 = vmatprep.subr.bf16.mxu0 0
  %4555 = vmatpush1.bf16.msra.mxu0 0
  %4556 = vmatprep.subr.bf16.mxu0 0
  %4557 = vmatpush1.bf16.msra.mxu0 0
  %4558 = vmatprep.subr.bf16.mxu0 0
  %4559 = vmatpush1.bf16.msra.mxu0 0
  %4560 = vmatprep.subr.bf16.mxu0 0
  %4561 = vmatpush1.bf16.msra.mxu0 0
  %4562 = vmatprep.subr.bf16.mxu0 0
  %4563 = vmatpush1.bf16.msra.mxu0 0
  %4564 = vmatprep.subr.bf16.mxu0 0
  %4565 = vmatpush1.bf16.msra.mxu0 0
  %4566 = vmatprep.mubr.bf16.mxu0 0
  %4567 = vmatmul.mubr.bf16.gmra.mrb[0].mxu0 %v4532
  %v4568 = vpop.f32.mrb[0].mxu0
  %v4569 = vadd.f32 0.0, %v4568
  %v4570 = vpop.f32.mrb[0].mxu0
  %v4571 = vadd.f32 0.0, %v4570
  %v4572 = vpop.f32.mrb[0].mxu0
  %v4573 = vadd.f32 0.0, %v4572
  %v4574 = vpop.f32.mrb[0].mxu0
  %v4575 = vadd.f32 0.0, %v4574
  %4576 = vdwg.mxu0
  %v4577 = vpack.c.bf16 %v4573, %v4569
  %v4578 = vpack.c.bf16 %v4575, %v4571
  %s4579 = scalar_lea.vmem %s3, 768
  %v4580 = vld [vmem:[%s4579] sm:$0xff]
  %v4581 = vld [vmem:[%s4579 + $0x8] sm:$0xff]
  %v4582 = vld [vmem:[%s4579 + $0x10] sm:$0xff]
  %v4583 = vld [vmem:[%s4579 + $0x18] sm:$0xff]
  %v4584 = vld [vmem:[%s4579 + $0x20] sm:$0xff]
  %v4585 = vld [vmem:[%s4579 + $0x28] sm:$0xff]
  %v4586 = vld [vmem:[%s4579 + $0x30] sm:$0xff]
  %v4587 = vld [vmem:[%s4579 + $0x38] sm:$0xff]
  %v4588 = vld [vmem:[%s4579 + $0x40] sm:$0xff]
  %v4589 = vld [vmem:[%s4579 + $0x48] sm:$0xff]
  %v4590 = vld [vmem:[%s4579 + $0x50] sm:$0xff]
  %v4591 = vld [vmem:[%s4579 + $0x58] sm:$0xff]
  %v4592 = vld [vmem:[%s4579 + $0x60] sm:$0xff]
  %v4593 = vld [vmem:[%s4579 + $0x68] sm:$0xff]
  %v4594 = vld [vmem:[%s4579 + $0x70] sm:$0xff]
  %v4595 = vld [vmem:[%s4579 + $0x78] sm:$0xff]
  %v4596 = vld [vmem:[%s4579 + $0x80] sm:$0xff]
  %v4597 = vld [vmem:[%s4579 + $0x88] sm:$0xff]
  %v4598 = vld [vmem:[%s4579 + $0x90] sm:$0xff]
  %v4599 = vld [vmem:[%s4579 + $0x98] sm:$0xff]
  %v4600 = vld [vmem:[%s4579 + $0xa0] sm:$0xff]
  %v4601 = vld [vmem:[%s4579 + $0xa8] sm:$0xff]
  %v4602 = vld [vmem:[%s4579 + $0xb0] sm:$0xff]
  %v4603 = vld [vmem:[%s4579 + $0xb8] sm:$0xff]
  %v4604 = vld [vmem:[%s4579 + $0xc0] sm:$0xff]
  %v4605 = vld [vmem:[%s4579 + $0xc8] sm:$0xff]
  %v4606 = vld [vmem:[%s4579 + $0xd0] sm:$0xff]
  %v4607 = vld [vmem:[%s4579 + $0xd8] sm:$0xff]
  %v4608 = vld [vmem:[%s4579 + $0xe0] sm:$0xff]
  %v4609 = vld [vmem:[%s4579 + $0xe8] sm:$0xff]
  %v4610 = vld [vmem:[%s4579 + $0xf0] sm:$0xff]
  %v4611 = vld [vmem:[%s4579 + $0xf8] sm:$0xff]
  %v4644 = vunpack.c.l.b16 %v4580
  %v4645 = vunpack.c.h.b16 %v4580
  %v4646 = vunpack.c.l.b16 %v4581
  %v4647 = vunpack.c.h.b16 %v4581
  %v4648 = vunpack.c.l.b16 %v4582
  %v4649 = vunpack.c.h.b16 %v4582
  %v4650 = vunpack.c.l.b16 %v4583
  %v4651 = vunpack.c.h.b16 %v4583
  %v4652 = vunpack.c.l.b16 %v4584
  %v4653 = vunpack.c.h.b16 %v4584
  %v4654 = vunpack.c.l.b16 %v4585
  %v4655 = vunpack.c.h.b16 %v4585
  %v4656 = vunpack.c.l.b16 %v4586
  %v4657 = vunpack.c.h.b16 %v4586
  %v4658 = vunpack.c.l.b16 %v4587
  %v4659 = vunpack.c.h.b16 %v4587
  %v4660 = vunpack.c.l.b16 %v4588
  %v4661 = vunpack.c.h.b16 %v4588
  %v4662 = vunpack.c.l.b16 %v4589
  %v4663 = vunpack.c.h.b16 %v4589
  %v4664 = vunpack.c.l.b16 %v4590
  %v4665 = vunpack.c.h.b16 %v4590
  %v4666 = vunpack.c.l.b16 %v4591
  %v4667 = vunpack.c.h.b16 %v4591
  %v4668 = vunpack.c.l.b16 %v4592
  %v4669 = vunpack.c.h.b16 %v4592
  %v4670 = vunpack.c.l.b16 %v4593
  %v4671 = vunpack.c.h.b16 %v4593
  %v4672 = vunpack.c.l.b16 %v4594
  %v4673 = vunpack.c.h.b16 %v4594
  %v4674 = vunpack.c.l.b16 %v4595
  %v4675 = vunpack.c.h.b16 %v4595
  %v4676 = vunpack.c.l.b16 %v4596
  %v4677 = vunpack.c.h.b16 %v4596
  %v4678 = vunpack.c.l.b16 %v4597
  %v4679 = vunpack.c.h.b16 %v4597
  %v4680 = vunpack.c.l.b16 %v4598
  %v4681 = vunpack.c.h.b16 %v4598
  %v4682 = vunpack.c.l.b16 %v4599
  %v4683 = vunpack.c.h.b16 %v4599
  %v4684 = vunpack.c.l.b16 %v4600
  %v4685 = vunpack.c.h.b16 %v4600
  %v4686 = vunpack.c.l.b16 %v4601
  %v4687 = vunpack.c.h.b16 %v4601
  %v4688 = vunpack.c.l.b16 %v4602
  %v4689 = vunpack.c.h.b16 %v4602
  %v4690 = vunpack.c.l.b16 %v4603
  %v4691 = vunpack.c.h.b16 %v4603
  %v4692 = vunpack.c.l.b16 %v4604
  %v4693 = vunpack.c.h.b16 %v4604
  %v4694 = vunpack.c.l.b16 %v4605
  %v4695 = vunpack.c.h.b16 %v4605
  %v4696 = vunpack.c.l.b16 %v4606
  %v4697 = vunpack.c.h.b16 %v4606
  %v4698 = vunpack.c.l.b16 %v4607
  %v4699 = vunpack.c.h.b16 %v4607
  %v4700 = vunpack.c.l.b16 %v4608
  %v4701 = vunpack.c.h.b16 %v4608
  %v4702 = vunpack.c.l.b16 %v4609
  %v4703 = vunpack.c.h.b16 %v4609
  %v4704 = vunpack.c.l.b16 %v4610
  %v4705 = vunpack.c.h.b16 %v4610
  %v4706 = vunpack.c.l.b16 %v4611
  %v4707 = vunpack.c.h.b16 %v4611
  %v4708 = vpack.c.b16 %v4646, %v4644
  %v4709 = vpack.c.b16 %v4647, %v4645
  %v4710 = vpack.c.b16 %v4650, %v4648
  %v4711 = vpack.c.b16 %v4651, %v4649
  %v4712 = vpack.c.b16 %v4654, %v4652
  %v4713 = vpack.c.b16 %v4655, %v4653
  %v4714 = vpack.c.b16 %v4658, %v4656
  %v4715 = vpack.c.b16 %v4659, %v4657
  %v4716 = vpack.c.b16 %v4662, %v4660
  %v4717 = vpack.c.b16 %v4663, %v4661
  %v4718 = vpack.c.b16 %v4666, %v4664
  %v4719 = vpack.c.b16 %v4667, %v4665
  %v4720 = vpack.c.b16 %v4670, %v4668
  %v4721 = vpack.c.b16 %v4671, %v4669
  %v4722 = vpack.c.b16 %v4674, %v4672
  %v4723 = vpack.c.b16 %v4675, %v4673
  %v4724 = vpack.c.b16 %v4678, %v4676
  %v4725 = vpack.c.b16 %v4679, %v4677
  %v4726 = vpack.c.b16 %v4682, %v4680
  %v4727 = vpack.c.b16 %v4683, %v4681
  %v4728 = vpack.c.b16 %v4686, %v4684
  %v4729 = vpack.c.b16 %v4687, %v4685
  %v4730 = vpack.c.b16 %v4690, %v4688
  %v4731 = vpack.c.b16 %v4691, %v4689
  %v4732 = vpack.c.b16 %v4694, %v4692
  %v4733 = vpack.c.b16 %v4695, %v4693
  %v4734 = vpack.c.b16 %v4698, %v4696
  %v4735 = vpack.c.b16 %v4699, %v4697
  %v4736 = vpack.c.b16 %v4702, %v4700
  %v4737 = vpack.c.b16 %v4703, %v4701
  %v4738 = vpack.c.b16 %v4706, %v4704
  %v4739 = vpack.c.b16 %v4707, %v4705
  %4772 = vmatprep.subr.bf16.mxu0 %v4709
  %4773 = vmatpush1.bf16.msra.mxu0 %v4708
  %4774 = vmatprep.subr.bf16.mxu0 %v4711
  %4775 = vmatpush1.bf16.msra.mxu0 %v4710
  %4776 = vmatprep.subr.bf16.mxu0 %v4713
  %4777 = vmatpush1.bf16.msra.mxu0 %v4712
  %4778 = vmatprep.subr.bf16.mxu0 %v4715
  %4779 = vmatpush1.bf16.msra.mxu0 %v4714
  %4780 = vmatprep.subr.bf16.mxu0 %v4717
  %4781 = vmatpush1.bf16.msra.mxu0 %v4716
  %4782 = vmatprep.subr.bf16.mxu0 %v4719
  %4783 = vmatpush1.bf16.msra.mxu0 %v4718
  %4784 = vmatprep.subr.bf16.mxu0 %v4721
  %4785 = vmatpush1.bf16.msra.mxu0 %v4720
  %4786 = vmatprep.subr.bf16.mxu0 %v4723
  %4787 = vmatpush1.bf16.msra.mxu0 %v4722
  %4788 = vmatprep.subr.bf16.mxu0 %v4725
  %4789 = vmatpush1.bf16.msra.mxu0 %v4724
  %4790 = vmatprep.subr.bf16.mxu0 %v4727
  %4791 = vmatpush1.bf16.msra.mxu0 %v4726
  %4792 = vmatprep.subr.bf16.mxu0 %v4729
  %4793 = vmatpush1.bf16.msra.mxu0 %v4728
  %4794 = vmatprep.subr.bf16.mxu0 %v4731
  %4795 = vmatpush1.bf16.msra.mxu0 %v4730
  %4796 = vmatprep.subr.bf16.mxu0 %v4733
  %4797 = vmatpush1.bf16.msra.mxu0 %v4732
  %4798 = vmatprep.subr.bf16.mxu0 %v4735
  %4799 = vmatpush1.bf16.msra.mxu0 %v4734
  %4800 = vmatprep.subr.bf16.mxu0 %v4737
  %4801 = vmatpush1.bf16.msra.mxu0 %v4736
  %4802 = vmatprep.subr.bf16.mxu0 %v4739
  %4803 = vmatpush1.bf16.msra.mxu0 %v4738
  %4804 = vmatprep.mubr.bf16.mxu0 %v4578
  %4805 = vmatmul.mubr.bf16.gmra.mrb[0].mxu0 %v4577
  %v4806 = vpop.f32.mrb[0].mxu0
  %v4807 = vadd.f32 0.0, %v4806
  %v4808 = vpop.f32.mrb[0].mxu0
  %v4809 = vadd.f32 0.0, %v4808
  %v4810 = vpop.f32.mrb[0].mxu0
  %v4811 = vadd.f32 0.0, %v4810
  %v4812 = vpop.f32.mrb[0].mxu0
  %v4813 = vadd.f32 0.0, %v4812
  %4814 = vdwg.mxu0
  %v4815 = vadd.f32 %v4510, %v4807
  %v4816 = vadd.f32 %v4511, %v4809
  %v4817 = vadd.f32 %v4512, %v4811
  %v4818 = vadd.f32 %v4513, %v4813
  %v4819 = vand.u32 %v3158, 31
  %v4820 = vand.u32 %v3159, 31
  %v4821 = vand.u32 %v3160, 31
  %v4822 = vand.u32 %v3161, 31
  %v4823 = vand.u32 %v3162, 31
  %v4824 = vand.u32 %v3163, 31
  %v4825 = vand.u32 %v3164, 31
  %v4826 = vand.u32 %v3165, 31
  %v4827 = vand.u32 %v3166, 31
  %v4828 = vand.u32 %v3167, 31
  %v4829 = vand.u32 %v3168, 31
  %v4830 = vand.u32 %v3169, 31
  %v4831 = vand.u32 %v3170, 31
  %v4832 = vand.u32 %v3171, 31
  %v4833 = vand.u32 %v3172, 31
  %v4834 = vand.u32 %v3173, 31
  %v4835 = vand.u32 %v3174, 31
  %v4836 = vand.u32 %v3175, 31
  %v4837 = vand.u32 %v3176, 31
  %v4838 = vand.u32 %v3177, 31
  %v4839 = vand.u32 %v3178, 31
  %v4840 = vand.u32 %v3179, 31
  %v4841 = vand.u32 %v3180, 31
  %v4842 = vand.u32 %v3181, 31
  %v4843 = vand.u32 %v50, 31
  %v4844 = vand.u32 %v3182, 31
  %vm4845 = vcmp.eq.s32.totalorder %v59, %v4843
  %vm4846 = vcmp.eq.s32.totalorder %v59, %v4844
  %vm4847 = vcmp.eq.s32.totalorder %v60, %v4843
  %vm4848 = vcmp.eq.s32.totalorder %v60, %v4844
  %vm4849 = vcmp.eq.s32.totalorder %v61, %v4843
  %vm4850 = vcmp.eq.s32.totalorder %v61, %v4844
  %vm4851 = vcmp.eq.s32.totalorder %v62, %v4843
  %vm4852 = vcmp.eq.s32.totalorder %v62, %v4844
  %vm4853 = vcmp.eq.s32.totalorder %v63, %v4843
  %vm4854 = vcmp.eq.s32.totalorder %v63, %v4844
  %vm4855 = vcmp.eq.s32.totalorder %v64, %v4843
  %vm4856 = vcmp.eq.s32.totalorder %v64, %v4844
  %vm4857 = vcmp.eq.s32.totalorder %v65, %v4843
  %vm4858 = vcmp.eq.s32.totalorder %v65, %v4844
  %vm4859 = vcmp.eq.s32.totalorder %v66, %v4843
  %vm4860 = vcmp.eq.s32.totalorder %v66, %v4844
  %vm4861 = vcmp.eq.s32.totalorder %v4819, %v4843
  %vm4862 = vcmp.eq.s32.totalorder %v4819, %v4844
  %vm4863 = vcmp.eq.s32.totalorder %v4820, %v4843
  %vm4864 = vcmp.eq.s32.totalorder %v4820, %v4844
  %vm4865 = vcmp.eq.s32.totalorder %v4821, %v4843
  %vm4866 = vcmp.eq.s32.totalorder %v4821, %v4844
  %vm4867 = vcmp.eq.s32.totalorder %v4822, %v4843
  %vm4868 = vcmp.eq.s32.totalorder %v4822, %v4844
  %vm4869 = vcmp.eq.s32.totalorder %v4823, %v4843
  %vm4870 = vcmp.eq.s32.totalorder %v4823, %v4844
  %vm4871 = vcmp.eq.s32.totalorder %v4824, %v4843
  %vm4872 = vcmp.eq.s32.totalorder %v4824, %v4844
  %vm4873 = vcmp.eq.s32.totalorder %v4825, %v4843
  %vm4874 = vcmp.eq.s32.totalorder %v4825, %v4844
  %vm4875 = vcmp.eq.s32.totalorder %v4826, %v4843
  %vm4876 = vcmp.eq.s32.totalorder %v4826, %v4844
  %vm4877 = vcmp.eq.s32.totalorder %v4827, %v4843
  %vm4878 = vcmp.eq.s32.totalorder %v4827, %v4844
  %vm4879 = vcmp.eq.s32.totalorder %v4828, %v4843
  %vm4880 = vcmp.eq.s32.totalorder %v4828, %v4844
  %vm4881 = vcmp.eq.s32.totalorder %v4829, %v4843
  %vm4882 = vcmp.eq.s32.totalorder %v4829, %v4844
  %vm4883 = vcmp.eq.s32.totalorder %v4830, %v4843
  %vm4884 = vcmp.eq.s32.totalorder %v4830, %v4844
  %vm4885 = vcmp.eq.s32.totalorder %v4831, %v4843
  %vm4886 = vcmp.eq.s32.totalorder %v4831, %v4844
  %vm4887 = vcmp.eq.s32.totalorder %v4832, %v4843
  %vm4888 = vcmp.eq.s32.totalorder %v4832, %v4844
  %vm4889 = vcmp.eq.s32.totalorder %v4833, %v4843
  %vm4890 = vcmp.eq.s32.totalorder %v4833, %v4844
  %vm4891 = vcmp.eq.s32.totalorder %v4834, %v4843
  %vm4892 = vcmp.eq.s32.totalorder %v4834, %v4844
  %vm4893 = vcmp.eq.s32.totalorder %v4835, %v4843
  %vm4894 = vcmp.eq.s32.totalorder %v4835, %v4844
  %vm4895 = vcmp.eq.s32.totalorder %v4836, %v4843
  %vm4896 = vcmp.eq.s32.totalorder %v4836, %v4844
  %vm4897 = vcmp.eq.s32.totalorder %v4837, %v4843
  %vm4898 = vcmp.eq.s32.totalorder %v4837, %v4844
  %vm4899 = vcmp.eq.s32.totalorder %v4838, %v4843
  %vm4900 = vcmp.eq.s32.totalorder %v4838, %v4844
  %vm4901 = vcmp.eq.s32.totalorder %v4839, %v4843
  %vm4902 = vcmp.eq.s32.totalorder %v4839, %v4844
  %vm4903 = vcmp.eq.s32.totalorder %v4840, %v4843
  %vm4904 = vcmp.eq.s32.totalorder %v4840, %v4844
  %vm4905 = vcmp.eq.s32.totalorder %v4841, %v4843
  %vm4906 = vcmp.eq.s32.totalorder %v4841, %v4844
  %vm4907 = vcmp.eq.s32.totalorder %v4842, %v4843
  %vm4908 = vcmp.eq.s32.totalorder %v4842, %v4844
  %v4909 = vsel %vm4845, 1.0, 0.0
  %v4910 = vsel %vm4846, 1.0, 0.0
  %v4911 = vsel %vm4847, 1.0, 0.0
  %v4912 = vsel %vm4848, 1.0, 0.0
  %v4913 = vsel %vm4849, 1.0, 0.0
  %v4914 = vsel %vm4850, 1.0, 0.0
  %v4915 = vsel %vm4851, 1.0, 0.0
  %v4916 = vsel %vm4852, 1.0, 0.0
  %v4917 = vsel %vm4853, 1.0, 0.0
  %v4918 = vsel %vm4854, 1.0, 0.0
  %v4919 = vsel %vm4855, 1.0, 0.0
  %v4920 = vsel %vm4856, 1.0, 0.0
  %v4921 = vsel %vm4857, 1.0, 0.0
  %v4922 = vsel %vm4858, 1.0, 0.0
  %v4923 = vsel %vm4859, 1.0, 0.0
  %v4924 = vsel %vm4860, 1.0, 0.0
  %v4925 = vsel %vm4861, 1.0, 0.0
  %v4926 = vsel %vm4862, 1.0, 0.0
  %v4927 = vsel %vm4863, 1.0, 0.0
  %v4928 = vsel %vm4864, 1.0, 0.0
  %v4929 = vsel %vm4865, 1.0, 0.0
  %v4930 = vsel %vm4866, 1.0, 0.0
  %v4931 = vsel %vm4867, 1.0, 0.0
  %v4932 = vsel %vm4868, 1.0, 0.0
  %v4933 = vsel %vm4869, 1.0, 0.0
  %v4934 = vsel %vm4870, 1.0, 0.0
  %v4935 = vsel %vm4871, 1.0, 0.0
  %v4936 = vsel %vm4872, 1.0, 0.0
  %v4937 = vsel %vm4873, 1.0, 0.0
  %v4938 = vsel %vm4874, 1.0, 0.0
  %v4939 = vsel %vm4875, 1.0, 0.0
  %v4940 = vsel %vm4876, 1.0, 0.0
  %v4941 = vsel %vm4877, 1.0, 0.0
  %v4942 = vsel %vm4878, 1.0, 0.0
  %v4943 = vsel %vm4879, 1.0, 0.0
  %v4944 = vsel %vm4880, 1.0, 0.0
  %v4945 = vsel %vm4881, 1.0, 0.0
  %v4946 = vsel %vm4882, 1.0, 0.0
  %v4947 = vsel %vm4883, 1.0, 0.0
  %v4948 = vsel %vm4884, 1.0, 0.0
  %v4949 = vsel %vm4885, 1.0, 0.0
  %v4950 = vsel %vm4886, 1.0, 0.0
  %v4951 = vsel %vm4887, 1.0, 0.0
  %v4952 = vsel %vm4888, 1.0, 0.0
  %v4953 = vsel %vm4889, 1.0, 0.0
  %v4954 = vsel %vm4890, 1.0, 0.0
  %v4955 = vsel %vm4891, 1.0, 0.0
  %v4956 = vsel %vm4892, 1.0, 0.0
  %v4957 = vsel %vm4893, 1.0, 0.0
  %v4958 = vsel %vm4894, 1.0, 0.0
  %v4959 = vsel %vm4895, 1.0, 0.0
  %v4960 = vsel %vm4896, 1.0, 0.0
  %v4961 = vsel %vm4897, 1.0, 0.0
  %v4962 = vsel %vm4898, 1.0, 0.0
  %v4963 = vsel %vm4899, 1.0, 0.0
  %v4964 = vsel %vm4900, 1.0, 0.0
  %v4965 = vsel %vm4901, 1.0, 0.0
  %v4966 = vsel %vm4902, 1.0, 0.0
  %v4967 = vsel %vm4903, 1.0, 0.0
  %v4968 = vsel %vm4904, 1.0, 0.0
  %v4969 = vsel %vm4905, 1.0, 0.0
  %v4970 = vsel %vm4906, 1.0, 0.0
  %v4971 = vsel %vm4907, 1.0, 0.0
  %v4972 = vsel %vm4908, 1.0, 0.0
  %v4973 = vadd.f32 %v4815, %v4817
  %v4974 = vrot.slane %v4973, 4
  %v4975 = vadd.f32 %v4973, %v4974
  %v4976 = vrot.slane %v4975, 2
  %v4977 = vadd.f32 %v4975, %v4976
  %v4978 = vrot.slane %v4977, 1
  %v4979 = vadd.f32 %v4977, %v4978
  %v4980 = vadd.f32 %v4816, %v4818
  %v4981 = vrot.slane %v4980, 4
  %v4982 = vadd.f32 %v4980, %v4981
  %v4983 = vrot.slane %v4982, 2
  %v4984 = vadd.f32 %v4982, %v4983
  %v4985 = vrot.slane %v4984, 1
  %v4986 = vadd.f32 %v4984, %v4985
  %v4987 = vmul.f32 %v4815, %v4815
  %v4988 = vmul.f32 %v4816, %v4816
  %v4989 = vmul.f32 %v4817, %v4817
  %v4990 = vmul.f32 %v4818, %v4818
  %v4991 = vadd.f32 %v4987, %v4989
  %v4992 = vrot.slane %v4991, 4
  %v4993 = vadd.f32 %v4991, %v4992
  %v4994 = vrot.slane %v4993, 2
  %v4995 = vadd.f32 %v4993, %v4994
  %v4996 = vrot.slane %v4995, 1
  %v4997 = vadd.f32 %v4995, %v4996
  %v4998 = vadd.f32 %v4988, %v4990
  %v4999 = vrot.slane %v4998, 4
  %v5000 = vadd.f32 %v4998, %v4999
  %v5001 = vrot.slane %v5000, 2
  %v5002 = vadd.f32 %v5000, %v5001
  %v5003 = vrot.slane %v5002, 1
  %v5004 = vadd.f32 %v5002, %v5003
  %5005 = vmatprep.subr.mxu0 %v4910
  %5006 = vmatpush1.msra.mxu0 %v4909
  %5007 = vmatprep.subr.mxu0 %v4912
  %5008 = vmatpush1.msra.mxu0 %v4911
  %5009 = vmatprep.subr.mxu0 %v4914
  %5010 = vmatpush1.msra.mxu0 %v4913
  %5011 = vmatprep.subr.mxu0 %v4916
  %5012 = vmatpush1.msra.mxu0 %v4915
  %5013 = vmatprep.subr.mxu0 %v4918
  %5014 = vmatpush1.msra.mxu0 %v4917
  %5015 = vmatprep.subr.mxu0 %v4920
  %5016 = vmatpush1.msra.mxu0 %v4919
  %5017 = vmatprep.subr.mxu0 %v4922
  %5018 = vmatpush1.msra.mxu0 %v4921
  %5019 = vmatprep.subr.mxu0 %v4924
  %5020 = vmatpush1.msra.mxu0 %v4923
  %5021 = vmatprep.subr.mxu0 %v4926
  %5022 = vmatpush1.msra.mxu0 %v4925
  %5023 = vmatprep.subr.mxu0 %v4928
  %5024 = vmatpush1.msra.mxu0 %v4927
  %5025 = vmatprep.subr.mxu0 %v4930
  %5026 = vmatpush1.msra.mxu0 %v4929
  %5027 = vmatprep.subr.mxu0 %v4932
  %5028 = vmatpush1.msra.mxu0 %v4931
  %5029 = vmatprep.subr.mxu0 %v4934
  %5030 = vmatpush1.msra.mxu0 %v4933
  %5031 = vmatprep.subr.mxu0 %v4936
  %5032 = vmatpush1.msra.mxu0 %v4935
  %5033 = vmatprep.subr.mxu0 %v4938
  %5034 = vmatpush1.msra.mxu0 %v4937
  %5035 = vmatprep.subr.mxu0 %v4940
  %5036 = vmatpush1.msra.mxu0 %v4939
  %5037 = vmatprep.subr.mxu0 %v4942
  %5038 = vmatpush1.msra.mxu0 %v4941
  %5039 = vmatprep.subr.mxu0 %v4944
  %5040 = vmatpush1.msra.mxu0 %v4943
  %5041 = vmatprep.subr.mxu0 %v4946
  %5042 = vmatpush1.msra.mxu0 %v4945
  %5043 = vmatprep.subr.mxu0 %v4948
  %5044 = vmatpush1.msra.mxu0 %v4947
  %5045 = vmatprep.subr.mxu0 %v4950
  %5046 = vmatpush1.msra.mxu0 %v4949
  %5047 = vmatprep.subr.mxu0 %v4952
  %5048 = vmatpush1.msra.mxu0 %v4951
  %5049 = vmatprep.subr.mxu0 %v4954
  %5050 = vmatpush1.msra.mxu0 %v4953
  %5051 = vmatprep.subr.mxu0 %v4956
  %5052 = vmatpush1.msra.mxu0 %v4955
  %5053 = vmatprep.subr.mxu0 %v4958
  %5054 = vmatpush1.msra.mxu0 %v4957
  %5055 = vmatprep.subr.mxu0 %v4960
  %5056 = vmatpush1.msra.mxu0 %v4959
  %5057 = vmatprep.subr.mxu0 %v4962
  %5058 = vmatpush1.msra.mxu0 %v4961
  %5059 = vmatprep.subr.mxu0 %v4964
  %5060 = vmatpush1.msra.mxu0 %v4963
  %5061 = vmatprep.subr.mxu0 %v4966
  %5062 = vmatpush1.msra.mxu0 %v4965
  %5063 = vmatprep.subr.mxu0 %v4968
  %5064 = vmatpush1.msra.mxu0 %v4967
  %5065 = vmatprep.subr.mxu0 %v4970
  %5066 = vmatpush1.msra.mxu0 %v4969
  %5067 = vmatprep.subr.mxu0 %v4972
  %5068 = vmatpush1.msra.mxu0 %v4971
  %5069 = vmatprep.mubr.f32.mxu0 %v4986
  %5070 = vmatmul.mubr.f32.gmra.mrb[0].mxu0 %v4979
  %v5071 = vpop.f32.mrb[0].mxu0
  %v5072 = vadd.f32 0.0, %v5071
  %v5073 = vpop.f32.mrb[0].mxu0
  %v5074 = vadd.f32 0.0, %v5073
  %5075 = vdwg.mxu0
  %v5076 = vmul.f32 %v5072, 0.0078125
  %v5077 = vmul.f32 %v5074, 0.0078125
  %5078 = vmatprep.subr.mxu0 %v4910
  %5079 = vmatpush1.msra.mxu0 %v4909
  %5080 = vmatprep.subr.mxu0 %v4912
  %5081 = vmatpush1.msra.mxu0 %v4911
  %5082 = vmatprep.subr.mxu0 %v4914
  %5083 = vmatpush1.msra.mxu0 %v4913
  %5084 = vmatprep.subr.mxu0 %v4916
  %5085 = vmatpush1.msra.mxu0 %v4915
  %5086 = vmatprep.subr.mxu0 %v4918
  %5087 = vmatpush1.msra.mxu0 %v4917
  %5088 = vmatprep.subr.mxu0 %v4920
  %5089 = vmatpush1.msra.mxu0 %v4919
  %5090 = vmatprep.subr.mxu0 %v4922
  %5091 = vmatpush1.msra.mxu0 %v4921
  %5092 = vmatprep.subr.mxu0 %v4924
  %5093 = vmatpush1.msra.mxu0 %v4923
  %5094 = vmatprep.subr.mxu0 %v4926
  %5095 = vmatpush1.msra.mxu0 %v4925
  %5096 = vmatprep.subr.mxu0 %v4928
  %5097 = vmatpush1.msra.mxu0 %v4927
  %5098 = vmatprep.subr.mxu0 %v4930
  %5099 = vmatpush1.msra.mxu0 %v4929
  %5100 = vmatprep.subr.mxu0 %v4932
  %5101 = vmatpush1.msra.mxu0 %v4931
  %5102 = vmatprep.subr.mxu0 %v4934
  %5103 = vmatpush1.msra.mxu0 %v4933
  %5104 = vmatprep.subr.mxu0 %v4936
  %5105 = vmatpush1.msra.mxu0 %v4935
  %5106 = vmatprep.subr.mxu0 %v4938
  %5107 = vmatpush1.msra.mxu0 %v4937
  %5108 = vmatprep.subr.mxu0 %v4940
  %5109 = vmatpush1.msra.mxu0 %v4939
  %5110 = vmatprep.subr.mxu0 %v4942
  %5111 = vmatpush1.msra.mxu0 %v4941
  %5112 = vmatprep.subr.mxu0 %v4944
  %5113 = vmatpush1.msra.mxu0 %v4943
  %5114 = vmatprep.subr.mxu0 %v4946
  %5115 = vmatpush1.msra.mxu0 %v4945
  %5116 = vmatprep.subr.mxu0 %v4948
  %5117 = vmatpush1.msra.mxu0 %v4947
  %5118 = vmatprep.subr.mxu0 %v4950
  %5119 = vmatpush1.msra.mxu0 %v4949
  %5120 = vmatprep.subr.mxu0 %v4952
  %5121 = vmatpush1.msra.mxu0 %v4951
  %5122 = vmatprep.subr.mxu0 %v4954
  %5123 = vmatpush1.msra.mxu0 %v4953
  %5124 = vmatprep.subr.mxu0 %v4956
  %5125 = vmatpush1.msra.mxu0 %v4955
  %5126 = vmatprep.subr.mxu0 %v4958
  %5127 = vmatpush1.msra.mxu0 %v4957
  %5128 = vmatprep.subr.mxu0 %v4960
  %5129 = vmatpush1.msra.mxu0 %v4959
  %5130 = vmatprep.subr.mxu0 %v4962
  %5131 = vmatpush1.msra.mxu0 %v4961
  %5132 = vmatprep.subr.mxu0 %v4964
  %5133 = vmatpush1.msra.mxu0 %v4963
  %5134 = vmatprep.subr.mxu0 %v4966
  %5135 = vmatpush1.msra.mxu0 %v4965
  %5136 = vmatprep.subr.mxu0 %v4968
  %5137 = vmatpush1.msra.mxu0 %v4967
  %5138 = vmatprep.subr.mxu0 %v4970
  %5139 = vmatpush1.msra.mxu0 %v4969
  %5140 = vmatprep.subr.mxu0 %v4972
  %5141 = vmatpush1.msra.mxu0 %v4971
  %5142 = vmatprep.mubr.f32.mxu0 %v5004
  %5143 = vmatmul.mubr.f32.gmra.mrb[0].mxu0 %v4997
  %v5144 = vpop.f32.mrb[0].mxu0
  %v5145 = vadd.f32 0.0, %v5144
  %v5146 = vpop.f32.mrb[0].mxu0
  %v5147 = vadd.f32 0.0, %v5146
  %5148 = vdwg.mxu0
  %v5149 = vmul.f32 %v5145, 0.0078125
  %v5150 = vmul.f32 %v5147, 0.0078125
  %v5151 = vmul.f32 %v5076, %v5076
  %v5152 = vmul.f32 %v5077, %v5077
  %v5153 = vsub.f32 %v5149, %v5151
  %v5154 = vsub.f32 %v5150, %v5152
  %v5155 = vmax.f32 %v5153, 0.0
  %v5156 = vmax.f32 %v5154, 0.0
  %v5157 = vlaneseq
  %v5158 = vshrl.u32 %v5157, 7
  %v5159 = vsub.s32 0, %v5158
  %v5160 = vrot.slane %v5076, %v5159
  %v5161 = vlaneseq
  %v5162 = vshrl.u32 %v5161, 7
  %v5163 = vsub.s32 0, %v5162
  %v5164 = vrot.slane %v5077, %v5163
  %v5165 = vsub.f32 %v4815, %v5160
  %v5166 = vsub.f32 %v4816, %v5164
  %v5167 = vsub.f32 %v4817, %v5160
  %v5168 = vsub.f32 %v4818, %v5164
  %v5169 = vadd.f32 %v5155, 1e-05
  %v5170 = vadd.f32 %v5156, 1e-05
  %v5171 = vrsqrt.pop %v5169
  %v5172 = vrsqrt.pop %v5170
  %v5173 = vlaneseq
  %v5174 = vshrl.u32 %v5173, 7
  %v5175 = vsub.s32 0, %v5174
  %v5176 = vrot.slane %v5171, %v5175
  %v5177 = vlaneseq
  %v5178 = vshrl.u32 %v5177, 7
  %v5179 = vsub.s32 0, %v5178
  %v5180 = vrot.slane %v5172, %v5179
  %v5181 = vmul.f32 %v5165, %v5176
  %v5182 = vmul.f32 %v5166, %v5180
  %v5183 = vmul.f32 %v5167, %v5176
  %v5184 = vmul.f32 %v5168, %v5180
  %vm5185 = vcmp.gt.f32.partialorder %v5181, 0.0
  %vm5186 = vcmp.gt.f32.partialorder %v5182, 0.0
  %vm5187 = vcmp.gt.f32.partialorder %v5183, 0.0
  %vm5188 = vcmp.gt.f32.partialorder %v5184, 0.0
  %v5189 = vmul.f32 %v5181, 0.2
  %v5190 = vmul.f32 %v5182, 0.2
  %v5191 = vmul.f32 %v5183, 0.2
  %v5192 = vmul.f32 %v5184, 0.2
  %v5193 = vsel %vm5185, %v5181, %v5189
  %v5194 = vsel %vm5186, %v5182, %v5190
  %v5195 = vsel %vm5187, %v5183, %v5191
  %v5196 = vsel %vm5188, %v5184, %v5192
  %v5197 = vpack.c.bf16 %v5195, %v5193
  %v5198 = vpack.c.bf16 %v5196, %v5194
  %v5199 = vshra.s32 %v41, 2
  %v5200 = vand.u32 %v41, 3
  %v5201 = vmul.u32 %v5200, 2
  %v5202 = vadd.s32 %v5201, 4294967295
  %vm5203 = vcmp.ge.s32.totalorder %v5202, 0
  %vm5204 = vcmp.lt.s32.totalorder %v5202, 8
  %vm5205 = vmand %vm5203, %vm5204
  %v5206 = vmul.u32 %v5199, 8
  %v5207 = vadd.s32 %v5206, %v5202
  %vm5208 = vcmp.eq.s32.totalorder %v50, %v5207
  %vm5209 = vmand %vm5208, %vm5205
  %v5210 = vsel %vm5209, 1.0, 0.0
  %v5211 = vpack.c.bf16 %v5210, %v5210
  %vm5212 = vcmask 130048
  %v5214 = vsel %vm5212, %v5211, 0
  %5216 = vmatprep.subr.bf16.mxu0 %v5198
  %5217 = vmatpush1.bf16.msra.mxu0 %v5197
  %5218 = vmatprep.subr.bf16.mxu0 0
  %5219 = vmatpush1.bf16.msra.mxu0 0
  %5220 = vmatprep.subr.bf16.mxu0 0
  %5221 = vmatpush1.bf16.msra.mxu0 0
  %5222 = vmatprep.subr.bf16.mxu0 0
  %5223 = vmatpush1.bf16.msra.mxu0 0
  %5224 = vmatprep.subr.bf16.mxu0 0
  %5225 = vmatpush1.bf16.msra.mxu0 0
  %5226 = vmatprep.subr.bf16.mxu0 0
  %5227 = vmatpush1.bf16.msra.mxu0 0
  %5228 = vmatprep.subr.bf16.mxu0 0
  %5229 = vmatpush1.bf16.msra.mxu0 0
  %5230 = vmatprep.subr.bf16.mxu0 0
  %5231 = vmatpush1.bf16.msra.mxu0 0
  %5232 = vmatprep.subr.bf16.mxu0 0
  %5233 = vmatpush1.bf16.msra.mxu0 0
  %5234 = vmatprep.subr.bf16.mxu0 0
  %5235 = vmatpush1.bf16.msra.mxu0 0
  %5236 = vmatprep.subr.bf16.mxu0 0
  %5237 = vmatpush1.bf16.msra.mxu0 0
  %5238 = vmatprep.subr.bf16.mxu0 0
  %5239 = vmatpush1.bf16.msra.mxu0 0
  %5240 = vmatprep.subr.bf16.mxu0 0
  %5241 = vmatpush1.bf16.msra.mxu0 0
  %5242 = vmatprep.subr.bf16.mxu0 0
  %5243 = vmatpush1.bf16.msra.mxu0 0
  %5244 = vmatprep.subr.bf16.mxu0 0
  %5245 = vmatpush1.bf16.msra.mxu0 0
  %5246 = vmatprep.subr.bf16.mxu0 0
  %5247 = vmatpush1.bf16.msra.mxu0 0
  %5248 = vmatprep.mubr.bf16.mxu0 0
  %5249 = vmatmul.mubr.bf16.gmra.mrb[0].mxu0 %v5214
  %v5250 = vpop.f32.mrb[0].mxu0
  %v5251 = vadd.f32 0.0, %v5250
  %v5252 = vpop.f32.mrb[0].mxu0
  %v5253 = vadd.f32 0.0, %v5252
  %v5254 = vpop.f32.mrb[0].mxu0
  %v5255 = vpop.f32.mrb[0].mxu0
  %5256 = vdwg.mxu0
  %v5257 = vpack.c.bf16 %v5251, %v5251
  %v5258 = vpack.c.bf16 %v5253, %v5253
  %v5259 = vld [vmem:[%s4] sm:$0xff]
  %v5260 = vld [vmem:[%s4 + $0x8] sm:$0xff]
  %v5261 = vld [vmem:[%s4 + $0x10] sm:$0xff]
  %v5262 = vld [vmem:[%s4 + $0x18] sm:$0xff]
  %v5263 = vld [vmem:[%s4 + $0x20] sm:$0xff]
  %v5264 = vld [vmem:[%s4 + $0x28] sm:$0xff]
  %v5265 = vld [vmem:[%s4 + $0x30] sm:$0xff]
  %v5266 = vld [vmem:[%s4 + $0x38] sm:$0xff]
  %v5267 = vld [vmem:[%s4 + $0x40] sm:$0xff]
  %v5268 = vld [vmem:[%s4 + $0x48] sm:$0xff]
  %v5269 = vld [vmem:[%s4 + $0x50] sm:$0xff]
  %v5270 = vld [vmem:[%s4 + $0x58] sm:$0xff]
  %v5271 = vld [vmem:[%s4 + $0x60] sm:$0xff]
  %v5272 = vld [vmem:[%s4 + $0x68] sm:$0xff]
  %v5273 = vld [vmem:[%s4 + $0x70] sm:$0xff]
  %v5274 = vld [vmem:[%s4 + $0x78] sm:$0xff]
  %v5275 = vld [vmem:[%s4 + $0x80] sm:$0xff]
  %v5276 = vld [vmem:[%s4 + $0x88] sm:$0xff]
  %v5277 = vld [vmem:[%s4 + $0x90] sm:$0xff]
  %v5278 = vld [vmem:[%s4 + $0x98] sm:$0xff]
  %v5279 = vld [vmem:[%s4 + $0xa0] sm:$0xff]
  %v5280 = vld [vmem:[%s4 + $0xa8] sm:$0xff]
  %v5281 = vld [vmem:[%s4 + $0xb0] sm:$0xff]
  %v5282 = vld [vmem:[%s4 + $0xb8] sm:$0xff]
  %v5283 = vld [vmem:[%s4 + $0xc0] sm:$0xff]
  %v5284 = vld [vmem:[%s4 + $0xc8] sm:$0xff]
  %v5285 = vld [vmem:[%s4 + $0xd0] sm:$0xff]
  %v5286 = vld [vmem:[%s4 + $0xd8] sm:$0xff]
  %v5287 = vld [vmem:[%s4 + $0xe0] sm:$0xff]
  %v5288 = vld [vmem:[%s4 + $0xe8] sm:$0xff]
  %v5289 = vld [vmem:[%s4 + $0xf0] sm:$0xff]
  %v5290 = vld [vmem:[%s4 + $0xf8] sm:$0xff]
  %vm5291 = vcmp.ge.s32.totalorder %v5201, 0
  %vm5292 = vcmp.lt.s32.totalorder %v5201, 8
  %vm5293 = vmand %vm5291, %vm5292
  %v5294 = vadd.s32 %v5206, %v5201
  %vm5295 = vcmp.eq.s32.totalorder %v50, %v5294
  %vm5296 = vmand %vm5295, %vm5293
  %v5297 = vsel %vm5296, 1.0, 0.0
  %v5298 = vpack.c.bf16 %v5297, %v5297
  %v5300 = vsel %vm5212, %v5298, 0
  %5302 = vmatprep.subr.bf16.mxu0 %v5198
  %5303 = vmatpush1.bf16.msra.mxu0 %v5197
  %5304 = vmatprep.subr.bf16.mxu0 0
  %5305 = vmatpush1.bf16.msra.mxu0 0
  %5306 = vmatprep.subr.bf16.mxu0 0
  %5307 = vmatpush1.bf16.msra.mxu0 0
  %5308 = vmatprep.subr.bf16.mxu0 0
  %5309 = vmatpush1.bf16.msra.mxu0 0
  %5310 = vmatprep.subr.bf16.mxu0 0
  %5311 = vmatpush1.bf16.msra.mxu0 0
  %5312 = vmatprep.subr.bf16.mxu0 0
  %5313 = vmatpush1.bf16.msra.mxu0 0
  %5314 = vmatprep.subr.bf16.mxu0 0
  %5315 = vmatpush1.bf16.msra.mxu0 0
  %5316 = vmatprep.subr.bf16.mxu0 0
  %5317 = vmatpush1.bf16.msra.mxu0 0
  %5318 = vmatprep.subr.bf16.mxu0 0
  %5319 = vmatpush1.bf16.msra.mxu0 0
  %5320 = vmatprep.subr.bf16.mxu0 0
  %5321 = vmatpush1.bf16.msra.mxu0 0
  %5322 = vmatprep.subr.bf16.mxu0 0
  %5323 = vmatpush1.bf16.msra.mxu0 0
  %5324 = vmatprep.subr.bf16.mxu0 0
  %5325 = vmatpush1.bf16.msra.mxu0 0
  %5326 = vmatprep.subr.bf16.mxu0 0
  %5327 = vmatpush1.bf16.msra.mxu0 0
  %5328 = vmatprep.subr.bf16.mxu0 0
  %5329 = vmatpush1.bf16.msra.mxu0 0
  %5330 = vmatprep.subr.bf16.mxu0 0
  %5331 = vmatpush1.bf16.msra.mxu0 0
  %5332 = vmatprep.subr.bf16.mxu0 0
  %5333 = vmatpush1.bf16.msra.mxu0 0
  %5334 = vmatprep.mubr.bf16.mxu0 0
  %5335 = vmatmul.mubr.bf16.gmra.mrb[0].mxu0 %v5300
  %v5336 = vpop.f32.mrb[0].mxu0
  %v5337 = vadd.f32 0.0, %v5336
  %v5338 = vpop.f32.mrb[0].mxu0
  %v5339 = vadd.f32 0.0, %v5338
  %v5340 = vpop.f32.mrb[0].mxu0
  %v5341 = vpop.f32.mrb[0].mxu0
  %5342 = vdwg.mxu0
  %v5343 = vpack.c.bf16 %v5337, %v5337
  %v5344 = vpack.c.bf16 %v5339, %v5339
  %s5345 = scalar_lea.vmem %s4, 256
  %v5346 = vld [vmem:[%s5345] sm:$0xff]
  %v5347 = vld [vmem:[%s5345 + $0x8] sm:$0xff]
  %v5348 = vld [vmem:[%s5345 + $0x10] sm:$0xff]
  %v5349 = vld [vmem:[%s5345 + $0x18] sm:$0xff]
  %v5350 = vld [vmem:[%s5345 + $0x20] sm:$0xff]
  %v5351 = vld [vmem:[%s5345 + $0x28] sm:$0xff]
  %v5352 = vld [vmem:[%s5345 + $0x30] sm:$0xff]
  %v5353 = vld [vmem:[%s5345 + $0x38] sm:$0xff]
  %v5354 = vld [vmem:[%s5345 + $0x40] sm:$0xff]
  %v5355 = vld [vmem:[%s5345 + $0x48] sm:$0xff]
  %v5356 = vld [vmem:[%s5345 + $0x50] sm:$0xff]
  %v5357 = vld [vmem:[%s5345 + $0x58] sm:$0xff]
  %v5358 = vld [vmem:[%s5345 + $0x60] sm:$0xff]
  %v5359 = vld [vmem:[%s5345 + $0x68] sm:$0xff]
  %v5360 = vld [vmem:[%s5345 + $0x70] sm:$0xff]
  %v5361 = vld [vmem:[%s5345 + $0x78] sm:$0xff]
  %v5362 = vld [vmem:[%s5345 + $0x80] sm:$0xff]
  %v5363 = vld [vmem:[%s5345 + $0x88] sm:$0xff]
  %v5364 = vld [vmem:[%s5345 + $0x90] sm:$0xff]
  %v5365 = vld [vmem:[%s5345 + $0x98] sm:$0xff]
  %v5366 = vld [vmem:[%s5345 + $0xa0] sm:$0xff]
  %v5367 = vld [vmem:[%s5345 + $0xa8] sm:$0xff]
  %v5368 = vld [vmem:[%s5345 + $0xb0] sm:$0xff]
  %v5369 = vld [vmem:[%s5345 + $0xb8] sm:$0xff]
  %v5370 = vld [vmem:[%s5345 + $0xc0] sm:$0xff]
  %v5371 = vld [vmem:[%s5345 + $0xc8] sm:$0xff]
  %v5372 = vld [vmem:[%s5345 + $0xd0] sm:$0xff]
  %v5373 = vld [vmem:[%s5345 + $0xd8] sm:$0xff]
  %v5374 = vld [vmem:[%s5345 + $0xe0] sm:$0xff]
  %v5375 = vld [vmem:[%s5345 + $0xe8] sm:$0xff]
  %v5376 = vld [vmem:[%s5345 + $0xf0] sm:$0xff]
  %v5377 = vld [vmem:[%s5345 + $0xf8] sm:$0xff]
  %v5410 = vunpack.c.l.b16 %v5346
  %v5411 = vunpack.c.h.b16 %v5346
  %v5412 = vunpack.c.l.b16 %v5347
  %v5413 = vunpack.c.h.b16 %v5347
  %v5414 = vunpack.c.l.b16 %v5348
  %v5415 = vunpack.c.h.b16 %v5348
  %v5416 = vunpack.c.l.b16 %v5349
  %v5417 = vunpack.c.h.b16 %v5349
  %v5418 = vunpack.c.l.b16 %v5350
  %v5419 = vunpack.c.h.b16 %v5350
  %v5420 = vunpack.c.l.b16 %v5351
  %v5421 = vunpack.c.h.b16 %v5351
  %v5422 = vunpack.c.l.b16 %v5352
  %v5423 = vunpack.c.h.b16 %v5352
  %v5424 = vunpack.c.l.b16 %v5353
  %v5425 = vunpack.c.h.b16 %v5353
  %v5426 = vunpack.c.l.b16 %v5354
  %v5427 = vunpack.c.h.b16 %v5354
  %v5428 = vunpack.c.l.b16 %v5355
  %v5429 = vunpack.c.h.b16 %v5355
  %v5430 = vunpack.c.l.b16 %v5356
  %v5431 = vunpack.c.h.b16 %v5356
  %v5432 = vunpack.c.l.b16 %v5357
  %v5433 = vunpack.c.h.b16 %v5357
  %v5434 = vunpack.c.l.b16 %v5358
  %v5435 = vunpack.c.h.b16 %v5358
  %v5436 = vunpack.c.l.b16 %v5359
  %v5437 = vunpack.c.h.b16 %v5359
  %v5438 = vunpack.c.l.b16 %v5360
  %v5439 = vunpack.c.h.b16 %v5360
  %v5440 = vunpack.c.l.b16 %v5361
  %v5441 = vunpack.c.h.b16 %v5361
  %v5442 = vunpack.c.l.b16 %v5362
  %v5443 = vunpack.c.h.b16 %v5362
  %v5444 = vunpack.c.l.b16 %v5363
  %v5445 = vunpack.c.h.b16 %v5363
  %v5446 = vunpack.c.l.b16 %v5364
  %v5447 = vunpack.c.h.b16 %v5364
  %v5448 = vunpack.c.l.b16 %v5365
  %v5449 = vunpack.c.h.b16 %v5365
  %v5450 = vunpack.c.l.b16 %v5366
  %v5451 = vunpack.c.h.b16 %v5366
  %v5452 = vunpack.c.l.b16 %v5367
  %v5453 = vunpack.c.h.b16 %v5367
  %v5454 = vunpack.c.l.b16 %v5368
  %v5455 = vunpack.c.h.b16 %v5368
  %v5456 = vunpack.c.l.b16 %v5369
  %v5457 = vunpack.c.h.b16 %v5369
  %v5458 = vunpack.c.l.b16 %v5370
  %v5459 = vunpack.c.h.b16 %v5370
  %v5460 = vunpack.c.l.b16 %v5371
  %v5461 = vunpack.c.h.b16 %v5371
  %v5462 = vunpack.c.l.b16 %v5372
  %v5463 = vunpack.c.h.b16 %v5372
  %v5464 = vunpack.c.l.b16 %v5373
  %v5465 = vunpack.c.h.b16 %v5373
  %v5466 = vunpack.c.l.b16 %v5374
  %v5467 = vunpack.c.h.b16 %v5374
  %v5468 = vunpack.c.l.b16 %v5375
  %v5469 = vunpack.c.h.b16 %v5375
  %v5470 = vunpack.c.l.b16 %v5376
  %v5471 = vunpack.c.h.b16 %v5376
  %v5472 = vunpack.c.l.b16 %v5377
  %v5473 = vunpack.c.h.b16 %v5377
  %v5474 = vpack.c.b16 %v5412, %v5410
  %v5475 = vpack.c.b16 %v5413, %v5411
  %v5476 = vpack.c.b16 %v5416, %v5414
  %v5477 = vpack.c.b16 %v5417, %v5415
  %v5478 = vpack.c.b16 %v5420, %v5418
  %v5479 = vpack.c.b16 %v5421, %v5419
  %v5480 = vpack.c.b16 %v5424, %v5422
  %v5481 = vpack.c.b16 %v5425, %v5423
  %v5482 = vpack.c.b16 %v5428, %v5426
  %v5483 = vpack.c.b16 %v5429, %v5427
  %v5484 = vpack.c.b16 %v5432, %v5430
  %v5485 = vpack.c.b16 %v5433, %v5431
  %v5486 = vpack.c.b16 %v5436, %v5434
  %v5487 = vpack.c.b16 %v5437, %v5435
  %v5488 = vpack.c.b16 %v5440, %v5438
  %v5489 = vpack.c.b16 %v5441, %v5439
  %v5490 = vpack.c.b16 %v5444, %v5442
  %v5491 = vpack.c.b16 %v5445, %v5443
  %v5492 = vpack.c.b16 %v5448, %v5446
  %v5493 = vpack.c.b16 %v5449, %v5447
  %v5494 = vpack.c.b16 %v5452, %v5450
  %v5495 = vpack.c.b16 %v5453, %v5451
  %v5496 = vpack.c.b16 %v5456, %v5454
  %v5497 = vpack.c.b16 %v5457, %v5455
  %v5498 = vpack.c.b16 %v5460, %v5458
  %v5499 = vpack.c.b16 %v5461, %v5459
  %v5500 = vpack.c.b16 %v5464, %v5462
  %v5501 = vpack.c.b16 %v5465, %v5463
  %v5502 = vpack.c.b16 %v5468, %v5466
  %v5503 = vpack.c.b16 %v5469, %v5467
  %v5504 = vpack.c.b16 %v5472, %v5470
  %v5505 = vpack.c.b16 %v5473, %v5471
  %5538 = vmatprep.subr.bf16.mxu0 %v5475
  %5539 = vmatpush1.bf16.msra.mxu0 %v5474
  %5540 = vmatprep.subr.bf16.mxu0 %v5477
  %5541 = vmatpush1.bf16.msra.mxu0 %v5476
  %5542 = vmatprep.subr.bf16.mxu0 %v5479
  %5543 = vmatpush1.bf16.msra.mxu0 %v5478
  %5544 = vmatprep.subr.bf16.mxu0 %v5481
  %5545 = vmatpush1.bf16.msra.mxu0 %v5480
  %5546 = vmatprep.subr.bf16.mxu0 %v5483
  %5547 = vmatpush1.bf16.msra.mxu0 %v5482
  %5548 = vmatprep.subr.bf16.mxu0 %v5485
  %5549 = vmatpush1.bf16.msra.mxu0 %v5484
  %5550 = vmatprep.subr.bf16.mxu0 %v5487
  %5551 = vmatpush1.bf16.msra.mxu0 %v5486
  %5552 = vmatprep.subr.bf16.mxu0 %v5489
  %5553 = vmatpush1.bf16.msra.mxu0 %v5488
  %5554 = vmatprep.subr.bf16.mxu0 %v5491
  %5555 = vmatpush1.bf16.msra.mxu0 %v5490
  %5556 = vmatprep.subr.bf16.mxu0 %v5493
  %5557 = vmatpush1.bf16.msra.mxu0 %v5492
  %5558 = vmatprep.subr.bf16.mxu0 %v5495
  %5559 = vmatpush1.bf16.msra.mxu0 %v5494
  %5560 = vmatprep.subr.bf16.mxu0 %v5497
  %5561 = vmatpush1.bf16.msra.mxu0 %v5496
  %5562 = vmatprep.subr.bf16.mxu0 %v5499
  %5563 = vmatpush1.bf16.msra.mxu0 %v5498
  %5564 = vmatprep.subr.bf16.mxu0 %v5501
  %5565 = vmatpush1.bf16.msra.mxu0 %v5500
  %5566 = vmatprep.subr.bf16.mxu0 %v5503
  %5567 = vmatpush1.bf16.msra.mxu0 %v5502
  %5568 = vmatprep.subr.bf16.mxu0 %v5505
  %5569 = vmatpush1.bf16.msra.mxu0 %v5504
  %5570 = vmatprep.mubr.bf16.mxu0 %v5344
  %5571 = vmatmul.mubr.bf16.gmra.mrb[0].mxu0 %v5343
  %v5572 = vpop.f32.mrb[0].mxu0
  %v5573 = vadd.f32 0.0, %v5572
  %v5574 = vpop.f32.mrb[0].mxu0
  %v5575 = vadd.f32 0.0, %v5574
  %v5576 = vpop.f32.mrb[0].mxu0
  %v5577 = vpop.f32.mrb[0].mxu0
  %5578 = vdwg.mxu0
  %v5611 = vunpack.c.l.b16 %v5259
  %v5612 = vunpack.c.h.b16 %v5259
  %v5613 = vunpack.c.l.b16 %v5260
  %v5614 = vunpack.c.h.b16 %v5260
  %v5615 = vunpack.c.l.b16 %v5261
  %v5616 = vunpack.c.h.b16 %v5261
  %v5617 = vunpack.c.l.b16 %v5262
  %v5618 = vunpack.c.h.b16 %v5262
  %v5619 = vunpack.c.l.b16 %v5263
  %v5620 = vunpack.c.h.b16 %v5263
  %v5621 = vunpack.c.l.b16 %v5264
  %v5622 = vunpack.c.h.b16 %v5264
  %v5623 = vunpack.c.l.b16 %v5265
  %v5624 = vunpack.c.h.b16 %v5265
  %v5625 = vunpack.c.l.b16 %v5266
  %v5626 = vunpack.c.h.b16 %v5266
  %v5627 = vunpack.c.l.b16 %v5267
  %v5628 = vunpack.c.h.b16 %v5267
  %v5629 = vunpack.c.l.b16 %v5268
  %v5630 = vunpack.c.h.b16 %v5268
  %v5631 = vunpack.c.l.b16 %v5269
  %v5632 = vunpack.c.h.b16 %v5269
  %v5633 = vunpack.c.l.b16 %v5270
  %v5634 = vunpack.c.h.b16 %v5270
  %v5635 = vunpack.c.l.b16 %v5271
  %v5636 = vunpack.c.h.b16 %v5271
  %v5637 = vunpack.c.l.b16 %v5272
  %v5638 = vunpack.c.h.b16 %v5272
  %v5639 = vunpack.c.l.b16 %v5273
  %v5640 = vunpack.c.h.b16 %v5273
  %v5641 = vunpack.c.l.b16 %v5274
  %v5642 = vunpack.c.h.b16 %v5274
  %v5643 = vunpack.c.l.b16 %v5275
  %v5644 = vunpack.c.h.b16 %v5275
  %v5645 = vunpack.c.l.b16 %v5276
  %v5646 = vunpack.c.h.b16 %v5276
  %v5647 = vunpack.c.l.b16 %v5277
  %v5648 = vunpack.c.h.b16 %v5277
  %v5649 = vunpack.c.l.b16 %v5278
  %v5650 = vunpack.c.h.b16 %v5278
  %v5651 = vunpack.c.l.b16 %v5279
  %v5652 = vunpack.c.h.b16 %v5279
  %v5653 = vunpack.c.l.b16 %v5280
  %v5654 = vunpack.c.h.b16 %v5280
  %v5655 = vunpack.c.l.b16 %v5281
  %v5656 = vunpack.c.h.b16 %v5281
  %v5657 = vunpack.c.l.b16 %v5282
  %v5658 = vunpack.c.h.b16 %v5282
  %v5659 = vunpack.c.l.b16 %v5283
  %v5660 = vunpack.c.h.b16 %v5283
  %v5661 = vunpack.c.l.b16 %v5284
  %v5662 = vunpack.c.h.b16 %v5284
  %v5663 = vunpack.c.l.b16 %v5285
  %v5664 = vunpack.c.h.b16 %v5285
  %v5665 = vunpack.c.l.b16 %v5286
  %v5666 = vunpack.c.h.b16 %v5286
  %v5667 = vunpack.c.l.b16 %v5287
  %v5668 = vunpack.c.h.b16 %v5287
  %v5669 = vunpack.c.l.b16 %v5288
  %v5670 = vunpack.c.h.b16 %v5288
  %v5671 = vunpack.c.l.b16 %v5289
  %v5672 = vunpack.c.h.b16 %v5289
  %v5673 = vunpack.c.l.b16 %v5290
  %v5674 = vunpack.c.h.b16 %v5290
  %v5675 = vpack.c.b16 %v5613, %v5611
  %v5676 = vpack.c.b16 %v5614, %v5612
  %v5677 = vpack.c.b16 %v5617, %v5615
  %v5678 = vpack.c.b16 %v5618, %v5616
  %v5679 = vpack.c.b16 %v5621, %v5619
  %v5680 = vpack.c.b16 %v5622, %v5620
  %v5681 = vpack.c.b16 %v5625, %v5623
  %v5682 = vpack.c.b16 %v5626, %v5624
  %v5683 = vpack.c.b16 %v5629, %v5627
  %v5684 = vpack.c.b16 %v5630, %v5628
  %v5685 = vpack.c.b16 %v5633, %v5631
  %v5686 = vpack.c.b16 %v5634, %v5632
  %v5687 = vpack.c.b16 %v5637, %v5635
  %v5688 = vpack.c.b16 %v5638, %v5636
  %v5689 = vpack.c.b16 %v5641, %v5639
  %v5690 = vpack.c.b16 %v5642, %v5640
  %v5691 = vpack.c.b16 %v5645, %v5643
  %v5692 = vpack.c.b16 %v5646, %v5644
  %v5693 = vpack.c.b16 %v5649, %v5647
  %v5694 = vpack.c.b16 %v5650, %v5648
  %v5695 = vpack.c.b16 %v5653, %v5651
  %v5696 = vpack.c.b16 %v5654, %v5652
  %v5697 = vpack.c.b16 %v5657, %v5655
  %v5698 = vpack.c.b16 %v5658, %v5656
  %v5699 = vpack.c.b16 %v5661, %v5659
  %v5700 = vpack.c.b16 %v5662, %v5660
  %v5701 = vpack.c.b16 %v5665, %v5663
  %v5702 = vpack.c.b16 %v5666, %v5664
  %v5703 = vpack.c.b16 %v5669, %v5667
  %v5704 = vpack.c.b16 %v5670, %v5668
  %v5705 = vpack.c.b16 %v5673, %v5671
  %v5706 = vpack.c.b16 %v5674, %v5672
  %5739 = vmatprep.subr.bf16.mxu0 %v5676
  %5740 = vmatpush1.bf16.msra.mxu0 %v5675
  %5741 = vmatprep.subr.bf16.mxu0 %v5678
  %5742 = vmatpush1.bf16.msra.mxu0 %v5677
  %5743 = vmatprep.subr.bf16.mxu0 %v5680
  %5744 = vmatpush1.bf16.msra.mxu0 %v5679
  %5745 = vmatprep.subr.bf16.mxu0 %v5682
  %5746 = vmatpush1.bf16.msra.mxu0 %v5681
  %5747 = vmatprep.subr.bf16.mxu0 %v5684
  %5748 = vmatpush1.bf16.msra.mxu0 %v5683
  %5749 = vmatprep.subr.bf16.mxu0 %v5686
  %5750 = vmatpush1.bf16.msra.mxu0 %v5685
  %5751 = vmatprep.subr.bf16.mxu0 %v5688
  %5752 = vmatpush1.bf16.msra.mxu0 %v5687
  %5753 = vmatprep.subr.bf16.mxu0 %v5690
  %5754 = vmatpush1.bf16.msra.mxu0 %v5689
  %5755 = vmatprep.subr.bf16.mxu0 %v5692
  %5756 = vmatpush1.bf16.msra.mxu0 %v5691
  %5757 = vmatprep.subr.bf16.mxu0 %v5694
  %5758 = vmatpush1.bf16.msra.mxu0 %v5693
  %5759 = vmatprep.subr.bf16.mxu0 %v5696
  %5760 = vmatpush1.bf16.msra.mxu0 %v5695
  %5761 = vmatprep.subr.bf16.mxu0 %v5698
  %5762 = vmatpush1.bf16.msra.mxu0 %v5697
  %5763 = vmatprep.subr.bf16.mxu0 %v5700
  %5764 = vmatpush1.bf16.msra.mxu0 %v5699
  %5765 = vmatprep.subr.bf16.mxu0 %v5702
  %5766 = vmatpush1.bf16.msra.mxu0 %v5701
  %5767 = vmatprep.subr.bf16.mxu0 %v5704
  %5768 = vmatpush1.bf16.msra.mxu0 %v5703
  %5769 = vmatprep.subr.bf16.mxu0 %v5706
  %5770 = vmatpush1.bf16.msra.mxu0 %v5705
  %5771 = vmatprep.mubr.bf16.mxu0 %v5258
  %5772 = vmatmul.mubr.bf16.gmra.mrb[0].mxu0 %v5257
  %v5773 = vpop.f32.mrb[0].mxu0
  %v5774 = vadd.f32 %v5573, %v5773
  %v5775 = vpop.f32.mrb[0].mxu0
  %v5776 = vadd.f32 %v5575, %v5775
  %v5777 = vpop.f32.mrb[0].mxu0
  %v5778 = vpop.f32.mrb[0].mxu0
  %5779 = vdwg.mxu0
  %v5780 = vadd.s32 %v5201, 1
  %vm5781 = vcmp.ge.s32.totalorder %v5780, 0
  %vm5782 = vcmp.lt.s32.totalorder %v5780, 8
  %vm5783 = vmand %vm5781, %vm5782
  %v5784 = vadd.s32 %v5206, %v5780
  %vm5785 = vcmp.eq.s32.totalorder %v50, %v5784
  %vm5786 = vmand %vm5785, %vm5783
  %v5787 = vsel %vm5786, 1.0, 0.0
  %v5788 = vpack.c.bf16 %v5787, %v5787
  %v5790 = vsel %vm5212, %v5788, 0
  %5792 = vmatprep.subr.bf16.mxu0 %v5198
  %5793 = vmatpush1.bf16.msra.mxu0 %v5197
  %5794 = vmatprep.subr.bf16.mxu0 0
  %5795 = vmatpush1.bf16.msra.mxu0 0
  %5796 = vmatprep.subr.bf16.mxu0 0
  %5797 = vmatpush1.bf16.msra.mxu0 0
  %5798 = vmatprep.subr.bf16.mxu0 0
  %5799 = vmatpush1.bf16.msra.mxu0 0
  %5800 = vmatprep.subr.bf16.mxu0 0
  %5801 = vmatpush1.bf16.msra.mxu0 0
  %5802 = vmatprep.subr.bf16.mxu0 0
  %5803 = vmatpush1.bf16.msra.mxu0 0
  %5804 = vmatprep.subr.bf16.mxu0 0
  %5805 = vmatpush1.bf16.msra.mxu0 0
  %5806 = vmatprep.subr.bf16.mxu0 0
  %5807 = vmatpush1.bf16.msra.mxu0 0
  %5808 = vmatprep.subr.bf16.mxu0 0
  %5809 = vmatpush1.bf16.msra.mxu0 0
  %5810 = vmatprep.subr.bf16.mxu0 0
  %5811 = vmatpush1.bf16.msra.mxu0 0
  %5812 = vmatprep.subr.bf16.mxu0 0
  %5813 = vmatpush1.bf16.msra.mxu0 0
  %5814 = vmatprep.subr.bf16.mxu0 0
  %5815 = vmatpush1.bf16.msra.mxu0 0
  %5816 = vmatprep.subr.bf16.mxu0 0
  %5817 = vmatpush1.bf16.msra.mxu0 0
  %5818 = vmatprep.subr.bf16.mxu0 0
  %5819 = vmatpush1.bf16.msra.mxu0 0
  %5820 = vmatprep.subr.bf16.mxu0 0
  %5821 = vmatpush1.bf16.msra.mxu0 0
  %5822 = vmatprep.subr.bf16.mxu0 0
  %5823 = vmatpush1.bf16.msra.mxu0 0
  %5824 = vmatprep.mubr.bf16.mxu0 0
  %5825 = vmatmul.mubr.bf16.gmra.mrb[0].mxu0 %v5790
  %v5826 = vpop.f32.mrb[0].mxu0
  %v5827 = vadd.f32 0.0, %v5826
  %v5828 = vpop.f32.mrb[0].mxu0
  %v5829 = vadd.f32 0.0, %v5828
  %v5830 = vpop.f32.mrb[0].mxu0
  %v5831 = vpop.f32.mrb[0].mxu0
  %5832 = vdwg.mxu0
  %v5833 = vpack.c.bf16 %v5827, %v5827
  %v5834 = vpack.c.bf16 %v5829, %v5829
  %s5835 = scalar_lea.vmem %s4, 512
  %v5836 = vld [vmem:[%s5835] sm:$0xff]
  %v5837 = vld [vmem:[%s5835 + $0x8] sm:$0xff]
  %v5838 = vld [vmem:[%s5835 + $0x10] sm:$0xff]
  %v5839 = vld [vmem:[%s5835 + $0x18] sm:$0xff]
  %v5840 = vld [vmem:[%s5835 + $0x20] sm:$0xff]
  %v5841 = vld [vmem:[%s5835 + $0x28] sm:$0xff]
  %v5842 = vld [vmem:[%s5835 + $0x30] sm:$0xff]
  %v5843 = vld [vmem:[%s5835 + $0x38] sm:$0xff]
  %v5844 = vld [vmem:[%s5835 + $0x40] sm:$0xff]
  %v5845 = vld [vmem:[%s5835 + $0x48] sm:$0xff]
  %v5846 = vld [vmem:[%s5835 + $0x50] sm:$0xff]
  %v5847 = vld [vmem:[%s5835 + $0x58] sm:$0xff]
  %v5848 = vld [vmem:[%s5835 + $0x60] sm:$0xff]
  %v5849 = vld [vmem:[%s5835 + $0x68] sm:$0xff]
  %v5850 = vld [vmem:[%s5835 + $0x70] sm:$0xff]
  %v5851 = vld [vmem:[%s5835 + $0x78] sm:$0xff]
  %v5852 = vld [vmem:[%s5835 + $0x80] sm:$0xff]
  %v5853 = vld [vmem:[%s5835 + $0x88] sm:$0xff]
  %v5854 = vld [vmem:[%s5835 + $0x90] sm:$0xff]
  %v5855 = vld [vmem:[%s5835 + $0x98] sm:$0xff]
  %v5856 = vld [vmem:[%s5835 + $0xa0] sm:$0xff]
  %v5857 = vld [vmem:[%s5835 + $0xa8] sm:$0xff]
  %v5858 = vld [vmem:[%s5835 + $0xb0] sm:$0xff]
  %v5859 = vld [vmem:[%s5835 + $0xb8] sm:$0xff]
  %v5860 = vld [vmem:[%s5835 + $0xc0] sm:$0xff]
  %v5861 = vld [vmem:[%s5835 + $0xc8] sm:$0xff]
  %v5862 = vld [vmem:[%s5835 + $0xd0] sm:$0xff]
  %v5863 = vld [vmem:[%s5835 + $0xd8] sm:$0xff]
  %v5864 = vld [vmem:[%s5835 + $0xe0] sm:$0xff]
  %v5865 = vld [vmem:[%s5835 + $0xe8] sm:$0xff]
  %v5866 = vld [vmem:[%s5835 + $0xf0] sm:$0xff]
  %v5867 = vld [vmem:[%s5835 + $0xf8] sm:$0xff]
  %v5900 = vunpack.c.l.b16 %v5836
  %v5901 = vunpack.c.h.b16 %v5836
  %v5902 = vunpack.c.l.b16 %v5837
  %v5903 = vunpack.c.h.b16 %v5837
  %v5904 = vunpack.c.l.b16 %v5838
  %v5905 = vunpack.c.h.b16 %v5838
  %v5906 = vunpack.c.l.b16 %v5839
  %v5907 = vunpack.c.h.b16 %v5839
  %v5908 = vunpack.c.l.b16 %v5840
  %v5909 = vunpack.c.h.b16 %v5840
  %v5910 = vunpack.c.l.b16 %v5841
  %v5911 = vunpack.c.h.b16 %v5841
  %v5912 = vunpack.c.l.b16 %v5842
  %v5913 = vunpack.c.h.b16 %v5842
  %v5914 = vunpack.c.l.b16 %v5843
  %v5915 = vunpack.c.h.b16 %v5843
  %v5916 = vunpack.c.l.b16 %v5844
  %v5917 = vunpack.c.h.b16 %v5844
  %v5918 = vunpack.c.l.b16 %v5845
  %v5919 = vunpack.c.h.b16 %v5845
  %v5920 = vunpack.c.l.b16 %v5846
  %v5921 = vunpack.c.h.b16 %v5846
  %v5922 = vunpack.c.l.b16 %v5847
  %v5923 = vunpack.c.h.b16 %v5847
  %v5924 = vunpack.c.l.b16 %v5848
  %v5925 = vunpack.c.h.b16 %v5848
  %v5926 = vunpack.c.l.b16 %v5849
  %v5927 = vunpack.c.h.b16 %v5849
  %v5928 = vunpack.c.l.b16 %v5850
  %v5929 = vunpack.c.h.b16 %v5850
  %v5930 = vunpack.c.l.b16 %v5851
  %v5931 = vunpack.c.h.b16 %v5851
  %v5932 = vunpack.c.l.b16 %v5852
  %v5933 = vunpack.c.h.b16 %v5852
  %v5934 = vunpack.c.l.b16 %v5853
  %v5935 = vunpack.c.h.b16 %v5853
  %v5936 = vunpack.c.l.b16 %v5854
  %v5937 = vunpack.c.h.b16 %v5854
  %v5938 = vunpack.c.l.b16 %v5855
  %v5939 = vunpack.c.h.b16 %v5855
  %v5940 = vunpack.c.l.b16 %v5856
  %v5941 = vunpack.c.h.b16 %v5856
  %v5942 = vunpack.c.l.b16 %v5857
  %v5943 = vunpack.c.h.b16 %v5857
  %v5944 = vunpack.c.l.b16 %v5858
  %v5945 = vunpack.c.h.b16 %v5858
  %v5946 = vunpack.c.l.b16 %v5859
  %v5947 = vunpack.c.h.b16 %v5859
  %v5948 = vunpack.c.l.b16 %v5860
  %v5949 = vunpack.c.h.b16 %v5860
  %v5950 = vunpack.c.l.b16 %v5861
  %v5951 = vunpack.c.h.b16 %v5861
  %v5952 = vunpack.c.l.b16 %v5862
  %v5953 = vunpack.c.h.b16 %v5862
  %v5954 = vunpack.c.l.b16 %v5863
  %v5955 = vunpack.c.h.b16 %v5863
  %v5956 = vunpack.c.l.b16 %v5864
  %v5957 = vunpack.c.h.b16 %v5864
  %v5958 = vunpack.c.l.b16 %v5865
  %v5959 = vunpack.c.h.b16 %v5865
  %v5960 = vunpack.c.l.b16 %v5866
  %v5961 = vunpack.c.h.b16 %v5866
  %v5962 = vunpack.c.l.b16 %v5867
  %v5963 = vunpack.c.h.b16 %v5867
  %v5964 = vpack.c.b16 %v5902, %v5900
  %v5965 = vpack.c.b16 %v5903, %v5901
  %v5966 = vpack.c.b16 %v5906, %v5904
  %v5967 = vpack.c.b16 %v5907, %v5905
  %v5968 = vpack.c.b16 %v5910, %v5908
  %v5969 = vpack.c.b16 %v5911, %v5909
  %v5970 = vpack.c.b16 %v5914, %v5912
  %v5971 = vpack.c.b16 %v5915, %v5913
  %v5972 = vpack.c.b16 %v5918, %v5916
  %v5973 = vpack.c.b16 %v5919, %v5917
  %v5974 = vpack.c.b16 %v5922, %v5920
  %v5975 = vpack.c.b16 %v5923, %v5921
  %v5976 = vpack.c.b16 %v5926, %v5924
  %v5977 = vpack.c.b16 %v5927, %v5925
  %v5978 = vpack.c.b16 %v5930, %v5928
  %v5979 = vpack.c.b16 %v5931, %v5929
  %v5980 = vpack.c.b16 %v5934, %v5932
  %v5981 = vpack.c.b16 %v5935, %v5933
  %v5982 = vpack.c.b16 %v5938, %v5936
  %v5983 = vpack.c.b16 %v5939, %v5937
  %v5984 = vpack.c.b16 %v5942, %v5940
  %v5985 = vpack.c.b16 %v5943, %v5941
  %v5986 = vpack.c.b16 %v5946, %v5944
  %v5987 = vpack.c.b16 %v5947, %v5945
  %v5988 = vpack.c.b16 %v5950, %v5948
  %v5989 = vpack.c.b16 %v5951, %v5949
  %v5990 = vpack.c.b16 %v5954, %v5952
  %v5991 = vpack.c.b16 %v5955, %v5953
  %v5992 = vpack.c.b16 %v5958, %v5956
  %v5993 = vpack.c.b16 %v5959, %v5957
  %v5994 = vpack.c.b16 %v5962, %v5960
  %v5995 = vpack.c.b16 %v5963, %v5961
  %6028 = vmatprep.subr.bf16.mxu0 %v5965
  %6029 = vmatpush1.bf16.msra.mxu0 %v5964
  %6030 = vmatprep.subr.bf16.mxu0 %v5967
  %6031 = vmatpush1.bf16.msra.mxu0 %v5966
  %6032 = vmatprep.subr.bf16.mxu0 %v5969
  %6033 = vmatpush1.bf16.msra.mxu0 %v5968
  %6034 = vmatprep.subr.bf16.mxu0 %v5971
  %6035 = vmatpush1.bf16.msra.mxu0 %v5970
  %6036 = vmatprep.subr.bf16.mxu0 %v5973
  %6037 = vmatpush1.bf16.msra.mxu0 %v5972
  %6038 = vmatprep.subr.bf16.mxu0 %v5975
  %6039 = vmatpush1.bf16.msra.mxu0 %v5974
  %6040 = vmatprep.subr.bf16.mxu0 %v5977
  %6041 = vmatpush1.bf16.msra.mxu0 %v5976
  %6042 = vmatprep.subr.bf16.mxu0 %v5979
  %6043 = vmatpush1.bf16.msra.mxu0 %v5978
  %6044 = vmatprep.subr.bf16.mxu0 %v5981
  %6045 = vmatpush1.bf16.msra.mxu0 %v5980
  %6046 = vmatprep.subr.bf16.mxu0 %v5983
  %6047 = vmatpush1.bf16.msra.mxu0 %v5982
  %6048 = vmatprep.subr.bf16.mxu0 %v5985
  %6049 = vmatpush1.bf16.msra.mxu0 %v5984
  %6050 = vmatprep.subr.bf16.mxu0 %v5987
  %6051 = vmatpush1.bf16.msra.mxu0 %v5986
  %6052 = vmatprep.subr.bf16.mxu0 %v5989
  %6053 = vmatpush1.bf16.msra.mxu0 %v5988
  %6054 = vmatprep.subr.bf16.mxu0 %v5991
  %6055 = vmatpush1.bf16.msra.mxu0 %v5990
  %6056 = vmatprep.subr.bf16.mxu0 %v5993
  %6057 = vmatpush1.bf16.msra.mxu0 %v5992
  %6058 = vmatprep.subr.bf16.mxu0 %v5995
  %6059 = vmatpush1.bf16.msra.mxu0 %v5994
  %6060 = vmatprep.mubr.bf16.mxu0 %v5834
  %6061 = vmatmul.mubr.bf16.gmra.mrb[0].mxu0 %v5833
  %v6062 = vpop.f32.mrb[0].mxu0
  %v6063 = vadd.f32 0.0, %v6062
  %v6064 = vpop.f32.mrb[0].mxu0
  %v6065 = vadd.f32 0.0, %v6064
  %v6066 = vpop.f32.mrb[0].mxu0
  %v6067 = vpop.f32.mrb[0].mxu0
  %6068 = vdwg.mxu0
  %v6069 = vadd.f32 %v5774, %v6063
  %v6070 = vadd.f32 %v5776, %v6065
  %v6071 = vadd.s32 %v5201, 2
  %vm6072 = vcmp.ge.s32.totalorder %v6071, 0
  %vm6073 = vcmp.lt.s32.totalorder %v6071, 8
  %vm6074 = vmand %vm6072, %vm6073
  %v6075 = vadd.s32 %v5206, %v6071
  %vm6076 = vcmp.eq.s32.totalorder %v50, %v6075
  %vm6077 = vmand %vm6076, %vm6074
  %v6078 = vsel %vm6077, 1.0, 0.0
  %v6079 = vpack.c.bf16 %v6078, %v6078
  %v6081 = vsel %vm5212, %v6079, 0
  %6083 = vmatprep.subr.bf16.mxu0 %v5198
  %6084 = vmatpush1.bf16.msra.mxu0 %v5197
  %6085 = vmatprep.subr.bf16.mxu0 0
  %6086 = vmatpush1.bf16.msra.mxu0 0
  %6087 = vmatprep.subr.bf16.mxu0 0
  %6088 = vmatpush1.bf16.msra.mxu0 0
  %6089 = vmatprep.subr.bf16.mxu0 0
  %6090 = vmatpush1.bf16.msra.mxu0 0
  %6091 = vmatprep.subr.bf16.mxu0 0
  %6092 = vmatpush1.bf16.msra.mxu0 0
  %6093 = vmatprep.subr.bf16.mxu0 0
  %6094 = vmatpush1.bf16.msra.mxu0 0
  %6095 = vmatprep.subr.bf16.mxu0 0
  %6096 = vmatpush1.bf16.msra.mxu0 0
  %6097 = vmatprep.subr.bf16.mxu0 0
  %6098 = vmatpush1.bf16.msra.mxu0 0
  %6099 = vmatprep.subr.bf16.mxu0 0
  %6100 = vmatpush1.bf16.msra.mxu0 0
  %6101 = vmatprep.subr.bf16.mxu0 0
  %6102 = vmatpush1.bf16.msra.mxu0 0
  %6103 = vmatprep.subr.bf16.mxu0 0
  %6104 = vmatpush1.bf16.msra.mxu0 0
  %6105 = vmatprep.subr.bf16.mxu0 0
  %6106 = vmatpush1.bf16.msra.mxu0 0
  %6107 = vmatprep.subr.bf16.mxu0 0
  %6108 = vmatpush1.bf16.msra.mxu0 0
  %6109 = vmatprep.subr.bf16.mxu0 0
  %6110 = vmatpush1.bf16.msra.mxu0 0
  %6111 = vmatprep.subr.bf16.mxu0 0
  %6112 = vmatpush1.bf16.msra.mxu0 0
  %6113 = vmatprep.subr.bf16.mxu0 0
  %6114 = vmatpush1.bf16.msra.mxu0 0
  %6115 = vmatprep.mubr.bf16.mxu0 0
  %6116 = vmatmul.mubr.bf16.gmra.mrb[0].mxu0 %v6081
  %v6117 = vpop.f32.mrb[0].mxu0
  %v6118 = vadd.f32 0.0, %v6117
  %v6119 = vpop.f32.mrb[0].mxu0
  %v6120 = vadd.f32 0.0, %v6119
  %v6121 = vpop.f32.mrb[0].mxu0
  %v6122 = vpop.f32.mrb[0].mxu0
  %6123 = vdwg.mxu0
  %v6124 = vpack.c.bf16 %v6118, %v6118
  %v6125 = vpack.c.bf16 %v6120, %v6120
  %s6126 = scalar_lea.vmem %s4, 768
  %v6127 = vld [vmem:[%s6126] sm:$0xff]
  %v6128 = vld [vmem:[%s6126 + $0x8] sm:$0xff]
  %v6129 = vld [vmem:[%s6126 + $0x10] sm:$0xff]
  %v6130 = vld [vmem:[%s6126 + $0x18] sm:$0xff]
  %v6131 = vld [vmem:[%s6126 + $0x20] sm:$0xff]
  %v6132 = vld [vmem:[%s6126 + $0x28] sm:$0xff]
  %v6133 = vld [vmem:[%s6126 + $0x30] sm:$0xff]
  %v6134 = vld [vmem:[%s6126 + $0x38] sm:$0xff]
  %v6135 = vld [vmem:[%s6126 + $0x40] sm:$0xff]
  %v6136 = vld [vmem:[%s6126 + $0x48] sm:$0xff]
  %v6137 = vld [vmem:[%s6126 + $0x50] sm:$0xff]
  %v6138 = vld [vmem:[%s6126 + $0x58] sm:$0xff]
  %v6139 = vld [vmem:[%s6126 + $0x60] sm:$0xff]
  %v6140 = vld [vmem:[%s6126 + $0x68] sm:$0xff]
  %v6141 = vld [vmem:[%s6126 + $0x70] sm:$0xff]
  %v6142 = vld [vmem:[%s6126 + $0x78] sm:$0xff]
  %v6143 = vld [vmem:[%s6126 + $0x80] sm:$0xff]
  %v6144 = vld [vmem:[%s6126 + $0x88] sm:$0xff]
  %v6145 = vld [vmem:[%s6126 + $0x90] sm:$0xff]
  %v6146 = vld [vmem:[%s6126 + $0x98] sm:$0xff]
  %v6147 = vld [vmem:[%s6126 + $0xa0] sm:$0xff]
  %v6148 = vld [vmem:[%s6126 + $0xa8] sm:$0xff]
  %v6149 = vld [vmem:[%s6126 + $0xb0] sm:$0xff]
  %v6150 = vld [vmem:[%s6126 + $0xb8] sm:$0xff]
  %v6151 = vld [vmem:[%s6126 + $0xc0] sm:$0xff]
  %v6152 = vld [vmem:[%s6126 + $0xc8] sm:$0xff]
  %v6153 = vld [vmem:[%s6126 + $0xd0] sm:$0xff]
  %v6154 = vld [vmem:[%s6126 + $0xd8] sm:$0xff]
  %v6155 = vld [vmem:[%s6126 + $0xe0] sm:$0xff]
  %v6156 = vld [vmem:[%s6126 + $0xe8] sm:$0xff]
  %v6157 = vld [vmem:[%s6126 + $0xf0] sm:$0xff]
  %v6158 = vld [vmem:[%s6126 + $0xf8] sm:$0xff]
  %v6191 = vunpack.c.l.b16 %v6127
  %v6192 = vunpack.c.h.b16 %v6127
  %v6193 = vunpack.c.l.b16 %v6128
  %v6194 = vunpack.c.h.b16 %v6128
  %v6195 = vunpack.c.l.b16 %v6129
  %v6196 = vunpack.c.h.b16 %v6129
  %v6197 = vunpack.c.l.b16 %v6130
  %v6198 = vunpack.c.h.b16 %v6130
  %v6199 = vunpack.c.l.b16 %v6131
  %v6200 = vunpack.c.h.b16 %v6131
  %v6201 = vunpack.c.l.b16 %v6132
  %v6202 = vunpack.c.h.b16 %v6132
  %v6203 = vunpack.c.l.b16 %v6133
  %v6204 = vunpack.c.h.b16 %v6133
  %v6205 = vunpack.c.l.b16 %v6134
  %v6206 = vunpack.c.h.b16 %v6134
  %v6207 = vunpack.c.l.b16 %v6135
  %v6208 = vunpack.c.h.b16 %v6135
  %v6209 = vunpack.c.l.b16 %v6136
  %v6210 = vunpack.c.h.b16 %v6136
  %v6211 = vunpack.c.l.b16 %v6137
  %v6212 = vunpack.c.h.b16 %v6137
  %v6213 = vunpack.c.l.b16 %v6138
  %v6214 = vunpack.c.h.b16 %v6138
  %v6215 = vunpack.c.l.b16 %v6139
  %v6216 = vunpack.c.h.b16 %v6139
  %v6217 = vunpack.c.l.b16 %v6140
  %v6218 = vunpack.c.h.b16 %v6140
  %v6219 = vunpack.c.l.b16 %v6141
  %v6220 = vunpack.c.h.b16 %v6141
  %v6221 = vunpack.c.l.b16 %v6142
  %v6222 = vunpack.c.h.b16 %v6142
  %v6223 = vunpack.c.l.b16 %v6143
  %v6224 = vunpack.c.h.b16 %v6143
  %v6225 = vunpack.c.l.b16 %v6144
  %v6226 = vunpack.c.h.b16 %v6144
  %v6227 = vunpack.c.l.b16 %v6145
  %v6228 = vunpack.c.h.b16 %v6145
  %v6229 = vunpack.c.l.b16 %v6146
  %v6230 = vunpack.c.h.b16 %v6146
  %v6231 = vunpack.c.l.b16 %v6147
  %v6232 = vunpack.c.h.b16 %v6147
  %v6233 = vunpack.c.l.b16 %v6148
  %v6234 = vunpack.c.h.b16 %v6148
  %v6235 = vunpack.c.l.b16 %v6149
  %v6236 = vunpack.c.h.b16 %v6149
  %v6237 = vunpack.c.l.b16 %v6150
  %v6238 = vunpack.c.h.b16 %v6150
  %v6239 = vunpack.c.l.b16 %v6151
  %v6240 = vunpack.c.h.b16 %v6151
  %v6241 = vunpack.c.l.b16 %v6152
  %v6242 = vunpack.c.h.b16 %v6152
  %v6243 = vunpack.c.l.b16 %v6153
  %v6244 = vunpack.c.h.b16 %v6153
  %v6245 = vunpack.c.l.b16 %v6154
  %v6246 = vunpack.c.h.b16 %v6154
  %v6247 = vunpack.c.l.b16 %v6155
  %v6248 = vunpack.c.h.b16 %v6155
  %v6249 = vunpack.c.l.b16 %v6156
  %v6250 = vunpack.c.h.b16 %v6156
  %v6251 = vunpack.c.l.b16 %v6157
  %v6252 = vunpack.c.h.b16 %v6157
  %v6253 = vunpack.c.l.b16 %v6158
  %v6254 = vunpack.c.h.b16 %v6158
  %v6255 = vpack.c.b16 %v6193, %v6191
  %v6256 = vpack.c.b16 %v6194, %v6192
  %v6257 = vpack.c.b16 %v6197, %v6195
  %v6258 = vpack.c.b16 %v6198, %v6196
  %v6259 = vpack.c.b16 %v6201, %v6199
  %v6260 = vpack.c.b16 %v6202, %v6200
  %v6261 = vpack.c.b16 %v6205, %v6203
  %v6262 = vpack.c.b16 %v6206, %v6204
  %v6263 = vpack.c.b16 %v6209, %v6207
  %v6264 = vpack.c.b16 %v6210, %v6208
  %v6265 = vpack.c.b16 %v6213, %v6211
  %v6266 = vpack.c.b16 %v6214, %v6212
  %v6267 = vpack.c.b16 %v6217, %v6215
  %v6268 = vpack.c.b16 %v6218, %v6216
  %v6269 = vpack.c.b16 %v6221, %v6219
  %v6270 = vpack.c.b16 %v6222, %v6220
  %v6271 = vpack.c.b16 %v6225, %v6223
  %v6272 = vpack.c.b16 %v6226, %v6224
  %v6273 = vpack.c.b16 %v6229, %v6227
  %v6274 = vpack.c.b16 %v6230, %v6228
  %v6275 = vpack.c.b16 %v6233, %v6231
  %v6276 = vpack.c.b16 %v6234, %v6232
  %v6277 = vpack.c.b16 %v6237, %v6235
  %v6278 = vpack.c.b16 %v6238, %v6236
  %v6279 = vpack.c.b16 %v6241, %v6239
  %v6280 = vpack.c.b16 %v6242, %v6240
  %v6281 = vpack.c.b16 %v6245, %v6243
  %v6282 = vpack.c.b16 %v6246, %v6244
  %v6283 = vpack.c.b16 %v6249, %v6247
  %v6284 = vpack.c.b16 %v6250, %v6248
  %v6285 = vpack.c.b16 %v6253, %v6251
  %v6286 = vpack.c.b16 %v6254, %v6252
  %6319 = vmatprep.subr.bf16.mxu0 %v6256
  %6320 = vmatpush1.bf16.msra.mxu0 %v6255
  %6321 = vmatprep.subr.bf16.mxu0 %v6258
  %6322 = vmatpush1.bf16.msra.mxu0 %v6257
  %6323 = vmatprep.subr.bf16.mxu0 %v6260
  %6324 = vmatpush1.bf16.msra.mxu0 %v6259
  %6325 = vmatprep.subr.bf16.mxu0 %v6262
  %6326 = vmatpush1.bf16.msra.mxu0 %v6261
  %6327 = vmatprep.subr.bf16.mxu0 %v6264
  %6328 = vmatpush1.bf16.msra.mxu0 %v6263
  %6329 = vmatprep.subr.bf16.mxu0 %v6266
  %6330 = vmatpush1.bf16.msra.mxu0 %v6265
  %6331 = vmatprep.subr.bf16.mxu0 %v6268
  %6332 = vmatpush1.bf16.msra.mxu0 %v6267
  %6333 = vmatprep.subr.bf16.mxu0 %v6270
  %6334 = vmatpush1.bf16.msra.mxu0 %v6269
  %6335 = vmatprep.subr.bf16.mxu0 %v6272
  %6336 = vmatpush1.bf16.msra.mxu0 %v6271
  %6337 = vmatprep.subr.bf16.mxu0 %v6274
  %6338 = vmatpush1.bf16.msra.mxu0 %v6273
  %6339 = vmatprep.subr.bf16.mxu0 %v6276
  %6340 = vmatpush1.bf16.msra.mxu0 %v6275
  %6341 = vmatprep.subr.bf16.mxu0 %v6278
  %6342 = vmatpush1.bf16.msra.mxu0 %v6277
  %6343 = vmatprep.subr.bf16.mxu0 %v6280
  %6344 = vmatpush1.bf16.msra.mxu0 %v6279
  %6345 = vmatprep.subr.bf16.mxu0 %v6282
  %6346 = vmatpush1.bf16.msra.mxu0 %v6281
  %6347 = vmatprep.subr.bf16.mxu0 %v6284
  %6348 = vmatpush1.bf16.msra.mxu0 %v6283
  %6349 = vmatprep.subr.bf16.mxu0 %v6286
  %6350 = vmatpush1.bf16.msra.mxu0 %v6285
  %6351 = vmatprep.mubr.bf16.mxu0 %v6125
  %6352 = vmatmul.mubr.bf16.gmra.mrb[0].mxu0 %v6124
  %v6353 = vpop.f32.mrb[0].mxu0
  %v6354 = vadd.f32 0.0, %v6353
  %v6355 = vpop.f32.mrb[0].mxu0
  %v6356 = vadd.f32 0.0, %v6355
  %v6357 = vpop.f32.mrb[0].mxu0
  %v6358 = vpop.f32.mrb[0].mxu0
  %6359 = vdwg.mxu0
  %v6360 = vadd.f32 %v6069, %v6354
  %v6361 = vadd.f32 %v6070, %v6356
  %v6362 = vand.u32 %v41, 63
  %v6363 = vand.u32 %v42, 63
  %v6364 = vand.u32 %v43, 63
  %v6365 = vand.u32 %v44, 63
  %v6366 = vand.u32 %v45, 63
  %v6367 = vand.u32 %v46, 63
  %v6368 = vand.u32 %v47, 63
  %v6369 = vand.u32 %v48, 63
  %v6370 = vand.u32 %v3158, 63
  %v6371 = vand.u32 %v3159, 63
  %v6372 = vand.u32 %v3160, 63
  %v6373 = vand.u32 %v3161, 63
  %v6374 = vand.u32 %v3162, 63
  %v6375 = vand.u32 %v3163, 63
  %v6376 = vand.u32 %v3164, 63
  %v6377 = vand.u32 %v3165, 63
  %v6378 = vand.u32 %v3166, 63
  %v6379 = vand.u32 %v3167, 63
  %v6380 = vand.u32 %v3168, 63
  %v6381 = vand.u32 %v3169, 63
  %v6382 = vand.u32 %v3170, 63
  %v6383 = vand.u32 %v3171, 63
  %v6384 = vand.u32 %v3172, 63
  %v6385 = vand.u32 %v3173, 63
  %v6386 = vand.u32 %v3174, 63
  %v6387 = vand.u32 %v3175, 63
  %v6388 = vand.u32 %v3176, 63
  %v6389 = vand.u32 %v3177, 63
  %v6390 = vand.u32 %v3178, 63
  %v6391 = vand.u32 %v3179, 63
  %v6392 = vand.u32 %v3180, 63
  %v6393 = vand.u32 %v3181, 63
  %v6394 = vand.u32 %v50, 63
  %v6395 = vand.u32 %v3182, 63
  %vm6396 = vcmp.eq.s32.totalorder %v6362, %v6394
  %vm6397 = vcmp.eq.s32.totalorder %v6362, %v6395
  %vm6398 = vcmp.eq.s32.totalorder %v6363, %v6394
  %vm6399 = vcmp.eq.s32.totalorder %v6363, %v6395
  %vm6400 = vcmp.eq.s32.totalorder %v6364, %v6394
  %vm6401 = vcmp.eq.s32.totalorder %v6364, %v6395
  %vm6402 = vcmp.eq.s32.totalorder %v6365, %v6394
  %vm6403 = vcmp.eq.s32.totalorder %v6365, %v6395
  %vm6404 = vcmp.eq.s32.totalorder %v6366, %v6394
  %vm6405 = vcmp.eq.s32.totalorder %v6366, %v6395
  %vm6406 = vcmp.eq.s32.totalorder %v6367, %v6394
  %vm6407 = vcmp.eq.s32.totalorder %v6367, %v6395
  %vm6408 = vcmp.eq.s32.totalorder %v6368, %v6394
  %vm6409 = vcmp.eq.s32.totalorder %v6368, %v6395
  %vm6410 = vcmp.eq.s32.totalorder %v6369, %v6394
  %vm6411 = vcmp.eq.s32.totalorder %v6369, %v6395
  %vm6412 = vcmp.eq.s32.totalorder %v6370, %v6394
  %vm6413 = vcmp.eq.s32.totalorder %v6370, %v6395
  %vm6414 = vcmp.eq.s32.totalorder %v6371, %v6394
  %vm6415 = vcmp.eq.s32.totalorder %v6371, %v6395
  %vm6416 = vcmp.eq.s32.totalorder %v6372, %v6394
  %vm6417 = vcmp.eq.s32.totalorder %v6372, %v6395
  %vm6418 = vcmp.eq.s32.totalorder %v6373, %v6394
  %vm6419 = vcmp.eq.s32.totalorder %v6373, %v6395
  %vm6420 = vcmp.eq.s32.totalorder %v6374, %v6394
  %vm6421 = vcmp.eq.s32.totalorder %v6374, %v6395
  %vm6422 = vcmp.eq.s32.totalorder %v6375, %v6394
  %vm6423 = vcmp.eq.s32.totalorder %v6375, %v6395
  %vm6424 = vcmp.eq.s32.totalorder %v6376, %v6394
  %vm6425 = vcmp.eq.s32.totalorder %v6376, %v6395
  %vm6426 = vcmp.eq.s32.totalorder %v6377, %v6394
  %vm6427 = vcmp.eq.s32.totalorder %v6377, %v6395
  %vm6428 = vcmp.eq.s32.totalorder %v6378, %v6394
  %vm6429 = vcmp.eq.s32.totalorder %v6378, %v6395
  %vm6430 = vcmp.eq.s32.totalorder %v6379, %v6394
  %vm6431 = vcmp.eq.s32.totalorder %v6379, %v6395
  %vm6432 = vcmp.eq.s32.totalorder %v6380, %v6394
  %vm6433 = vcmp.eq.s32.totalorder %v6380, %v6395
  %vm6434 = vcmp.eq.s32.totalorder %v6381, %v6394
  %vm6435 = vcmp.eq.s32.totalorder %v6381, %v6395
  %vm6436 = vcmp.eq.s32.totalorder %v6382, %v6394
  %vm6437 = vcmp.eq.s32.totalorder %v6382, %v6395
  %vm6438 = vcmp.eq.s32.totalorder %v6383, %v6394
  %vm6439 = vcmp.eq.s32.totalorder %v6383, %v6395
  %vm6440 = vcmp.eq.s32.totalorder %v6384, %v6394
  %vm6441 = vcmp.eq.s32.totalorder %v6384, %v6395
  %vm6442 = vcmp.eq.s32.totalorder %v6385, %v6394
  %vm6443 = vcmp.eq.s32.totalorder %v6385, %v6395
  %vm6444 = vcmp.eq.s32.totalorder %v6386, %v6394
  %vm6445 = vcmp.eq.s32.totalorder %v6386, %v6395
  %vm6446 = vcmp.eq.s32.totalorder %v6387, %v6394
  %vm6447 = vcmp.eq.s32.totalorder %v6387, %v6395
  %vm6448 = vcmp.eq.s32.totalorder %v6388, %v6394
  %vm6449 = vcmp.eq.s32.totalorder %v6388, %v6395
  %vm6450 = vcmp.eq.s32.totalorder %v6389, %v6394
  %vm6451 = vcmp.eq.s32.totalorder %v6389, %v6395
  %vm6452 = vcmp.eq.s32.totalorder %v6390, %v6394
  %vm6453 = vcmp.eq.s32.totalorder %v6390, %v6395
  %vm6454 = vcmp.eq.s32.totalorder %v6391, %v6394
  %vm6455 = vcmp.eq.s32.totalorder %v6391, %v6395
  %vm6456 = vcmp.eq.s32.totalorder %v6392, %v6394
  %vm6457 = vcmp.eq.s32.totalorder %v6392, %v6395
  %vm6458 = vcmp.eq.s32.totalorder %v6393, %v6394
  %vm6459 = vcmp.eq.s32.totalorder %v6393, %v6395
  %v6460 = vsel %vm6396, 1.0, 0.0
  %v6461 = vsel %vm6397, 1.0, 0.0
  %v6462 = vsel %vm6398, 1.0, 0.0
  %v6463 = vsel %vm6399, 1.0, 0.0
  %v6464 = vsel %vm6400, 1.0, 0.0
  %v6465 = vsel %vm6401, 1.0, 0.0
  %v6466 = vsel %vm6402, 1.0, 0.0
  %v6467 = vsel %vm6403, 1.0, 0.0
  %v6468 = vsel %vm6404, 1.0, 0.0
  %v6469 = vsel %vm6405, 1.0, 0.0
  %v6470 = vsel %vm6406, 1.0, 0.0
  %v6471 = vsel %vm6407, 1.0, 0.0
  %v6472 = vsel %vm6408, 1.0, 0.0
  %v6473 = vsel %vm6409, 1.0, 0.0
  %v6474 = vsel %vm6410, 1.0, 0.0
  %v6475 = vsel %vm6411, 1.0, 0.0
  %v6476 = vsel %vm6412, 1.0, 0.0
  %v6477 = vsel %vm6413, 1.0, 0.0
  %v6478 = vsel %vm6414, 1.0, 0.0
  %v6479 = vsel %vm6415, 1.0, 0.0
  %v6480 = vsel %vm6416, 1.0, 0.0
  %v6481 = vsel %vm6417, 1.0, 0.0
  %v6482 = vsel %vm6418, 1.0, 0.0
  %v6483 = vsel %vm6419, 1.0, 0.0
  %v6484 = vsel %vm6420, 1.0, 0.0
  %v6485 = vsel %vm6421, 1.0, 0.0
  %v6486 = vsel %vm6422, 1.0, 0.0
  %v6487 = vsel %vm6423, 1.0, 0.0
  %v6488 = vsel %vm6424, 1.0, 0.0
  %v6489 = vsel %vm6425, 1.0, 0.0
  %v6490 = vsel %vm6426, 1.0, 0.0
  %v6491 = vsel %vm6427, 1.0, 0.0
  %v6492 = vsel %vm6428, 1.0, 0.0
  %v6493 = vsel %vm6429, 1.0, 0.0
  %v6494 = vsel %vm6430, 1.0, 0.0
  %v6495 = vsel %vm6431, 1.0, 0.0
  %v6496 = vsel %vm6432, 1.0, 0.0
  %v6497 = vsel %vm6433, 1.0, 0.0
  %v6498 = vsel %vm6434, 1.0, 0.0
  %v6499 = vsel %vm6435, 1.0, 0.0
  %v6500 = vsel %vm6436, 1.0, 0.0
  %v6501 = vsel %vm6437, 1.0, 0.0
  %v6502 = vsel %vm6438, 1.0, 0.0
  %v6503 = vsel %vm6439, 1.0, 0.0
  %v6504 = vsel %vm6440, 1.0, 0.0
  %v6505 = vsel %vm6441, 1.0, 0.0
  %v6506 = vsel %vm6442, 1.0, 0.0
  %v6507 = vsel %vm6443, 1.0, 0.0
  %v6508 = vsel %vm6444, 1.0, 0.0
  %v6509 = vsel %vm6445, 1.0, 0.0
  %v6510 = vsel %vm6446, 1.0, 0.0
  %v6511 = vsel %vm6447, 1.0, 0.0
  %v6512 = vsel %vm6448, 1.0, 0.0
  %v6513 = vsel %vm6449, 1.0, 0.0
  %v6514 = vsel %vm6450, 1.0, 0.0
  %v6515 = vsel %vm6451, 1.0, 0.0
  %v6516 = vsel %vm6452, 1.0, 0.0
  %v6517 = vsel %vm6453, 1.0, 0.0
  %v6518 = vsel %vm6454, 1.0, 0.0
  %v6519 = vsel %vm6455, 1.0, 0.0
  %v6520 = vsel %vm6456, 1.0, 0.0
  %v6521 = vsel %vm6457, 1.0, 0.0
  %v6522 = vsel %vm6458, 1.0, 0.0
  %v6523 = vsel %vm6459, 1.0, 0.0
  %v6524 = vrot.slane %v6360, 4
  %v6525 = vadd.f32 %v6360, %v6524
  %v6526 = vrot.slane %v6525, 2
  %v6527 = vadd.f32 %v6525, %v6526
  %v6528 = vrot.slane %v6527, 1
  %v6529 = vadd.f32 %v6527, %v6528
  %v6530 = vrot.slane %v6361, 4
  %v6531 = vadd.f32 %v6361, %v6530
  %v6532 = vrot.slane %v6531, 2
  %v6533 = vadd.f32 %v6531, %v6532
  %v6534 = vrot.slane %v6533, 1
  %v6535 = vadd.f32 %v6533, %v6534
  %v6536 = vmul.f32 %v6360, %v6360
  %v6537 = vmul.f32 %v6361, %v6361
  %v6538 = vrot.slane %v6536, 4
  %v6539 = vadd.f32 %v6536, %v6538
  %v6540 = vrot.slane %v6539, 2
  %v6541 = vadd.f32 %v6539, %v6540
  %v6542 = vrot.slane %v6541, 1
  %v6543 = vadd.f32 %v6541, %v6542
  %v6544 = vrot.slane %v6537, 4
  %v6545 = vadd.f32 %v6537, %v6544
  %v6546 = vrot.slane %v6545, 2
  %v6547 = vadd.f32 %v6545, %v6546
  %v6548 = vrot.slane %v6547, 1
  %v6549 = vadd.f32 %v6547, %v6548
  %6550 = vmatprep.subr.mxu0 %v6461
  %6551 = vmatpush1.msra.mxu0 %v6460
  %6552 = vmatprep.subr.mxu0 %v6463
  %6553 = vmatpush1.msra.mxu0 %v6462
  %6554 = vmatprep.subr.mxu0 %v6465
  %6555 = vmatpush1.msra.mxu0 %v6464
  %6556 = vmatprep.subr.mxu0 %v6467
  %6557 = vmatpush1.msra.mxu0 %v6466
  %6558 = vmatprep.subr.mxu0 %v6469
  %6559 = vmatpush1.msra.mxu0 %v6468
  %6560 = vmatprep.subr.mxu0 %v6471
  %6561 = vmatpush1.msra.mxu0 %v6470
  %6562 = vmatprep.subr.mxu0 %v6473
  %6563 = vmatpush1.msra.mxu0 %v6472
  %6564 = vmatprep.subr.mxu0 %v6475
  %6565 = vmatpush1.msra.mxu0 %v6474
  %6566 = vmatprep.subr.mxu0 %v6477
  %6567 = vmatpush1.msra.mxu0 %v6476
  %6568 = vmatprep.subr.mxu0 %v6479
  %6569 = vmatpush1.msra.mxu0 %v6478
  %6570 = vmatprep.subr.mxu0 %v6481
  %6571 = vmatpush1.msra.mxu0 %v6480
  %6572 = vmatprep.subr.mxu0 %v6483
  %6573 = vmatpush1.msra.mxu0 %v6482
  %6574 = vmatprep.subr.mxu0 %v6485
  %6575 = vmatpush1.msra.mxu0 %v6484
  %6576 = vmatprep.subr.mxu0 %v6487
  %6577 = vmatpush1.msra.mxu0 %v6486
  %6578 = vmatprep.subr.mxu0 %v6489
  %6579 = vmatpush1.msra.mxu0 %v6488
  %6580 = vmatprep.subr.mxu0 %v6491
  %6581 = vmatpush1.msra.mxu0 %v6490
  %6582 = vmatprep.subr.mxu0 %v6493
  %6583 = vmatpush1.msra.mxu0 %v6492
  %6584 = vmatprep.subr.mxu0 %v6495
  %6585 = vmatpush1.msra.mxu0 %v6494
  %6586 = vmatprep.subr.mxu0 %v6497
  %6587 = vmatpush1.msra.mxu0 %v6496
  %6588 = vmatprep.subr.mxu0 %v6499
  %6589 = vmatpush1.msra.mxu0 %v6498
  %6590 = vmatprep.subr.mxu0 %v6501
  %6591 = vmatpush1.msra.mxu0 %v6500
  %6592 = vmatprep.subr.mxu0 %v6503
  %6593 = vmatpush1.msra.mxu0 %v6502
  %6594 = vmatprep.subr.mxu0 %v6505
  %6595 = vmatpush1.msra.mxu0 %v6504
  %6596 = vmatprep.subr.mxu0 %v6507
  %6597 = vmatpush1.msra.mxu0 %v6506
  %6598 = vmatprep.subr.mxu0 %v6509
  %6599 = vmatpush1.msra.mxu0 %v6508
  %6600 = vmatprep.subr.mxu0 %v6511
  %6601 = vmatpush1.msra.mxu0 %v6510
  %6602 = vmatprep.subr.mxu0 %v6513
  %6603 = vmatpush1.msra.mxu0 %v6512
  %6604 = vmatprep.subr.mxu0 %v6515
  %6605 = vmatpush1.msra.mxu0 %v6514
  %6606 = vmatprep.subr.mxu0 %v6517
  %6607 = vmatpush1.msra.mxu0 %v6516
  %6608 = vmatprep.subr.mxu0 %v6519
  %6609 = vmatpush1.msra.mxu0 %v6518
  %6610 = vmatprep.subr.mxu0 %v6521
  %6611 = vmatpush1.msra.mxu0 %v6520
  %6612 = vmatprep.subr.mxu0 %v6523
  %6613 = vmatpush1.msra.mxu0 %v6522
  %6614 = vmatprep.mubr.f32.mxu0 %v6535
  %6615 = vmatmul.mubr.f32.gmra.mrb[0].mxu0 %v6529
  %v6616 = vpop.f32.mrb[0].mxu0
  %v6617 = vadd.f32 0.0, %v6616
  %v6618 = vpop.f32.mrb[0].mxu0
  %v6619 = vadd.f32 0.0, %v6618
  %6620 = vdwg.mxu0
  %v6621 = vmul.f32 %v6617, 0.03125
  %v6622 = vmul.f32 %v6619, 0.03125
  %6623 = vmatprep.subr.mxu0 %v6461
  %6624 = vmatpush1.msra.mxu0 %v6460
  %6625 = vmatprep.subr.mxu0 %v6463
  %6626 = vmatpush1.msra.mxu0 %v6462
  %6627 = vmatprep.subr.mxu0 %v6465
  %6628 = vmatpush1.msra.mxu0 %v6464
  %6629 = vmatprep.subr.mxu0 %v6467
  %6630 = vmatpush1.msra.mxu0 %v6466
  %6631 = vmatprep.subr.mxu0 %v6469
  %6632 = vmatpush1.msra.mxu0 %v6468
  %6633 = vmatprep.subr.mxu0 %v6471
  %6634 = vmatpush1.msra.mxu0 %v6470
  %6635 = vmatprep.subr.mxu0 %v6473
  %6636 = vmatpush1.msra.mxu0 %v6472
  %6637 = vmatprep.subr.mxu0 %v6475
  %6638 = vmatpush1.msra.mxu0 %v6474
  %6639 = vmatprep.subr.mxu0 %v6477
  %6640 = vmatpush1.msra.mxu0 %v6476
  %6641 = vmatprep.subr.mxu0 %v6479
  %6642 = vmatpush1.msra.mxu0 %v6478
  %6643 = vmatprep.subr.mxu0 %v6481
  %6644 = vmatpush1.msra.mxu0 %v6480
  %6645 = vmatprep.subr.mxu0 %v6483
  %6646 = vmatpush1.msra.mxu0 %v6482
  %6647 = vmatprep.subr.mxu0 %v6485
  %6648 = vmatpush1.msra.mxu0 %v6484
  %6649 = vmatprep.subr.mxu0 %v6487
  %6650 = vmatpush1.msra.mxu0 %v6486
  %6651 = vmatprep.subr.mxu0 %v6489
  %6652 = vmatpush1.msra.mxu0 %v6488
  %6653 = vmatprep.subr.mxu0 %v6491
  %6654 = vmatpush1.msra.mxu0 %v6490
  %6655 = vmatprep.subr.mxu0 %v6493
  %6656 = vmatpush1.msra.mxu0 %v6492
  %6657 = vmatprep.subr.mxu0 %v6495
  %6658 = vmatpush1.msra.mxu0 %v6494
  %6659 = vmatprep.subr.mxu0 %v6497
  %6660 = vmatpush1.msra.mxu0 %v6496
  %6661 = vmatprep.subr.mxu0 %v6499
  %6662 = vmatpush1.msra.mxu0 %v6498
  %6663 = vmatprep.subr.mxu0 %v6501
  %6664 = vmatpush1.msra.mxu0 %v6500
  %6665 = vmatprep.subr.mxu0 %v6503
  %6666 = vmatpush1.msra.mxu0 %v6502
  %6667 = vmatprep.subr.mxu0 %v6505
  %6668 = vmatpush1.msra.mxu0 %v6504
  %6669 = vmatprep.subr.mxu0 %v6507
  %6670 = vmatpush1.msra.mxu0 %v6506
  %6671 = vmatprep.subr.mxu0 %v6509
  %6672 = vmatpush1.msra.mxu0 %v6508
  %6673 = vmatprep.subr.mxu0 %v6511
  %6674 = vmatpush1.msra.mxu0 %v6510
  %6675 = vmatprep.subr.mxu0 %v6513
  %6676 = vmatpush1.msra.mxu0 %v6512
  %6677 = vmatprep.subr.mxu0 %v6515
  %6678 = vmatpush1.msra.mxu0 %v6514
  %6679 = vmatprep.subr.mxu0 %v6517
  %6680 = vmatpush1.msra.mxu0 %v6516
  %6681 = vmatprep.subr.mxu0 %v6519
  %6682 = vmatpush1.msra.mxu0 %v6518
  %6683 = vmatprep.subr.mxu0 %v6521
  %6684 = vmatpush1.msra.mxu0 %v6520
  %6685 = vmatprep.subr.mxu0 %v6523
  %6686 = vmatpush1.msra.mxu0 %v6522
  %6687 = vmatprep.mubr.f32.mxu0 %v6549
  %6688 = vmatmul.mubr.f32.gmra.mrb[0].mxu0 %v6543
  %v6689 = vpop.f32.mrb[0].mxu0
  %v6690 = vadd.f32 0.0, %v6689
  %v6691 = vpop.f32.mrb[0].mxu0
  %v6692 = vadd.f32 0.0, %v6691
  %6693 = vdwg.mxu0
  %v6694 = vmul.f32 %v6690, 0.03125
  %v6695 = vmul.f32 %v6692, 0.03125
  %v6696 = vmul.f32 %v6621, %v6621
  %v6697 = vmul.f32 %v6622, %v6622
  %v6698 = vsub.f32 %v6694, %v6696
  %v6699 = vsub.f32 %v6695, %v6697
  %v6700 = vmax.f32 %v6698, 0.0
  %v6701 = vmax.f32 %v6699, 0.0
  %v6702 = vlaneseq
  %v6703 = vshrl.u32 %v6702, 7
  %v6704 = vsub.s32 0, %v6703
  %v6705 = vrot.slane %v6621, %v6704
  %v6706 = vlaneseq
  %v6707 = vshrl.u32 %v6706, 7
  %v6708 = vsub.s32 0, %v6707
  %v6709 = vrot.slane %v6622, %v6708
  %v6710 = vsub.f32 %v6360, %v6705
  %v6711 = vsub.f32 %v6361, %v6709
  %v6712 = vadd.f32 %v6700, 1e-05
  %v6713 = vadd.f32 %v6701, 1e-05
  %v6714 = vrsqrt.pop %v6712
  %v6715 = vrsqrt.pop %v6713
  %v6716 = vlaneseq
  %v6717 = vshrl.u32 %v6716, 7
  %v6718 = vsub.s32 0, %v6717
  %v6719 = vrot.slane %v6714, %v6718
  %v6720 = vlaneseq
  %v6721 = vshrl.u32 %v6720, 7
  %v6722 = vsub.s32 0, %v6721
  %v6723 = vrot.slane %v6715, %v6722
  %v6724 = vmul.f32 %v6710, %v6719
  %v6725 = vmul.f32 %v6711, %v6723
  %vm6726 = vcmp.gt.f32.partialorder %v6724, 0.0
  %vm6727 = vcmp.gt.f32.partialorder %v6725, 0.0
  %v6728 = vmul.f32 %v6724, 0.2
  %v6729 = vmul.f32 %v6725, 0.2
  %v6730 = vsel %vm6726, %v6724, %v6728
  %v6731 = vsel %vm6727, %v6725, %v6729
  %v6732 = vld [vmem:[%s5] sm:$0xff]
  %v6734 = vcombine.high %v6732, %v6732
  %v6736 = vmul.f32 %v6730, %v6732
  %v6737 = vmul.f32 %v6731, %v6734
  %vm6738 = vcmask 1043456
  %v6739 = vsel %vm6738, %v6736, 0.0
  %v6740 = vsel %vm6738, %v6737, 0.0
  %v6741 = vadd.f32 %v6739, %v6740
  %6742 = vadd.xlane.f32.xlu0 %v6741
  %v6743 = vpop.xlane.xlu0 %6742
  %v6744 = vrot.slane %v6743, 4
  %v6745 = vadd.f32 %v6743, %v6744
  %v6746 = vrot.slane %v6745, 2
  %v6747 = vadd.f32 %v6745, %v6746
  %v6748 = vrot.slane %v6747, 1
  %v6749 = vadd.f32 %v6747, %v6748
  %s6750 = vtos %v6749
  %v6751 = vstv %s6750
  %v6752 = vand.u32 2147483647, %v6751
  %v6753 = vsub.f32 0.0, %v6752
  %v6754 = vmul.f32 %v6753, 1.442695
  %v6755 = vpow.pop %v6754
  %vm6756 = vcmp.ge.f32.partialorder %v6751, 0.0
  %v6757 = vadd.f32 %v6755, 1.0
  %v6758 = vrcp.pop %v6757
  %v6759 = vmul.f32 1.0, %v6758
  %v6760 = vmul.f32 %v6755, %v6758
  %v6761 = vsel %vm6756, %v6759, %v6760
  %vm6762 = vcmask 0
  %6763 = vst.msk [vmem:[%s6] sm:$0x1] %vm6762, %v6761
  %v6764 = vcombine.low %v6732, %v6732
  %v6766 = vmul.f32 %v6730, %v6764
  %v6767 = vmul.f32 %v6731, %v6732
  %v6770 = vrot.slane %v6766, 4
  %v6771 = vrot.slane %v6767, 4
  %v6774 = vsel %vm6738, %v6770, 0.0
  %v6775 = vsel %vm6738, %v6771, 0.0
  %v6776 = vadd.f32 %v6774, %v6775
  %6777 = vadd.xlane.f32.xlu0 %v6776
  %v6778 = vpop.xlane.xlu0 %6777
  %v6779 = vrot.slane %v6778, 4
  %v6780 = vadd.f32 %v6778, %v6779
  %v6781 = vrot.slane %v6780, 2
  %v6782 = vadd.f32 %v6780, %v6781
  %v6783 = vrot.slane %v6782, 1
  %v6784 = vadd.f32 %v6782, %v6783
  %s6785 = vtos %v6784
  %v6786 = vstv %s6785
  %v6787 = vand.u32 2147483647, %v6786
  %v6788 = vsub.f32 0.0, %v6787
  %v6789 = vmul.f32 %v6788, 1.442695
  %v6790 = vpow.pop %v6789
  %vm6791 = vcmp.ge.f32.partialorder %v6786, 0.0
  %v6792 = vadd.f32 %v6790, 1.0
  %v6793 = vrcp.pop %v6792
  %v6794 = vmul.f32 1.0, %v6793
  %v6795 = vmul.f32 %v6790, %v6793
  %v6796 = vsel %vm6791, %v6794, %v6795
  %6797 = vst.msk [vmem:[%s6 + $0x1] sm:$0x1] %vm6762, %v6796
  // Predicated region
  $region26: #{discriminator_forward.1} parent=0 // pred_check
    _
  $region27: #{discriminator_forward.1} parent=0 // pred_check_branch
    %6799 = sbr.rel (0) target = $region29
  $region28: #{discriminator_forward.1} parent=0 // pred_region
    _
  $region29: #{discriminator_forward.1} parent=0 // pred_fallthru
    _
  // Predicated region
  $region30: #{discriminator_forward.1} parent=0 // pred_check
    _
  $region31: #{discriminator_forward.1} parent=0 // pred_check_branch
    %6801 = sbr.rel (0) target = $region33
  $region32: #{discriminator_forward.1} parent=0 // pred_region
    _
  $region33: #{discriminator_forward.1} parent=0 // pred_fallthru
    _

</llo_original>
